<compile_context>
chip_gen: v7x
topology: tpu7x:2x2x1
jax: 0.10.0
libtpu: 0.0.40
codegen_flags: <defaults>
</compile_context>

<pallas_src>
import functools

import jax
import jax.numpy as jnp
from jax.experimental import pallas as pl
from jax.experimental.pallas import tpu as pltpu


# ----------------------------------------------------------------------------
# Pallas kernel
# ----------------------------------------------------------------------------
def _dblock_kernel(*refs, H, W, downsample, learnable_sc):
    if learnable_sc:
        (x_ref, w1_ref, b1_ref, w2_ref, b2_ref, wsc_ref, bsc_ref) = refs[:7]
        rest = refs[7:]
    else:
        (x_ref, w1_ref, b1_ref, w2_ref, b2_ref) = refs[:5]
        wsc_ref = bsc_ref = None
        rest = refs[5:]
    if downsample:
        o_ref, pad1, pad2, pool_buf = rest
    else:
        o_ref, pad1, pad2 = rest
        pool_buf = None

    j = pl.program_id(1)                 # Cout-tile index (innermost, "arbitrary")
    Cin_p = pad1.shape[-1]
    Chid_p = pad2.shape[-1]
    TCo = o_ref.shape[-1]
    Ho = H // 2 if downsample else H
    Wo = W // 2 if downsample else W

    def fill_padded(pad_ref, interior):
        # Zero the 1-pixel halo with 8-sublane-aligned tiles (unmasked stores);
        # the interior store below overwrites the interior columns of those
        # tiles.  Columns > W+1 are never read by the 3x3 taps.
        Wp = pad_ref.shape[1]
        C = pad_ref.shape[-1]
        zrow = jnp.zeros((1, Wp, C), jnp.float32)
        ztile = jnp.zeros((H, 8, C), jnp.float32)
        pad_ref[0:1, :, :] = zrow
        pad_ref[H + 1:H + 2, :, :] = zrow
        pad_ref[1:H + 1, 0:8, :] = ztile               # covers halo col 0
        pad_ref[1:H + 1, Wp - 8:Wp, :] = ztile         # covers halo col W+1
        pad_ref[1:H + 1, 1:W + 1, :] = interior

    def conv3x3(pad_ref, w_ref, b_ref):
        # 9 per-tap MXU matmuls accumulated into one f32 value (no im2col).
        # TODO(synk): pair taps (K = 2*C) on v6e/v7x to fill the 256-deep MXU,
        # and/or produce the +/-1 column shifts with pltpu.roll on one aligned
        # slab to push the shift work onto the otherwise idle XLU.
        C = pad_ref.shape[-1]
        acc = None
        t = 0
        for ky in range(3):
            for kx in range(3):
                patch = (pad_ref[ky:ky + H, kx:kx + W, :]
                         .reshape(H * W, C).astype(jnp.bfloat16))
                d = jnp.dot(patch, w_ref[t * C:(t + 1) * C, :],
                            preferred_element_type=jnp.float32)
                acc = d if acc is None else acc + d
                t += 1
        return acc + b_ref[...]

    def avgpool2(val):
        # val: (Hc, Wc, C) f32 with C a multiple of 128.  Vertical pair-sum in
        # registers (leading-dim-only reshape), horizontal pair-sum via
        # stride-2 sublane reads of a small VMEM staging buffer.
        Hc, Wc, C = val.shape
        v = val.reshape(Hc // 2, 2, Wc, C)
        pool_buf[:, :, 0:C] = v[:, 0] + v[:, 1]        # (Hc//2, Wc, C)
        return (pool_buf[:, pl.ds(0, Wc // 2, 2), 0:C] +
                pool_buf[:, pl.ds(1, Wc // 2, 2), 0:C]) * 0.25

    # ---------------- shortcut branch ----------------
    if learnable_sc:
        if downsample:
            # avgpool commutes with the 1x1 conv (+ bias): pool x first ->
            # 4x fewer shortcut MXU FLOPs and a 4x smaller live x0.
            x_pool = avgpool2(x_ref[0].astype(jnp.float32))       # (Ho, Wo, Cin_p)
            x0 = (jnp.dot(x_pool.reshape(Ho * Wo, Cin_p).astype(jnp.bfloat16),
                          wsc_ref[...], preferred_element_type=jnp.float32)
                  + bsc_ref[...]).reshape(Ho, Wo, TCo)
        else:
            x0 = (jnp.dot(x_ref[0].reshape(H * W, Cin_p), wsc_ref[...],
                          preferred_element_type=jnp.float32)
                  + bsc_ref[...]).reshape(H, W, TCo)
    else:
        # The module uses ReLU(inplace=True) and x0 aliases x, so in this
        # configuration the identity shortcut sees the ACTIVATED tensor.
        # (Cin == Cout here, and the wrapper uses a single Cout tile.)
        x0 = jnp.maximum(x_ref[0].astype(jnp.float32), 0.0)

    # ---------------- main branch ----------------
    # conv #1 (3x3, pad 1) + relu is shared by every Cout tile: run on j == 0
    # only and park relu(conv1) in the persistent pad2 scratch plane.
    @pl.when(j == 0)
    def _():
        relu_x = jnp.maximum(x_ref[0].astype(jnp.float32), 0.0)
        fill_padded(pad1, relu_x)
        h1 = conv3x3(pad1, w1_ref, b1_ref)                        # (H*W, Chid_p)
        fill_padded(pad2, jnp.maximum(h1, 0.0).reshape(H, W, Chid_p))

    # conv #2 (3x3, pad 1) for this Cout tile.
    h2 = conv3x3(pad2, w2_ref, b2_ref).reshape(H, W, TCo)
    if downsample:
        h2 = avgpool2(h2)

    # f32 residual add, single lane-dense bf16 store.
    o_ref[0] = (x0 + h2).astype(o_ref.dtype)


# ----------------------------------------------------------------------------
# Parameter helpers (plain JAX glue)
# ----------------------------------------------------------------------------
def spectral_normalize(w, key, n_iter=10, eps=1e-12):
    """Normalize a conv weight (O, I, kh, kw) by its largest singular value."""
    w_mat = w.reshape(w.shape[0], -1)
    u = jax.random.normal(key, (w.shape[0],), dtype=w.dtype)
    u = u / (jnp.linalg.norm(u) + eps)
    v = None
    for _ in range(n_iter):
        v = w_mat.T @ u
        v = v / (jnp.linalg.norm(v) + eps)
        u = w_mat @ v
        u = u / (jnp.linalg.norm(u) + eps)
    sigma = u @ (w_mat @ v)
    return w / sigma


def _round_up(n, m):
    return ((n + m - 1) // m) * m


def _vmem_limit_bytes():
    # Generation-aware scoped-VMEM limit: ~3/4 of physical VMEM, capped at
    # 100 MiB (v5e/v6e -> ~96 MiB, v7x -> ~48 MiB), never below 32 MiB.
    try:
        cap = getattr(pltpu.get_tpu_info(), "vmem_capacity_bytes", None)
    except Exception:
        cap = None
    if not cap:
        cap = 128 * 1024 * 1024
    return max(32 * 1024 * 1024, min((cap * 3) // 4, 100 * 1024 * 1024))


# ----------------------------------------------------------------------------
# Wrapper: NCHW in / NCHW out, launches the Pallas kernel
# ----------------------------------------------------------------------------
def dblock_forward(x_nchw, params, *, downsample):
    w1, b1, w2, b2 = params["w1"], params["b1"], params["w2"], params["b2"]
    Chid, Cin = w1.shape[0], w1.shape[1]
    Cout = w2.shape[0]
    B, _, H, W = x_nchw.shape
    learnable_sc = (Cin != Cout) or downsample
    if downsample:
        assert H % 2 == 0 and W % 2 == 0, "downsample=True requires even H, W"
    Ho = H // 2 if downsample else H
    Wo = W // 2 if downsample else W

    LANE = 128
    Cin_p = _round_up(Cin, LANE)     # lane-aligned input channels
    Chid_p = _round_up(Chid, LANE)   # lane-aligned hidden channels
    Cout_p = _round_up(Cout, LANE)   # lane-aligned output channels
    Wp = _round_up(W + 2, 8)         # padded-plane width (sublane aligned)

    # Cout tile width: bounds the conv2/shortcut weight + output working set.
    if not learnable_sc:
        tco = Cout_p                 # identity shortcut reads x directly: 1 tile
    elif Cout_p % 256 == 0:
        tco = 256
    else:
        tco = 128
    n_cout = Cout_p // tco

    # NCHW -> NHWC, zero-pad channels to lane width, bf16 for DMA/MXU.
    # TODO(synk): keep activations NHWC + bf16 + lane-padded end-to-end in the
    # surrounding model so these boundary transposes/pads/casts disappear.
    x_nhwc = jnp.transpose(x_nchw, (0, 2, 3, 1))
    if Cin_p != Cin:
        x_nhwc = jnp.pad(x_nhwc, ((0, 0), (0, 0), (0, 0), (0, Cin_p - Cin)))
    x_nhwc = x_nhwc.astype(jnp.bfloat16)

    def pack3x3(w, ci, ci_p, co, co_p):
        # (O, I, 3, 3) -> (9*ci_p, co_p) with zero rows/cols for the padding.
        wk = jnp.transpose(w, (2, 3, 1, 0))                      # (3, 3, I, O)
        wk = jnp.pad(wk, ((0, 0), (0, 0), (0, ci_p - ci), (0, co_p - co)))
        return wk.reshape(9 * ci_p, co_p).astype(jnp.bfloat16)

    w1_k = pack3x3(w1, Cin, Cin_p, Chid, Chid_p)
    w2_k = pack3x3(w2, Chid, Chid_p, Cout, Cout_p)
    b1_k = jnp.pad(b1, (0, Chid_p - Chid)).reshape(1, Chid_p).astype(jnp.float32)
    b2_k = jnp.pad(b2, (0, Cout_p - Cout)).reshape(1, Cout_p).astype(jnp.float32)

    # TODO(synk): once pipeline_mode=pl.Buffered(1) is validated on the main
    # pallas_call pipeline, single-buffer the grid-invariant weight/bias specs
    # below to halve their VMEM footprint (matters most on v7x).
    in_arrays = [x_nhwc, w1_k, b1_k, w2_k, b2_k]
    in_specs = [
        pl.BlockSpec((1, H, W, Cin_p), lambda b, j: (b, 0, 0, 0)),
        pl.BlockSpec((9 * Cin_p, Chid_p), lambda b, j: (0, 0)),
        pl.BlockSpec((1, Chid_p), lambda b, j: (0, 0)),
        pl.BlockSpec((9 * Chid_p, tco), lambda b, j: (0, j)),
        pl.BlockSpec((1, tco), lambda b, j: (0, j)),
    ]
    if learnable_sc:
        wsc, bsc = params["wsc"], params["bsc"]
        wsc_k = jnp.transpose(wsc[:, :, 0, 0], (1, 0))           # (Cin, Cout)
        wsc_k = jnp.pad(wsc_k, ((0, Cin_p - Cin), (0, Cout_p - Cout)))
        wsc_k = wsc_k.astype(jnp.bfloat16)
        bsc_k = (jnp.pad(bsc, (0, Cout_p - Cout))
                 .reshape(1, Cout_p).astype(jnp.float32))
        in_arrays += [wsc_k, bsc_k]
        in_specs += [
            pl.BlockSpec((Cin_p, tco), lambda b, j: (0, j)),
            pl.BlockSpec((1, tco), lambda b, j: (0, j)),
        ]

    # TODO(synk): for production H, W add a row-strip grid axis (with a 1-row
    # halo recompute of conv1) so pad1/pad2 stay within the v7x 64 MiB VMEM.
    scratch = [
        pltpu.VMEM((H + 2, Wp, Cin_p), jnp.float32),    # zero-haloed relu(x)
        pltpu.VMEM((H + 2, Wp, Chid_p), jnp.float32),   # zero-haloed relu(conv1)
    ]
    if downsample:
        scratch.append(
            pltpu.VMEM((H // 2, W, max(Cin_p, tco)), jnp.float32))  # pool staging

    kernel = functools.partial(
        _dblock_kernel, H=H, W=W,
        downsample=downsample, learnable_sc=learnable_sc)

    out_nhwc = pl.pallas_call(
        kernel,
        out_shape=jax.ShapeDtypeStruct((B, Ho, Wo, Cout_p), jnp.bfloat16),
        grid=(B, n_cout),
        in_specs=in_specs,
        out_specs=pl.BlockSpec((1, Ho, Wo, tco), lambda b, j: (b, 0, 0, j)),
        scratch_shapes=scratch,
        compiler_params=pltpu.CompilerParams(
            dimension_semantics=("parallel", "arbitrary"),
            vmem_limit_bytes=_vmem_limit_bytes()),
    )(*in_arrays)

    out = out_nhwc[..., :Cout]                                   # drop lane pad
    return jnp.transpose(out, (0, 3, 1, 2)).astype(jnp.float32)  # NCHW f32


# ----------------------------------------------------------------------------
# Pure-JAX reference (for correctness check)
# ----------------------------------------------------------------------------
def dblock_reference(x, params, *, downsample):
    w1, b1, w2, b2 = params["w1"], params["b1"], params["w2"], params["b2"]
    Cin, Cout = w1.shape[1], w2.shape[0]
    learnable_sc = (Cin != Cout) or downsample

    def conv(v, w, b, pad):
        y = jax.lax.conv_general_dilated(
            v, w, window_strides=(1, 1), padding=[(pad, pad), (pad, pad)],
            dimension_numbers=("NCHW", "OIHW", "NCHW"))
        return y + b[None, :, None, None]

    def avgpool(v):
        B, C, H, W = v.shape
        return v.reshape(B, C, H // 2, 2, W // 2, 2).mean(axis=(3, 5))

    if learnable_sc:
        x0 = conv(x, params["wsc"], params["bsc"], 0)
        if downsample:
            x0 = avgpool(x0)
    else:
        x0 = jax.nn.relu(x)   # mirrors the inplace-ReLU aliasing of the module

    h = jax.nn.relu(x)
    h = conv(h, w1, b1, 1)
    h = jax.nn.relu(h)
    h = conv(h, w2, b2, 1)
    if downsample:
        h = avgpool(h)
    return h + x0


# ----------------------------------------------------------------------------
if __name__ == "__main__":
    key = jax.random.PRNGKey(0)
    ks = jax.random.split(key, 20)

    # ---------------- config 1: downsample + learnable (1x1) shortcut -------
    B, Cin, Chid, Cout, H, W = 2, 4, 8, 8, 16, 16
    w1 = 0.2 * jax.random.normal(ks[0], (Chid, Cin, 3, 3), jnp.float32)
    b1 = 0.1 * jax.random.normal(ks[1], (Chid,), jnp.float32)
    w2 = 0.2 * jax.random.normal(ks[2], (Cout, Chid, 3, 3), jnp.float32)
    b2 = 0.1 * jax.random.normal(ks[3], (Cout,), jnp.float32)
    wsc = 0.2 * jax.random.normal(ks[4], (Cout, Cin, 1, 1), jnp.float32)
    bsc = 0.1 * jax.random.normal(ks[5], (Cout,), jnp.float32)
    x = jax.random.normal(ks[6], (B, Cin, H, W), jnp.float32)

    # SNConv2d: divide weights by their spectral norm (power iteration).
    w1 = spectral_normalize(w1, ks[7])
    w2 = spectral_normalize(w2, ks[8])
    wsc = spectral_normalize(wsc, ks[9])
    params = dict(w1=w1, b1=b1, w2=w2, b2=b2, wsc=wsc, bsc=bsc)

    out = jax.block_until_ready(dblock_forward(x, params, downsample=True))
    ref = jax.block_until_ready(dblock_reference(x, params, downsample=True))
    assert out.shape == (B, Cout, H // 2, W // 2), out.shape
    if not jnp.allclose(out, ref, rtol=5e-2, atol=5e-2):
        max_err = float(jnp.max(jnp.abs(out - ref)))
        raise AssertionError(f"DBlock (downsample) mismatch, max abs err={max_err}")

    # ---------------- config 2: no downsample, Cin == Cout (identity sc) ----
    C2, Chid2 = 8, 16
    w1b = spectral_normalize(
        0.2 * jax.random.normal(ks[10], (Chid2, C2, 3, 3), jnp.float32), ks[11])
    b1b = 0.1 * jax.random.normal(ks[12], (Chid2,), jnp.float32)
    w2b = spectral_normalize(
        0.2 * jax.random.normal(ks[13], (C2, Chid2, 3, 3), jnp.float32), ks[14])
    b2b = 0.1 * jax.random.normal(ks[15], (C2,), jnp.float32)
    x2 = jax.random.normal(ks[16], (B, C2, H, W), jnp.float32)
    params2 = dict(w1=w1b, b1=b1b, w2=w2b, b2=b2b)

    out2 = jax.block_until_ready(dblock_forward(x2, params2, downsample=False))
    ref2 = jax.block_until_ready(dblock_reference(x2, params2, downsample=False))
    assert out2.shape == (B, C2, H, W), out2.shape
    if not jnp.allclose(out2, ref2, rtol=5e-2, atol=5e-2):
        max_err = float(jnp.max(jnp.abs(out2 - ref2)))
        raise AssertionError(f"DBlock (identity sc) mismatch, max abs err={max_err}")

    print("KERNEL_OK")
</pallas_src>

<mosaic_0001>
module attributes {stable_mosaic.version = 11 : i64} {
  func.func @_dblock_kernel(%arg0: i32, %arg1: i32, %arg2: memref<1x16x16x128xbf16, #tpu.memory_space<vmem>>, %arg3: memref<1152x128xbf16, #tpu.memory_space<vmem>>, %arg4: memref<1x128xf32, #tpu.memory_space<vmem>>, %arg5: memref<1152x128xbf16, #tpu.memory_space<vmem>>, %arg6: memref<1x128xf32, #tpu.memory_space<vmem>>, %arg7: memref<128x128xbf16, #tpu.memory_space<vmem>>, %arg8: memref<1x128xf32, #tpu.memory_space<vmem>>, %arg9: memref<1x8x8x128xbf16, #tpu.memory_space<vmem>>, %arg10: memref<18x24x128xf32, #tpu.memory_space<vmem>>, %arg11: memref<18x24x128xf32, #tpu.memory_space<vmem>>, %arg12: memref<8x16x128xf32, #tpu.memory_space<vmem>>) attributes {dimension_semantics = [#tpu.dimension_semantics<parallel>, #tpu.dimension_semantics<arbitrary>], iteration_bounds = array<i64: 2, 1>, scalar_prefetch = 0 : i64, scratch_operands = 3 : i64, tpu.core_type = #tpu.core_type<tc>, window_params = [{transform_indices = @transform_0, window_bounds = array<i64: 1, 16, 16, 128>}, {pipeline_mode = #tpu.pipeline_mode<synchronous>, transform_indices = @transform_1, window_bounds = array<i64: 1152, 128>}, {pipeline_mode = #tpu.pipeline_mode<synchronous>, transform_indices = @transform_2, window_bounds = array<i64: 1, 128>}, {transform_indices = @transform_3, window_bounds = array<i64: 1152, 128>}, {transform_indices = @transform_4, window_bounds = array<i64: 1, 128>}, {transform_indices = @transform_5, window_bounds = array<i64: 128, 128>}, {transform_indices = @transform_6, window_bounds = array<i64: 1, 128>}, {transform_indices = @transform_7, window_bounds = array<i64: 1, 8, 8, 128>}]} {
    %c0 = arith.constant 0 : index
    %c0_0 = arith.constant 0 : index
    %c0_1 = arith.constant 0 : index
    %c0_2 = arith.constant 0 : index
    %0 = vector.load %arg2[%c0, %c0_0, %c0_1, %c0_2] : memref<1x16x16x128xbf16, #tpu.memory_space<vmem>>, vector<1x16x16x128xbf16>
    %1 = vector.shape_cast %0 : vector<1x16x16x128xbf16> to vector<16x16x128xbf16>
    %2 = arith.extf %1 : vector<16x16x128xbf16> to vector<16x16x128xf32>
    %3 = vector.shape_cast %2 : vector<16x16x128xf32> to vector<8x2x16x128xf32>
    %4 = vector.extract_strided_slice %3 {offsets = [0, 0, 0, 0], sizes = [8, 1, 16, 128], strides = [1, 1, 1, 1]} : vector<8x2x16x128xf32> to vector<8x1x16x128xf32>
    %5 = vector.shape_cast %4 : vector<8x1x16x128xf32> to vector<8x16x128xf32>
    %6 = vector.extract_strided_slice %3 {offsets = [0, 1, 0, 0], sizes = [8, 1, 16, 128], strides = [1, 1, 1, 1]} : vector<8x2x16x128xf32> to vector<8x1x16x128xf32>
    %7 = vector.shape_cast %6 : vector<8x1x16x128xf32> to vector<8x16x128xf32>
    %8 = arith.addf %5, %7 : vector<8x16x128xf32>
    %c0_3 = arith.constant 0 : index
    %c0_4 = arith.constant 0 : index
    %c0_5 = arith.constant 0 : index
    %9 = vector.load %arg12[%c0_3, %c0_4, %c0_5] : memref<8x16x128xf32, #tpu.memory_space<vmem>>, vector<8x16x128xf32>
    tpu.vector_store %arg12[%c0_3, %c0_4, %c0_5], %8 {strides = array<i32>} : memref<8x16x128xf32, #tpu.memory_space<vmem>>, vector<8x16x128xf32>,
    %c0_6 = arith.constant 0 : index
    %c0_7 = arith.constant 0 : index
    %c0_8 = arith.constant 0 : index
    %10 = tpu.strided_load %arg12[%c0_6, %c0_7, %c0_8] {strides = array<i32: 1, 2, 1>} : memref<8x16x128xf32, #tpu.memory_space<vmem>>, vector<8x8x128xf32>
    %c0_9 = arith.constant 0 : index
    %c1 = arith.constant 1 : index
    %c0_10 = arith.constant 0 : index
    %11 = tpu.strided_load %arg12[%c0_9, %c1, %c0_10] {strides = array<i32: 1, 2, 1>} : memref<8x16x128xf32, #tpu.memory_space<vmem>>, vector<8x8x128xf32>
    %12 = arith.addf %10, %11 : vector<8x8x128xf32>
    %cst = arith.constant 2.500000e-01 : f32
    %13 = vector.broadcast %cst : f32 to vector<8x8x128xf32>
    %14 = arith.mulf %12, %13 : vector<8x8x128xf32>
    %15 = vector.shape_cast %14 : vector<8x8x128xf32> to vector<64x128xf32>
    %16 = arith.truncf %15 : vector<64x128xf32> to vector<64x128xbf16>
    %c0_11 = arith.constant 0 : index
    %c0_12 = arith.constant 0 : index
    %17 = vector.load %arg7[%c0_11, %c0_12] : memref<128x128xbf16, #tpu.memory_space<vmem>>, vector<128x128xbf16>
    %cst_13 = arith.constant dense<0.000000e+00> : vector<64x128xf32>
    %18 = tpu.matmul %16, %17, %cst_13 {dimension_numbers = #tpu.dot_dimension_numbers<[1], [0], [0], [1], [0, 0, 1, 1], [], []>} : vector<64x128xbf16>, vector<128x128xbf16>, vector<64x128xf32> -> vector<64x128xf32>
    %c0_14 = arith.constant 0 : index
    %c0_15 = arith.constant 0 : index
    %19 = vector.load %arg8[%c0_14, %c0_15] : memref<1x128xf32, #tpu.memory_space<vmem>>, vector<1x128xf32>
    %20 = vector.broadcast %19 : vector<1x128xf32> to vector<64x128xf32>
    %21 = arith.addf %18, %20 : vector<64x128xf32>
    %22 = vector.shape_cast %21 : vector<64x128xf32> to vector<8x8x128xf32>
    %c0_i32 = arith.constant 0 : i32
    %23 = arith.cmpi eq, %arg1, %c0_i32 : i32
    %24 = arith.extui %23 : i1 to i32
    %c0_i32_16 = arith.constant 0 : i32
    %25 = arith.cmpi ne, %24, %c0_i32_16 : i32
    scf.if %25 {
      %c0_78 = arith.constant 0 : index
      %c0_79 = arith.constant 0 : index
      %c0_80 = arith.constant 0 : index
      %c0_81 = arith.constant 0 : index
      %100 = vector.load %arg2[%c0_78, %c0_79, %c0_80, %c0_81] : memref<1x16x16x128xbf16, #tpu.memory_space<vmem>>, vector<1x16x16x128xbf16>
      %101 = vector.shape_cast %100 : vector<1x16x16x128xbf16> to vector<16x16x128xbf16>
      %102 = arith.extf %101 : vector<16x16x128xbf16> to vector<16x16x128xf32>
      %cst_82 = arith.constant 0.000000e+00 : f32
      %103 = vector.broadcast %cst_82 : f32 to vector<16x16x128xf32>
      %104 = arith.maximumf %102, %103 : vector<16x16x128xf32>
      %cst_83 = arith.constant 0.000000e+00 : f32
      %105 = vector.broadcast %cst_83 : f32 to vector<1x24x128xf32>
      %cst_84 = arith.constant 0.000000e+00 : f32
      %106 = vector.broadcast %cst_84 : f32 to vector<16x8x128xf32>
      %c0_85 = arith.constant 0 : index
      %c0_86 = arith.constant 0 : index
      %c0_87 = arith.constant 0 : index
      %107 = vector.load %arg10[%c0_85, %c0_86, %c0_87] : memref<18x24x128xf32, #tpu.memory_space<vmem>>, vector<1x24x128xf32>
      tpu.vector_store %arg10[%c0_85, %c0_86, %c0_87], %105 {strides = array<i32>} : memref<18x24x128xf32, #tpu.memory_space<vmem>>, vector<1x24x128xf32>,
      %c17 = arith.constant 17 : index
      %c0_88 = arith.constant 0 : index
      %c0_89 = arith.constant 0 : index
      %108 = vector.load %arg10[%c17, %c0_88, %c0_89] : memref<18x24x128xf32, #tpu.memory_space<vmem>>, vector<1x24x128xf32>
      tpu.vector_store %arg10[%c17, %c0_88, %c0_89], %105 {strides = array<i32>} : memref<18x24x128xf32, #tpu.memory_space<vmem>>, vector<1x24x128xf32>,
      %c1_90 = arith.constant 1 : index
      %c0_91 = arith.constant 0 : index
      %c0_92 = arith.constant 0 : index
      %109 = vector.load %arg10[%c1_90, %c0_91, %c0_92] : memref<18x24x128xf32, #tpu.memory_space<vmem>>, vector<16x8x128xf32>
      tpu.vector_store %arg10[%c1_90, %c0_91, %c0_92], %106 {strides = array<i32>} : memref<18x24x128xf32, #tpu.memory_space<vmem>>, vector<16x8x128xf32>,
      %c1_93 = arith.constant 1 : index
      %c16 = arith.constant 16 : index
      %c0_94 = arith.constant 0 : index
      %110 = vector.load %arg10[%c1_93, %c16, %c0_94] : memref<18x24x128xf32, #tpu.memory_space<vmem>>, vector<16x8x128xf32>
      tpu.vector_store %arg10[%c1_93, %c16, %c0_94], %106 {strides = array<i32>} : memref<18x24x128xf32, #tpu.memory_space<vmem>>, vector<16x8x128xf32>,
      %c1_95 = arith.constant 1 : index
      %c1_96 = arith.constant 1 : index
      %c0_97 = arith.constant 0 : index
      %111 = vector.load %arg10[%c1_95, %c1_96, %c0_97] : memref<18x24x128xf32, #tpu.memory_space<vmem>>, vector<16x16x128xf32>
      tpu.vector_store %arg10[%c1_95, %c1_96, %c0_97], %104 {strides = array<i32>} : memref<18x24x128xf32, #tpu.memory_space<vmem>>, vector<16x16x128xf32>,
      %c0_98 = arith.constant 0 : index
      %c0_99 = arith.constant 0 : index
      %c0_100 = arith.constant 0 : index
      %112 = vector.load %arg10[%c0_98, %c0_99, %c0_100] : memref<18x24x128xf32, #tpu.memory_space<vmem>>, vector<16x16x128xf32>
      %113 = vector.shape_cast %112 : vector<16x16x128xf32> to vector<256x128xf32>
      %114 = arith.truncf %113 : vector<256x128xf32> to vector<256x128xbf16>
      %c0_101 = arith.constant 0 : index
      %c0_102 = arith.constant 0 : index
      %115 = vector.load %arg3[%c0_101, %c0_102] : memref<1152x128xbf16, #tpu.memory_space<vmem>>, vector<128x128xbf16>
      %cst_103 = arith.constant dense<0.000000e+00> : vector<256x128xf32>
      %116 = tpu.matmul %114, %115, %cst_103 {dimension_numbers = #tpu.dot_dimension_numbers<[1], [0], [0], [1], [0, 0, 1, 1], [], []>} : vector<256x128xbf16>, vector<128x128xbf16>, vector<256x128xf32> -> vector<256x128xf32>
      %c0_104 = arith.constant 0 : index
      %c1_105 = arith.constant 1 : index
      %c0_106 = arith.constant 0 : index
      %117 = vector.load %arg10[%c0_104, %c1_105, %c0_106] : memref<18x24x128xf32, #tpu.memory_space<vmem>>, vector<16x16x128xf32>
      %118 = vector.shape_cast %117 : vector<16x16x128xf32> to vector<256x128xf32>
      %119 = arith.truncf %118 : vector<256x128xf32> to vector<256x128xbf16>
      %c128_107 = arith.constant 128 : index
      %c0_108 = arith.constant 0 : index
      %120 = vector.load %arg3[%c128_107, %c0_108] : memref<1152x128xbf16, #tpu.memory_space<vmem>>, vector<128x128xbf16>
      %cst_109 = arith.constant dense<0.000000e+00> : vector<256x128xf32>
      %121 = tpu.matmul %119, %120, %cst_109 {dimension_numbers = #tpu.dot_dimension_numbers<[1], [0], [0], [1], [0, 0, 1, 1], [], []>} : vector<256x128xbf16>, vector<128x128xbf16>, vector<256x128xf32> -> vector<256x128xf32>
      %122 = arith.addf %116, %121 : vector<256x128xf32>
      %c0_110 = arith.constant 0 : index
      %c2_111 = arith.constant 2 : index
      %c0_112 = arith.constant 0 : index
      %123 = vector.load %arg10[%c0_110, %c2_111, %c0_112] : memref<18x24x128xf32, #tpu.memory_space<vmem>>, vector<16x16x128xf32>
      %124 = vector.shape_cast %123 : vector<16x16x128xf32> to vector<256x128xf32>
      %125 = arith.truncf %124 : vector<256x128xf32> to vector<256x128xbf16>
      %c256_113 = arith.constant 256 : index
      %c0_114 = arith.constant 0 : index
      %126 = vector.load %arg3[%c256_113, %c0_114] : memref<1152x128xbf16, #tpu.memory_space<vmem>>, vector<128x128xbf16>
      %cst_115 = arith.constant dense<0.000000e+00> : vector<256x128xf32>
      %127 = tpu.matmul %125, %126, %cst_115 {dimension_numbers = #tpu.dot_dimension_numbers<[1], [0], [0], [1], [0, 0, 1, 1], [], []>} : vector<256x128xbf16>, vector<128x128xbf16>, vector<256x128xf32> -> vector<256x128xf32>
      %128 = arith.addf %122, %127 : vector<256x128xf32>
      %c1_116 = arith.constant 1 : index
      %c0_117 = arith.constant 0 : index
      %c0_118 = arith.constant 0 : index
      %129 = vector.load %arg10[%c1_116, %c0_117, %c0_118] : memref<18x24x128xf32, #tpu.memory_space<vmem>>, vector<16x16x128xf32>
      %130 = vector.shape_cast %129 : vector<16x16x128xf32> to vector<256x128xf32>
      %131 = arith.truncf %130 : vector<256x128xf32> to vector<256x128xbf16>
      %c384_119 = arith.constant 384 : index
      %c0_120 = arith.constant 0 : index
      %132 = vector.load %arg3[%c384_119, %c0_120] : memref<1152x128xbf16, #tpu.memory_space<vmem>>, vector<128x128xbf16>
      %cst_121 = arith.constant dense<0.000000e+00> : vector<256x128xf32>
      %133 = tpu.matmul %131, %132, %cst_121 {dimension_numbers = #tpu.dot_dimension_numbers<[1], [0], [0], [1], [0, 0, 1, 1], [], []>} : vector<256x128xbf16>, vector<128x128xbf16>, vector<256x128xf32> -> vector<256x128xf32>
      %134 = arith.addf %128, %133 : vector<256x128xf32>
      %c1_122 = arith.constant 1 : index
      %c1_123 = arith.constant 1 : index
      %c0_124 = arith.constant 0 : index
      %135 = vector.load %arg10[%c1_122, %c1_123, %c0_124] : memref<18x24x128xf32, #tpu.memory_space<vmem>>, vector<16x16x128xf32>
      %136 = vector.shape_cast %135 : vector<16x16x128xf32> to vector<256x128xf32>
      %137 = arith.truncf %136 : vector<256x128xf32> to vector<256x128xbf16>
      %c512_125 = arith.constant 512 : index
      %c0_126 = arith.constant 0 : index
      %138 = vector.load %arg3[%c512_125, %c0_126] : memref<1152x128xbf16, #tpu.memory_space<vmem>>, vector<128x128xbf16>
      %cst_127 = arith.constant dense<0.000000e+00> : vector<256x128xf32>
      %139 = tpu.matmul %137, %138, %cst_127 {dimension_numbers = #tpu.dot_dimension_numbers<[1], [0], [0], [1], [0, 0, 1, 1], [], []>} : vector<256x128xbf16>, vector<128x128xbf16>, vector<256x128xf32> -> vector<256x128xf32>
      %140 = arith.addf %134, %139 : vector<256x128xf32>
      %c1_128 = arith.constant 1 : index
      %c2_129 = arith.constant 2 : index
      %c0_130 = arith.constant 0 : index
      %141 = vector.load %arg10[%c1_128, %c2_129, %c0_130] : memref<18x24x128xf32, #tpu.memory_space<vmem>>, vector<16x16x128xf32>
      %142 = vector.shape_cast %141 : vector<16x16x128xf32> to vector<256x128xf32>
      %143 = arith.truncf %142 : vector<256x128xf32> to vector<256x128xbf16>
      %c640_131 = arith.constant 640 : index
      %c0_132 = arith.constant 0 : index
      %144 = vector.load %arg3[%c640_131, %c0_132] : memref<1152x128xbf16, #tpu.memory_space<vmem>>, vector<128x128xbf16>
      %cst_133 = arith.constant dense<0.000000e+00> : vector<256x128xf32>
      %145 = tpu.matmul %143, %144, %cst_133 {dimension_numbers = #tpu.dot_dimension_numbers<[1], [0], [0], [1], [0, 0, 1, 1], [], []>} : vector<256x128xbf16>, vector<128x128xbf16>, vector<256x128xf32> -> vector<256x128xf32>
      %146 = arith.addf %140, %145 : vector<256x128xf32>
      %c2_134 = arith.constant 2 : index
      %c0_135 = arith.constant 0 : index
      %c0_136 = arith.constant 0 : index
      %147 = vector.load %arg10[%c2_134, %c0_135, %c0_136] : memref<18x24x128xf32, #tpu.memory_space<vmem>>, vector<16x16x128xf32>
      %148 = vector.shape_cast %147 : vector<16x16x128xf32> to vector<256x128xf32>
      %149 = arith.truncf %148 : vector<256x128xf32> to vector<256x128xbf16>
      %c768_137 = arith.constant 768 : index
      %c0_138 = arith.constant 0 : index
      %150 = vector.load %arg3[%c768_137, %c0_138] : memref<1152x128xbf16, #tpu.memory_space<vmem>>, vector<128x128xbf16>
      %cst_139 = arith.constant dense<0.000000e+00> : vector<256x128xf32>
      %151 = tpu.matmul %149, %150, %cst_139 {dimension_numbers = #tpu.dot_dimension_numbers<[1], [0], [0], [1], [0, 0, 1, 1], [], []>} : vector<256x128xbf16>, vector<128x128xbf16>, vector<256x128xf32> -> vector<256x128xf32>
      %152 = arith.addf %146, %151 : vector<256x128xf32>
      %c2_140 = arith.constant 2 : index
      %c1_141 = arith.constant 1 : index
      %c0_142 = arith.constant 0 : index
      %153 = vector.load %arg10[%c2_140, %c1_141, %c0_142] : memref<18x24x128xf32, #tpu.memory_space<vmem>>, vector<16x16x128xf32>
      %154 = vector.shape_cast %153 : vector<16x16x128xf32> to vector<256x128xf32>
      %155 = arith.truncf %154 : vector<256x128xf32> to vector<256x128xbf16>
      %c896_143 = arith.constant 896 : index
      %c0_144 = arith.constant 0 : index
      %156 = vector.load %arg3[%c896_143, %c0_144] : memref<1152x128xbf16, #tpu.memory_space<vmem>>, vector<128x128xbf16>
      %cst_145 = arith.constant dense<0.000000e+00> : vector<256x128xf32>
      %157 = tpu.matmul %155, %156, %cst_145 {dimension_numbers = #tpu.dot_dimension_numbers<[1], [0], [0], [1], [0, 0, 1, 1], [], []>} : vector<256x128xbf16>, vector<128x128xbf16>, vector<256x128xf32> -> vector<256x128xf32>
      %158 = arith.addf %152, %157 : vector<256x128xf32>
      %c2_146 = arith.constant 2 : index
      %c2_147 = arith.constant 2 : index
      %c0_148 = arith.constant 0 : index
      %159 = vector.load %arg10[%c2_146, %c2_147, %c0_148] : memref<18x24x128xf32, #tpu.memory_space<vmem>>, vector<16x16x128xf32>
      %160 = vector.shape_cast %159 : vector<16x16x128xf32> to vector<256x128xf32>
      %161 = arith.truncf %160 : vector<256x128xf32> to vector<256x128xbf16>
      %c1024_149 = arith.constant 1024 : index
      %c0_150 = arith.constant 0 : index
      %162 = vector.load %arg3[%c1024_149, %c0_150] : memref<1152x128xbf16, #tpu.memory_space<vmem>>, vector<128x128xbf16>
      %cst_151 = arith.constant dense<0.000000e+00> : vector<256x128xf32>
      %163 = tpu.matmul %161, %162, %cst_151 {dimension_numbers = #tpu.dot_dimension_numbers<[1], [0], [0], [1], [0, 0, 1, 1], [], []>} : vector<256x128xbf16>, vector<128x128xbf16>, vector<256x128xf32> -> vector<256x128xf32>
      %164 = arith.addf %158, %163 : vector<256x128xf32>
      %c0_152 = arith.constant 0 : index
      %c0_153 = arith.constant 0 : index
      %165 = vector.load %arg4[%c0_152, %c0_153] : memref<1x128xf32, #tpu.memory_space<vmem>>, vector<1x128xf32>
      %166 = vector.broadcast %165 : vector<1x128xf32> to vector<256x128xf32>
      %167 = arith.addf %164, %166 : vector<256x128xf32>
      %cst_154 = arith.constant 0.000000e+00 : f32
      %168 = vector.broadcast %cst_154 : f32 to vector<256x128xf32>
      %169 = arith.maximumf %167, %168 : vector<256x128xf32>
      %170 = vector.shape_cast %169 : vector<256x128xf32> to vector<16x16x128xf32>
      %cst_155 = arith.constant 0.000000e+00 : f32
      %171 = vector.broadcast %cst_155 : f32 to vector<1x24x128xf32>
      %cst_156 = arith.constant 0.000000e+00 : f32
      %172 = vector.broadcast %cst_156 : f32 to vector<16x8x128xf32>
      %c0_157 = arith.constant 0 : index
      %c0_158 = arith.constant 0 : index
      %c0_159 = arith.constant 0 : index
      %173 = vector.load %arg11[%c0_157, %c0_158, %c0_159] : memref<18x24x128xf32, #tpu.memory_space<vmem>>, vector<1x24x128xf32>
      tpu.vector_store %arg11[%c0_157, %c0_158, %c0_159], %171 {strides = array<i32>} : memref<18x24x128xf32, #tpu.memory_space<vmem>>, vector<1x24x128xf32>,
      %c17_160 = arith.constant 17 : index
      %c0_161 = arith.constant 0 : index
      %c0_162 = arith.constant 0 : index
      %174 = vector.load %arg11[%c17_160, %c0_161, %c0_162] : memref<18x24x128xf32, #tpu.memory_space<vmem>>, vector<1x24x128xf32>
      tpu.vector_store %arg11[%c17_160, %c0_161, %c0_162], %171 {strides = array<i32>} : memref<18x24x128xf32, #tpu.memory_space<vmem>>, vector<1x24x128xf32>,
      %c1_163 = arith.constant 1 : index
      %c0_164 = arith.constant 0 : index
      %c0_165 = arith.constant 0 : index
      %175 = vector.load %arg11[%c1_163, %c0_164, %c0_165] : memref<18x24x128xf32, #tpu.memory_space<vmem>>, vector<16x8x128xf32>
      tpu.vector_store %arg11[%c1_163, %c0_164, %c0_165], %172 {strides = array<i32>} : memref<18x24x128xf32, #tpu.memory_space<vmem>>, vector<16x8x128xf32>,
      %c1_166 = arith.constant 1 : index
      %c16_167 = arith.constant 16 : index
      %c0_168 = arith.constant 0 : index
      %176 = vector.load %arg11[%c1_166, %c16_167, %c0_168] : memref<18x24x128xf32, #tpu.memory_space<vmem>>, vector<16x8x128xf32>
      tpu.vector_store %arg11[%c1_166, %c16_167, %c0_168], %172 {strides = array<i32>} : memref<18x24x128xf32, #tpu.memory_space<vmem>>, vector<16x8x128xf32>,
      %c1_169 = arith.constant 1 : index
      %c1_170 = arith.constant 1 : index
      %c0_171 = arith.constant 0 : index
      %177 = vector.load %arg11[%c1_169, %c1_170, %c0_171] : memref<18x24x128xf32, #tpu.memory_space<vmem>>, vector<16x16x128xf32>
      tpu.vector_store %arg11[%c1_169, %c1_170, %c0_171], %170 {strides = array<i32>} : memref<18x24x128xf32, #tpu.memory_space<vmem>>, vector<16x16x128xf32>,
    } else {
    }
    %c0_17 = arith.constant 0 : index
    %c0_18 = arith.constant 0 : index
    %c0_19 = arith.constant 0 : index
    %26 = vector.load %arg11[%c0_17, %c0_18, %c0_19] : memref<18x24x128xf32, #tpu.memory_space<vmem>>, vector<16x16x128xf32>
    %27 = vector.shape_cast %26 : vector<16x16x128xf32> to vector<256x128xf32>
    %28 = arith.truncf %27 : vector<256x128xf32> to vector<256x128xbf16>
    %c0_20 = arith.constant 0 : index
    %c0_21 = arith.constant 0 : index
    %29 = vector.load %arg5[%c0_20, %c0_21] : memref<1152x128xbf16, #tpu.memory_space<vmem>>, vector<128x128xbf16>
    %cst_22 = arith.constant dense<0.000000e+00> : vector<256x128xf32>
    %30 = tpu.matmul %28, %29, %cst_22 {dimension_numbers = #tpu.dot_dimension_numbers<[1], [0], [0], [1], [0, 0, 1, 1], [], []>} : vector<256x128xbf16>, vector<128x128xbf16>, vector<256x128xf32> -> vector<256x128xf32>
    %c0_23 = arith.constant 0 : index
    %c1_24 = arith.constant 1 : index
    %c0_25 = arith.constant 0 : index
    %31 = vector.load %arg11[%c0_23, %c1_24, %c0_25] : memref<18x24x128xf32, #tpu.memory_space<vmem>>, vector<16x16x128xf32>
    %32 = vector.shape_cast %31 : vector<16x16x128xf32> to vector<256x128xf32>
    %33 = arith.truncf %32 : vector<256x128xf32> to vector<256x128xbf16>
    %c128 = arith.constant 128 : index
    %c0_26 = arith.constant 0 : index
    %34 = vector.load %arg5[%c128, %c0_26] : memref<1152x128xbf16, #tpu.memory_space<vmem>>, vector<128x128xbf16>
    %cst_27 = arith.constant dense<0.000000e+00> : vector<256x128xf32>
    %35 = tpu.matmul %33, %34, %cst_27 {dimension_numbers = #tpu.dot_dimension_numbers<[1], [0], [0], [1], [0, 0, 1, 1], [], []>} : vector<256x128xbf16>, vector<128x128xbf16>, vector<256x128xf32> -> vector<256x128xf32>
    %36 = arith.addf %30, %35 : vector<256x128xf32>
    %c0_28 = arith.constant 0 : index
    %c2 = arith.constant 2 : index
    %c0_29 = arith.constant 0 : index
    %37 = vector.load %arg11[%c0_28, %c2, %c0_29] : memref<18x24x128xf32, #tpu.memory_space<vmem>>, vector<16x16x128xf32>
    %38 = vector.shape_cast %37 : vector<16x16x128xf32> to vector<256x128xf32>
    %39 = arith.truncf %38 : vector<256x128xf32> to vector<256x128xbf16>
    %c256 = arith.constant 256 : index
    %c0_30 = arith.constant 0 : index
    %40 = vector.load %arg5[%c256, %c0_30] : memref<1152x128xbf16, #tpu.memory_space<vmem>>, vector<128x128xbf16>
    %cst_31 = arith.constant dense<0.000000e+00> : vector<256x128xf32>
    %41 = tpu.matmul %39, %40, %cst_31 {dimension_numbers = #tpu.dot_dimension_numbers<[1], [0], [0], [1], [0, 0, 1, 1], [], []>} : vector<256x128xbf16>, vector<128x128xbf16>, vector<256x128xf32> -> vector<256x128xf32>
    %42 = arith.addf %36, %41 : vector<256x128xf32>
    %c1_32 = arith.constant 1 : index
    %c0_33 = arith.constant 0 : index
    %c0_34 = arith.constant 0 : index
    %43 = vector.load %arg11[%c1_32, %c0_33, %c0_34] : memref<18x24x128xf32, #tpu.memory_space<vmem>>, vector<16x16x128xf32>
    %44 = vector.shape_cast %43 : vector<16x16x128xf32> to vector<256x128xf32>
    %45 = arith.truncf %44 : vector<256x128xf32> to vector<256x128xbf16>
    %c384 = arith.constant 384 : index
    %c0_35 = arith.constant 0 : index
    %46 = vector.load %arg5[%c384, %c0_35] : memref<1152x128xbf16, #tpu.memory_space<vmem>>, vector<128x128xbf16>
    %cst_36 = arith.constant dense<0.000000e+00> : vector<256x128xf32>
    %47 = tpu.matmul %45, %46, %cst_36 {dimension_numbers = #tpu.dot_dimension_numbers<[1], [0], [0], [1], [0, 0, 1, 1], [], []>} : vector<256x128xbf16>, vector<128x128xbf16>, vector<256x128xf32> -> vector<256x128xf32>
    %48 = arith.addf %42, %47 : vector<256x128xf32>
    %c1_37 = arith.constant 1 : index
    %c1_38 = arith.constant 1 : index
    %c0_39 = arith.constant 0 : index
    %49 = vector.load %arg11[%c1_37, %c1_38, %c0_39] : memref<18x24x128xf32, #tpu.memory_space<vmem>>, vector<16x16x128xf32>
    %50 = vector.shape_cast %49 : vector<16x16x128xf32> to vector<256x128xf32>
    %51 = arith.truncf %50 : vector<256x128xf32> to vector<256x128xbf16>
    %c512 = arith.constant 512 : index
    %c0_40 = arith.constant 0 : index
    %52 = vector.load %arg5[%c512, %c0_40] : memref<1152x128xbf16, #tpu.memory_space<vmem>>, vector<128x128xbf16>
    %cst_41 = arith.constant dense<0.000000e+00> : vector<256x128xf32>
    %53 = tpu.matmul %51, %52, %cst_41 {dimension_numbers = #tpu.dot_dimension_numbers<[1], [0], [0], [1], [0, 0, 1, 1], [], []>} : vector<256x128xbf16>, vector<128x128xbf16>, vector<256x128xf32> -> vector<256x128xf32>
    %54 = arith.addf %48, %53 : vector<256x128xf32>
    %c1_42 = arith.constant 1 : index
    %c2_43 = arith.constant 2 : index
    %c0_44 = arith.constant 0 : index
    %55 = vector.load %arg11[%c1_42, %c2_43, %c0_44] : memref<18x24x128xf32, #tpu.memory_space<vmem>>, vector<16x16x128xf32>
    %56 = vector.shape_cast %55 : vector<16x16x128xf32> to vector<256x128xf32>
    %57 = arith.truncf %56 : vector<256x128xf32> to vector<256x128xbf16>
    %c640 = arith.constant 640 : index
    %c0_45 = arith.constant 0 : index
    %58 = vector.load %arg5[%c640, %c0_45] : memref<1152x128xbf16, #tpu.memory_space<vmem>>, vector<128x128xbf16>
    %cst_46 = arith.constant dense<0.000000e+00> : vector<256x128xf32>
    %59 = tpu.matmul %57, %58, %cst_46 {dimension_numbers = #tpu.dot_dimension_numbers<[1], [0], [0], [1], [0, 0, 1, 1], [], []>} : vector<256x128xbf16>, vector<128x128xbf16>, vector<256x128xf32> -> vector<256x128xf32>
    %60 = arith.addf %54, %59 : vector<256x128xf32>
    %c2_47 = arith.constant 2 : index
    %c0_48 = arith.constant 0 : index
    %c0_49 = arith.constant 0 : index
    %61 = vector.load %arg11[%c2_47, %c0_48, %c0_49] : memref<18x24x128xf32, #tpu.memory_space<vmem>>, vector<16x16x128xf32>
    %62 = vector.shape_cast %61 : vector<16x16x128xf32> to vector<256x128xf32>
    %63 = arith.truncf %62 : vector<256x128xf32> to vector<256x128xbf16>
    %c768 = arith.constant 768 : index
    %c0_50 = arith.constant 0 : index
    %64 = vector.load %arg5[%c768, %c0_50] : memref<1152x128xbf16, #tpu.memory_space<vmem>>, vector<128x128xbf16>
    %cst_51 = arith.constant dense<0.000000e+00> : vector<256x128xf32>
    %65 = tpu.matmul %63, %64, %cst_51 {dimension_numbers = #tpu.dot_dimension_numbers<[1], [0], [0], [1], [0, 0, 1, 1], [], []>} : vector<256x128xbf16>, vector<128x128xbf16>, vector<256x128xf32> -> vector<256x128xf32>
    %66 = arith.addf %60, %65 : vector<256x128xf32>
    %c2_52 = arith.constant 2 : index
    %c1_53 = arith.constant 1 : index
    %c0_54 = arith.constant 0 : index
    %67 = vector.load %arg11[%c2_52, %c1_53, %c0_54] : memref<18x24x128xf32, #tpu.memory_space<vmem>>, vector<16x16x128xf32>
    %68 = vector.shape_cast %67 : vector<16x16x128xf32> to vector<256x128xf32>
    %69 = arith.truncf %68 : vector<256x128xf32> to vector<256x128xbf16>
    %c896 = arith.constant 896 : index
    %c0_55 = arith.constant 0 : index
    %70 = vector.load %arg5[%c896, %c0_55] : memref<1152x128xbf16, #tpu.memory_space<vmem>>, vector<128x128xbf16>
    %cst_56 = arith.constant dense<0.000000e+00> : vector<256x128xf32>
    %71 = tpu.matmul %69, %70, %cst_56 {dimension_numbers = #tpu.dot_dimension_numbers<[1], [0], [0], [1], [0, 0, 1, 1], [], []>} : vector<256x128xbf16>, vector<128x128xbf16>, vector<256x128xf32> -> vector<256x128xf32>
    %72 = arith.addf %66, %71 : vector<256x128xf32>
    %c2_57 = arith.constant 2 : index
    %c2_58 = arith.constant 2 : index
    %c0_59 = arith.constant 0 : index
    %73 = vector.load %arg11[%c2_57, %c2_58, %c0_59] : memref<18x24x128xf32, #tpu.memory_space<vmem>>, vector<16x16x128xf32>
    %74 = vector.shape_cast %73 : vector<16x16x128xf32> to vector<256x128xf32>
    %75 = arith.truncf %74 : vector<256x128xf32> to vector<256x128xbf16>
    %c1024 = arith.constant 1024 : index
    %c0_60 = arith.constant 0 : index
    %76 = vector.load %arg5[%c1024, %c0_60] : memref<1152x128xbf16, #tpu.memory_space<vmem>>, vector<128x128xbf16>
    %cst_61 = arith.constant dense<0.000000e+00> : vector<256x128xf32>
    %77 = tpu.matmul %75, %76, %cst_61 {dimension_numbers = #tpu.dot_dimension_numbers<[1], [0], [0], [1], [0, 0, 1, 1], [], []>} : vector<256x128xbf16>, vector<128x128xbf16>, vector<256x128xf32> -> vector<256x128xf32>
    %78 = arith.addf %72, %77 : vector<256x128xf32>
    %c0_62 = arith.constant 0 : index
    %c0_63 = arith.constant 0 : index
    %79 = vector.load %arg6[%c0_62, %c0_63] : memref<1x128xf32, #tpu.memory_space<vmem>>, vector<1x128xf32>
    %80 = vector.broadcast %79 : vector<1x128xf32> to vector<256x128xf32>
    %81 = arith.addf %78, %80 : vector<256x128xf32>
    %82 = vector.shape_cast %81 : vector<256x128xf32> to vector<16x16x128xf32>
    %83 = vector.shape_cast %82 : vector<16x16x128xf32> to vector<8x2x16x128xf32>
    %84 = vector.extract_strided_slice %83 {offsets = [0, 0, 0, 0], sizes = [8, 1, 16, 128], strides = [1, 1, 1, 1]} : vector<8x2x16x128xf32> to vector<8x1x16x128xf32>
    %85 = vector.shape_cast %84 : vector<8x1x16x128xf32> to vector<8x16x128xf32>
    %86 = vector.extract_strided_slice %83 {offsets = [0, 1, 0, 0], sizes = [8, 1, 16, 128], strides = [1, 1, 1, 1]} : vector<8x2x16x128xf32> to vector<8x1x16x128xf32>
    %87 = vector.shape_cast %86 : vector<8x1x16x128xf32> to vector<8x16x128xf32>
    %88 = arith.addf %85, %87 : vector<8x16x128xf32>
    %c0_64 = arith.constant 0 : index
    %c0_65 = arith.constant 0 : index
    %c0_66 = arith.constant 0 : index
    %89 = vector.load %arg12[%c0_64, %c0_65, %c0_66] : memref<8x16x128xf32, #tpu.memory_space<vmem>>, vector<8x16x128xf32>
    tpu.vector_store %arg12[%c0_64, %c0_65, %c0_66], %88 {strides = array<i32>} : memref<8x16x128xf32, #tpu.memory_space<vmem>>, vector<8x16x128xf32>,
    %c0_67 = arith.constant 0 : index
    %c0_68 = arith.constant 0 : index
    %c0_69 = arith.constant 0 : index
    %90 = tpu.strided_load %arg12[%c0_67, %c0_68, %c0_69] {strides = array<i32: 1, 2, 1>} : memref<8x16x128xf32, #tpu.memory_space<vmem>>, vector<8x8x128xf32>
    %c0_70 = arith.constant 0 : index
    %c1_71 = arith.constant 1 : index
    %c0_72 = arith.constant 0 : index
    %91 = tpu.strided_load %arg12[%c0_70, %c1_71, %c0_72] {strides = array<i32: 1, 2, 1>} : memref<8x16x128xf32, #tpu.memory_space<vmem>>, vector<8x8x128xf32>
    %92 = arith.addf %90, %91 : vector<8x8x128xf32>
    %cst_73 = arith.constant 2.500000e-01 : f32
    %93 = vector.broadcast %cst_73 : f32 to vector<8x8x128xf32>
    %94 = arith.mulf %92, %93 : vector<8x8x128xf32>
    %95 = arith.addf %22, %94 : vector<8x8x128xf32>
    %96 = arith.truncf %95 : vector<8x8x128xf32> to vector<8x8x128xbf16>
    %c0_74 = arith.constant 0 : index
    %c0_75 = arith.constant 0 : index
    %c0_76 = arith.constant 0 : index
    %c0_77 = arith.constant 0 : index
    %97 = vector.load %arg9[%c0_74, %c0_75, %c0_76, %c0_77] : memref<1x8x8x128xbf16, #tpu.memory_space<vmem>>, vector<1x8x8x128xbf16>
    %98 = vector.shape_cast %97 : vector<1x8x8x128xbf16> to vector<8x8x128xbf16>
    %99 = vector.shape_cast %96 : vector<8x8x128xbf16> to vector<1x8x8x128xbf16>
    tpu.vector_store %arg9[%c0_74, %c0_75, %c0_76, %c0_77], %99 {strides = array<i32>} : memref<1x8x8x128xbf16, #tpu.memory_space<vmem>>, vector<1x8x8x128xbf16>,
    return
  }
  func.func @transform_0(%arg0: i32, %arg1: i32) -> (i32, i32, i32, i32) {
    %c0_i32 = arith.constant 0 : i32
    %c0_i32_0 = arith.constant 0 : i32
    %c0_i32_1 = arith.constant 0 : i32
    %c0_i32_2 = arith.constant 0 : i32
    return %arg0, %c0_i32, %c0_i32_0, %c0_i32_1 : i32, i32, i32, i32
  }
  func.func @transform_1(%arg0: i32, %arg1: i32) -> (i32, i32) {
    %c0_i32 = arith.constant 0 : i32
    %c0_i32_0 = arith.constant 0 : i32
    %c0_i32_1 = arith.constant 0 : i32
    return %c0_i32, %c0_i32_0 : i32, i32
  }
  func.func @transform_2(%arg0: i32, %arg1: i32) -> (i32, i32) {
    %c0_i32 = arith.constant 0 : i32
    %c0_i32_0 = arith.constant 0 : i32
    %c0_i32_1 = arith.constant 0 : i32
    return %c0_i32, %c0_i32_0 : i32, i32
  }
  func.func @transform_3(%arg0: i32, %arg1: i32) -> (i32, i32) {
    %c0_i32 = arith.constant 0 : i32
    %c0_i32_0 = arith.constant 0 : i32
    return %c0_i32, %arg1 : i32, i32
  }
  func.func @transform_4(%arg0: i32, %arg1: i32) -> (i32, i32) {
    %c0_i32 = arith.constant 0 : i32
    %c0_i32_0 = arith.constant 0 : i32
    return %c0_i32, %arg1 : i32, i32
  }
  func.func @transform_5(%arg0: i32, %arg1: i32) -> (i32, i32) {
    %c0_i32 = arith.constant 0 : i32
    %c0_i32_0 = arith.constant 0 : i32
    return %c0_i32, %arg1 : i32, i32
  }
  func.func @transform_6(%arg0: i32, %arg1: i32) -> (i32, i32) {
    %c0_i32 = arith.constant 0 : i32
    %c0_i32_0 = arith.constant 0 : i32
    return %c0_i32, %arg1 : i32, i32
  }
  func.func @transform_7(%arg0: i32, %arg1: i32) -> (i32, i32, i32, i32) {
    %c0_i32 = arith.constant 0 : i32
    %c0_i32_0 = arith.constant 0 : i32
    %c0_i32_1 = arith.constant 0 : i32
    return %arg0, %c0_i32, %c0_i32_0, %arg1 : i32, i32, i32, i32
  }
}

</mosaic_0001>

<llo_original>
// kernel: tpu_custom_call.1
$region0: #{tpu_custom_call.1}
  #allocation0 [shape = 'u32[]', space=smem, size = 0x4, offset = 0x4, fixed_abs, tag = 'smem constant byte address 0x4 - core index']
  #allocation1 [shape = 'u32[144,128]{1,0:T(1,128)}', space=vmem, size = 0x12000, scoped, tag = 'internal scratch']
  #allocation2 [shape = 'f32[18,24,128]{2,1,0:T(8,128)}', space=vmem, size = 0x36000, scoped, tag = 'scratch operand']
  #allocation3 [shape = 'f32[18,24,128]{2,1,0:T(8,128)}', space=vmem, size = 0x36000, scoped, tag = 'scratch operand']
  #allocation4 [shape = 'f32[8,16,128]{2,1,0:T(8,128)}', space=vmem, size = 0x10000, scoped, tag = 'scratch operand']
  %s0 = inlined_call_operand.hbm [shape: bf16[2,16,16,128], index: 0, kind: input, shape index: {}]
  %s1 = inlined_call_operand.hbm [shape: bf16[1152,128], index: 1, kind: input, shape index: {}]
  %s2 = inlined_call_operand.hbm [shape: f32[1,128], index: 2, kind: input, shape index: {}]
  %s3 = inlined_call_operand.hbm [shape: bf16[1152,128], index: 3, kind: input, shape index: {}]
  %s4 = inlined_call_operand.hbm [shape: f32[1,128], index: 4, kind: input, shape index: {}]
  %s5 = inlined_call_operand.hbm [shape: bf16[128,128], index: 5, kind: input, shape index: {}]
  %s6 = inlined_call_operand.hbm [shape: f32[1,128], index: 6, kind: input, shape index: {}]
  %s7 = inlined_call_operand.hbm [shape: bf16[2,8,8,128], index: 7, kind: output, shape index: {}]
  %s8 = sld [smem:[#allocation0]]
  $region93: #{tpu_custom_call.1} parent=0
    _
  %s10 = ssub.s32 1, %s8
  %s11 = scalar_select 0, %s10, %s8
  $region1: #{tpu_custom_call.1} parent=0
    #allocation5 [shape = 'u8[131072]{0}', space=vmem, size = 0x20000, scoped, tag = 'input window, operand 0']
    #allocation6 [shape = 's32[2]{0}', space=sflag, size = 0x8, scoped, tag = 'scoped memory for tpu_custom_call.1']
    #allocation7 [shape = 's32[2]{0}', space=sflag, size = 0x8, scoped, tag = 'scoped memory for tpu_custom_call.1']
    #allocation8 [shape = 'u8[294912]{0}', space=vmem, size = 0x48000, scoped, tag = 'input window, operand 1, single buffered']
    #allocation9 [shape = 's32[1]{0}', space=sflag, size = 0x4, scoped, tag = 'scoped memory for tpu_custom_call.1']
    #allocation10 [shape = 'u8[512]{0}', space=vmem, size = 0x400, scoped, tag = 'input window, operand 2, single buffered']
    #allocation11 [shape = 'u8[294912]{0}', space=vmem, size = 0x48000, scoped, tag = 'input window, operand 3, single buffered']
    #allocation12 [shape = 's32[1]{0}', space=sflag, size = 0x4, scoped, tag = 'scoped memory for tpu_custom_call.1']
    #allocation13 [shape = 'u8[512]{0}', space=vmem, size = 0x400, scoped, tag = 'input window, operand 4, single buffered']
    #allocation14 [shape = 'u8[32768]{0}', space=vmem, size = 0x8000, scoped, tag = 'input window, operand 5, single buffered']
    #allocation15 [shape = 's32[1]{0}', space=sflag, size = 0x4, scoped, tag = 'scoped memory for tpu_custom_call.1']
    #allocation16 [shape = 'u8[512]{0}', space=vmem, size = 0x400, scoped, tag = 'input window, operand 6, single buffered']
    #allocation17 [shape = 'u8[32768]{0}', space=vmem, size = 0x8000, scoped, tag = 'output window, operand 0']
    %12 = vsyncpa [#allocation6], 0
    %s13 = scalar_lea.sflag [#allocation6], 1
    %14 = vsyncpa %s13, 0
    %15 = vsyncpa [#allocation9], 0
    %16 = vsyncpa [#allocation12], 0
    %17 = vsyncpa [#allocation15], 0
    %18 = vsyncpa [#allocation7], 0
    %s19 = scalar_lea.sflag [#allocation7], 1
    %20 = vsyncpa %s19, 0
    loop: start=0, step=1, limit=4
    $region2: #{tpu_custom_call.1} parent=1 // loop_pre_header
      _
    $region3: #{tpu_custom_call.1} parent=1 // loop_header
      %s22 = sphi 0, %s26
      %p23 = scmp.ge.s32.totalorder %s22, 4
      %s29 = sphi 0, %s41
      %s30 = sphi 0, %s37
      %s31 = sphi 0, %s29
      %s32 = sphi 0, %s30
      %s33 = sphi 0, %s31
      %s34 = sphi 0, %s32
      %s44 = sphi 0, %s46
      %s47 = sphi 0, %s44
      %s48 = sphi 0, %s47
      %s64 = sphi 0, %s48
      %s68 = sphi 0, %s68
      %s70 = sphi 0, %s68
      %s71 = sphi 0, %s70
      %s85 = sphi 0, %s71
      %s89 = sphi 0, %s89
      %s91 = sphi 0, %s89
      %s92 = sphi 0, %s91
      %s106 = sphi 0, %s92
      %s112 = sphi 0, %s114
      %s115 = sphi 0, %s112
      %s116 = sphi 0, %s115
      %s132 = sphi 0, %s116
      %s138 = sphi 0, %s140
      %s141 = sphi 0, %s138
      %s142 = sphi 0, %s141
      %s158 = sphi 0, %s142
      %s164 = sphi 0, %s166
      %s167 = sphi 0, %s164
      %s168 = sphi 0, %s167
      %s184 = sphi 0, %s168
      %s190 = sphi 0, %s192
      %s193 = sphi 0, %s190
      %s194 = sphi 0, %s193
      %s210 = sphi 0, %s194
      %s218 = sphi 0, %s220
      %s221 = sphi 0, %s218
      %s222 = sphi 0, %s221
      %s238 = sphi 0, %s222
    $region4: #{tpu_custom_call.1} parent=1 // loop_header_branch
      %25 = sbr.rel (%p23) target = $region8
    $region5: #{tpu_custom_call.1} parent=1 // loop_body
      %s27 = ssub.s32 %s22, 1
      %s28 = ssub.s32 %s22, 2
      %s35 = sadd.s32 1, %s30
      %p36 = scmp.ge.s32.totalorder %s35, 1
      %s37 = scalar_select %p36, 0, %s35
      %s38 = sadd.s32 1, %s29
      %s39 = scalar_select %p36, %s38, %s29
      %p40 = scmp.ge.s32.totalorder %s39, 2
      %s41 = scalar_select %p40, 0, %s39
      %s42 = ssub.s32 %s29, %s41
      %p43 = scmp.eq.s32.totalorder %s42, 0
      %s45 = sadd.s32 %s44, 1
      %s46 = scalar_select %p43, %s44, %s45
      %p49 = pneg %p43
      %p50 = scmp.eq.s32.totalorder %s22, 1
      %p51 = por %p49, %p50
      %p52 = scmp.ne.s32.totalorder %s44, %s47
      %p53 = scmp.eq.s32.totalorder %s22, 0
      %p54 = por %p52, %p53
      %p55 = scmp.ne.s32.totalorder %s44, %s47
      %p56 = scmp.eq.s32.totalorder %s27, 1
      %p57 = por %p55, %p56
      %p58 = scmp.ne.s32.totalorder %s47, %s48
      %p59 = scmp.eq.s32.totalorder %s27, 0
      %p60 = por %p58, %p59
      %p61 = scmp.ne.s32.totalorder %s47, %s48
      %p62 = scmp.eq.s32.totalorder %s28, 1
      %p63 = por %p61, %p62
      %p65 = scmp.ne.s32.totalorder %s48, %s64
      %p66 = scmp.eq.s32.totalorder %s28, 0
      %p67 = por %p65, %p66
      %s69 = sadd.s32 %s68, 1
      %p72 = scmp.eq.s32.totalorder %s22, 1
      %p73 = scmp.ne.s32.totalorder %s68, %s70
      %p74 = scmp.eq.s32.totalorder %s22, 0
      %p75 = por %p73, %p74
      %p76 = scmp.ne.s32.totalorder %s68, %s70
      %p77 = scmp.eq.s32.totalorder %s27, 1
      %p78 = por %p76, %p77
      %p79 = scmp.ne.s32.totalorder %s70, %s71
      %p80 = scmp.eq.s32.totalorder %s27, 0
      %p81 = por %p79, %p80
      %p82 = scmp.ne.s32.totalorder %s70, %s71
      %p83 = scmp.eq.s32.totalorder %s28, 1
      %p84 = por %p82, %p83
      %p86 = scmp.ne.s32.totalorder %s71, %s85
      %p87 = scmp.eq.s32.totalorder %s28, 0
      %p88 = por %p86, %p87
      %s90 = sadd.s32 %s89, 1
      %p93 = scmp.eq.s32.totalorder %s22, 1
      %p94 = scmp.ne.s32.totalorder %s89, %s91
      %p95 = scmp.eq.s32.totalorder %s22, 0
      %p96 = por %p94, %p95
      %p97 = scmp.ne.s32.totalorder %s89, %s91
      %p98 = scmp.eq.s32.totalorder %s27, 1
      %p99 = por %p97, %p98
      %p100 = scmp.ne.s32.totalorder %s91, %s92
      %p101 = scmp.eq.s32.totalorder %s27, 0
      %p102 = por %p100, %p101
      %p103 = scmp.ne.s32.totalorder %s91, %s92
      %p104 = scmp.eq.s32.totalorder %s28, 1
      %p105 = por %p103, %p104
      %p107 = scmp.ne.s32.totalorder %s92, %s106
      %p108 = scmp.eq.s32.totalorder %s28, 0
      %p109 = por %p107, %p108
      %s110 = ssub.s32 %s30, %s37
      %p111 = scmp.eq.s32.totalorder %s110, 0
      %s113 = sadd.s32 %s112, 1
      %s114 = scalar_select %p111, %s112, %s113
      %p117 = pneg %p111
      %p118 = scmp.eq.s32.totalorder %s22, 1
      %p119 = por %p117, %p118
      %p120 = scmp.ne.s32.totalorder %s112, %s115
      %p121 = scmp.eq.s32.totalorder %s22, 0
      %p122 = por %p120, %p121
      %p123 = scmp.ne.s32.totalorder %s112, %s115
      %p124 = scmp.eq.s32.totalorder %s27, 1
      %p125 = por %p123, %p124
      %p126 = scmp.ne.s32.totalorder %s115, %s116
      %p127 = scmp.eq.s32.totalorder %s27, 0
      %p128 = por %p126, %p127
      %p129 = scmp.ne.s32.totalorder %s115, %s116
      %p130 = scmp.eq.s32.totalorder %s28, 1
      %p131 = por %p129, %p130
      %p133 = scmp.ne.s32.totalorder %s116, %s132
      %p134 = scmp.eq.s32.totalorder %s28, 0
      %p135 = por %p133, %p134
      %s136 = ssub.s32 %s30, %s37
      %p137 = scmp.eq.s32.totalorder %s136, 0
      %s139 = sadd.s32 %s138, 1
      %s140 = scalar_select %p137, %s138, %s139
      %p143 = pneg %p137
      %p144 = scmp.eq.s32.totalorder %s22, 1
      %p145 = por %p143, %p144
      %p146 = scmp.ne.s32.totalorder %s138, %s141
      %p147 = scmp.eq.s32.totalorder %s22, 0
      %p148 = por %p146, %p147
      %p149 = scmp.ne.s32.totalorder %s138, %s141
      %p150 = scmp.eq.s32.totalorder %s27, 1
      %p151 = por %p149, %p150
      %p152 = scmp.ne.s32.totalorder %s141, %s142
      %p153 = scmp.eq.s32.totalorder %s27, 0
      %p154 = por %p152, %p153
      %p155 = scmp.ne.s32.totalorder %s141, %s142
      %p156 = scmp.eq.s32.totalorder %s28, 1
      %p157 = por %p155, %p156
      %p159 = scmp.ne.s32.totalorder %s142, %s158
      %p160 = scmp.eq.s32.totalorder %s28, 0
      %p161 = por %p159, %p160
      %s162 = ssub.s32 %s30, %s37
      %p163 = scmp.eq.s32.totalorder %s162, 0
      %s165 = sadd.s32 %s164, 1
      %s166 = scalar_select %p163, %s164, %s165
      %p169 = pneg %p163
      %p170 = scmp.eq.s32.totalorder %s22, 1
      %p171 = por %p169, %p170
      %p172 = scmp.ne.s32.totalorder %s164, %s167
      %p173 = scmp.eq.s32.totalorder %s22, 0
      %p174 = por %p172, %p173
      %p175 = scmp.ne.s32.totalorder %s164, %s167
      %p176 = scmp.eq.s32.totalorder %s27, 1
      %p177 = por %p175, %p176
      %p178 = scmp.ne.s32.totalorder %s167, %s168
      %p179 = scmp.eq.s32.totalorder %s27, 0
      %p180 = por %p178, %p179
      %p181 = scmp.ne.s32.totalorder %s167, %s168
      %p182 = scmp.eq.s32.totalorder %s28, 1
      %p183 = por %p181, %p182
      %p185 = scmp.ne.s32.totalorder %s168, %s184
      %p186 = scmp.eq.s32.totalorder %s28, 0
      %p187 = por %p185, %p186
      %s188 = ssub.s32 %s30, %s37
      %p189 = scmp.eq.s32.totalorder %s188, 0
      %s191 = sadd.s32 %s190, 1
      %s192 = scalar_select %p189, %s190, %s191
      %p195 = pneg %p189
      %p196 = scmp.eq.s32.totalorder %s22, 1
      %p197 = por %p195, %p196
      %p198 = scmp.ne.s32.totalorder %s190, %s193
      %p199 = scmp.eq.s32.totalorder %s22, 0
      %p200 = por %p198, %p199
      %p201 = scmp.ne.s32.totalorder %s190, %s193
      %p202 = scmp.eq.s32.totalorder %s27, 1
      %p203 = por %p201, %p202
      %p204 = scmp.ne.s32.totalorder %s193, %s194
      %p205 = scmp.eq.s32.totalorder %s27, 0
      %p206 = por %p204, %p205
      %p207 = scmp.ne.s32.totalorder %s193, %s194
      %p208 = scmp.eq.s32.totalorder %s28, 1
      %p209 = por %p207, %p208
      %p211 = scmp.ne.s32.totalorder %s194, %s210
      %p212 = scmp.eq.s32.totalorder %s28, 0
      %p213 = por %p211, %p212
      %s214 = ssub.s32 %s29, %s41
      %s215 = ssub.s32 %s30, %s37
      %s216 = sor.u32 %s214, %s215
      %p217 = scmp.eq.s32.totalorder %s216, 0
      %s219 = sadd.s32 %s218, 1
      %s220 = scalar_select %p217, %s218, %s219
      %p223 = pneg %p217
      %p224 = scmp.eq.s32.totalorder %s22, 1
      %p225 = por %p223, %p224
      %p226 = scmp.ne.s32.totalorder %s218, %s221
      %p227 = scmp.eq.s32.totalorder %s22, 0
      %p228 = por %p226, %p227
      %p229 = scmp.ne.s32.totalorder %s218, %s221
      %p230 = scmp.eq.s32.totalorder %s27, 1
      %p231 = por %p229, %p230
      %p232 = scmp.ne.s32.totalorder %s221, %s222
      %p233 = scmp.eq.s32.totalorder %s27, 0
      %p234 = por %p232, %p233
      %p235 = scmp.ne.s32.totalorder %s221, %s222
      %p236 = scmp.eq.s32.totalorder %s28, 1
      %p237 = por %p235, %p236
      %p239 = scmp.ne.s32.totalorder %s222, %s238
      %p240 = scmp.eq.s32.totalorder %s28, 0
      %p241 = por %p239, %p240
      %p242 = scmp.le.s32.totalorder 1, %s22
      %p243 = scmp.lt.s32.totalorder %s22, 3
      %p244 = pnand %p242, %p243
      %p245 = pneg %p244
      // Predicated region
      $region9: #{tpu_custom_call.1} parent=5 // pred_check
        _
      $region10: #{tpu_custom_call.1} parent=5 // pred_check_branch
        %247 = sbr.rel (%p244) target = $region12
      $region11: #{tpu_custom_call.1} parent=5 // pred_region
        %s248 = ssub.s32 %s22, 1
        // Predicated region
        $region13: #{tpu_custom_call.1} parent=11 // pred_check
          %p249 = pneg %p81
        $region14: #{tpu_custom_call.1} parent=11 // pred_check_branch
          %251 = sbr.rel (%p249) target = $region16
        $region15: #{tpu_custom_call.1} parent=11 // pred_region
          %s253 = ssub.s32 9216, 9216
          %254 = vsyncadd [#allocation9], %s253
          %s255 = sshll.u32 [#allocation8], 4
          %s256 = int_to_ptr.vmem [resolvable:$true] %s255
          %261 = dma.hbm_to_vmem [thread:$0]  %s1, 9216, %s256, [#allocation9], 64, 64, 4
        $region16: #{tpu_custom_call.1} parent=11 // pred_fallthru
          _
        // Predicated region
        $region17: #{tpu_custom_call.1} parent=11 // pred_check
          %p262 = pneg %p102
        $region18: #{tpu_custom_call.1} parent=11 // pred_check_branch
          %264 = sbr.rel (%p262) target = $region20
        $region19: #{tpu_custom_call.1} parent=11 // pred_region
          %s266 = ssub.s32 16, 16
          %267 = vsyncadd [#allocation9], %s266
          %s269 = sshll.u32 [#allocation10], 4
          %s270 = int_to_ptr.vmem [resolvable:$true] %s269
          %272 = dma.hbm_to_vmem [thread:$0]  %s2, 16, %s270, [#allocation9]
        $region20: #{tpu_custom_call.1} parent=11 // pred_fallthru
          _
        // Predicated region
        $region21: #{tpu_custom_call.1} parent=11 // pred_check
          %p273 = pneg %p128
        $region22: #{tpu_custom_call.1} parent=11 // pred_check_branch
          %275 = sbr.rel (%p273) target = $region24
        $region23: #{tpu_custom_call.1} parent=11 // pred_region
          %s277 = ssub.s32 9216, 9216
          %278 = vsyncadd [#allocation12], %s277
          %s279 = smul.addr %s32, 64
          %s280 = scalar_lea.hbm %s3, %s279
          %s281 = sshll.u32 [#allocation11], 4
          %s282 = int_to_ptr.vmem [resolvable:$true] %s281
          %287 = dma.hbm_to_vmem [thread:$0]  %s280, 9216, %s282, [#allocation12], 64, 64, 4
        $region24: #{tpu_custom_call.1} parent=11 // pred_fallthru
          _
        // Predicated region
        $region25: #{tpu_custom_call.1} parent=11 // pred_check
          %p288 = pneg %p154
        $region26: #{tpu_custom_call.1} parent=11 // pred_check_branch
          %290 = sbr.rel (%p288) target = $region28
        $region27: #{tpu_custom_call.1} parent=11 // pred_region
          %s292 = ssub.s32 16, 16
          %293 = vsyncadd [#allocation12], %s292
          %s294 = smul.addr %s32, 16
          %s295 = scalar_lea.hbm %s4, %s294
          %s297 = sshll.u32 [#allocation13], 4
          %s298 = int_to_ptr.vmem [resolvable:$true] %s297
          %300 = dma.hbm_to_vmem [thread:$0]  %s295, 16, %s298, [#allocation12]
        $region28: #{tpu_custom_call.1} parent=11 // pred_fallthru
          _
        // Predicated region
        $region29: #{tpu_custom_call.1} parent=11 // pred_check
          %p301 = pneg %p180
        $region30: #{tpu_custom_call.1} parent=11 // pred_check_branch
          %303 = sbr.rel (%p301) target = $region32
        $region31: #{tpu_custom_call.1} parent=11 // pred_region
          %s305 = ssub.s32 1024, 1024
          %306 = vsyncadd [#allocation15], %s305
          %s307 = smul.addr %s32, 64
          %s308 = scalar_lea.hbm %s5, %s307
          %s309 = sshll.u32 [#allocation14], 4
          %s310 = int_to_ptr.vmem [resolvable:$true] %s309
          %315 = dma.hbm_to_vmem [thread:$0]  %s308, 1024, %s310, [#allocation15], 64, 64, 4
        $region32: #{tpu_custom_call.1} parent=11 // pred_fallthru
          _
        // Predicated region
        $region33: #{tpu_custom_call.1} parent=11 // pred_check
          %p316 = pneg %p206
        $region34: #{tpu_custom_call.1} parent=11 // pred_check_branch
          %318 = sbr.rel (%p316) target = $region36
        $region35: #{tpu_custom_call.1} parent=11 // pred_region
          %s320 = ssub.s32 16, 16
          %321 = vsyncadd [#allocation15], %s320
          %s322 = smul.addr %s32, 16
          %s323 = scalar_lea.hbm %s6, %s322
          %s325 = sshll.u32 [#allocation16], 4
          %s326 = int_to_ptr.vmem [resolvable:$true] %s325
          %328 = dma.hbm_to_vmem [thread:$0]  %s323, 16, %s326, [#allocation15]
        $region36: #{tpu_custom_call.1} parent=11 // pred_fallthru
          _
      $region12: #{tpu_custom_call.1} parent=5 // pred_fallthru
        _
      %p329 = scmp.lt.s32.totalorder %s22, 2
      // Predicated region
      $region37: #{tpu_custom_call.1} parent=5 // pred_check
        %p330 = pneg %p329
      $region38: #{tpu_custom_call.1} parent=5 // pred_check_branch
        %332 = sbr.rel (%p330) target = $region40
      $region39: #{tpu_custom_call.1} parent=5 // pred_region
        // Predicated region
        $region41: #{tpu_custom_call.1} parent=39 // pred_check
          %p333 = pneg %p54
        $region42: #{tpu_custom_call.1} parent=39 // pred_check_branch
          %335 = sbr.rel (%p333) target = $region44
        $region43: #{tpu_custom_call.1} parent=39 // pred_region
          %s336 = sand.u32 %s44, 1
          %s337 = scalar_lea.sflag [#allocation6], %s336
          %s338 = sand.u32 %s44, 1
          %s339 = smul.addr %s338, 128
          %s340 = scalar_lea.vmem [#allocation5], %s339
          %s342 = ssub.s32 2048, 2048
          %343 = vsyncadd %s337, %s342
          %s344 = smul.addr %s29, 32
          %s345 = smul.addr %s344, 64
          %s346 = scalar_lea.hbm %s0, %s345
          %s347 = sshll.u32 %s340, 4
          %s348 = int_to_ptr.vmem [resolvable:$true] %s347
          %353 = dma.hbm_to_vmem [thread:$0]  %s346, 2048, %s348, %s337, 64, 64, 4
        $region44: #{tpu_custom_call.1} parent=39 // pred_fallthru
          _
      $region40: #{tpu_custom_call.1} parent=5 // pred_fallthru
        _
      %p354 = scmp.le.s32.totalorder 1, %s22
      %p355 = scmp.lt.s32.totalorder %s22, 3
      %p356 = pnand %p354, %p355
      %p357 = pneg %p356
      // Predicated region
      $region45: #{tpu_custom_call.1} parent=5 // pred_check
        _
      $region46: #{tpu_custom_call.1} parent=5 // pred_check_branch
        %359 = sbr.rel (%p356) target = $region48
      $region47: #{tpu_custom_call.1} parent=5 // pred_region
        %s360 = ssub.s32 %s22, 1
        %s361 = sand.u32 %s47, 1
        %s362 = scalar_lea.sflag [#allocation6], %s361
        %s363 = sand.u32 %s47, 1
        %s364 = smul.addr %s363, 128
        %s365 = scalar_lea.vmem [#allocation5], %s364
        // Predicated region
        $region49: #{tpu_custom_call.1} parent=47 // pred_check
          %p366 = pneg %p60
        $region50: #{tpu_custom_call.1} parent=47 // pred_check_branch
          %368 = sbr.rel (%p366) target = $region52
        $region51: #{tpu_custom_call.1} parent=47 // pred_region
          %369 = dma.done %s362, 2048
        $region52: #{tpu_custom_call.1} parent=47 // pred_fallthru
          _
        // Predicated region
        $region53: #{tpu_custom_call.1} parent=47 // pred_check
          %p370 = pneg %p81
        $region54: #{tpu_custom_call.1} parent=47 // pred_check_branch
          %372 = sbr.rel (%p370) target = $region56
        $region55: #{tpu_custom_call.1} parent=47 // pred_region
          %373 = dma.done [#allocation9], 9216
        $region56: #{tpu_custom_call.1} parent=47 // pred_fallthru
          _
        // Predicated region
        $region57: #{tpu_custom_call.1} parent=47 // pred_check
          %p374 = pneg %p102
        $region58: #{tpu_custom_call.1} parent=47 // pred_check_branch
          %376 = sbr.rel (%p374) target = $region60
        $region59: #{tpu_custom_call.1} parent=47 // pred_region
          %377 = dma.done [#allocation9], 16
        $region60: #{tpu_custom_call.1} parent=47 // pred_fallthru
          _
        // Predicated region
        $region61: #{tpu_custom_call.1} parent=47 // pred_check
          %p378 = pneg %p128
        $region62: #{tpu_custom_call.1} parent=47 // pred_check_branch
          %380 = sbr.rel (%p378) target = $region64
        $region63: #{tpu_custom_call.1} parent=47 // pred_region
          %381 = dma.done [#allocation12], 9216
        $region64: #{tpu_custom_call.1} parent=47 // pred_fallthru
          _
        // Predicated region
        $region65: #{tpu_custom_call.1} parent=47 // pred_check
          %p382 = pneg %p154
        $region66: #{tpu_custom_call.1} parent=47 // pred_check_branch
          %384 = sbr.rel (%p382) target = $region68
        $region67: #{tpu_custom_call.1} parent=47 // pred_region
          %385 = dma.done [#allocation12], 16
        $region68: #{tpu_custom_call.1} parent=47 // pred_fallthru
          _
        // Predicated region
        $region69: #{tpu_custom_call.1} parent=47 // pred_check
          %p386 = pneg %p180
        $region70: #{tpu_custom_call.1} parent=47 // pred_check_branch
          %388 = sbr.rel (%p386) target = $region72
        $region71: #{tpu_custom_call.1} parent=47 // pred_region
          %389 = dma.done [#allocation15], 1024
        $region72: #{tpu_custom_call.1} parent=47 // pred_fallthru
          _
        // Predicated region
        $region73: #{tpu_custom_call.1} parent=47 // pred_check
          %p390 = pneg %p206
        $region74: #{tpu_custom_call.1} parent=47 // pred_check_branch
          %392 = sbr.rel (%p390) target = $region76
        $region75: #{tpu_custom_call.1} parent=47 // pred_region
          %393 = dma.done [#allocation15], 16
        $region76: #{tpu_custom_call.1} parent=47 // pred_fallthru
          _
        %s394 = sand.u32 %s47, 1
        %s395 = scalar_lea.sflag [#allocation6], %s394
        %s396 = sand.u32 %s47, 1
        %s397 = smul.addr %s396, 128
        %s398 = scalar_lea.vmem [#allocation5], %s397
        %p399 = pneg %p60
        %p400 = pneg %p57
        %p401 = pneg %p81
        %p402 = pneg %p78
        %p403 = pneg %p102
        %p404 = pneg %p99
        %p405 = pneg %p128
        %p406 = pneg %p125
        %p407 = pneg %p154
        %p408 = pneg %p151
        %p409 = pneg %p180
        %p410 = pneg %p177
        %p411 = pneg %p206
        %p412 = pneg %p203
        %p413 = pneg %p234
        %p414 = pneg %p231
        %s415 = sand.u32 %s221, 1
        %s416 = scalar_lea.sflag [#allocation7], %s415
        %s417 = sand.u32 %s221, 1
        %s418 = smul.addr %s417, 32
        %s419 = scalar_lea.vmem [#allocation17], %s418
        %v421 = vld [vmem:[%s365] sm:$0xf]
        %v422 = vld [vmem:[%s365 + $0x4] sm:$0xf]
        %v423 = vld [vmem:[%s365 + $0x8] sm:$0xf]
        %v424 = vld [vmem:[%s365 + $0xc] sm:$0xf]
        %v425 = vld [vmem:[%s365 + $0x10] sm:$0xf]
        %v426 = vld [vmem:[%s365 + $0x14] sm:$0xf]
        %v427 = vld [vmem:[%s365 + $0x18] sm:$0xf]
        %v428 = vld [vmem:[%s365 + $0x1c] sm:$0xf]
        %v429 = vld [vmem:[%s365 + $0x20] sm:$0xf]
        %v430 = vld [vmem:[%s365 + $0x24] sm:$0xf]
        %v431 = vld [vmem:[%s365 + $0x28] sm:$0xf]
        %v432 = vld [vmem:[%s365 + $0x2c] sm:$0xf]
        %v433 = vld [vmem:[%s365 + $0x30] sm:$0xf]
        %v434 = vld [vmem:[%s365 + $0x34] sm:$0xf]
        %v435 = vld [vmem:[%s365 + $0x38] sm:$0xf]
        %v436 = vld [vmem:[%s365 + $0x3c] sm:$0xf]
        %v437 = vld [vmem:[%s365 + $0x40] sm:$0xf]
        %v438 = vld [vmem:[%s365 + $0x44] sm:$0xf]
        %v439 = vld [vmem:[%s365 + $0x48] sm:$0xf]
        %v440 = vld [vmem:[%s365 + $0x4c] sm:$0xf]
        %v441 = vld [vmem:[%s365 + $0x50] sm:$0xf]
        %v442 = vld [vmem:[%s365 + $0x54] sm:$0xf]
        %v443 = vld [vmem:[%s365 + $0x58] sm:$0xf]
        %v444 = vld [vmem:[%s365 + $0x5c] sm:$0xf]
        %v445 = vld [vmem:[%s365 + $0x60] sm:$0xf]
        %v446 = vld [vmem:[%s365 + $0x64] sm:$0xf]
        %v447 = vld [vmem:[%s365 + $0x68] sm:$0xf]
        %v448 = vld [vmem:[%s365 + $0x6c] sm:$0xf]
        %v449 = vld [vmem:[%s365 + $0x70] sm:$0xf]
        %v450 = vld [vmem:[%s365 + $0x74] sm:$0xf]
        %v451 = vld [vmem:[%s365 + $0x78] sm:$0xf]
        %v452 = vld [vmem:[%s365 + $0x7c] sm:$0xf]
        %v453 = vunpack.c.l.bf16 %v421
        %v454 = vunpack.c.l.bf16 %v422
        %v455 = vunpack.c.l.bf16 %v423
        %v456 = vunpack.c.l.bf16 %v424
        %v457 = vunpack.c.l.bf16 %v425
        %v458 = vunpack.c.l.bf16 %v426
        %v459 = vunpack.c.l.bf16 %v427
        %v460 = vunpack.c.l.bf16 %v428
        %v461 = vunpack.c.l.bf16 %v429
        %v462 = vunpack.c.l.bf16 %v430
        %v463 = vunpack.c.l.bf16 %v431
        %v464 = vunpack.c.l.bf16 %v432
        %v465 = vunpack.c.l.bf16 %v433
        %v466 = vunpack.c.l.bf16 %v434
        %v467 = vunpack.c.l.bf16 %v435
        %v468 = vunpack.c.l.bf16 %v436
        %v469 = vunpack.c.l.bf16 %v437
        %v470 = vunpack.c.l.bf16 %v438
        %v471 = vunpack.c.l.bf16 %v439
        %v472 = vunpack.c.l.bf16 %v440
        %v473 = vunpack.c.l.bf16 %v441
        %v474 = vunpack.c.l.bf16 %v442
        %v475 = vunpack.c.l.bf16 %v443
        %v476 = vunpack.c.l.bf16 %v444
        %v477 = vunpack.c.l.bf16 %v445
        %v478 = vunpack.c.l.bf16 %v446
        %v479 = vunpack.c.l.bf16 %v447
        %v480 = vunpack.c.l.bf16 %v448
        %v481 = vunpack.c.l.bf16 %v449
        %v482 = vunpack.c.l.bf16 %v450
        %v483 = vunpack.c.l.bf16 %v451
        %v484 = vunpack.c.l.bf16 %v452
        %v485 = vadd.f32 %v453, %v455
        %v486 = vadd.f32 %v454, %v456
        %v487 = vadd.f32 %v457, %v459
        %v488 = vadd.f32 %v458, %v460
        %v489 = vadd.f32 %v461, %v463
        %v490 = vadd.f32 %v462, %v464
        %v491 = vadd.f32 %v465, %v467
        %v492 = vadd.f32 %v466, %v468
        %v493 = vadd.f32 %v469, %v471
        %v494 = vadd.f32 %v470, %v472
        %v495 = vadd.f32 %v473, %v475
        %v496 = vadd.f32 %v474, %v476
        %v497 = vadd.f32 %v477, %v479
        %v498 = vadd.f32 %v478, %v480
        %v499 = vadd.f32 %v481, %v483
        %v500 = vadd.f32 %v482, %v484
        %501 = vst [vmem:[#allocation4] sm:$0xff] %v485
        %502 = vst [vmem:[#allocation4 + $0x8] sm:$0xff] %v486
        %503 = vst [vmem:[#allocation4 + $0x10] sm:$0xff] %v487
        %504 = vst [vmem:[#allocation4 + $0x18] sm:$0xff] %v488
        %505 = vst [vmem:[#allocation4 + $0x20] sm:$0xff] %v489
        %506 = vst [vmem:[#allocation4 + $0x28] sm:$0xff] %v490
        %507 = vst [vmem:[#allocation4 + $0x30] sm:$0xff] %v491
        %508 = vst [vmem:[#allocation4 + $0x38] sm:$0xff] %v492
        %509 = vst [vmem:[#allocation4 + $0x40] sm:$0xff] %v493
        %510 = vst [vmem:[#allocation4 + $0x48] sm:$0xff] %v494
        %511 = vst [vmem:[#allocation4 + $0x50] sm:$0xff] %v495
        %512 = vst [vmem:[#allocation4 + $0x58] sm:$0xff] %v496
        %513 = vst [vmem:[#allocation4 + $0x60] sm:$0xff] %v497
        %514 = vst [vmem:[#allocation4 + $0x68] sm:$0xff] %v498
        %515 = vst [vmem:[#allocation4 + $0x70] sm:$0xff] %v499
        %516 = vst [vmem:[#allocation4 + $0x78] sm:$0xff] %v500
        %v517 = vld [vmem:[#allocation4] ss:$2 sm:$0xff]
        %s518 = scalar_lea.vmem [#allocation4], 16
        %v519 = vld [vmem:[%s518] ss:$2 sm:$0xff]
        %s520 = scalar_lea.vmem [#allocation4], 32
        %v521 = vld [vmem:[%s520] ss:$2 sm:$0xff]
        %s522 = scalar_lea.vmem [#allocation4], 48
        %v523 = vld [vmem:[%s522] ss:$2 sm:$0xff]
        %s524 = scalar_lea.vmem [#allocation4], 64
        %v525 = vld [vmem:[%s524] ss:$2 sm:$0xff]
        %s526 = scalar_lea.vmem [#allocation4], 80
        %v527 = vld [vmem:[%s526] ss:$2 sm:$0xff]
        %s528 = scalar_lea.vmem [#allocation4], 96
        %v529 = vld [vmem:[%s528] ss:$2 sm:$0xff]
        %s530 = scalar_lea.vmem [#allocation4], 112
        %v531 = vld [vmem:[%s530] ss:$2 sm:$0xff]
        %s532 = scalar_lea.vmem [#allocation4], 1
        %v533 = vld [vmem:[%s532] ss:$2 sm:$0xff]
        %s534 = scalar_lea.vmem [#allocation4], 17
        %v535 = vld [vmem:[%s534] ss:$2 sm:$0xff]
        %s536 = scalar_lea.vmem [#allocation4], 33
        %v537 = vld [vmem:[%s536] ss:$2 sm:$0xff]
        %s538 = scalar_lea.vmem [#allocation4], 49
        %v539 = vld [vmem:[%s538] ss:$2 sm:$0xff]
        %s540 = scalar_lea.vmem [#allocation4], 65
        %v541 = vld [vmem:[%s540] ss:$2 sm:$0xff]
        %s542 = scalar_lea.vmem [#allocation4], 81
        %v543 = vld [vmem:[%s542] ss:$2 sm:$0xff]
        %s544 = scalar_lea.vmem [#allocation4], 97
        %v545 = vld [vmem:[%s544] ss:$2 sm:$0xff]
        %s546 = scalar_lea.vmem [#allocation4], 113
        %v547 = vld [vmem:[%s546] ss:$2 sm:$0xff]
        %v548 = vadd.f32 %v517, %v533
        %v549 = vadd.f32 %v519, %v535
        %v550 = vadd.f32 %v521, %v537
        %v551 = vadd.f32 %v523, %v539
        %v552 = vadd.f32 %v525, %v541
        %v553 = vadd.f32 %v527, %v543
        %v554 = vadd.f32 %v529, %v545
        %v555 = vadd.f32 %v531, %v547
        %v556 = vmul.f32 %v548, 0.25
        %v557 = vmul.f32 %v549, 0.25
        %v558 = vmul.f32 %v550, 0.25
        %v559 = vmul.f32 %v551, 0.25
        %v560 = vmul.f32 %v552, 0.25
        %v561 = vmul.f32 %v553, 0.25
        %v562 = vmul.f32 %v554, 0.25
        %v563 = vmul.f32 %v555, 0.25
        %v564 = vpack.c.bf16 %v557, %v556
        %v565 = vpack.c.bf16 %v559, %v558
        %v566 = vpack.c.bf16 %v561, %v560
        %v567 = vpack.c.bf16 %v563, %v562
        %v568 = vld [vmem:[#allocation14] sm:$0xf]
        %v569 = vld [vmem:[#allocation14 + $0x4] sm:$0xf]
        %v570 = vld [vmem:[#allocation14 + $0x8] sm:$0xf]
        %v571 = vld [vmem:[#allocation14 + $0xc] sm:$0xf]
        %v572 = vld [vmem:[#allocation14 + $0x10] sm:$0xf]
        %v573 = vld [vmem:[#allocation14 + $0x14] sm:$0xf]
        %v574 = vld [vmem:[#allocation14 + $0x18] sm:$0xf]
        %v575 = vld [vmem:[#allocation14 + $0x1c] sm:$0xf]
        %v576 = vld [vmem:[#allocation14 + $0x20] sm:$0xf]
        %v577 = vld [vmem:[#allocation14 + $0x24] sm:$0xf]
        %v578 = vld [vmem:[#allocation14 + $0x28] sm:$0xf]
        %v579 = vld [vmem:[#allocation14 + $0x2c] sm:$0xf]
        %v580 = vld [vmem:[#allocation14 + $0x30] sm:$0xf]
        %v581 = vld [vmem:[#allocation14 + $0x34] sm:$0xf]
        %v582 = vld [vmem:[#allocation14 + $0x38] sm:$0xf]
        %v583 = vld [vmem:[#allocation14 + $0x3c] sm:$0xf]
        %v584 = vld [vmem:[#allocation16] sm:$0x1]
        %v586 = vlaneseq
        %v587 = vshrl.u32 %v586, 7
        %v588 = vsub.s32 0, %v587
        %v589 = vrot.slane %v584, %v588
        %v607 = vunpack.c.l.b16 %v568
        %v608 = vunpack.c.l.b16 %v569
        %v609 = vunpack.c.l.b16 %v570
        %v610 = vunpack.c.l.b16 %v571
        %v611 = vunpack.c.l.b16 %v572
        %v612 = vunpack.c.l.b16 %v573
        %v613 = vunpack.c.l.b16 %v574
        %v614 = vunpack.c.l.b16 %v575
        %v615 = vunpack.c.l.b16 %v576
        %v616 = vunpack.c.l.b16 %v577
        %v617 = vunpack.c.l.b16 %v578
        %v618 = vunpack.c.l.b16 %v579
        %v619 = vunpack.c.l.b16 %v580
        %v620 = vunpack.c.l.b16 %v581
        %v621 = vunpack.c.l.b16 %v582
        %v622 = vunpack.c.l.b16 %v583
        %v623 = vpack.c.b16 %v608, %v607
        %v624 = vpack.c.b16 %v610, %v609
        %v625 = vpack.c.b16 %v612, %v611
        %v626 = vpack.c.b16 %v614, %v613
        %v627 = vpack.c.b16 %v616, %v615
        %v628 = vpack.c.b16 %v618, %v617
        %v629 = vpack.c.b16 %v620, %v619
        %v630 = vpack.c.b16 %v622, %v621
        %639 = vmatprep.subr.bf16.mxu0 0
        %640 = vmatpush1.bf16.msra.mxu0 %v623
        %641 = vmatprep.subr.bf16.mxu0 0
        %642 = vmatpush1.bf16.msra.mxu0 %v624
        %643 = vmatprep.subr.bf16.mxu0 0
        %644 = vmatpush1.bf16.msra.mxu0 %v625
        %645 = vmatprep.subr.bf16.mxu0 0
        %646 = vmatpush1.bf16.msra.mxu0 %v626
        %647 = vmatprep.subr.bf16.mxu0 0
        %648 = vmatpush1.bf16.msra.mxu0 %v627
        %649 = vmatprep.subr.bf16.mxu0 0
        %650 = vmatpush1.bf16.msra.mxu0 %v628
        %651 = vmatprep.subr.bf16.mxu0 0
        %652 = vmatpush1.bf16.msra.mxu0 %v629
        %653 = vmatprep.subr.bf16.mxu0 0
        %654 = vmatpush1.bf16.msra.mxu0 %v630
        %655 = vmatprep.subr.bf16.mxu0 0
        %656 = vmatpush1.bf16.msra.mxu0 0
        %657 = vmatprep.subr.bf16.mxu0 0
        %658 = vmatpush1.bf16.msra.mxu0 0
        %659 = vmatprep.subr.bf16.mxu0 0
        %660 = vmatpush1.bf16.msra.mxu0 0
        %661 = vmatprep.subr.bf16.mxu0 0
        %662 = vmatpush1.bf16.msra.mxu0 0
        %663 = vmatprep.subr.bf16.mxu0 0
        %664 = vmatpush1.bf16.msra.mxu0 0
        %665 = vmatprep.subr.bf16.mxu0 0
        %666 = vmatpush1.bf16.msra.mxu0 0
        %667 = vmatprep.subr.bf16.mxu0 0
        %668 = vmatpush1.bf16.msra.mxu0 0
        %669 = vmatprep.subr.bf16.mxu0 0
        %670 = vmatpush1.bf16.msra.mxu0 0
        %671 = vmatprep.mubr.bf16.mxu0 0
        %672 = vmatmul.mubr.bf16.gmra.mrb[0].mxu0 %v564
        %v673 = vpop.f32.mrb[0].mxu0
        %v674 = vadd.f32 %v589, %v673
        %v675 = vpop.f32.mrb[0].mxu0
        %v676 = vpop.f32.mrb[0].mxu0
        %v677 = vadd.f32 %v589, %v676
        %v678 = vpop.f32.mrb[0].mxu0
        %679 = vmatprep.mubr.bf16.mxu0 0
        %680 = vmatmul.mubr.bf16.gmra.mrb[0].mxu0 %v565
        %v681 = vpop.f32.mrb[0].mxu0
        %v682 = vadd.f32 %v589, %v681
        %v683 = vpop.f32.mrb[0].mxu0
        %v684 = vpop.f32.mrb[0].mxu0
        %v685 = vadd.f32 %v589, %v684
        %v686 = vpop.f32.mrb[0].mxu0
        %687 = vmatprep.mubr.bf16.mxu0 0
        %688 = vmatmul.mubr.bf16.gmra.mrb[0].mxu0 %v566
        %v689 = vpop.f32.mrb[0].mxu0
        %v690 = vadd.f32 %v589, %v689
        %v691 = vpop.f32.mrb[0].mxu0
        %v692 = vpop.f32.mrb[0].mxu0
        %v693 = vadd.f32 %v589, %v692
        %v694 = vpop.f32.mrb[0].mxu0
        %695 = vmatprep.mubr.bf16.mxu0 0
        %696 = vmatmul.mubr.bf16.gmra.mrb[0].mxu0 %v567
        %v697 = vpop.f32.mrb[0].mxu0
        %v698 = vadd.f32 %v589, %v697
        %v699 = vpop.f32.mrb[0].mxu0
        %v700 = vpop.f32.mrb[0].mxu0
        %v701 = vadd.f32 %v589, %v700
        %v702 = vpop.f32.mrb[0].mxu0
        %703 = vdwg.mxu0
        %p704 = scmp.eq.s32.totalorder %s32, 0
        // Predicated region
        $region77: #{tpu_custom_call.1} parent=47 // pred_check
          %p705 = pneg %p704
        $region78: #{tpu_custom_call.1} parent=47 // pred_check_branch
          %707 = sbr.rel (%p705) target = $region80
        $region79: #{tpu_custom_call.1} parent=47 // pred_region
          %v708 = vld [vmem:[%s365] sm:$0xf]
          %v709 = vld [vmem:[%s365 + $0x4] sm:$0xf]
          %v710 = vld [vmem:[%s365 + $0x8] sm:$0xf]
          %v711 = vld [vmem:[%s365 + $0xc] sm:$0xf]
          %v712 = vld [vmem:[%s365 + $0x10] sm:$0xf]
          %v713 = vld [vmem:[%s365 + $0x14] sm:$0xf]
          %v714 = vld [vmem:[%s365 + $0x18] sm:$0xf]
          %v715 = vld [vmem:[%s365 + $0x1c] sm:$0xf]
          %v716 = vld [vmem:[%s365 + $0x20] sm:$0xf]
          %v717 = vld [vmem:[%s365 + $0x24] sm:$0xf]
          %v718 = vld [vmem:[%s365 + $0x28] sm:$0xf]
          %v719 = vld [vmem:[%s365 + $0x2c] sm:$0xf]
          %v720 = vld [vmem:[%s365 + $0x30] sm:$0xf]
          %v721 = vld [vmem:[%s365 + $0x34] sm:$0xf]
          %v722 = vld [vmem:[%s365 + $0x38] sm:$0xf]
          %v723 = vld [vmem:[%s365 + $0x3c] sm:$0xf]
          %v724 = vld [vmem:[%s365 + $0x40] sm:$0xf]
          %v725 = vld [vmem:[%s365 + $0x44] sm:$0xf]
          %v726 = vld [vmem:[%s365 + $0x48] sm:$0xf]
          %v727 = vld [vmem:[%s365 + $0x4c] sm:$0xf]
          %v728 = vld [vmem:[%s365 + $0x50] sm:$0xf]
          %v729 = vld [vmem:[%s365 + $0x54] sm:$0xf]
          %v730 = vld [vmem:[%s365 + $0x58] sm:$0xf]
          %v731 = vld [vmem:[%s365 + $0x5c] sm:$0xf]
          %v732 = vld [vmem:[%s365 + $0x60] sm:$0xf]
          %v733 = vld [vmem:[%s365 + $0x64] sm:$0xf]
          %v734 = vld [vmem:[%s365 + $0x68] sm:$0xf]
          %v735 = vld [vmem:[%s365 + $0x6c] sm:$0xf]
          %v736 = vld [vmem:[%s365 + $0x70] sm:$0xf]
          %v737 = vld [vmem:[%s365 + $0x74] sm:$0xf]
          %v738 = vld [vmem:[%s365 + $0x78] sm:$0xf]
          %v739 = vld [vmem:[%s365 + $0x7c] sm:$0xf]
          %v740 = vunpack.c.l.bf16 %v708
          %v741 = vunpack.c.l.bf16 %v709
          %v742 = vunpack.c.l.bf16 %v710
          %v743 = vunpack.c.l.bf16 %v711
          %v744 = vunpack.c.l.bf16 %v712
          %v745 = vunpack.c.l.bf16 %v713
          %v746 = vunpack.c.l.bf16 %v714
          %v747 = vunpack.c.l.bf16 %v715
          %v748 = vunpack.c.l.bf16 %v716
          %v749 = vunpack.c.l.bf16 %v717
          %v750 = vunpack.c.l.bf16 %v718
          %v751 = vunpack.c.l.bf16 %v719
          %v752 = vunpack.c.l.bf16 %v720
          %v753 = vunpack.c.l.bf16 %v721
          %v754 = vunpack.c.l.bf16 %v722
          %v755 = vunpack.c.l.bf16 %v723
          %v756 = vunpack.c.l.bf16 %v724
          %v757 = vunpack.c.l.bf16 %v725
          %v758 = vunpack.c.l.bf16 %v726
          %v759 = vunpack.c.l.bf16 %v727
          %v760 = vunpack.c.l.bf16 %v728
          %v761 = vunpack.c.l.bf16 %v729
          %v762 = vunpack.c.l.bf16 %v730
          %v763 = vunpack.c.l.bf16 %v731
          %v764 = vunpack.c.l.bf16 %v732
          %v765 = vunpack.c.l.bf16 %v733
          %v766 = vunpack.c.l.bf16 %v734
          %v767 = vunpack.c.l.bf16 %v735
          %v768 = vunpack.c.l.bf16 %v736
          %v769 = vunpack.c.l.bf16 %v737
          %v770 = vunpack.c.l.bf16 %v738
          %v771 = vunpack.c.l.bf16 %v739
          %v772 = vmax.f32 %v740, 0.0
          %v773 = vmax.f32 %v741, 0.0
          %v774 = vmax.f32 %v742, 0.0
          %v775 = vmax.f32 %v743, 0.0
          %v776 = vmax.f32 %v744, 0.0
          %v777 = vmax.f32 %v745, 0.0
          %v778 = vmax.f32 %v746, 0.0
          %v779 = vmax.f32 %v747, 0.0
          %v780 = vmax.f32 %v748, 0.0
          %v781 = vmax.f32 %v749, 0.0
          %v782 = vmax.f32 %v750, 0.0
          %v783 = vmax.f32 %v751, 0.0
          %v784 = vmax.f32 %v752, 0.0
          %v785 = vmax.f32 %v753, 0.0
          %v786 = vmax.f32 %v754, 0.0
          %v787 = vmax.f32 %v755, 0.0
          %v788 = vmax.f32 %v756, 0.0
          %v789 = vmax.f32 %v757, 0.0
          %v790 = vmax.f32 %v758, 0.0
          %v791 = vmax.f32 %v759, 0.0
          %v792 = vmax.f32 %v760, 0.0
          %v793 = vmax.f32 %v761, 0.0
          %v794 = vmax.f32 %v762, 0.0
          %v795 = vmax.f32 %v763, 0.0
          %v796 = vmax.f32 %v764, 0.0
          %v797 = vmax.f32 %v765, 0.0
          %v798 = vmax.f32 %v766, 0.0
          %v799 = vmax.f32 %v767, 0.0
          %v800 = vmax.f32 %v768, 0.0
          %v801 = vmax.f32 %v769, 0.0
          %v802 = vmax.f32 %v770, 0.0
          %v803 = vmax.f32 %v771, 0.0
          %804 = vst [vmem:[#allocation2] sm:$0xff] 0.0
          %805 = vst [vmem:[#allocation2 + $0x8] sm:$0xff] 0.0
          %806 = vst [vmem:[#allocation2 + $0x10] sm:$0xff] 0.0
          %s807 = scalar_lea.vmem [#allocation2], 408
          %808 = vst [vmem:[%s807] sm:$0xff] 0.0
          %809 = vst [vmem:[%s807 + $0x8] sm:$0xff] 0.0
          %810 = vst [vmem:[%s807 + $0x10] sm:$0xff] 0.0
          %s811 = scalar_lea.vmem [#allocation2], 24
          %812 = vst [vmem:[%s811] sm:$0xff] 0.0
          %813 = vst [vmem:[%s811 + $0x18] sm:$0xff] 0.0
          %814 = vst [vmem:[%s811 + $0x30] sm:$0xff] 0.0
          %815 = vst [vmem:[%s811 + $0x48] sm:$0xff] 0.0
          %816 = vst [vmem:[%s811 + $0x60] sm:$0xff] 0.0
          %817 = vst [vmem:[%s811 + $0x78] sm:$0xff] 0.0
          %818 = vst [vmem:[%s811 + $0x90] sm:$0xff] 0.0
          %819 = vst [vmem:[%s811 + $0xa8] sm:$0xff] 0.0
          %820 = vst [vmem:[%s811 + $0xc0] sm:$0xff] 0.0
          %821 = vst [vmem:[%s811 + $0xd8] sm:$0xff] 0.0
          %822 = vst [vmem:[%s811 + $0xf0] sm:$0xff] 0.0
          %823 = vst [vmem:[%s811 + $0x108] sm:$0xff] 0.0
          %824 = vst [vmem:[%s811 + $0x120] sm:$0xff] 0.0
          %825 = vst [vmem:[%s811 + $0x138] sm:$0xff] 0.0
          %826 = vst [vmem:[%s811 + $0x150] sm:$0xff] 0.0
          %827 = vst [vmem:[%s811 + $0x168] sm:$0xff] 0.0
          %828 = vst [vmem:[%s811 + $0x10] sm:$0xff] 0.0
          %829 = vst [vmem:[%s811 + $0x28] sm:$0xff] 0.0
          %830 = vst [vmem:[%s811 + $0x40] sm:$0xff] 0.0
          %831 = vst [vmem:[%s811 + $0x58] sm:$0xff] 0.0
          %832 = vst [vmem:[%s811 + $0x70] sm:$0xff] 0.0
          %833 = vst [vmem:[%s811 + $0x88] sm:$0xff] 0.0
          %834 = vst [vmem:[%s811 + $0xa0] sm:$0xff] 0.0
          %835 = vst [vmem:[%s811 + $0xb8] sm:$0xff] 0.0
          %836 = vst [vmem:[%s811 + $0xd0] sm:$0xff] 0.0
          %837 = vst [vmem:[%s811 + $0xe8] sm:$0xff] 0.0
          %838 = vst [vmem:[%s811 + $0x100] sm:$0xff] 0.0
          %839 = vst [vmem:[%s811 + $0x118] sm:$0xff] 0.0
          %840 = vst [vmem:[%s811 + $0x130] sm:$0xff] 0.0
          %841 = vst [vmem:[%s811 + $0x148] sm:$0xff] 0.0
          %842 = vst [vmem:[%s811 + $0x160] sm:$0xff] 0.0
          %843 = vst [vmem:[%s811 + $0x178] sm:$0xff] 0.0
          %844 = vst [vmem:[%s811 + $0x1] sm:$0xff] %v772
          %845 = vst [vmem:[%s811 + $0x9] sm:$0xff] %v773
          %846 = vst [vmem:[%s811 + $0x19] sm:$0xff] %v774
          %847 = vst [vmem:[%s811 + $0x21] sm:$0xff] %v775
          %848 = vst [vmem:[%s811 + $0x31] sm:$0xff] %v776
          %849 = vst [vmem:[%s811 + $0x39] sm:$0xff] %v777
          %850 = vst [vmem:[%s811 + $0x49] sm:$0xff] %v778
          %851 = vst [vmem:[%s811 + $0x51] sm:$0xff] %v779
          %852 = vst [vmem:[%s811 + $0x61] sm:$0xff] %v780
          %853 = vst [vmem:[%s811 + $0x69] sm:$0xff] %v781
          %854 = vst [vmem:[%s811 + $0x79] sm:$0xff] %v782
          %855 = vst [vmem:[%s811 + $0x81] sm:$0xff] %v783
          %856 = vst [vmem:[%s811 + $0x91] sm:$0xff] %v784
          %857 = vst [vmem:[%s811 + $0x99] sm:$0xff] %v785
          %858 = vst [vmem:[%s811 + $0xa9] sm:$0xff] %v786
          %859 = vst [vmem:[%s811 + $0xb1] sm:$0xff] %v787
          %860 = vst [vmem:[%s811 + $0xc1] sm:$0xff] %v788
          %861 = vst [vmem:[%s811 + $0xc9] sm:$0xff] %v789
          %862 = vst [vmem:[%s811 + $0xd9] sm:$0xff] %v790
          %863 = vst [vmem:[%s811 + $0xe1] sm:$0xff] %v791
          %864 = vst [vmem:[%s811 + $0xf1] sm:$0xff] %v792
          %865 = vst [vmem:[%s811 + $0xf9] sm:$0xff] %v793
          %866 = vst [vmem:[%s811 + $0x109] sm:$0xff] %v794
          %867 = vst [vmem:[%s811 + $0x111] sm:$0xff] %v795
          %868 = vst [vmem:[%s811 + $0x121] sm:$0xff] %v796
          %869 = vst [vmem:[%s811 + $0x129] sm:$0xff] %v797
          %870 = vst [vmem:[%s811 + $0x139] sm:$0xff] %v798
          %871 = vst [vmem:[%s811 + $0x141] sm:$0xff] %v799
          %872 = vst [vmem:[%s811 + $0x151] sm:$0xff] %v800
          %873 = vst [vmem:[%s811 + $0x159] sm:$0xff] %v801
          %874 = vst [vmem:[%s811 + $0x169] sm:$0xff] %v802
          %875 = vst [vmem:[%s811 + $0x171] sm:$0xff] %v803
          %v876 = vld [vmem:[#allocation2] sm:$0xff]
          %v877 = vld [vmem:[#allocation2 + $0x8] sm:$0xff]
          %v878 = vld [vmem:[#allocation2 + $0x18] sm:$0xff]
          %v879 = vld [vmem:[#allocation2 + $0x20] sm:$0xff]
          %v880 = vld [vmem:[#allocation2 + $0x30] sm:$0xff]
          %v881 = vld [vmem:[#allocation2 + $0x38] sm:$0xff]
          %v882 = vld [vmem:[#allocation2 + $0x48] sm:$0xff]
          %v883 = vld [vmem:[#allocation2 + $0x50] sm:$0xff]
          %v884 = vld [vmem:[#allocation2 + $0x60] sm:$0xff]
          %v885 = vld [vmem:[#allocation2 + $0x68] sm:$0xff]
          %v886 = vld [vmem:[#allocation2 + $0x78] sm:$0xff]
          %v887 = vld [vmem:[#allocation2 + $0x80] sm:$0xff]
          %v888 = vld [vmem:[#allocation2 + $0x90] sm:$0xff]
          %v889 = vld [vmem:[#allocation2 + $0x98] sm:$0xff]
          %v890 = vld [vmem:[#allocation2 + $0xa8] sm:$0xff]
          %v891 = vld [vmem:[#allocation2 + $0xb0] sm:$0xff]
          %v892 = vld [vmem:[#allocation2 + $0xc0] sm:$0xff]
          %v893 = vld [vmem:[#allocation2 + $0xc8] sm:$0xff]
          %v894 = vld [vmem:[#allocation2 + $0xd8] sm:$0xff]
          %v895 = vld [vmem:[#allocation2 + $0xe0] sm:$0xff]
          %v896 = vld [vmem:[#allocation2 + $0xf0] sm:$0xff]
          %v897 = vld [vmem:[#allocation2 + $0xf8] sm:$0xff]
          %v898 = vld [vmem:[#allocation2 + $0x108] sm:$0xff]
          %v899 = vld [vmem:[#allocation2 + $0x110] sm:$0xff]
          %v900 = vld [vmem:[#allocation2 + $0x120] sm:$0xff]
          %v901 = vld [vmem:[#allocation2 + $0x128] sm:$0xff]
          %v902 = vld [vmem:[#allocation2 + $0x138] sm:$0xff]
          %v903 = vld [vmem:[#allocation2 + $0x140] sm:$0xff]
          %v904 = vld [vmem:[#allocation2 + $0x150] sm:$0xff]
          %v905 = vld [vmem:[#allocation2 + $0x158] sm:$0xff]
          %v906 = vld [vmem:[#allocation2 + $0x168] sm:$0xff]
          %v907 = vld [vmem:[#allocation2 + $0x170] sm:$0xff]
          %v908 = vpack.c.bf16 %v877, %v876
          %v909 = vpack.c.bf16 %v879, %v878
          %v910 = vpack.c.bf16 %v881, %v880
          %v911 = vpack.c.bf16 %v883, %v882
          %v912 = vpack.c.bf16 %v885, %v884
          %v913 = vpack.c.bf16 %v887, %v886
          %v914 = vpack.c.bf16 %v889, %v888
          %v915 = vpack.c.bf16 %v891, %v890
          %v916 = vpack.c.bf16 %v893, %v892
          %v917 = vpack.c.bf16 %v895, %v894
          %v918 = vpack.c.bf16 %v897, %v896
          %v919 = vpack.c.bf16 %v899, %v898
          %v920 = vpack.c.bf16 %v901, %v900
          %v921 = vpack.c.bf16 %v903, %v902
          %v922 = vpack.c.bf16 %v905, %v904
          %v923 = vpack.c.bf16 %v907, %v906
          %v924 = vld [vmem:[#allocation8] sm:$0xf]
          %v925 = vld [vmem:[#allocation8 + $0x4] sm:$0xf]
          %v926 = vld [vmem:[#allocation8 + $0x8] sm:$0xf]
          %v927 = vld [vmem:[#allocation8 + $0xc] sm:$0xf]
          %v928 = vld [vmem:[#allocation8 + $0x10] sm:$0xf]
          %v929 = vld [vmem:[#allocation8 + $0x14] sm:$0xf]
          %v930 = vld [vmem:[#allocation8 + $0x18] sm:$0xf]
          %v931 = vld [vmem:[#allocation8 + $0x1c] sm:$0xf]
          %v932 = vld [vmem:[#allocation8 + $0x20] sm:$0xf]
          %v933 = vld [vmem:[#allocation8 + $0x24] sm:$0xf]
          %v934 = vld [vmem:[#allocation8 + $0x28] sm:$0xf]
          %v935 = vld [vmem:[#allocation8 + $0x2c] sm:$0xf]
          %v936 = vld [vmem:[#allocation8 + $0x30] sm:$0xf]
          %v937 = vld [vmem:[#allocation8 + $0x34] sm:$0xf]
          %v938 = vld [vmem:[#allocation8 + $0x38] sm:$0xf]
          %v939 = vld [vmem:[#allocation8 + $0x3c] sm:$0xf]
          %v940 = vld [vmem:[#allocation2 + $0x1] sm:$0xff]
          %v941 = vld [vmem:[#allocation2 + $0x9] sm:$0xff]
          %v942 = vld [vmem:[#allocation2 + $0x19] sm:$0xff]
          %v943 = vld [vmem:[#allocation2 + $0x21] sm:$0xff]
          %v944 = vld [vmem:[#allocation2 + $0x31] sm:$0xff]
          %v945 = vld [vmem:[#allocation2 + $0x39] sm:$0xff]
          %v946 = vld [vmem:[#allocation2 + $0x49] sm:$0xff]
          %v947 = vld [vmem:[#allocation2 + $0x51] sm:$0xff]
          %v948 = vld [vmem:[#allocation2 + $0x61] sm:$0xff]
          %v949 = vld [vmem:[#allocation2 + $0x69] sm:$0xff]
          %v950 = vld [vmem:[#allocation2 + $0x79] sm:$0xff]
          %v951 = vld [vmem:[#allocation2 + $0x81] sm:$0xff]
          %v952 = vld [vmem:[#allocation2 + $0x91] sm:$0xff]
          %v953 = vld [vmem:[#allocation2 + $0x99] sm:$0xff]
          %v954 = vld [vmem:[#allocation2 + $0xa9] sm:$0xff]
          %v955 = vld [vmem:[#allocation2 + $0xb1] sm:$0xff]
          %v956 = vld [vmem:[#allocation2 + $0xc1] sm:$0xff]
          %v957 = vld [vmem:[#allocation2 + $0xc9] sm:$0xff]
          %v958 = vld [vmem:[#allocation2 + $0xd9] sm:$0xff]
          %v959 = vld [vmem:[#allocation2 + $0xe1] sm:$0xff]
          %v960 = vld [vmem:[#allocation2 + $0xf1] sm:$0xff]
          %v961 = vld [vmem:[#allocation2 + $0xf9] sm:$0xff]
          %v962 = vld [vmem:[#allocation2 + $0x109] sm:$0xff]
          %v963 = vld [vmem:[#allocation2 + $0x111] sm:$0xff]
          %v964 = vld [vmem:[#allocation2 + $0x121] sm:$0xff]
          %v965 = vld [vmem:[#allocation2 + $0x129] sm:$0xff]
          %v966 = vld [vmem:[#allocation2 + $0x139] sm:$0xff]
          %v967 = vld [vmem:[#allocation2 + $0x141] sm:$0xff]
          %v968 = vld [vmem:[#allocation2 + $0x151] sm:$0xff]
          %v969 = vld [vmem:[#allocation2 + $0x159] sm:$0xff]
          %v970 = vld [vmem:[#allocation2 + $0x169] sm:$0xff]
          %v971 = vld [vmem:[#allocation2 + $0x171] sm:$0xff]
          %v972 = vpack.c.bf16 %v941, %v940
          %v973 = vpack.c.bf16 %v943, %v942
          %v974 = vpack.c.bf16 %v945, %v944
          %v975 = vpack.c.bf16 %v947, %v946
          %v976 = vpack.c.bf16 %v949, %v948
          %v977 = vpack.c.bf16 %v951, %v950
          %v978 = vpack.c.bf16 %v953, %v952
          %v979 = vpack.c.bf16 %v955, %v954
          %v980 = vpack.c.bf16 %v957, %v956
          %v981 = vpack.c.bf16 %v959, %v958
          %v982 = vpack.c.bf16 %v961, %v960
          %v983 = vpack.c.bf16 %v963, %v962
          %v984 = vpack.c.bf16 %v965, %v964
          %v985 = vpack.c.bf16 %v967, %v966
          %v986 = vpack.c.bf16 %v969, %v968
          %v987 = vpack.c.bf16 %v971, %v970
          %v988 = vld [vmem:[#allocation8 + $0x40] sm:$0xf]
          %v989 = vld [vmem:[#allocation8 + $0x44] sm:$0xf]
          %v990 = vld [vmem:[#allocation8 + $0x48] sm:$0xf]
          %v991 = vld [vmem:[#allocation8 + $0x4c] sm:$0xf]
          %v992 = vld [vmem:[#allocation8 + $0x50] sm:$0xf]
          %v993 = vld [vmem:[#allocation8 + $0x54] sm:$0xf]
          %v994 = vld [vmem:[#allocation8 + $0x58] sm:$0xf]
          %v995 = vld [vmem:[#allocation8 + $0x5c] sm:$0xf]
          %v996 = vld [vmem:[#allocation8 + $0x60] sm:$0xf]
          %v997 = vld [vmem:[#allocation8 + $0x64] sm:$0xf]
          %v998 = vld [vmem:[#allocation8 + $0x68] sm:$0xf]
          %v999 = vld [vmem:[#allocation8 + $0x6c] sm:$0xf]
          %v1000 = vld [vmem:[#allocation8 + $0x70] sm:$0xf]
          %v1001 = vld [vmem:[#allocation8 + $0x74] sm:$0xf]
          %v1002 = vld [vmem:[#allocation8 + $0x78] sm:$0xf]
          %v1003 = vld [vmem:[#allocation8 + $0x7c] sm:$0xf]
          %v1020 = vunpack.c.l.b16 %v988
          %v1021 = vunpack.c.l.b16 %v989
          %v1022 = vunpack.c.l.b16 %v990
          %v1023 = vunpack.c.l.b16 %v991
          %v1024 = vunpack.c.l.b16 %v992
          %v1025 = vunpack.c.l.b16 %v993
          %v1026 = vunpack.c.l.b16 %v994
          %v1027 = vunpack.c.l.b16 %v995
          %v1028 = vunpack.c.l.b16 %v996
          %v1029 = vunpack.c.l.b16 %v997
          %v1030 = vunpack.c.l.b16 %v998
          %v1031 = vunpack.c.l.b16 %v999
          %v1032 = vunpack.c.l.b16 %v1000
          %v1033 = vunpack.c.l.b16 %v1001
          %v1034 = vunpack.c.l.b16 %v1002
          %v1035 = vunpack.c.l.b16 %v1003
          %v1036 = vpack.c.b16 %v1021, %v1020
          %v1037 = vpack.c.b16 %v1023, %v1022
          %v1038 = vpack.c.b16 %v1025, %v1024
          %v1039 = vpack.c.b16 %v1027, %v1026
          %v1040 = vpack.c.b16 %v1029, %v1028
          %v1041 = vpack.c.b16 %v1031, %v1030
          %v1042 = vpack.c.b16 %v1033, %v1032
          %v1043 = vpack.c.b16 %v1035, %v1034
          %1052 = vmatprep.subr.bf16.mxu0 0
          %1053 = vmatpush1.bf16.msra.mxu0 %v1036
          %1054 = vmatprep.subr.bf16.mxu0 0
          %1055 = vmatpush1.bf16.msra.mxu0 %v1037
          %1056 = vmatprep.subr.bf16.mxu0 0
          %1057 = vmatpush1.bf16.msra.mxu0 %v1038
          %1058 = vmatprep.subr.bf16.mxu0 0
          %1059 = vmatpush1.bf16.msra.mxu0 %v1039
          %1060 = vmatprep.subr.bf16.mxu0 0
          %1061 = vmatpush1.bf16.msra.mxu0 %v1040
          %1062 = vmatprep.subr.bf16.mxu0 0
          %1063 = vmatpush1.bf16.msra.mxu0 %v1041
          %1064 = vmatprep.subr.bf16.mxu0 0
          %1065 = vmatpush1.bf16.msra.mxu0 %v1042
          %1066 = vmatprep.subr.bf16.mxu0 0
          %1067 = vmatpush1.bf16.msra.mxu0 %v1043
          %1068 = vmatprep.subr.bf16.mxu0 0
          %1069 = vmatpush1.bf16.msra.mxu0 0
          %1070 = vmatprep.subr.bf16.mxu0 0
          %1071 = vmatpush1.bf16.msra.mxu0 0
          %1072 = vmatprep.subr.bf16.mxu0 0
          %1073 = vmatpush1.bf16.msra.mxu0 0
          %1074 = vmatprep.subr.bf16.mxu0 0
          %1075 = vmatpush1.bf16.msra.mxu0 0
          %1076 = vmatprep.subr.bf16.mxu0 0
          %1077 = vmatpush1.bf16.msra.mxu0 0
          %1078 = vmatprep.subr.bf16.mxu0 0
          %1079 = vmatpush1.bf16.msra.mxu0 0
          %1080 = vmatprep.subr.bf16.mxu0 0
          %1081 = vmatpush1.bf16.msra.mxu0 0
          %1082 = vmatprep.subr.bf16.mxu0 0
          %1083 = vmatpush1.bf16.msra.mxu0 0
          %1084 = vmatprep.mubr.bf16.mxu0 0
          %1085 = vmatmul.mubr.bf16.gmra.mrb[0].mxu0 %v972
          %v1086 = vpop.f32.mrb[0].mxu0
          %v1087 = vadd.f32 0.0, %v1086
          %v1088 = vpop.f32.mrb[0].mxu0
          %v1089 = vpop.f32.mrb[0].mxu0
          %v1090 = vadd.f32 0.0, %v1089
          %v1091 = vpop.f32.mrb[0].mxu0
          %1092 = vmatprep.mubr.bf16.mxu0 0
          %1093 = vmatmul.mubr.bf16.gmra.mrb[0].mxu0 %v973
          %v1094 = vpop.f32.mrb[0].mxu0
          %v1095 = vadd.f32 0.0, %v1094
          %v1096 = vpop.f32.mrb[0].mxu0
          %v1097 = vpop.f32.mrb[0].mxu0
          %v1098 = vadd.f32 0.0, %v1097
          %v1099 = vpop.f32.mrb[0].mxu0
          %1100 = vmatprep.mubr.bf16.mxu0 0
          %1101 = vmatmul.mubr.bf16.gmra.mrb[0].mxu0 %v974
          %v1102 = vpop.f32.mrb[0].mxu0
          %v1103 = vadd.f32 0.0, %v1102
          %v1104 = vpop.f32.mrb[0].mxu0
          %v1105 = vpop.f32.mrb[0].mxu0
          %v1106 = vadd.f32 0.0, %v1105
          %v1107 = vpop.f32.mrb[0].mxu0
          %1108 = vmatprep.mubr.bf16.mxu0 0
          %1109 = vmatmul.mubr.bf16.gmra.mrb[0].mxu0 %v975
          %v1110 = vpop.f32.mrb[0].mxu0
          %v1111 = vadd.f32 0.0, %v1110
          %v1112 = vpop.f32.mrb[0].mxu0
          %v1113 = vpop.f32.mrb[0].mxu0
          %v1114 = vadd.f32 0.0, %v1113
          %v1115 = vpop.f32.mrb[0].mxu0
          %1116 = vmatprep.mubr.bf16.mxu0 0
          %1117 = vmatmul.mubr.bf16.gmra.mrb[0].mxu0 %v976
          %v1118 = vpop.f32.mrb[0].mxu0
          %v1119 = vadd.f32 0.0, %v1118
          %v1120 = vpop.f32.mrb[0].mxu0
          %v1121 = vpop.f32.mrb[0].mxu0
          %v1122 = vadd.f32 0.0, %v1121
          %v1123 = vpop.f32.mrb[0].mxu0
          %1124 = vmatprep.mubr.bf16.mxu0 0
          %1125 = vmatmul.mubr.bf16.gmra.mrb[0].mxu0 %v977
          %v1126 = vpop.f32.mrb[0].mxu0
          %v1127 = vadd.f32 0.0, %v1126
          %v1128 = vpop.f32.mrb[0].mxu0
          %v1129 = vpop.f32.mrb[0].mxu0
          %v1130 = vadd.f32 0.0, %v1129
          %v1131 = vpop.f32.mrb[0].mxu0
          %1132 = vmatprep.mubr.bf16.mxu0 0
          %1133 = vmatmul.mubr.bf16.gmra.mrb[0].mxu0 %v978
          %v1134 = vpop.f32.mrb[0].mxu0
          %v1135 = vadd.f32 0.0, %v1134
          %v1136 = vpop.f32.mrb[0].mxu0
          %v1137 = vpop.f32.mrb[0].mxu0
          %v1138 = vadd.f32 0.0, %v1137
          %v1139 = vpop.f32.mrb[0].mxu0
          %1140 = vmatprep.mubr.bf16.mxu0 0
          %1141 = vmatmul.mubr.bf16.gmra.mrb[0].mxu0 %v979
          %v1142 = vpop.f32.mrb[0].mxu0
          %v1143 = vadd.f32 0.0, %v1142
          %v1144 = vpop.f32.mrb[0].mxu0
          %v1145 = vpop.f32.mrb[0].mxu0
          %v1146 = vadd.f32 0.0, %v1145
          %v1147 = vpop.f32.mrb[0].mxu0
          %1148 = vmatprep.mubr.bf16.mxu0 0
          %1149 = vmatmul.mubr.bf16.gmra.mrb[0].mxu0 %v980
          %v1150 = vpop.f32.mrb[0].mxu0
          %v1151 = vadd.f32 0.0, %v1150
          %v1152 = vpop.f32.mrb[0].mxu0
          %v1153 = vpop.f32.mrb[0].mxu0
          %v1154 = vadd.f32 0.0, %v1153
          %v1155 = vpop.f32.mrb[0].mxu0
          %1156 = vmatprep.mubr.bf16.mxu0 0
          %1157 = vmatmul.mubr.bf16.gmra.mrb[0].mxu0 %v981
          %v1158 = vpop.f32.mrb[0].mxu0
          %v1159 = vadd.f32 0.0, %v1158
          %v1160 = vpop.f32.mrb[0].mxu0
          %v1161 = vpop.f32.mrb[0].mxu0
          %v1162 = vadd.f32 0.0, %v1161
          %v1163 = vpop.f32.mrb[0].mxu0
          %1164 = vmatprep.mubr.bf16.mxu0 0
          %1165 = vmatmul.mubr.bf16.gmra.mrb[0].mxu0 %v982
          %v1166 = vpop.f32.mrb[0].mxu0
          %v1167 = vadd.f32 0.0, %v1166
          %v1168 = vpop.f32.mrb[0].mxu0
          %v1169 = vpop.f32.mrb[0].mxu0
          %v1170 = vadd.f32 0.0, %v1169
          %v1171 = vpop.f32.mrb[0].mxu0
          %1172 = vmatprep.mubr.bf16.mxu0 0
          %1173 = vmatmul.mubr.bf16.gmra.mrb[0].mxu0 %v983
          %v1174 = vpop.f32.mrb[0].mxu0
          %v1175 = vadd.f32 0.0, %v1174
          %v1176 = vpop.f32.mrb[0].mxu0
          %v1177 = vpop.f32.mrb[0].mxu0
          %v1178 = vadd.f32 0.0, %v1177
          %v1179 = vpop.f32.mrb[0].mxu0
          %1180 = vmatprep.mubr.bf16.mxu0 0
          %1181 = vmatmul.mubr.bf16.gmra.mrb[0].mxu0 %v984
          %v1182 = vpop.f32.mrb[0].mxu0
          %v1183 = vadd.f32 0.0, %v1182
          %v1184 = vpop.f32.mrb[0].mxu0
          %v1185 = vpop.f32.mrb[0].mxu0
          %v1186 = vadd.f32 0.0, %v1185
          %v1187 = vpop.f32.mrb[0].mxu0
          %1188 = vmatprep.mubr.bf16.mxu0 0
          %1189 = vmatmul.mubr.bf16.gmra.mrb[0].mxu0 %v985
          %v1190 = vpop.f32.mrb[0].mxu0
          %v1191 = vadd.f32 0.0, %v1190
          %v1192 = vpop.f32.mrb[0].mxu0
          %v1193 = vpop.f32.mrb[0].mxu0
          %v1194 = vadd.f32 0.0, %v1193
          %v1195 = vpop.f32.mrb[0].mxu0
          %1196 = vmatprep.mubr.bf16.mxu0 0
          %1197 = vmatmul.mubr.bf16.gmra.mrb[0].mxu0 %v986
          %v1198 = vpop.f32.mrb[0].mxu0
          %v1199 = vadd.f32 0.0, %v1198
          %v1200 = vpop.f32.mrb[0].mxu0
          %v1201 = vpop.f32.mrb[0].mxu0
          %v1202 = vadd.f32 0.0, %v1201
          %v1203 = vpop.f32.mrb[0].mxu0
          %1204 = vmatprep.mubr.bf16.mxu0 0
          %1205 = vmatmul.mubr.bf16.gmra.mrb[0].mxu0 %v987
          %v1206 = vpop.f32.mrb[0].mxu0
          %v1207 = vadd.f32 0.0, %v1206
          %v1208 = vpop.f32.mrb[0].mxu0
          %v1209 = vpop.f32.mrb[0].mxu0
          %v1210 = vadd.f32 0.0, %v1209
          %v1211 = vpop.f32.mrb[0].mxu0
          %1212 = vdwg.mxu0
          %v1229 = vunpack.c.l.b16 %v924
          %v1230 = vunpack.c.l.b16 %v925
          %v1231 = vunpack.c.l.b16 %v926
          %v1232 = vunpack.c.l.b16 %v927
          %v1233 = vunpack.c.l.b16 %v928
          %v1234 = vunpack.c.l.b16 %v929
          %v1235 = vunpack.c.l.b16 %v930
          %v1236 = vunpack.c.l.b16 %v931
          %v1237 = vunpack.c.l.b16 %v932
          %v1238 = vunpack.c.l.b16 %v933
          %v1239 = vunpack.c.l.b16 %v934
          %v1240 = vunpack.c.l.b16 %v935
          %v1241 = vunpack.c.l.b16 %v936
          %v1242 = vunpack.c.l.b16 %v937
          %v1243 = vunpack.c.l.b16 %v938
          %v1244 = vunpack.c.l.b16 %v939
          %v1245 = vpack.c.b16 %v1230, %v1229
          %v1246 = vpack.c.b16 %v1232, %v1231
          %v1247 = vpack.c.b16 %v1234, %v1233
          %v1248 = vpack.c.b16 %v1236, %v1235
          %v1249 = vpack.c.b16 %v1238, %v1237
          %v1250 = vpack.c.b16 %v1240, %v1239
          %v1251 = vpack.c.b16 %v1242, %v1241
          %v1252 = vpack.c.b16 %v1244, %v1243
          %1261 = vmatprep.subr.bf16.mxu0 0
          %1262 = vmatpush1.bf16.msra.mxu0 %v1245
          %1263 = vmatprep.subr.bf16.mxu0 0
          %1264 = vmatpush1.bf16.msra.mxu0 %v1246
          %1265 = vmatprep.subr.bf16.mxu0 0
          %1266 = vmatpush1.bf16.msra.mxu0 %v1247
          %1267 = vmatprep.subr.bf16.mxu0 0
          %1268 = vmatpush1.bf16.msra.mxu0 %v1248
          %1269 = vmatprep.subr.bf16.mxu0 0
          %1270 = vmatpush1.bf16.msra.mxu0 %v1249
          %1271 = vmatprep.subr.bf16.mxu0 0
          %1272 = vmatpush1.bf16.msra.mxu0 %v1250
          %1273 = vmatprep.subr.bf16.mxu0 0
          %1274 = vmatpush1.bf16.msra.mxu0 %v1251
          %1275 = vmatprep.subr.bf16.mxu0 0
          %1276 = vmatpush1.bf16.msra.mxu0 %v1252
          %1277 = vmatprep.subr.bf16.mxu0 0
          %1278 = vmatpush1.bf16.msra.mxu0 0
          %1279 = vmatprep.subr.bf16.mxu0 0
          %1280 = vmatpush1.bf16.msra.mxu0 0
          %1281 = vmatprep.subr.bf16.mxu0 0
          %1282 = vmatpush1.bf16.msra.mxu0 0
          %1283 = vmatprep.subr.bf16.mxu0 0
          %1284 = vmatpush1.bf16.msra.mxu0 0
          %1285 = vmatprep.subr.bf16.mxu0 0
          %1286 = vmatpush1.bf16.msra.mxu0 0
          %1287 = vmatprep.subr.bf16.mxu0 0
          %1288 = vmatpush1.bf16.msra.mxu0 0
          %1289 = vmatprep.subr.bf16.mxu0 0
          %1290 = vmatpush1.bf16.msra.mxu0 0
          %1291 = vmatprep.subr.bf16.mxu0 0
          %1292 = vmatpush1.bf16.msra.mxu0 0
          %1293 = vmatprep.mubr.bf16.mxu0 0
          %1294 = vmatmul.mubr.bf16.gmra.mrb[0].mxu0 %v908
          %v1295 = vpop.f32.mrb[0].mxu0
          %v1296 = vadd.f32 %v1087, %v1295
          %v1297 = vpop.f32.mrb[0].mxu0
          %v1298 = vpop.f32.mrb[0].mxu0
          %v1299 = vadd.f32 %v1090, %v1298
          %v1300 = vpop.f32.mrb[0].mxu0
          %1301 = vmatprep.mubr.bf16.mxu0 0
          %1302 = vmatmul.mubr.bf16.gmra.mrb[0].mxu0 %v909
          %v1303 = vpop.f32.mrb[0].mxu0
          %v1304 = vadd.f32 %v1095, %v1303
          %v1305 = vpop.f32.mrb[0].mxu0
          %v1306 = vpop.f32.mrb[0].mxu0
          %v1307 = vadd.f32 %v1098, %v1306
          %v1308 = vpop.f32.mrb[0].mxu0
          %1309 = vmatprep.mubr.bf16.mxu0 0
          %1310 = vmatmul.mubr.bf16.gmra.mrb[0].mxu0 %v910
          %v1311 = vpop.f32.mrb[0].mxu0
          %v1312 = vadd.f32 %v1103, %v1311
          %v1313 = vpop.f32.mrb[0].mxu0
          %v1314 = vpop.f32.mrb[0].mxu0
          %v1315 = vadd.f32 %v1106, %v1314
          %v1316 = vpop.f32.mrb[0].mxu0
          %1317 = vmatprep.mubr.bf16.mxu0 0
          %1318 = vmatmul.mubr.bf16.gmra.mrb[0].mxu0 %v911
          %v1319 = vpop.f32.mrb[0].mxu0
          %v1320 = vadd.f32 %v1111, %v1319
          %v1321 = vpop.f32.mrb[0].mxu0
          %v1322 = vpop.f32.mrb[0].mxu0
          %v1323 = vadd.f32 %v1114, %v1322
          %v1324 = vpop.f32.mrb[0].mxu0
          %1325 = vmatprep.mubr.bf16.mxu0 0
          %1326 = vmatmul.mubr.bf16.gmra.mrb[0].mxu0 %v912
          %v1327 = vpop.f32.mrb[0].mxu0
          %v1328 = vadd.f32 %v1119, %v1327
          %v1329 = vpop.f32.mrb[0].mxu0
          %v1330 = vpop.f32.mrb[0].mxu0
          %v1331 = vadd.f32 %v1122, %v1330
          %v1332 = vpop.f32.mrb[0].mxu0
          %1333 = vmatprep.mubr.bf16.mxu0 0
          %1334 = vmatmul.mubr.bf16.gmra.mrb[0].mxu0 %v913
          %v1335 = vpop.f32.mrb[0].mxu0
          %v1336 = vadd.f32 %v1127, %v1335
          %v1337 = vpop.f32.mrb[0].mxu0
          %v1338 = vpop.f32.mrb[0].mxu0
          %v1339 = vadd.f32 %v1130, %v1338
          %v1340 = vpop.f32.mrb[0].mxu0
          %1341 = vmatprep.mubr.bf16.mxu0 0
          %1342 = vmatmul.mubr.bf16.gmra.mrb[0].mxu0 %v914
          %v1343 = vpop.f32.mrb[0].mxu0
          %v1344 = vadd.f32 %v1135, %v1343
          %v1345 = vpop.f32.mrb[0].mxu0
          %v1346 = vpop.f32.mrb[0].mxu0
          %v1347 = vadd.f32 %v1138, %v1346
          %v1348 = vpop.f32.mrb[0].mxu0
          %1349 = vmatprep.mubr.bf16.mxu0 0
          %1350 = vmatmul.mubr.bf16.gmra.mrb[0].mxu0 %v915
          %v1351 = vpop.f32.mrb[0].mxu0
          %v1352 = vadd.f32 %v1143, %v1351
          %v1353 = vpop.f32.mrb[0].mxu0
          %v1354 = vpop.f32.mrb[0].mxu0
          %v1355 = vadd.f32 %v1146, %v1354
          %v1356 = vpop.f32.mrb[0].mxu0
          %1357 = vmatprep.mubr.bf16.mxu0 0
          %1358 = vmatmul.mubr.bf16.gmra.mrb[0].mxu0 %v916
          %v1359 = vpop.f32.mrb[0].mxu0
          %v1360 = vadd.f32 %v1151, %v1359
          %v1361 = vpop.f32.mrb[0].mxu0
          %v1362 = vpop.f32.mrb[0].mxu0
          %v1363 = vadd.f32 %v1154, %v1362
          %v1364 = vpop.f32.mrb[0].mxu0
          %1365 = vmatprep.mubr.bf16.mxu0 0
          %1366 = vmatmul.mubr.bf16.gmra.mrb[0].mxu0 %v917
          %v1367 = vpop.f32.mrb[0].mxu0
          %v1368 = vadd.f32 %v1159, %v1367
          %v1369 = vpop.f32.mrb[0].mxu0
          %v1370 = vpop.f32.mrb[0].mxu0
          %v1371 = vadd.f32 %v1162, %v1370
          %v1372 = vpop.f32.mrb[0].mxu0
          %1373 = vmatprep.mubr.bf16.mxu0 0
          %1374 = vmatmul.mubr.bf16.gmra.mrb[0].mxu0 %v918
          %v1375 = vpop.f32.mrb[0].mxu0
          %v1376 = vadd.f32 %v1167, %v1375
          %v1377 = vpop.f32.mrb[0].mxu0
          %v1378 = vpop.f32.mrb[0].mxu0
          %v1379 = vadd.f32 %v1170, %v1378
          %v1380 = vpop.f32.mrb[0].mxu0
          %1381 = vmatprep.mubr.bf16.mxu0 0
          %1382 = vmatmul.mubr.bf16.gmra.mrb[0].mxu0 %v919
          %v1383 = vpop.f32.mrb[0].mxu0
          %v1384 = vadd.f32 %v1175, %v1383
          %v1385 = vpop.f32.mrb[0].mxu0
          %v1386 = vpop.f32.mrb[0].mxu0
          %v1387 = vadd.f32 %v1178, %v1386
          %v1388 = vpop.f32.mrb[0].mxu0
          %1389 = vmatprep.mubr.bf16.mxu0 0
          %1390 = vmatmul.mubr.bf16.gmra.mrb[0].mxu0 %v920
          %v1391 = vpop.f32.mrb[0].mxu0
          %v1392 = vadd.f32 %v1183, %v1391
          %v1393 = vpop.f32.mrb[0].mxu0
          %v1394 = vpop.f32.mrb[0].mxu0
          %v1395 = vadd.f32 %v1186, %v1394
          %v1396 = vpop.f32.mrb[0].mxu0
          %1397 = vmatprep.mubr.bf16.mxu0 0
          %1398 = vmatmul.mubr.bf16.gmra.mrb[0].mxu0 %v921
          %v1399 = vpop.f32.mrb[0].mxu0
          %v1400 = vadd.f32 %v1191, %v1399
          %v1401 = vpop.f32.mrb[0].mxu0
          %v1402 = vpop.f32.mrb[0].mxu0
          %v1403 = vadd.f32 %v1194, %v1402
          %v1404 = vpop.f32.mrb[0].mxu0
          %1405 = vmatprep.mubr.bf16.mxu0 0
          %1406 = vmatmul.mubr.bf16.gmra.mrb[0].mxu0 %v922
          %v1407 = vpop.f32.mrb[0].mxu0
          %v1408 = vadd.f32 %v1199, %v1407
          %v1409 = vpop.f32.mrb[0].mxu0
          %v1410 = vpop.f32.mrb[0].mxu0
          %v1411 = vadd.f32 %v1202, %v1410
          %v1412 = vpop.f32.mrb[0].mxu0
          %1413 = vmatprep.mubr.bf16.mxu0 0
          %1414 = vmatmul.mubr.bf16.gmra.mrb[0].mxu0 %v923
          %v1415 = vpop.f32.mrb[0].mxu0
          %v1416 = vadd.f32 %v1207, %v1415
          %v1417 = vpop.f32.mrb[0].mxu0
          %v1418 = vpop.f32.mrb[0].mxu0
          %v1419 = vadd.f32 %v1210, %v1418
          %v1420 = vpop.f32.mrb[0].mxu0
          %1421 = vdwg.mxu0
          %v1422 = vld [vmem:[#allocation2 + $0x2] sm:$0xff]
          %v1423 = vld [vmem:[#allocation2 + $0xa] sm:$0xff]
          %v1424 = vld [vmem:[#allocation2 + $0x1a] sm:$0xff]
          %v1425 = vld [vmem:[#allocation2 + $0x22] sm:$0xff]
          %v1426 = vld [vmem:[#allocation2 + $0x32] sm:$0xff]
          %v1427 = vld [vmem:[#allocation2 + $0x3a] sm:$0xff]
          %v1428 = vld [vmem:[#allocation2 + $0x4a] sm:$0xff]
          %v1429 = vld [vmem:[#allocation2 + $0x52] sm:$0xff]
          %v1430 = vld [vmem:[#allocation2 + $0x62] sm:$0xff]
          %v1431 = vld [vmem:[#allocation2 + $0x6a] sm:$0xff]
          %v1432 = vld [vmem:[#allocation2 + $0x7a] sm:$0xff]
          %v1433 = vld [vmem:[#allocation2 + $0x82] sm:$0xff]
          %v1434 = vld [vmem:[#allocation2 + $0x92] sm:$0xff]
          %v1435 = vld [vmem:[#allocation2 + $0x9a] sm:$0xff]
          %v1436 = vld [vmem:[#allocation2 + $0xaa] sm:$0xff]
          %v1437 = vld [vmem:[#allocation2 + $0xb2] sm:$0xff]
          %v1438 = vld [vmem:[#allocation2 + $0xc2] sm:$0xff]
          %v1439 = vld [vmem:[#allocation2 + $0xca] sm:$0xff]
          %v1440 = vld [vmem:[#allocation2 + $0xda] sm:$0xff]
          %v1441 = vld [vmem:[#allocation2 + $0xe2] sm:$0xff]
          %v1442 = vld [vmem:[#allocation2 + $0xf2] sm:$0xff]
          %v1443 = vld [vmem:[#allocation2 + $0xfa] sm:$0xff]
          %v1444 = vld [vmem:[#allocation2 + $0x10a] sm:$0xff]
          %v1445 = vld [vmem:[#allocation2 + $0x112] sm:$0xff]
          %v1446 = vld [vmem:[#allocation2 + $0x122] sm:$0xff]
          %v1447 = vld [vmem:[#allocation2 + $0x12a] sm:$0xff]
          %v1448 = vld [vmem:[#allocation2 + $0x13a] sm:$0xff]
          %v1449 = vld [vmem:[#allocation2 + $0x142] sm:$0xff]
          %v1450 = vld [vmem:[#allocation2 + $0x152] sm:$0xff]
          %v1451 = vld [vmem:[#allocation2 + $0x15a] sm:$0xff]
          %v1452 = vld [vmem:[#allocation2 + $0x16a] sm:$0xff]
          %v1453 = vld [vmem:[#allocation2 + $0x172] sm:$0xff]
          %v1454 = vpack.c.bf16 %v1423, %v1422
          %v1455 = vpack.c.bf16 %v1425, %v1424
          %v1456 = vpack.c.bf16 %v1427, %v1426
          %v1457 = vpack.c.bf16 %v1429, %v1428
          %v1458 = vpack.c.bf16 %v1431, %v1430
          %v1459 = vpack.c.bf16 %v1433, %v1432
          %v1460 = vpack.c.bf16 %v1435, %v1434
          %v1461 = vpack.c.bf16 %v1437, %v1436
          %v1462 = vpack.c.bf16 %v1439, %v1438
          %v1463 = vpack.c.bf16 %v1441, %v1440
          %v1464 = vpack.c.bf16 %v1443, %v1442
          %v1465 = vpack.c.bf16 %v1445, %v1444
          %v1466 = vpack.c.bf16 %v1447, %v1446
          %v1467 = vpack.c.bf16 %v1449, %v1448
          %v1468 = vpack.c.bf16 %v1451, %v1450
          %v1469 = vpack.c.bf16 %v1453, %v1452
          %v1470 = vld [vmem:[#allocation8 + $0x80] sm:$0xf]
          %v1471 = vld [vmem:[#allocation8 + $0x84] sm:$0xf]
          %v1472 = vld [vmem:[#allocation8 + $0x88] sm:$0xf]
          %v1473 = vld [vmem:[#allocation8 + $0x8c] sm:$0xf]
          %v1474 = vld [vmem:[#allocation8 + $0x90] sm:$0xf]
          %v1475 = vld [vmem:[#allocation8 + $0x94] sm:$0xf]
          %v1476 = vld [vmem:[#allocation8 + $0x98] sm:$0xf]
          %v1477 = vld [vmem:[#allocation8 + $0x9c] sm:$0xf]
          %v1478 = vld [vmem:[#allocation8 + $0xa0] sm:$0xf]
          %v1479 = vld [vmem:[#allocation8 + $0xa4] sm:$0xf]
          %v1480 = vld [vmem:[#allocation8 + $0xa8] sm:$0xf]
          %v1481 = vld [vmem:[#allocation8 + $0xac] sm:$0xf]
          %v1482 = vld [vmem:[#allocation8 + $0xb0] sm:$0xf]
          %v1483 = vld [vmem:[#allocation8 + $0xb4] sm:$0xf]
          %v1484 = vld [vmem:[#allocation8 + $0xb8] sm:$0xf]
          %v1485 = vld [vmem:[#allocation8 + $0xbc] sm:$0xf]
          %v1502 = vunpack.c.l.b16 %v1470
          %v1503 = vunpack.c.l.b16 %v1471
          %v1504 = vunpack.c.l.b16 %v1472
          %v1505 = vunpack.c.l.b16 %v1473
          %v1506 = vunpack.c.l.b16 %v1474
          %v1507 = vunpack.c.l.b16 %v1475
          %v1508 = vunpack.c.l.b16 %v1476
          %v1509 = vunpack.c.l.b16 %v1477
          %v1510 = vunpack.c.l.b16 %v1478
          %v1511 = vunpack.c.l.b16 %v1479
          %v1512 = vunpack.c.l.b16 %v1480
          %v1513 = vunpack.c.l.b16 %v1481
          %v1514 = vunpack.c.l.b16 %v1482
          %v1515 = vunpack.c.l.b16 %v1483
          %v1516 = vunpack.c.l.b16 %v1484
          %v1517 = vunpack.c.l.b16 %v1485
          %v1518 = vpack.c.b16 %v1503, %v1502
          %v1519 = vpack.c.b16 %v1505, %v1504
          %v1520 = vpack.c.b16 %v1507, %v1506
          %v1521 = vpack.c.b16 %v1509, %v1508
          %v1522 = vpack.c.b16 %v1511, %v1510
          %v1523 = vpack.c.b16 %v1513, %v1512
          %v1524 = vpack.c.b16 %v1515, %v1514
          %v1525 = vpack.c.b16 %v1517, %v1516
          %1534 = vmatprep.subr.bf16.mxu0 0
          %1535 = vmatpush1.bf16.msra.mxu0 %v1518
          %1536 = vmatprep.subr.bf16.mxu0 0
          %1537 = vmatpush1.bf16.msra.mxu0 %v1519
          %1538 = vmatprep.subr.bf16.mxu0 0
          %1539 = vmatpush1.bf16.msra.mxu0 %v1520
          %1540 = vmatprep.subr.bf16.mxu0 0
          %1541 = vmatpush1.bf16.msra.mxu0 %v1521
          %1542 = vmatprep.subr.bf16.mxu0 0
          %1543 = vmatpush1.bf16.msra.mxu0 %v1522
          %1544 = vmatprep.subr.bf16.mxu0 0
          %1545 = vmatpush1.bf16.msra.mxu0 %v1523
          %1546 = vmatprep.subr.bf16.mxu0 0
          %1547 = vmatpush1.bf16.msra.mxu0 %v1524
          %1548 = vmatprep.subr.bf16.mxu0 0
          %1549 = vmatpush1.bf16.msra.mxu0 %v1525
          %1550 = vmatprep.subr.bf16.mxu0 0
          %1551 = vmatpush1.bf16.msra.mxu0 0
          %1552 = vmatprep.subr.bf16.mxu0 0
          %1553 = vmatpush1.bf16.msra.mxu0 0
          %1554 = vmatprep.subr.bf16.mxu0 0
          %1555 = vmatpush1.bf16.msra.mxu0 0
          %1556 = vmatprep.subr.bf16.mxu0 0
          %1557 = vmatpush1.bf16.msra.mxu0 0
          %1558 = vmatprep.subr.bf16.mxu0 0
          %1559 = vmatpush1.bf16.msra.mxu0 0
          %1560 = vmatprep.subr.bf16.mxu0 0
          %1561 = vmatpush1.bf16.msra.mxu0 0
          %1562 = vmatprep.subr.bf16.mxu0 0
          %1563 = vmatpush1.bf16.msra.mxu0 0
          %1564 = vmatprep.subr.bf16.mxu0 0
          %1565 = vmatpush1.bf16.msra.mxu0 0
          %1566 = vmatprep.mubr.bf16.mxu0 0
          %1567 = vmatmul.mubr.bf16.gmra.mrb[0].mxu0 %v1454
          %v1568 = vpop.f32.mrb[0].mxu0
          %v1569 = vadd.f32 0.0, %v1568
          %v1570 = vpop.f32.mrb[0].mxu0
          %v1571 = vpop.f32.mrb[0].mxu0
          %v1572 = vadd.f32 0.0, %v1571
          %v1573 = vpop.f32.mrb[0].mxu0
          %1574 = vmatprep.mubr.bf16.mxu0 0
          %1575 = vmatmul.mubr.bf16.gmra.mrb[0].mxu0 %v1455
          %v1576 = vpop.f32.mrb[0].mxu0
          %v1577 = vadd.f32 0.0, %v1576
          %v1578 = vpop.f32.mrb[0].mxu0
          %v1579 = vpop.f32.mrb[0].mxu0
          %v1580 = vadd.f32 0.0, %v1579
          %v1581 = vpop.f32.mrb[0].mxu0
          %1582 = vmatprep.mubr.bf16.mxu0 0
          %1583 = vmatmul.mubr.bf16.gmra.mrb[0].mxu0 %v1456
          %v1584 = vpop.f32.mrb[0].mxu0
          %v1585 = vadd.f32 0.0, %v1584
          %v1586 = vpop.f32.mrb[0].mxu0
          %v1587 = vpop.f32.mrb[0].mxu0
          %v1588 = vadd.f32 0.0, %v1587
          %v1589 = vpop.f32.mrb[0].mxu0
          %1590 = vmatprep.mubr.bf16.mxu0 0
          %1591 = vmatmul.mubr.bf16.gmra.mrb[0].mxu0 %v1457
          %v1592 = vpop.f32.mrb[0].mxu0
          %v1593 = vadd.f32 0.0, %v1592
          %v1594 = vpop.f32.mrb[0].mxu0
          %v1595 = vpop.f32.mrb[0].mxu0
          %v1596 = vadd.f32 0.0, %v1595
          %v1597 = vpop.f32.mrb[0].mxu0
          %1598 = vmatprep.mubr.bf16.mxu0 0
          %1599 = vmatmul.mubr.bf16.gmra.mrb[0].mxu0 %v1458
          %v1600 = vpop.f32.mrb[0].mxu0
          %v1601 = vadd.f32 0.0, %v1600
          %v1602 = vpop.f32.mrb[0].mxu0
          %v1603 = vpop.f32.mrb[0].mxu0
          %v1604 = vadd.f32 0.0, %v1603
          %v1605 = vpop.f32.mrb[0].mxu0
          %1606 = vmatprep.mubr.bf16.mxu0 0
          %1607 = vmatmul.mubr.bf16.gmra.mrb[0].mxu0 %v1459
          %v1608 = vpop.f32.mrb[0].mxu0
          %v1609 = vadd.f32 0.0, %v1608
          %v1610 = vpop.f32.mrb[0].mxu0
          %v1611 = vpop.f32.mrb[0].mxu0
          %v1612 = vadd.f32 0.0, %v1611
          %v1613 = vpop.f32.mrb[0].mxu0
          %1614 = vmatprep.mubr.bf16.mxu0 0
          %1615 = vmatmul.mubr.bf16.gmra.mrb[0].mxu0 %v1460
          %v1616 = vpop.f32.mrb[0].mxu0
          %v1617 = vadd.f32 0.0, %v1616
          %v1618 = vpop.f32.mrb[0].mxu0
          %v1619 = vpop.f32.mrb[0].mxu0
          %v1620 = vadd.f32 0.0, %v1619
          %v1621 = vpop.f32.mrb[0].mxu0
          %1622 = vmatprep.mubr.bf16.mxu0 0
          %1623 = vmatmul.mubr.bf16.gmra.mrb[0].mxu0 %v1461
          %v1624 = vpop.f32.mrb[0].mxu0
          %v1625 = vadd.f32 0.0, %v1624
          %v1626 = vpop.f32.mrb[0].mxu0
          %v1627 = vpop.f32.mrb[0].mxu0
          %v1628 = vadd.f32 0.0, %v1627
          %v1629 = vpop.f32.mrb[0].mxu0
          %1630 = vmatprep.mubr.bf16.mxu0 0
          %1631 = vmatmul.mubr.bf16.gmra.mrb[0].mxu0 %v1462
          %v1632 = vpop.f32.mrb[0].mxu0
          %v1633 = vadd.f32 0.0, %v1632
          %v1634 = vpop.f32.mrb[0].mxu0
          %v1635 = vpop.f32.mrb[0].mxu0
          %v1636 = vadd.f32 0.0, %v1635
          %v1637 = vpop.f32.mrb[0].mxu0
          %1638 = vmatprep.mubr.bf16.mxu0 0
          %1639 = vmatmul.mubr.bf16.gmra.mrb[0].mxu0 %v1463
          %v1640 = vpop.f32.mrb[0].mxu0
          %v1641 = vadd.f32 0.0, %v1640
          %v1642 = vpop.f32.mrb[0].mxu0
          %v1643 = vpop.f32.mrb[0].mxu0
          %v1644 = vadd.f32 0.0, %v1643
          %v1645 = vpop.f32.mrb[0].mxu0
          %1646 = vmatprep.mubr.bf16.mxu0 0
          %1647 = vmatmul.mubr.bf16.gmra.mrb[0].mxu0 %v1464
          %v1648 = vpop.f32.mrb[0].mxu0
          %v1649 = vadd.f32 0.0, %v1648
          %v1650 = vpop.f32.mrb[0].mxu0
          %v1651 = vpop.f32.mrb[0].mxu0
          %v1652 = vadd.f32 0.0, %v1651
          %v1653 = vpop.f32.mrb[0].mxu0
          %1654 = vmatprep.mubr.bf16.mxu0 0
          %1655 = vmatmul.mubr.bf16.gmra.mrb[0].mxu0 %v1465
          %v1656 = vpop.f32.mrb[0].mxu0
          %v1657 = vadd.f32 0.0, %v1656
          %v1658 = vpop.f32.mrb[0].mxu0
          %v1659 = vpop.f32.mrb[0].mxu0
          %v1660 = vadd.f32 0.0, %v1659
          %v1661 = vpop.f32.mrb[0].mxu0
          %1662 = vmatprep.mubr.bf16.mxu0 0
          %1663 = vmatmul.mubr.bf16.gmra.mrb[0].mxu0 %v1466
          %v1664 = vpop.f32.mrb[0].mxu0
          %v1665 = vadd.f32 0.0, %v1664
          %v1666 = vpop.f32.mrb[0].mxu0
          %v1667 = vpop.f32.mrb[0].mxu0
          %v1668 = vadd.f32 0.0, %v1667
          %v1669 = vpop.f32.mrb[0].mxu0
          %1670 = vmatprep.mubr.bf16.mxu0 0
          %1671 = vmatmul.mubr.bf16.gmra.mrb[0].mxu0 %v1467
          %v1672 = vpop.f32.mrb[0].mxu0
          %v1673 = vadd.f32 0.0, %v1672
          %v1674 = vpop.f32.mrb[0].mxu0
          %v1675 = vpop.f32.mrb[0].mxu0
          %v1676 = vadd.f32 0.0, %v1675
          %v1677 = vpop.f32.mrb[0].mxu0
          %1678 = vmatprep.mubr.bf16.mxu0 0
          %1679 = vmatmul.mubr.bf16.gmra.mrb[0].mxu0 %v1468
          %v1680 = vpop.f32.mrb[0].mxu0
          %v1681 = vadd.f32 0.0, %v1680
          %v1682 = vpop.f32.mrb[0].mxu0
          %v1683 = vpop.f32.mrb[0].mxu0
          %v1684 = vadd.f32 0.0, %v1683
          %v1685 = vpop.f32.mrb[0].mxu0
          %1686 = vmatprep.mubr.bf16.mxu0 0
          %1687 = vmatmul.mubr.bf16.gmra.mrb[0].mxu0 %v1469
          %v1688 = vpop.f32.mrb[0].mxu0
          %v1689 = vadd.f32 0.0, %v1688
          %v1690 = vpop.f32.mrb[0].mxu0
          %v1691 = vpop.f32.mrb[0].mxu0
          %v1692 = vadd.f32 0.0, %v1691
          %v1693 = vpop.f32.mrb[0].mxu0
          %1694 = vdwg.mxu0
          %v1695 = vadd.f32 %v1296, %v1569
          %v1696 = vadd.f32 %v1299, %v1572
          %v1697 = vadd.f32 %v1304, %v1577
          %v1698 = vadd.f32 %v1307, %v1580
          %v1699 = vadd.f32 %v1312, %v1585
          %v1700 = vadd.f32 %v1315, %v1588
          %v1701 = vadd.f32 %v1320, %v1593
          %v1702 = vadd.f32 %v1323, %v1596
          %v1703 = vadd.f32 %v1328, %v1601
          %v1704 = vadd.f32 %v1331, %v1604
          %v1705 = vadd.f32 %v1336, %v1609
          %v1706 = vadd.f32 %v1339, %v1612
          %v1707 = vadd.f32 %v1344, %v1617
          %v1708 = vadd.f32 %v1347, %v1620
          %v1709 = vadd.f32 %v1352, %v1625
          %v1710 = vadd.f32 %v1355, %v1628
          %v1711 = vadd.f32 %v1360, %v1633
          %v1712 = vadd.f32 %v1363, %v1636
          %v1713 = vadd.f32 %v1368, %v1641
          %v1714 = vadd.f32 %v1371, %v1644
          %v1715 = vadd.f32 %v1376, %v1649
          %v1716 = vadd.f32 %v1379, %v1652
          %v1717 = vadd.f32 %v1384, %v1657
          %v1718 = vadd.f32 %v1387, %v1660
          %v1719 = vadd.f32 %v1392, %v1665
          %v1720 = vadd.f32 %v1395, %v1668
          %v1721 = vadd.f32 %v1400, %v1673
          %v1722 = vadd.f32 %v1403, %v1676
          %v1723 = vadd.f32 %v1408, %v1681
          %v1724 = vadd.f32 %v1411, %v1684
          %v1725 = vadd.f32 %v1416, %v1689
          %v1726 = vadd.f32 %v1419, %v1692
          %v1727 = vld [vmem:[%s811] sm:$0xff]
          %v1728 = vld [vmem:[%s811 + $0x8] sm:$0xff]
          %v1729 = vld [vmem:[%s811 + $0x18] sm:$0xff]
          %v1730 = vld [vmem:[%s811 + $0x20] sm:$0xff]
          %v1731 = vld [vmem:[%s811 + $0x30] sm:$0xff]
          %v1732 = vld [vmem:[%s811 + $0x38] sm:$0xff]
          %v1733 = vld [vmem:[%s811 + $0x48] sm:$0xff]
          %v1734 = vld [vmem:[%s811 + $0x50] sm:$0xff]
          %v1735 = vld [vmem:[%s811 + $0x60] sm:$0xff]
          %v1736 = vld [vmem:[%s811 + $0x68] sm:$0xff]
          %v1737 = vld [vmem:[%s811 + $0x78] sm:$0xff]
          %v1738 = vld [vmem:[%s811 + $0x80] sm:$0xff]
          %v1739 = vld [vmem:[%s811 + $0x90] sm:$0xff]
          %v1740 = vld [vmem:[%s811 + $0x98] sm:$0xff]
          %v1741 = vld [vmem:[%s811 + $0xa8] sm:$0xff]
          %v1742 = vld [vmem:[%s811 + $0xb0] sm:$0xff]
          %v1743 = vld [vmem:[%s811 + $0xc0] sm:$0xff]
          %v1744 = vld [vmem:[%s811 + $0xc8] sm:$0xff]
          %v1745 = vld [vmem:[%s811 + $0xd8] sm:$0xff]
          %v1746 = vld [vmem:[%s811 + $0xe0] sm:$0xff]
          %v1747 = vld [vmem:[%s811 + $0xf0] sm:$0xff]
          %v1748 = vld [vmem:[%s811 + $0xf8] sm:$0xff]
          %v1749 = vld [vmem:[%s811 + $0x108] sm:$0xff]
          %v1750 = vld [vmem:[%s811 + $0x110] sm:$0xff]
          %v1751 = vld [vmem:[%s811 + $0x120] sm:$0xff]
          %v1752 = vld [vmem:[%s811 + $0x128] sm:$0xff]
          %v1753 = vld [vmem:[%s811 + $0x138] sm:$0xff]
          %v1754 = vld [vmem:[%s811 + $0x140] sm:$0xff]
          %v1755 = vld [vmem:[%s811 + $0x150] sm:$0xff]
          %v1756 = vld [vmem:[%s811 + $0x158] sm:$0xff]
          %v1757 = vld [vmem:[%s811 + $0x168] sm:$0xff]
          %v1758 = vld [vmem:[%s811 + $0x170] sm:$0xff]
          %v1759 = vpack.c.bf16 %v1728, %v1727
          %v1760 = vpack.c.bf16 %v1730, %v1729
          %v1761 = vpack.c.bf16 %v1732, %v1731
          %v1762 = vpack.c.bf16 %v1734, %v1733
          %v1763 = vpack.c.bf16 %v1736, %v1735
          %v1764 = vpack.c.bf16 %v1738, %v1737
          %v1765 = vpack.c.bf16 %v1740, %v1739
          %v1766 = vpack.c.bf16 %v1742, %v1741
          %v1767 = vpack.c.bf16 %v1744, %v1743
          %v1768 = vpack.c.bf16 %v1746, %v1745
          %v1769 = vpack.c.bf16 %v1748, %v1747
          %v1770 = vpack.c.bf16 %v1750, %v1749
          %v1771 = vpack.c.bf16 %v1752, %v1751
          %v1772 = vpack.c.bf16 %v1754, %v1753
          %v1773 = vpack.c.bf16 %v1756, %v1755
          %v1774 = vpack.c.bf16 %v1758, %v1757
          %v1775 = vld [vmem:[#allocation8 + $0xc0] sm:$0xf]
          %v1776 = vld [vmem:[#allocation8 + $0xc4] sm:$0xf]
          %v1777 = vld [vmem:[#allocation8 + $0xc8] sm:$0xf]
          %v1778 = vld [vmem:[#allocation8 + $0xcc] sm:$0xf]
          %v1779 = vld [vmem:[#allocation8 + $0xd0] sm:$0xf]
          %v1780 = vld [vmem:[#allocation8 + $0xd4] sm:$0xf]
          %v1781 = vld [vmem:[#allocation8 + $0xd8] sm:$0xf]
          %v1782 = vld [vmem:[#allocation8 + $0xdc] sm:$0xf]
          %v1783 = vld [vmem:[#allocation8 + $0xe0] sm:$0xf]
          %v1784 = vld [vmem:[#allocation8 + $0xe4] sm:$0xf]
          %v1785 = vld [vmem:[#allocation8 + $0xe8] sm:$0xf]
          %v1786 = vld [vmem:[#allocation8 + $0xec] sm:$0xf]
          %v1787 = vld [vmem:[#allocation8 + $0xf0] sm:$0xf]
          %v1788 = vld [vmem:[#allocation8 + $0xf4] sm:$0xf]
          %v1789 = vld [vmem:[#allocation8 + $0xf8] sm:$0xf]
          %v1790 = vld [vmem:[#allocation8 + $0xfc] sm:$0xf]
          %v1807 = vunpack.c.l.b16 %v1775
          %v1808 = vunpack.c.l.b16 %v1776
          %v1809 = vunpack.c.l.b16 %v1777
          %v1810 = vunpack.c.l.b16 %v1778
          %v1811 = vunpack.c.l.b16 %v1779
          %v1812 = vunpack.c.l.b16 %v1780
          %v1813 = vunpack.c.l.b16 %v1781
          %v1814 = vunpack.c.l.b16 %v1782
          %v1815 = vunpack.c.l.b16 %v1783
          %v1816 = vunpack.c.l.b16 %v1784
          %v1817 = vunpack.c.l.b16 %v1785
          %v1818 = vunpack.c.l.b16 %v1786
          %v1819 = vunpack.c.l.b16 %v1787
          %v1820 = vunpack.c.l.b16 %v1788
          %v1821 = vunpack.c.l.b16 %v1789
          %v1822 = vunpack.c.l.b16 %v1790
          %v1823 = vpack.c.b16 %v1808, %v1807
          %v1824 = vpack.c.b16 %v1810, %v1809
          %v1825 = vpack.c.b16 %v1812, %v1811
          %v1826 = vpack.c.b16 %v1814, %v1813
          %v1827 = vpack.c.b16 %v1816, %v1815
          %v1828 = vpack.c.b16 %v1818, %v1817
          %v1829 = vpack.c.b16 %v1820, %v1819
          %v1830 = vpack.c.b16 %v1822, %v1821
          %1839 = vmatprep.subr.bf16.mxu0 0
          %1840 = vmatpush1.bf16.msra.mxu0 %v1823
          %1841 = vmatprep.subr.bf16.mxu0 0
          %1842 = vmatpush1.bf16.msra.mxu0 %v1824
          %1843 = vmatprep.subr.bf16.mxu0 0
          %1844 = vmatpush1.bf16.msra.mxu0 %v1825
          %1845 = vmatprep.subr.bf16.mxu0 0
          %1846 = vmatpush1.bf16.msra.mxu0 %v1826
          %1847 = vmatprep.subr.bf16.mxu0 0
          %1848 = vmatpush1.bf16.msra.mxu0 %v1827
          %1849 = vmatprep.subr.bf16.mxu0 0
          %1850 = vmatpush1.bf16.msra.mxu0 %v1828
          %1851 = vmatprep.subr.bf16.mxu0 0
          %1852 = vmatpush1.bf16.msra.mxu0 %v1829
          %1853 = vmatprep.subr.bf16.mxu0 0
          %1854 = vmatpush1.bf16.msra.mxu0 %v1830
          %1855 = vmatprep.subr.bf16.mxu0 0
          %1856 = vmatpush1.bf16.msra.mxu0 0
          %1857 = vmatprep.subr.bf16.mxu0 0
          %1858 = vmatpush1.bf16.msra.mxu0 0
          %1859 = vmatprep.subr.bf16.mxu0 0
          %1860 = vmatpush1.bf16.msra.mxu0 0
          %1861 = vmatprep.subr.bf16.mxu0 0
          %1862 = vmatpush1.bf16.msra.mxu0 0
          %1863 = vmatprep.subr.bf16.mxu0 0
          %1864 = vmatpush1.bf16.msra.mxu0 0
          %1865 = vmatprep.subr.bf16.mxu0 0
          %1866 = vmatpush1.bf16.msra.mxu0 0
          %1867 = vmatprep.subr.bf16.mxu0 0
          %1868 = vmatpush1.bf16.msra.mxu0 0
          %1869 = vmatprep.subr.bf16.mxu0 0
          %1870 = vmatpush1.bf16.msra.mxu0 0
          %1871 = vmatprep.mubr.bf16.mxu0 0
          %1872 = vmatmul.mubr.bf16.gmra.mrb[0].mxu0 %v1759
          %v1873 = vpop.f32.mrb[0].mxu0
          %v1874 = vadd.f32 0.0, %v1873
          %v1875 = vpop.f32.mrb[0].mxu0
          %v1876 = vpop.f32.mrb[0].mxu0
          %v1877 = vadd.f32 0.0, %v1876
          %v1878 = vpop.f32.mrb[0].mxu0
          %1879 = vmatprep.mubr.bf16.mxu0 0
          %1880 = vmatmul.mubr.bf16.gmra.mrb[0].mxu0 %v1760
          %v1881 = vpop.f32.mrb[0].mxu0
          %v1882 = vadd.f32 0.0, %v1881
          %v1883 = vpop.f32.mrb[0].mxu0
          %v1884 = vpop.f32.mrb[0].mxu0
          %v1885 = vadd.f32 0.0, %v1884
          %v1886 = vpop.f32.mrb[0].mxu0
          %1887 = vmatprep.mubr.bf16.mxu0 0
          %1888 = vmatmul.mubr.bf16.gmra.mrb[0].mxu0 %v1761
          %v1889 = vpop.f32.mrb[0].mxu0
          %v1890 = vadd.f32 0.0, %v1889
          %v1891 = vpop.f32.mrb[0].mxu0
          %v1892 = vpop.f32.mrb[0].mxu0
          %v1893 = vadd.f32 0.0, %v1892
          %v1894 = vpop.f32.mrb[0].mxu0
          %1895 = vmatprep.mubr.bf16.mxu0 0
          %1896 = vmatmul.mubr.bf16.gmra.mrb[0].mxu0 %v1762
          %v1897 = vpop.f32.mrb[0].mxu0
          %v1898 = vadd.f32 0.0, %v1897
          %v1899 = vpop.f32.mrb[0].mxu0
          %v1900 = vpop.f32.mrb[0].mxu0
          %v1901 = vadd.f32 0.0, %v1900
          %v1902 = vpop.f32.mrb[0].mxu0
          %1903 = vmatprep.mubr.bf16.mxu0 0
          %1904 = vmatmul.mubr.bf16.gmra.mrb[0].mxu0 %v1763
          %v1905 = vpop.f32.mrb[0].mxu0
          %v1906 = vadd.f32 0.0, %v1905
          %v1907 = vpop.f32.mrb[0].mxu0
          %v1908 = vpop.f32.mrb[0].mxu0
          %v1909 = vadd.f32 0.0, %v1908
          %v1910 = vpop.f32.mrb[0].mxu0
          %1911 = vmatprep.mubr.bf16.mxu0 0
          %1912 = vmatmul.mubr.bf16.gmra.mrb[0].mxu0 %v1764
          %v1913 = vpop.f32.mrb[0].mxu0
          %v1914 = vadd.f32 0.0, %v1913
          %v1915 = vpop.f32.mrb[0].mxu0
          %v1916 = vpop.f32.mrb[0].mxu0
          %v1917 = vadd.f32 0.0, %v1916
          %v1918 = vpop.f32.mrb[0].mxu0
          %1919 = vmatprep.mubr.bf16.mxu0 0
          %1920 = vmatmul.mubr.bf16.gmra.mrb[0].mxu0 %v1765
          %v1921 = vpop.f32.mrb[0].mxu0
          %v1922 = vadd.f32 0.0, %v1921
          %v1923 = vpop.f32.mrb[0].mxu0
          %v1924 = vpop.f32.mrb[0].mxu0
          %v1925 = vadd.f32 0.0, %v1924
          %v1926 = vpop.f32.mrb[0].mxu0
          %1927 = vmatprep.mubr.bf16.mxu0 0
          %1928 = vmatmul.mubr.bf16.gmra.mrb[0].mxu0 %v1766
          %v1929 = vpop.f32.mrb[0].mxu0
          %v1930 = vadd.f32 0.0, %v1929
          %v1931 = vpop.f32.mrb[0].mxu0
          %v1932 = vpop.f32.mrb[0].mxu0
          %v1933 = vadd.f32 0.0, %v1932
          %v1934 = vpop.f32.mrb[0].mxu0
          %1935 = vmatprep.mubr.bf16.mxu0 0
          %1936 = vmatmul.mubr.bf16.gmra.mrb[0].mxu0 %v1767
          %v1937 = vpop.f32.mrb[0].mxu0
          %v1938 = vadd.f32 0.0, %v1937
          %v1939 = vpop.f32.mrb[0].mxu0
          %v1940 = vpop.f32.mrb[0].mxu0
          %v1941 = vadd.f32 0.0, %v1940
          %v1942 = vpop.f32.mrb[0].mxu0
          %1943 = vmatprep.mubr.bf16.mxu0 0
          %1944 = vmatmul.mubr.bf16.gmra.mrb[0].mxu0 %v1768
          %v1945 = vpop.f32.mrb[0].mxu0
          %v1946 = vadd.f32 0.0, %v1945
          %v1947 = vpop.f32.mrb[0].mxu0
          %v1948 = vpop.f32.mrb[0].mxu0
          %v1949 = vadd.f32 0.0, %v1948
          %v1950 = vpop.f32.mrb[0].mxu0
          %1951 = vmatprep.mubr.bf16.mxu0 0
          %1952 = vmatmul.mubr.bf16.gmra.mrb[0].mxu0 %v1769
          %v1953 = vpop.f32.mrb[0].mxu0
          %v1954 = vadd.f32 0.0, %v1953
          %v1955 = vpop.f32.mrb[0].mxu0
          %v1956 = vpop.f32.mrb[0].mxu0
          %v1957 = vadd.f32 0.0, %v1956
          %v1958 = vpop.f32.mrb[0].mxu0
          %1959 = vmatprep.mubr.bf16.mxu0 0
          %1960 = vmatmul.mubr.bf16.gmra.mrb[0].mxu0 %v1770
          %v1961 = vpop.f32.mrb[0].mxu0
          %v1962 = vadd.f32 0.0, %v1961
          %v1963 = vpop.f32.mrb[0].mxu0
          %v1964 = vpop.f32.mrb[0].mxu0
          %v1965 = vadd.f32 0.0, %v1964
          %v1966 = vpop.f32.mrb[0].mxu0
          %1967 = vmatprep.mubr.bf16.mxu0 0
          %1968 = vmatmul.mubr.bf16.gmra.mrb[0].mxu0 %v1771
          %v1969 = vpop.f32.mrb[0].mxu0
          %v1970 = vadd.f32 0.0, %v1969
          %v1971 = vpop.f32.mrb[0].mxu0
          %v1972 = vpop.f32.mrb[0].mxu0
          %v1973 = vadd.f32 0.0, %v1972
          %v1974 = vpop.f32.mrb[0].mxu0
          %1975 = vmatprep.mubr.bf16.mxu0 0
          %1976 = vmatmul.mubr.bf16.gmra.mrb[0].mxu0 %v1772
          %v1977 = vpop.f32.mrb[0].mxu0
          %v1978 = vadd.f32 0.0, %v1977
          %v1979 = vpop.f32.mrb[0].mxu0
          %v1980 = vpop.f32.mrb[0].mxu0
          %v1981 = vadd.f32 0.0, %v1980
          %v1982 = vpop.f32.mrb[0].mxu0
          %1983 = vmatprep.mubr.bf16.mxu0 0
          %1984 = vmatmul.mubr.bf16.gmra.mrb[0].mxu0 %v1773
          %v1985 = vpop.f32.mrb[0].mxu0
          %v1986 = vadd.f32 0.0, %v1985
          %v1987 = vpop.f32.mrb[0].mxu0
          %v1988 = vpop.f32.mrb[0].mxu0
          %v1989 = vadd.f32 0.0, %v1988
          %v1990 = vpop.f32.mrb[0].mxu0
          %1991 = vmatprep.mubr.bf16.mxu0 0
          %1992 = vmatmul.mubr.bf16.gmra.mrb[0].mxu0 %v1774
          %v1993 = vpop.f32.mrb[0].mxu0
          %v1994 = vadd.f32 0.0, %v1993
          %v1995 = vpop.f32.mrb[0].mxu0
          %v1996 = vpop.f32.mrb[0].mxu0
          %v1997 = vadd.f32 0.0, %v1996
          %v1998 = vpop.f32.mrb[0].mxu0
          %1999 = vdwg.mxu0
          %v2000 = vadd.f32 %v1695, %v1874
          %v2001 = vadd.f32 %v1696, %v1877
          %v2002 = vadd.f32 %v1697, %v1882
          %v2003 = vadd.f32 %v1698, %v1885
          %v2004 = vadd.f32 %v1699, %v1890
          %v2005 = vadd.f32 %v1700, %v1893
          %v2006 = vadd.f32 %v1701, %v1898
          %v2007 = vadd.f32 %v1702, %v1901
          %v2008 = vadd.f32 %v1703, %v1906
          %v2009 = vadd.f32 %v1704, %v1909
          %v2010 = vadd.f32 %v1705, %v1914
          %v2011 = vadd.f32 %v1706, %v1917
          %v2012 = vadd.f32 %v1707, %v1922
          %v2013 = vadd.f32 %v1708, %v1925
          %v2014 = vadd.f32 %v1709, %v1930
          %v2015 = vadd.f32 %v1710, %v1933
          %v2016 = vadd.f32 %v1711, %v1938
          %v2017 = vadd.f32 %v1712, %v1941
          %v2018 = vadd.f32 %v1713, %v1946
          %v2019 = vadd.f32 %v1714, %v1949
          %v2020 = vadd.f32 %v1715, %v1954
          %v2021 = vadd.f32 %v1716, %v1957
          %v2022 = vadd.f32 %v1717, %v1962
          %v2023 = vadd.f32 %v1718, %v1965
          %v2024 = vadd.f32 %v1719, %v1970
          %v2025 = vadd.f32 %v1720, %v1973
          %v2026 = vadd.f32 %v1721, %v1978
          %v2027 = vadd.f32 %v1722, %v1981
          %v2028 = vadd.f32 %v1723, %v1986
          %v2029 = vadd.f32 %v1724, %v1989
          %v2030 = vadd.f32 %v1725, %v1994
          %v2031 = vadd.f32 %v1726, %v1997
          %v2032 = vld [vmem:[%s811 + $0x1] sm:$0xff]
          %v2033 = vld [vmem:[%s811 + $0x9] sm:$0xff]
          %v2034 = vld [vmem:[%s811 + $0x19] sm:$0xff]
          %v2035 = vld [vmem:[%s811 + $0x21] sm:$0xff]
          %v2036 = vld [vmem:[%s811 + $0x31] sm:$0xff]
          %v2037 = vld [vmem:[%s811 + $0x39] sm:$0xff]
          %v2038 = vld [vmem:[%s811 + $0x49] sm:$0xff]
          %v2039 = vld [vmem:[%s811 + $0x51] sm:$0xff]
          %v2040 = vld [vmem:[%s811 + $0x61] sm:$0xff]
          %v2041 = vld [vmem:[%s811 + $0x69] sm:$0xff]
          %v2042 = vld [vmem:[%s811 + $0x79] sm:$0xff]
          %v2043 = vld [vmem:[%s811 + $0x81] sm:$0xff]
          %v2044 = vld [vmem:[%s811 + $0x91] sm:$0xff]
          %v2045 = vld [vmem:[%s811 + $0x99] sm:$0xff]
          %v2046 = vld [vmem:[%s811 + $0xa9] sm:$0xff]
          %v2047 = vld [vmem:[%s811 + $0xb1] sm:$0xff]
          %v2048 = vld [vmem:[%s811 + $0xc1] sm:$0xff]
          %v2049 = vld [vmem:[%s811 + $0xc9] sm:$0xff]
          %v2050 = vld [vmem:[%s811 + $0xd9] sm:$0xff]
          %v2051 = vld [vmem:[%s811 + $0xe1] sm:$0xff]
          %v2052 = vld [vmem:[%s811 + $0xf1] sm:$0xff]
          %v2053 = vld [vmem:[%s811 + $0xf9] sm:$0xff]
          %v2054 = vld [vmem:[%s811 + $0x109] sm:$0xff]
          %v2055 = vld [vmem:[%s811 + $0x111] sm:$0xff]
          %v2056 = vld [vmem:[%s811 + $0x121] sm:$0xff]
          %v2057 = vld [vmem:[%s811 + $0x129] sm:$0xff]
          %v2058 = vld [vmem:[%s811 + $0x139] sm:$0xff]
          %v2059 = vld [vmem:[%s811 + $0x141] sm:$0xff]
          %v2060 = vld [vmem:[%s811 + $0x151] sm:$0xff]
          %v2061 = vld [vmem:[%s811 + $0x159] sm:$0xff]
          %v2062 = vld [vmem:[%s811 + $0x169] sm:$0xff]
          %v2063 = vld [vmem:[%s811 + $0x171] sm:$0xff]
          %v2064 = vpack.c.bf16 %v2033, %v2032
          %v2065 = vpack.c.bf16 %v2035, %v2034
          %v2066 = vpack.c.bf16 %v2037, %v2036
          %v2067 = vpack.c.bf16 %v2039, %v2038
          %v2068 = vpack.c.bf16 %v2041, %v2040
          %v2069 = vpack.c.bf16 %v2043, %v2042
          %v2070 = vpack.c.bf16 %v2045, %v2044
          %v2071 = vpack.c.bf16 %v2047, %v2046
          %v2072 = vpack.c.bf16 %v2049, %v2048
          %v2073 = vpack.c.bf16 %v2051, %v2050
          %v2074 = vpack.c.bf16 %v2053, %v2052
          %v2075 = vpack.c.bf16 %v2055, %v2054
          %v2076 = vpack.c.bf16 %v2057, %v2056
          %v2077 = vpack.c.bf16 %v2059, %v2058
          %v2078 = vpack.c.bf16 %v2061, %v2060
          %v2079 = vpack.c.bf16 %v2063, %v2062
          %v2080 = vld [vmem:[#allocation8 + $0x100] sm:$0xf]
          %v2081 = vld [vmem:[#allocation8 + $0x104] sm:$0xf]
          %v2082 = vld [vmem:[#allocation8 + $0x108] sm:$0xf]
          %v2083 = vld [vmem:[#allocation8 + $0x10c] sm:$0xf]
          %v2084 = vld [vmem:[#allocation8 + $0x110] sm:$0xf]
          %v2085 = vld [vmem:[#allocation8 + $0x114] sm:$0xf]
          %v2086 = vld [vmem:[#allocation8 + $0x118] sm:$0xf]
          %v2087 = vld [vmem:[#allocation8 + $0x11c] sm:$0xf]
          %v2088 = vld [vmem:[#allocation8 + $0x120] sm:$0xf]
          %v2089 = vld [vmem:[#allocation8 + $0x124] sm:$0xf]
          %v2090 = vld [vmem:[#allocation8 + $0x128] sm:$0xf]
          %v2091 = vld [vmem:[#allocation8 + $0x12c] sm:$0xf]
          %v2092 = vld [vmem:[#allocation8 + $0x130] sm:$0xf]
          %v2093 = vld [vmem:[#allocation8 + $0x134] sm:$0xf]
          %v2094 = vld [vmem:[#allocation8 + $0x138] sm:$0xf]
          %v2095 = vld [vmem:[#allocation8 + $0x13c] sm:$0xf]
          %v2112 = vunpack.c.l.b16 %v2080
          %v2113 = vunpack.c.l.b16 %v2081
          %v2114 = vunpack.c.l.b16 %v2082
          %v2115 = vunpack.c.l.b16 %v2083
          %v2116 = vunpack.c.l.b16 %v2084
          %v2117 = vunpack.c.l.b16 %v2085
          %v2118 = vunpack.c.l.b16 %v2086
          %v2119 = vunpack.c.l.b16 %v2087
          %v2120 = vunpack.c.l.b16 %v2088
          %v2121 = vunpack.c.l.b16 %v2089
          %v2122 = vunpack.c.l.b16 %v2090
          %v2123 = vunpack.c.l.b16 %v2091
          %v2124 = vunpack.c.l.b16 %v2092
          %v2125 = vunpack.c.l.b16 %v2093
          %v2126 = vunpack.c.l.b16 %v2094
          %v2127 = vunpack.c.l.b16 %v2095
          %v2128 = vpack.c.b16 %v2113, %v2112
          %v2129 = vpack.c.b16 %v2115, %v2114
          %v2130 = vpack.c.b16 %v2117, %v2116
          %v2131 = vpack.c.b16 %v2119, %v2118
          %v2132 = vpack.c.b16 %v2121, %v2120
          %v2133 = vpack.c.b16 %v2123, %v2122
          %v2134 = vpack.c.b16 %v2125, %v2124
          %v2135 = vpack.c.b16 %v2127, %v2126
          %2144 = vmatprep.subr.bf16.mxu0 0
          %2145 = vmatpush1.bf16.msra.mxu0 %v2128
          %2146 = vmatprep.subr.bf16.mxu0 0
          %2147 = vmatpush1.bf16.msra.mxu0 %v2129
          %2148 = vmatprep.subr.bf16.mxu0 0
          %2149 = vmatpush1.bf16.msra.mxu0 %v2130
          %2150 = vmatprep.subr.bf16.mxu0 0
          %2151 = vmatpush1.bf16.msra.mxu0 %v2131
          %2152 = vmatprep.subr.bf16.mxu0 0
          %2153 = vmatpush1.bf16.msra.mxu0 %v2132
          %2154 = vmatprep.subr.bf16.mxu0 0
          %2155 = vmatpush1.bf16.msra.mxu0 %v2133
          %2156 = vmatprep.subr.bf16.mxu0 0
          %2157 = vmatpush1.bf16.msra.mxu0 %v2134
          %2158 = vmatprep.subr.bf16.mxu0 0
          %2159 = vmatpush1.bf16.msra.mxu0 %v2135
          %2160 = vmatprep.subr.bf16.mxu0 0
          %2161 = vmatpush1.bf16.msra.mxu0 0
          %2162 = vmatprep.subr.bf16.mxu0 0
          %2163 = vmatpush1.bf16.msra.mxu0 0
          %2164 = vmatprep.subr.bf16.mxu0 0
          %2165 = vmatpush1.bf16.msra.mxu0 0
          %2166 = vmatprep.subr.bf16.mxu0 0
          %2167 = vmatpush1.bf16.msra.mxu0 0
          %2168 = vmatprep.subr.bf16.mxu0 0
          %2169 = vmatpush1.bf16.msra.mxu0 0
          %2170 = vmatprep.subr.bf16.mxu0 0
          %2171 = vmatpush1.bf16.msra.mxu0 0
          %2172 = vmatprep.subr.bf16.mxu0 0
          %2173 = vmatpush1.bf16.msra.mxu0 0
          %2174 = vmatprep.subr.bf16.mxu0 0
          %2175 = vmatpush1.bf16.msra.mxu0 0
          %2176 = vmatprep.mubr.bf16.mxu0 0
          %2177 = vmatmul.mubr.bf16.gmra.mrb[0].mxu0 %v2064
          %v2178 = vpop.f32.mrb[0].mxu0
          %v2179 = vadd.f32 0.0, %v2178
          %v2180 = vpop.f32.mrb[0].mxu0
          %v2181 = vpop.f32.mrb[0].mxu0
          %v2182 = vadd.f32 0.0, %v2181
          %v2183 = vpop.f32.mrb[0].mxu0
          %2184 = vmatprep.mubr.bf16.mxu0 0
          %2185 = vmatmul.mubr.bf16.gmra.mrb[0].mxu0 %v2065
          %v2186 = vpop.f32.mrb[0].mxu0
          %v2187 = vadd.f32 0.0, %v2186
          %v2188 = vpop.f32.mrb[0].mxu0
          %v2189 = vpop.f32.mrb[0].mxu0
          %v2190 = vadd.f32 0.0, %v2189
          %v2191 = vpop.f32.mrb[0].mxu0
          %2192 = vmatprep.mubr.bf16.mxu0 0
          %2193 = vmatmul.mubr.bf16.gmra.mrb[0].mxu0 %v2066
          %v2194 = vpop.f32.mrb[0].mxu0
          %v2195 = vadd.f32 0.0, %v2194
          %v2196 = vpop.f32.mrb[0].mxu0
          %v2197 = vpop.f32.mrb[0].mxu0
          %v2198 = vadd.f32 0.0, %v2197
          %v2199 = vpop.f32.mrb[0].mxu0
          %2200 = vmatprep.mubr.bf16.mxu0 0
          %2201 = vmatmul.mubr.bf16.gmra.mrb[0].mxu0 %v2067
          %v2202 = vpop.f32.mrb[0].mxu0
          %v2203 = vadd.f32 0.0, %v2202
          %v2204 = vpop.f32.mrb[0].mxu0
          %v2205 = vpop.f32.mrb[0].mxu0
          %v2206 = vadd.f32 0.0, %v2205
          %v2207 = vpop.f32.mrb[0].mxu0
          %2208 = vmatprep.mubr.bf16.mxu0 0
          %2209 = vmatmul.mubr.bf16.gmra.mrb[0].mxu0 %v2068
          %v2210 = vpop.f32.mrb[0].mxu0
          %v2211 = vadd.f32 0.0, %v2210
          %v2212 = vpop.f32.mrb[0].mxu0
          %v2213 = vpop.f32.mrb[0].mxu0
          %v2214 = vadd.f32 0.0, %v2213
          %v2215 = vpop.f32.mrb[0].mxu0
          %2216 = vmatprep.mubr.bf16.mxu0 0
          %2217 = vmatmul.mubr.bf16.gmra.mrb[0].mxu0 %v2069
          %v2218 = vpop.f32.mrb[0].mxu0
          %v2219 = vadd.f32 0.0, %v2218
          %v2220 = vpop.f32.mrb[0].mxu0
          %v2221 = vpop.f32.mrb[0].mxu0
          %v2222 = vadd.f32 0.0, %v2221
          %v2223 = vpop.f32.mrb[0].mxu0
          %2224 = vmatprep.mubr.bf16.mxu0 0
          %2225 = vmatmul.mubr.bf16.gmra.mrb[0].mxu0 %v2070
          %v2226 = vpop.f32.mrb[0].mxu0
          %v2227 = vadd.f32 0.0, %v2226
          %v2228 = vpop.f32.mrb[0].mxu0
          %v2229 = vpop.f32.mrb[0].mxu0
          %v2230 = vadd.f32 0.0, %v2229
          %v2231 = vpop.f32.mrb[0].mxu0
          %2232 = vmatprep.mubr.bf16.mxu0 0
          %2233 = vmatmul.mubr.bf16.gmra.mrb[0].mxu0 %v2071
          %v2234 = vpop.f32.mrb[0].mxu0
          %v2235 = vadd.f32 0.0, %v2234
          %v2236 = vpop.f32.mrb[0].mxu0
          %v2237 = vpop.f32.mrb[0].mxu0
          %v2238 = vadd.f32 0.0, %v2237
          %v2239 = vpop.f32.mrb[0].mxu0
          %2240 = vmatprep.mubr.bf16.mxu0 0
          %2241 = vmatmul.mubr.bf16.gmra.mrb[0].mxu0 %v2072
          %v2242 = vpop.f32.mrb[0].mxu0
          %v2243 = vadd.f32 0.0, %v2242
          %v2244 = vpop.f32.mrb[0].mxu0
          %v2245 = vpop.f32.mrb[0].mxu0
          %v2246 = vadd.f32 0.0, %v2245
          %v2247 = vpop.f32.mrb[0].mxu0
          %2248 = vmatprep.mubr.bf16.mxu0 0
          %2249 = vmatmul.mubr.bf16.gmra.mrb[0].mxu0 %v2073
          %v2250 = vpop.f32.mrb[0].mxu0
          %v2251 = vadd.f32 0.0, %v2250
          %v2252 = vpop.f32.mrb[0].mxu0
          %v2253 = vpop.f32.mrb[0].mxu0
          %v2254 = vadd.f32 0.0, %v2253
          %v2255 = vpop.f32.mrb[0].mxu0
          %2256 = vmatprep.mubr.bf16.mxu0 0
          %2257 = vmatmul.mubr.bf16.gmra.mrb[0].mxu0 %v2074
          %v2258 = vpop.f32.mrb[0].mxu0
          %v2259 = vadd.f32 0.0, %v2258
          %v2260 = vpop.f32.mrb[0].mxu0
          %v2261 = vpop.f32.mrb[0].mxu0
          %v2262 = vadd.f32 0.0, %v2261
          %v2263 = vpop.f32.mrb[0].mxu0
          %2264 = vmatprep.mubr.bf16.mxu0 0
          %2265 = vmatmul.mubr.bf16.gmra.mrb[0].mxu0 %v2075
          %v2266 = vpop.f32.mrb[0].mxu0
          %v2267 = vadd.f32 0.0, %v2266
          %v2268 = vpop.f32.mrb[0].mxu0
          %v2269 = vpop.f32.mrb[0].mxu0
          %v2270 = vadd.f32 0.0, %v2269
          %v2271 = vpop.f32.mrb[0].mxu0
          %2272 = vmatprep.mubr.bf16.mxu0 0
          %2273 = vmatmul.mubr.bf16.gmra.mrb[0].mxu0 %v2076
          %v2274 = vpop.f32.mrb[0].mxu0
          %v2275 = vadd.f32 0.0, %v2274
          %v2276 = vpop.f32.mrb[0].mxu0
          %v2277 = vpop.f32.mrb[0].mxu0
          %v2278 = vadd.f32 0.0, %v2277
          %v2279 = vpop.f32.mrb[0].mxu0
          %2280 = vmatprep.mubr.bf16.mxu0 0
          %2281 = vmatmul.mubr.bf16.gmra.mrb[0].mxu0 %v2077
          %v2282 = vpop.f32.mrb[0].mxu0
          %v2283 = vadd.f32 0.0, %v2282
          %v2284 = vpop.f32.mrb[0].mxu0
          %v2285 = vpop.f32.mrb[0].mxu0
          %v2286 = vadd.f32 0.0, %v2285
          %v2287 = vpop.f32.mrb[0].mxu0
          %2288 = vmatprep.mubr.bf16.mxu0 0
          %2289 = vmatmul.mubr.bf16.gmra.mrb[0].mxu0 %v2078
          %v2290 = vpop.f32.mrb[0].mxu0
          %v2291 = vadd.f32 0.0, %v2290
          %v2292 = vpop.f32.mrb[0].mxu0
          %v2293 = vpop.f32.mrb[0].mxu0
          %v2294 = vadd.f32 0.0, %v2293
          %v2295 = vpop.f32.mrb[0].mxu0
          %2296 = vmatprep.mubr.bf16.mxu0 0
          %2297 = vmatmul.mubr.bf16.gmra.mrb[0].mxu0 %v2079
          %v2298 = vpop.f32.mrb[0].mxu0
          %v2299 = vadd.f32 0.0, %v2298
          %v2300 = vpop.f32.mrb[0].mxu0
          %v2301 = vpop.f32.mrb[0].mxu0
          %v2302 = vadd.f32 0.0, %v2301
          %v2303 = vpop.f32.mrb[0].mxu0
          %2304 = vdwg.mxu0
          %v2305 = vadd.f32 %v2000, %v2179
          %v2306 = vadd.f32 %v2001, %v2182
          %v2307 = vadd.f32 %v2002, %v2187
          %v2308 = vadd.f32 %v2003, %v2190
          %v2309 = vadd.f32 %v2004, %v2195
          %v2310 = vadd.f32 %v2005, %v2198
          %v2311 = vadd.f32 %v2006, %v2203
          %v2312 = vadd.f32 %v2007, %v2206
          %v2313 = vadd.f32 %v2008, %v2211
          %v2314 = vadd.f32 %v2009, %v2214
          %v2315 = vadd.f32 %v2010, %v2219
          %v2316 = vadd.f32 %v2011, %v2222
          %v2317 = vadd.f32 %v2012, %v2227
          %v2318 = vadd.f32 %v2013, %v2230
          %v2319 = vadd.f32 %v2014, %v2235
          %v2320 = vadd.f32 %v2015, %v2238
          %v2321 = vadd.f32 %v2016, %v2243
          %v2322 = vadd.f32 %v2017, %v2246
          %v2323 = vadd.f32 %v2018, %v2251
          %v2324 = vadd.f32 %v2019, %v2254
          %v2325 = vadd.f32 %v2020, %v2259
          %v2326 = vadd.f32 %v2021, %v2262
          %v2327 = vadd.f32 %v2022, %v2267
          %v2328 = vadd.f32 %v2023, %v2270
          %v2329 = vadd.f32 %v2024, %v2275
          %v2330 = vadd.f32 %v2025, %v2278
          %v2331 = vadd.f32 %v2026, %v2283
          %v2332 = vadd.f32 %v2027, %v2286
          %v2333 = vadd.f32 %v2028, %v2291
          %v2334 = vadd.f32 %v2029, %v2294
          %v2335 = vadd.f32 %v2030, %v2299
          %v2336 = vadd.f32 %v2031, %v2302
          %v2337 = vld [vmem:[%s811 + $0x2] sm:$0xff]
          %v2338 = vld [vmem:[%s811 + $0xa] sm:$0xff]
          %v2339 = vld [vmem:[%s811 + $0x1a] sm:$0xff]
          %v2340 = vld [vmem:[%s811 + $0x22] sm:$0xff]
          %v2341 = vld [vmem:[%s811 + $0x32] sm:$0xff]
          %v2342 = vld [vmem:[%s811 + $0x3a] sm:$0xff]
          %v2343 = vld [vmem:[%s811 + $0x4a] sm:$0xff]
          %v2344 = vld [vmem:[%s811 + $0x52] sm:$0xff]
          %v2345 = vld [vmem:[%s811 + $0x62] sm:$0xff]
          %v2346 = vld [vmem:[%s811 + $0x6a] sm:$0xff]
          %v2347 = vld [vmem:[%s811 + $0x7a] sm:$0xff]
          %v2348 = vld [vmem:[%s811 + $0x82] sm:$0xff]
          %v2349 = vld [vmem:[%s811 + $0x92] sm:$0xff]
          %v2350 = vld [vmem:[%s811 + $0x9a] sm:$0xff]
          %v2351 = vld [vmem:[%s811 + $0xaa] sm:$0xff]
          %v2352 = vld [vmem:[%s811 + $0xb2] sm:$0xff]
          %v2353 = vld [vmem:[%s811 + $0xc2] sm:$0xff]
          %v2354 = vld [vmem:[%s811 + $0xca] sm:$0xff]
          %v2355 = vld [vmem:[%s811 + $0xda] sm:$0xff]
          %v2356 = vld [vmem:[%s811 + $0xe2] sm:$0xff]
          %v2357 = vld [vmem:[%s811 + $0xf2] sm:$0xff]
          %v2358 = vld [vmem:[%s811 + $0xfa] sm:$0xff]
          %v2359 = vld [vmem:[%s811 + $0x10a] sm:$0xff]
          %v2360 = vld [vmem:[%s811 + $0x112] sm:$0xff]
          %v2361 = vld [vmem:[%s811 + $0x122] sm:$0xff]
          %v2362 = vld [vmem:[%s811 + $0x12a] sm:$0xff]
          %v2363 = vld [vmem:[%s811 + $0x13a] sm:$0xff]
          %v2364 = vld [vmem:[%s811 + $0x142] sm:$0xff]
          %v2365 = vld [vmem:[%s811 + $0x152] sm:$0xff]
          %v2366 = vld [vmem:[%s811 + $0x15a] sm:$0xff]
          %v2367 = vld [vmem:[%s811 + $0x16a] sm:$0xff]
          %v2368 = vld [vmem:[%s811 + $0x172] sm:$0xff]
          %v2369 = vpack.c.bf16 %v2338, %v2337
          %v2370 = vpack.c.bf16 %v2340, %v2339
          %v2371 = vpack.c.bf16 %v2342, %v2341
          %v2372 = vpack.c.bf16 %v2344, %v2343
          %v2373 = vpack.c.bf16 %v2346, %v2345
          %v2374 = vpack.c.bf16 %v2348, %v2347
          %v2375 = vpack.c.bf16 %v2350, %v2349
          %v2376 = vpack.c.bf16 %v2352, %v2351
          %v2377 = vpack.c.bf16 %v2354, %v2353
          %v2378 = vpack.c.bf16 %v2356, %v2355
          %v2379 = vpack.c.bf16 %v2358, %v2357
          %v2380 = vpack.c.bf16 %v2360, %v2359
          %v2381 = vpack.c.bf16 %v2362, %v2361
          %v2382 = vpack.c.bf16 %v2364, %v2363
          %v2383 = vpack.c.bf16 %v2366, %v2365
          %v2384 = vpack.c.bf16 %v2368, %v2367
          %v2385 = vld [vmem:[#allocation8 + $0x140] sm:$0xf]
          %v2386 = vld [vmem:[#allocation8 + $0x144] sm:$0xf]
          %v2387 = vld [vmem:[#allocation8 + $0x148] sm:$0xf]
          %v2388 = vld [vmem:[#allocation8 + $0x14c] sm:$0xf]
          %v2389 = vld [vmem:[#allocation8 + $0x150] sm:$0xf]
          %v2390 = vld [vmem:[#allocation8 + $0x154] sm:$0xf]
          %v2391 = vld [vmem:[#allocation8 + $0x158] sm:$0xf]
          %v2392 = vld [vmem:[#allocation8 + $0x15c] sm:$0xf]
          %v2393 = vld [vmem:[#allocation8 + $0x160] sm:$0xf]
          %v2394 = vld [vmem:[#allocation8 + $0x164] sm:$0xf]
          %v2395 = vld [vmem:[#allocation8 + $0x168] sm:$0xf]
          %v2396 = vld [vmem:[#allocation8 + $0x16c] sm:$0xf]
          %v2397 = vld [vmem:[#allocation8 + $0x170] sm:$0xf]
          %v2398 = vld [vmem:[#allocation8 + $0x174] sm:$0xf]
          %v2399 = vld [vmem:[#allocation8 + $0x178] sm:$0xf]
          %v2400 = vld [vmem:[#allocation8 + $0x17c] sm:$0xf]
          %v2417 = vunpack.c.l.b16 %v2385
          %v2418 = vunpack.c.l.b16 %v2386
          %v2419 = vunpack.c.l.b16 %v2387
          %v2420 = vunpack.c.l.b16 %v2388
          %v2421 = vunpack.c.l.b16 %v2389
          %v2422 = vunpack.c.l.b16 %v2390
          %v2423 = vunpack.c.l.b16 %v2391
          %v2424 = vunpack.c.l.b16 %v2392
          %v2425 = vunpack.c.l.b16 %v2393
          %v2426 = vunpack.c.l.b16 %v2394
          %v2427 = vunpack.c.l.b16 %v2395
          %v2428 = vunpack.c.l.b16 %v2396
          %v2429 = vunpack.c.l.b16 %v2397
          %v2430 = vunpack.c.l.b16 %v2398
          %v2431 = vunpack.c.l.b16 %v2399
          %v2432 = vunpack.c.l.b16 %v2400
          %v2433 = vpack.c.b16 %v2418, %v2417
          %v2434 = vpack.c.b16 %v2420, %v2419
          %v2435 = vpack.c.b16 %v2422, %v2421
          %v2436 = vpack.c.b16 %v2424, %v2423
          %v2437 = vpack.c.b16 %v2426, %v2425
          %v2438 = vpack.c.b16 %v2428, %v2427
          %v2439 = vpack.c.b16 %v2430, %v2429
          %v2440 = vpack.c.b16 %v2432, %v2431
          %2449 = vmatprep.subr.bf16.mxu0 0
          %2450 = vmatpush1.bf16.msra.mxu0 %v2433
          %2451 = vmatprep.subr.bf16.mxu0 0
          %2452 = vmatpush1.bf16.msra.mxu0 %v2434
          %2453 = vmatprep.subr.bf16.mxu0 0
          %2454 = vmatpush1.bf16.msra.mxu0 %v2435
          %2455 = vmatprep.subr.bf16.mxu0 0
          %2456 = vmatpush1.bf16.msra.mxu0 %v2436
          %2457 = vmatprep.subr.bf16.mxu0 0
          %2458 = vmatpush1.bf16.msra.mxu0 %v2437
          %2459 = vmatprep.subr.bf16.mxu0 0
          %2460 = vmatpush1.bf16.msra.mxu0 %v2438
          %2461 = vmatprep.subr.bf16.mxu0 0
          %2462 = vmatpush1.bf16.msra.mxu0 %v2439
          %2463 = vmatprep.subr.bf16.mxu0 0
          %2464 = vmatpush1.bf16.msra.mxu0 %v2440
          %2465 = vmatprep.subr.bf16.mxu0 0
          %2466 = vmatpush1.bf16.msra.mxu0 0
          %2467 = vmatprep.subr.bf16.mxu0 0
          %2468 = vmatpush1.bf16.msra.mxu0 0
          %2469 = vmatprep.subr.bf16.mxu0 0
          %2470 = vmatpush1.bf16.msra.mxu0 0
          %2471 = vmatprep.subr.bf16.mxu0 0
          %2472 = vmatpush1.bf16.msra.mxu0 0
          %2473 = vmatprep.subr.bf16.mxu0 0
          %2474 = vmatpush1.bf16.msra.mxu0 0
          %2475 = vmatprep.subr.bf16.mxu0 0
          %2476 = vmatpush1.bf16.msra.mxu0 0
          %2477 = vmatprep.subr.bf16.mxu0 0
          %2478 = vmatpush1.bf16.msra.mxu0 0
          %2479 = vmatprep.subr.bf16.mxu0 0
          %2480 = vmatpush1.bf16.msra.mxu0 0
          %2481 = vmatprep.mubr.bf16.mxu0 0
          %2482 = vmatmul.mubr.bf16.gmra.mrb[0].mxu0 %v2369
          %v2483 = vpop.f32.mrb[0].mxu0
          %v2484 = vadd.f32 0.0, %v2483
          %v2485 = vpop.f32.mrb[0].mxu0
          %v2486 = vpop.f32.mrb[0].mxu0
          %v2487 = vadd.f32 0.0, %v2486
          %v2488 = vpop.f32.mrb[0].mxu0
          %2489 = vmatprep.mubr.bf16.mxu0 0
          %2490 = vmatmul.mubr.bf16.gmra.mrb[0].mxu0 %v2370
          %v2491 = vpop.f32.mrb[0].mxu0
          %v2492 = vadd.f32 0.0, %v2491
          %v2493 = vpop.f32.mrb[0].mxu0
          %v2494 = vpop.f32.mrb[0].mxu0
          %v2495 = vadd.f32 0.0, %v2494
          %v2496 = vpop.f32.mrb[0].mxu0
          %2497 = vmatprep.mubr.bf16.mxu0 0
          %2498 = vmatmul.mubr.bf16.gmra.mrb[0].mxu0 %v2371
          %v2499 = vpop.f32.mrb[0].mxu0
          %v2500 = vadd.f32 0.0, %v2499
          %v2501 = vpop.f32.mrb[0].mxu0
          %v2502 = vpop.f32.mrb[0].mxu0
          %v2503 = vadd.f32 0.0, %v2502
          %v2504 = vpop.f32.mrb[0].mxu0
          %2505 = vmatprep.mubr.bf16.mxu0 0
          %2506 = vmatmul.mubr.bf16.gmra.mrb[0].mxu0 %v2372
          %v2507 = vpop.f32.mrb[0].mxu0
          %v2508 = vadd.f32 0.0, %v2507
          %v2509 = vpop.f32.mrb[0].mxu0
          %v2510 = vpop.f32.mrb[0].mxu0
          %v2511 = vadd.f32 0.0, %v2510
          %v2512 = vpop.f32.mrb[0].mxu0
          %2513 = vmatprep.mubr.bf16.mxu0 0
          %2514 = vmatmul.mubr.bf16.gmra.mrb[0].mxu0 %v2373
          %v2515 = vpop.f32.mrb[0].mxu0
          %v2516 = vadd.f32 0.0, %v2515
          %v2517 = vpop.f32.mrb[0].mxu0
          %v2518 = vpop.f32.mrb[0].mxu0
          %v2519 = vadd.f32 0.0, %v2518
          %v2520 = vpop.f32.mrb[0].mxu0
          %2521 = vmatprep.mubr.bf16.mxu0 0
          %2522 = vmatmul.mubr.bf16.gmra.mrb[0].mxu0 %v2374
          %v2523 = vpop.f32.mrb[0].mxu0
          %v2524 = vadd.f32 0.0, %v2523
          %v2525 = vpop.f32.mrb[0].mxu0
          %v2526 = vpop.f32.mrb[0].mxu0
          %v2527 = vadd.f32 0.0, %v2526
          %v2528 = vpop.f32.mrb[0].mxu0
          %2529 = vmatprep.mubr.bf16.mxu0 0
          %2530 = vmatmul.mubr.bf16.gmra.mrb[0].mxu0 %v2375
          %v2531 = vpop.f32.mrb[0].mxu0
          %v2532 = vadd.f32 0.0, %v2531
          %v2533 = vpop.f32.mrb[0].mxu0
          %v2534 = vpop.f32.mrb[0].mxu0
          %v2535 = vadd.f32 0.0, %v2534
          %v2536 = vpop.f32.mrb[0].mxu0
          %2537 = vmatprep.mubr.bf16.mxu0 0
          %2538 = vmatmul.mubr.bf16.gmra.mrb[0].mxu0 %v2376
          %v2539 = vpop.f32.mrb[0].mxu0
          %v2540 = vadd.f32 0.0, %v2539
          %v2541 = vpop.f32.mrb[0].mxu0
          %v2542 = vpop.f32.mrb[0].mxu0
          %v2543 = vadd.f32 0.0, %v2542
          %v2544 = vpop.f32.mrb[0].mxu0
          %2545 = vmatprep.mubr.bf16.mxu0 0
          %2546 = vmatmul.mubr.bf16.gmra.mrb[0].mxu0 %v2377
          %v2547 = vpop.f32.mrb[0].mxu0
          %v2548 = vadd.f32 0.0, %v2547
          %v2549 = vpop.f32.mrb[0].mxu0
          %v2550 = vpop.f32.mrb[0].mxu0
          %v2551 = vadd.f32 0.0, %v2550
          %v2552 = vpop.f32.mrb[0].mxu0
          %2553 = vmatprep.mubr.bf16.mxu0 0
          %2554 = vmatmul.mubr.bf16.gmra.mrb[0].mxu0 %v2378
          %v2555 = vpop.f32.mrb[0].mxu0
          %v2556 = vadd.f32 0.0, %v2555
          %v2557 = vpop.f32.mrb[0].mxu0
          %v2558 = vpop.f32.mrb[0].mxu0
          %v2559 = vadd.f32 0.0, %v2558
          %v2560 = vpop.f32.mrb[0].mxu0
          %2561 = vmatprep.mubr.bf16.mxu0 0
          %2562 = vmatmul.mubr.bf16.gmra.mrb[0].mxu0 %v2379
          %v2563 = vpop.f32.mrb[0].mxu0
          %v2564 = vadd.f32 0.0, %v2563
          %v2565 = vpop.f32.mrb[0].mxu0
          %v2566 = vpop.f32.mrb[0].mxu0
          %v2567 = vadd.f32 0.0, %v2566
          %v2568 = vpop.f32.mrb[0].mxu0
          %2569 = vmatprep.mubr.bf16.mxu0 0
          %2570 = vmatmul.mubr.bf16.gmra.mrb[0].mxu0 %v2380
          %v2571 = vpop.f32.mrb[0].mxu0
          %v2572 = vadd.f32 0.0, %v2571
          %v2573 = vpop.f32.mrb[0].mxu0
          %v2574 = vpop.f32.mrb[0].mxu0
          %v2575 = vadd.f32 0.0, %v2574
          %v2576 = vpop.f32.mrb[0].mxu0
          %2577 = vmatprep.mubr.bf16.mxu0 0
          %2578 = vmatmul.mubr.bf16.gmra.mrb[0].mxu0 %v2381
          %v2579 = vpop.f32.mrb[0].mxu0
          %v2580 = vadd.f32 0.0, %v2579
          %v2581 = vpop.f32.mrb[0].mxu0
          %v2582 = vpop.f32.mrb[0].mxu0
          %v2583 = vadd.f32 0.0, %v2582
          %v2584 = vpop.f32.mrb[0].mxu0
          %2585 = vmatprep.mubr.bf16.mxu0 0
          %2586 = vmatmul.mubr.bf16.gmra.mrb[0].mxu0 %v2382
          %v2587 = vpop.f32.mrb[0].mxu0
          %v2588 = vadd.f32 0.0, %v2587
          %v2589 = vpop.f32.mrb[0].mxu0
          %v2590 = vpop.f32.mrb[0].mxu0
          %v2591 = vadd.f32 0.0, %v2590
          %v2592 = vpop.f32.mrb[0].mxu0
          %2593 = vmatprep.mubr.bf16.mxu0 0
          %2594 = vmatmul.mubr.bf16.gmra.mrb[0].mxu0 %v2383
          %v2595 = vpop.f32.mrb[0].mxu0
          %v2596 = vadd.f32 0.0, %v2595
          %v2597 = vpop.f32.mrb[0].mxu0
          %v2598 = vpop.f32.mrb[0].mxu0
          %v2599 = vadd.f32 0.0, %v2598
          %v2600 = vpop.f32.mrb[0].mxu0
          %2601 = vmatprep.mubr.bf16.mxu0 0
          %2602 = vmatmul.mubr.bf16.gmra.mrb[0].mxu0 %v2384
          %v2603 = vpop.f32.mrb[0].mxu0
          %v2604 = vadd.f32 0.0, %v2603
          %v2605 = vpop.f32.mrb[0].mxu0
          %v2606 = vpop.f32.mrb[0].mxu0
          %v2607 = vadd.f32 0.0, %v2606
          %v2608 = vpop.f32.mrb[0].mxu0
          %2609 = vdwg.mxu0
          %v2610 = vadd.f32 %v2305, %v2484
          %v2611 = vadd.f32 %v2306, %v2487
          %v2612 = vadd.f32 %v2307, %v2492
          %v2613 = vadd.f32 %v2308, %v2495
          %v2614 = vadd.f32 %v2309, %v2500
          %v2615 = vadd.f32 %v2310, %v2503
          %v2616 = vadd.f32 %v2311, %v2508
          %v2617 = vadd.f32 %v2312, %v2511
          %v2618 = vadd.f32 %v2313, %v2516
          %v2619 = vadd.f32 %v2314, %v2519
          %v2620 = vadd.f32 %v2315, %v2524
          %v2621 = vadd.f32 %v2316, %v2527
          %v2622 = vadd.f32 %v2317, %v2532
          %v2623 = vadd.f32 %v2318, %v2535
          %v2624 = vadd.f32 %v2319, %v2540
          %v2625 = vadd.f32 %v2320, %v2543
          %v2626 = vadd.f32 %v2321, %v2548
          %v2627 = vadd.f32 %v2322, %v2551
          %v2628 = vadd.f32 %v2323, %v2556
          %v2629 = vadd.f32 %v2324, %v2559
          %v2630 = vadd.f32 %v2325, %v2564
          %v2631 = vadd.f32 %v2326, %v2567
          %v2632 = vadd.f32 %v2327, %v2572
          %v2633 = vadd.f32 %v2328, %v2575
          %v2634 = vadd.f32 %v2329, %v2580
          %v2635 = vadd.f32 %v2330, %v2583
          %v2636 = vadd.f32 %v2331, %v2588
          %v2637 = vadd.f32 %v2332, %v2591
          %v2638 = vadd.f32 %v2333, %v2596
          %v2639 = vadd.f32 %v2334, %v2599
          %v2640 = vadd.f32 %v2335, %v2604
          %v2641 = vadd.f32 %v2336, %v2607
          %s2642 = scalar_lea.vmem [#allocation2], 48
          %v2643 = vld [vmem:[%s2642] sm:$0xff]
          %v2644 = vld [vmem:[%s2642 + $0x8] sm:$0xff]
          %v2645 = vld [vmem:[%s2642 + $0x18] sm:$0xff]
          %v2646 = vld [vmem:[%s2642 + $0x20] sm:$0xff]
          %v2647 = vld [vmem:[%s2642 + $0x30] sm:$0xff]
          %v2648 = vld [vmem:[%s2642 + $0x38] sm:$0xff]
          %v2649 = vld [vmem:[%s2642 + $0x48] sm:$0xff]
          %v2650 = vld [vmem:[%s2642 + $0x50] sm:$0xff]
          %v2651 = vld [vmem:[%s2642 + $0x60] sm:$0xff]
          %v2652 = vld [vmem:[%s2642 + $0x68] sm:$0xff]
          %v2653 = vld [vmem:[%s2642 + $0x78] sm:$0xff]
          %v2654 = vld [vmem:[%s2642 + $0x80] sm:$0xff]
          %v2655 = vld [vmem:[%s2642 + $0x90] sm:$0xff]
          %v2656 = vld [vmem:[%s2642 + $0x98] sm:$0xff]
          %v2657 = vld [vmem:[%s2642 + $0xa8] sm:$0xff]
          %v2658 = vld [vmem:[%s2642 + $0xb0] sm:$0xff]
          %v2659 = vld [vmem:[%s2642 + $0xc0] sm:$0xff]
          %v2660 = vld [vmem:[%s2642 + $0xc8] sm:$0xff]
          %v2661 = vld [vmem:[%s2642 + $0xd8] sm:$0xff]
          %v2662 = vld [vmem:[%s2642 + $0xe0] sm:$0xff]
          %v2663 = vld [vmem:[%s2642 + $0xf0] sm:$0xff]
          %v2664 = vld [vmem:[%s2642 + $0xf8] sm:$0xff]
          %v2665 = vld [vmem:[%s2642 + $0x108] sm:$0xff]
          %v2666 = vld [vmem:[%s2642 + $0x110] sm:$0xff]
          %v2667 = vld [vmem:[%s2642 + $0x120] sm:$0xff]
          %v2668 = vld [vmem:[%s2642 + $0x128] sm:$0xff]
          %v2669 = vld [vmem:[%s2642 + $0x138] sm:$0xff]
          %v2670 = vld [vmem:[%s2642 + $0x140] sm:$0xff]
          %v2671 = vld [vmem:[%s2642 + $0x150] sm:$0xff]
          %v2672 = vld [vmem:[%s2642 + $0x158] sm:$0xff]
          %v2673 = vld [vmem:[%s2642 + $0x168] sm:$0xff]
          %v2674 = vld [vmem:[%s2642 + $0x170] sm:$0xff]
          %v2675 = vpack.c.bf16 %v2644, %v2643
          %v2676 = vpack.c.bf16 %v2646, %v2645
          %v2677 = vpack.c.bf16 %v2648, %v2647
          %v2678 = vpack.c.bf16 %v2650, %v2649
          %v2679 = vpack.c.bf16 %v2652, %v2651
          %v2680 = vpack.c.bf16 %v2654, %v2653
          %v2681 = vpack.c.bf16 %v2656, %v2655
          %v2682 = vpack.c.bf16 %v2658, %v2657
          %v2683 = vpack.c.bf16 %v2660, %v2659
          %v2684 = vpack.c.bf16 %v2662, %v2661
          %v2685 = vpack.c.bf16 %v2664, %v2663
          %v2686 = vpack.c.bf16 %v2666, %v2665
          %v2687 = vpack.c.bf16 %v2668, %v2667
          %v2688 = vpack.c.bf16 %v2670, %v2669
          %v2689 = vpack.c.bf16 %v2672, %v2671
          %v2690 = vpack.c.bf16 %v2674, %v2673
          %v2691 = vld [vmem:[#allocation8 + $0x180] sm:$0xf]
          %v2692 = vld [vmem:[#allocation8 + $0x184] sm:$0xf]
          %v2693 = vld [vmem:[#allocation8 + $0x188] sm:$0xf]
          %v2694 = vld [vmem:[#allocation8 + $0x18c] sm:$0xf]
          %v2695 = vld [vmem:[#allocation8 + $0x190] sm:$0xf]
          %v2696 = vld [vmem:[#allocation8 + $0x194] sm:$0xf]
          %v2697 = vld [vmem:[#allocation8 + $0x198] sm:$0xf]
          %v2698 = vld [vmem:[#allocation8 + $0x19c] sm:$0xf]
          %v2699 = vld [vmem:[#allocation8 + $0x1a0] sm:$0xf]
          %v2700 = vld [vmem:[#allocation8 + $0x1a4] sm:$0xf]
          %v2701 = vld [vmem:[#allocation8 + $0x1a8] sm:$0xf]
          %v2702 = vld [vmem:[#allocation8 + $0x1ac] sm:$0xf]
          %v2703 = vld [vmem:[#allocation8 + $0x1b0] sm:$0xf]
          %v2704 = vld [vmem:[#allocation8 + $0x1b4] sm:$0xf]
          %v2705 = vld [vmem:[#allocation8 + $0x1b8] sm:$0xf]
          %v2706 = vld [vmem:[#allocation8 + $0x1bc] sm:$0xf]
          %v2723 = vunpack.c.l.b16 %v2691
          %v2724 = vunpack.c.l.b16 %v2692
          %v2725 = vunpack.c.l.b16 %v2693
          %v2726 = vunpack.c.l.b16 %v2694
          %v2727 = vunpack.c.l.b16 %v2695
          %v2728 = vunpack.c.l.b16 %v2696
          %v2729 = vunpack.c.l.b16 %v2697
          %v2730 = vunpack.c.l.b16 %v2698
          %v2731 = vunpack.c.l.b16 %v2699
          %v2732 = vunpack.c.l.b16 %v2700
          %v2733 = vunpack.c.l.b16 %v2701
          %v2734 = vunpack.c.l.b16 %v2702
          %v2735 = vunpack.c.l.b16 %v2703
          %v2736 = vunpack.c.l.b16 %v2704
          %v2737 = vunpack.c.l.b16 %v2705
          %v2738 = vunpack.c.l.b16 %v2706
          %v2739 = vpack.c.b16 %v2724, %v2723
          %v2740 = vpack.c.b16 %v2726, %v2725
          %v2741 = vpack.c.b16 %v2728, %v2727
          %v2742 = vpack.c.b16 %v2730, %v2729
          %v2743 = vpack.c.b16 %v2732, %v2731
          %v2744 = vpack.c.b16 %v2734, %v2733
          %v2745 = vpack.c.b16 %v2736, %v2735
          %v2746 = vpack.c.b16 %v2738, %v2737
          %2755 = vmatprep.subr.bf16.mxu0 0
          %2756 = vmatpush1.bf16.msra.mxu0 %v2739
          %2757 = vmatprep.subr.bf16.mxu0 0
          %2758 = vmatpush1.bf16.msra.mxu0 %v2740
          %2759 = vmatprep.subr.bf16.mxu0 0
          %2760 = vmatpush1.bf16.msra.mxu0 %v2741
          %2761 = vmatprep.subr.bf16.mxu0 0
          %2762 = vmatpush1.bf16.msra.mxu0 %v2742
          %2763 = vmatprep.subr.bf16.mxu0 0
          %2764 = vmatpush1.bf16.msra.mxu0 %v2743
          %2765 = vmatprep.subr.bf16.mxu0 0
          %2766 = vmatpush1.bf16.msra.mxu0 %v2744
          %2767 = vmatprep.subr.bf16.mxu0 0
          %2768 = vmatpush1.bf16.msra.mxu0 %v2745
          %2769 = vmatprep.subr.bf16.mxu0 0
          %2770 = vmatpush1.bf16.msra.mxu0 %v2746
          %2771 = vmatprep.subr.bf16.mxu0 0
          %2772 = vmatpush1.bf16.msra.mxu0 0
          %2773 = vmatprep.subr.bf16.mxu0 0
          %2774 = vmatpush1.bf16.msra.mxu0 0
          %2775 = vmatprep.subr.bf16.mxu0 0
          %2776 = vmatpush1.bf16.msra.mxu0 0
          %2777 = vmatprep.subr.bf16.mxu0 0
          %2778 = vmatpush1.bf16.msra.mxu0 0
          %2779 = vmatprep.subr.bf16.mxu0 0
          %2780 = vmatpush1.bf16.msra.mxu0 0
          %2781 = vmatprep.subr.bf16.mxu0 0
          %2782 = vmatpush1.bf16.msra.mxu0 0
          %2783 = vmatprep.subr.bf16.mxu0 0
          %2784 = vmatpush1.bf16.msra.mxu0 0
          %2785 = vmatprep.subr.bf16.mxu0 0
          %2786 = vmatpush1.bf16.msra.mxu0 0
          %2787 = vmatprep.mubr.bf16.mxu0 0
          %2788 = vmatmul.mubr.bf16.gmra.mrb[0].mxu0 %v2675
          %v2789 = vpop.f32.mrb[0].mxu0
          %v2790 = vadd.f32 0.0, %v2789
          %v2791 = vpop.f32.mrb[0].mxu0
          %v2792 = vpop.f32.mrb[0].mxu0
          %v2793 = vadd.f32 0.0, %v2792
          %v2794 = vpop.f32.mrb[0].mxu0
          %2795 = vmatprep.mubr.bf16.mxu0 0
          %2796 = vmatmul.mubr.bf16.gmra.mrb[0].mxu0 %v2676
          %v2797 = vpop.f32.mrb[0].mxu0
          %v2798 = vadd.f32 0.0, %v2797
          %v2799 = vpop.f32.mrb[0].mxu0
          %v2800 = vpop.f32.mrb[0].mxu0
          %v2801 = vadd.f32 0.0, %v2800
          %v2802 = vpop.f32.mrb[0].mxu0
          %2803 = vmatprep.mubr.bf16.mxu0 0
          %2804 = vmatmul.mubr.bf16.gmra.mrb[0].mxu0 %v2677
          %v2805 = vpop.f32.mrb[0].mxu0
          %v2806 = vadd.f32 0.0, %v2805
          %v2807 = vpop.f32.mrb[0].mxu0
          %v2808 = vpop.f32.mrb[0].mxu0
          %v2809 = vadd.f32 0.0, %v2808
          %v2810 = vpop.f32.mrb[0].mxu0
          %2811 = vmatprep.mubr.bf16.mxu0 0
          %2812 = vmatmul.mubr.bf16.gmra.mrb[0].mxu0 %v2678
          %v2813 = vpop.f32.mrb[0].mxu0
          %v2814 = vadd.f32 0.0, %v2813
          %v2815 = vpop.f32.mrb[0].mxu0
          %v2816 = vpop.f32.mrb[0].mxu0
          %v2817 = vadd.f32 0.0, %v2816
          %v2818 = vpop.f32.mrb[0].mxu0
          %2819 = vmatprep.mubr.bf16.mxu0 0
          %2820 = vmatmul.mubr.bf16.gmra.mrb[0].mxu0 %v2679
          %v2821 = vpop.f32.mrb[0].mxu0
          %v2822 = vadd.f32 0.0, %v2821
          %v2823 = vpop.f32.mrb[0].mxu0
          %v2824 = vpop.f32.mrb[0].mxu0
          %v2825 = vadd.f32 0.0, %v2824
          %v2826 = vpop.f32.mrb[0].mxu0
          %2827 = vmatprep.mubr.bf16.mxu0 0
          %2828 = vmatmul.mubr.bf16.gmra.mrb[0].mxu0 %v2680
          %v2829 = vpop.f32.mrb[0].mxu0
          %v2830 = vadd.f32 0.0, %v2829
          %v2831 = vpop.f32.mrb[0].mxu0
          %v2832 = vpop.f32.mrb[0].mxu0
          %v2833 = vadd.f32 0.0, %v2832
          %v2834 = vpop.f32.mrb[0].mxu0
          %2835 = vmatprep.mubr.bf16.mxu0 0
          %2836 = vmatmul.mubr.bf16.gmra.mrb[0].mxu0 %v2681
          %v2837 = vpop.f32.mrb[0].mxu0
          %v2838 = vadd.f32 0.0, %v2837
          %v2839 = vpop.f32.mrb[0].mxu0
          %v2840 = vpop.f32.mrb[0].mxu0
          %v2841 = vadd.f32 0.0, %v2840
          %v2842 = vpop.f32.mrb[0].mxu0
          %2843 = vmatprep.mubr.bf16.mxu0 0
          %2844 = vmatmul.mubr.bf16.gmra.mrb[0].mxu0 %v2682
          %v2845 = vpop.f32.mrb[0].mxu0
          %v2846 = vadd.f32 0.0, %v2845
          %v2847 = vpop.f32.mrb[0].mxu0
          %v2848 = vpop.f32.mrb[0].mxu0
          %v2849 = vadd.f32 0.0, %v2848
          %v2850 = vpop.f32.mrb[0].mxu0
          %2851 = vmatprep.mubr.bf16.mxu0 0
          %2852 = vmatmul.mubr.bf16.gmra.mrb[0].mxu0 %v2683
          %v2853 = vpop.f32.mrb[0].mxu0
          %v2854 = vadd.f32 0.0, %v2853
          %v2855 = vpop.f32.mrb[0].mxu0
          %v2856 = vpop.f32.mrb[0].mxu0
          %v2857 = vadd.f32 0.0, %v2856
          %v2858 = vpop.f32.mrb[0].mxu0
          %2859 = vmatprep.mubr.bf16.mxu0 0
          %2860 = vmatmul.mubr.bf16.gmra.mrb[0].mxu0 %v2684
          %v2861 = vpop.f32.mrb[0].mxu0
          %v2862 = vadd.f32 0.0, %v2861
          %v2863 = vpop.f32.mrb[0].mxu0
          %v2864 = vpop.f32.mrb[0].mxu0
          %v2865 = vadd.f32 0.0, %v2864
          %v2866 = vpop.f32.mrb[0].mxu0
          %2867 = vmatprep.mubr.bf16.mxu0 0
          %2868 = vmatmul.mubr.bf16.gmra.mrb[0].mxu0 %v2685
          %v2869 = vpop.f32.mrb[0].mxu0
          %v2870 = vadd.f32 0.0, %v2869
          %v2871 = vpop.f32.mrb[0].mxu0
          %v2872 = vpop.f32.mrb[0].mxu0
          %v2873 = vadd.f32 0.0, %v2872
          %v2874 = vpop.f32.mrb[0].mxu0
          %2875 = vmatprep.mubr.bf16.mxu0 0
          %2876 = vmatmul.mubr.bf16.gmra.mrb[0].mxu0 %v2686
          %v2877 = vpop.f32.mrb[0].mxu0
          %v2878 = vadd.f32 0.0, %v2877
          %v2879 = vpop.f32.mrb[0].mxu0
          %v2880 = vpop.f32.mrb[0].mxu0
          %v2881 = vadd.f32 0.0, %v2880
          %v2882 = vpop.f32.mrb[0].mxu0
          %2883 = vmatprep.mubr.bf16.mxu0 0
          %2884 = vmatmul.mubr.bf16.gmra.mrb[0].mxu0 %v2687
          %v2885 = vpop.f32.mrb[0].mxu0
          %v2886 = vadd.f32 0.0, %v2885
          %v2887 = vpop.f32.mrb[0].mxu0
          %v2888 = vpop.f32.mrb[0].mxu0
          %v2889 = vadd.f32 0.0, %v2888
          %v2890 = vpop.f32.mrb[0].mxu0
          %2891 = vmatprep.mubr.bf16.mxu0 0
          %2892 = vmatmul.mubr.bf16.gmra.mrb[0].mxu0 %v2688
          %v2893 = vpop.f32.mrb[0].mxu0
          %v2894 = vadd.f32 0.0, %v2893
          %v2895 = vpop.f32.mrb[0].mxu0
          %v2896 = vpop.f32.mrb[0].mxu0
          %v2897 = vadd.f32 0.0, %v2896
          %v2898 = vpop.f32.mrb[0].mxu0
          %2899 = vmatprep.mubr.bf16.mxu0 0
          %2900 = vmatmul.mubr.bf16.gmra.mrb[0].mxu0 %v2689
          %v2901 = vpop.f32.mrb[0].mxu0
          %v2902 = vadd.f32 0.0, %v2901
          %v2903 = vpop.f32.mrb[0].mxu0
          %v2904 = vpop.f32.mrb[0].mxu0
          %v2905 = vadd.f32 0.0, %v2904
          %v2906 = vpop.f32.mrb[0].mxu0
          %2907 = vmatprep.mubr.bf16.mxu0 0
          %2908 = vmatmul.mubr.bf16.gmra.mrb[0].mxu0 %v2690
          %v2909 = vpop.f32.mrb[0].mxu0
          %v2910 = vadd.f32 0.0, %v2909
          %v2911 = vpop.f32.mrb[0].mxu0
          %v2912 = vpop.f32.mrb[0].mxu0
          %v2913 = vadd.f32 0.0, %v2912
          %v2914 = vpop.f32.mrb[0].mxu0
          %2915 = vdwg.mxu0
          %v2916 = vadd.f32 %v2610, %v2790
          %v2917 = vadd.f32 %v2611, %v2793
          %v2918 = vadd.f32 %v2612, %v2798
          %v2919 = vadd.f32 %v2613, %v2801
          %v2920 = vadd.f32 %v2614, %v2806
          %v2921 = vadd.f32 %v2615, %v2809
          %v2922 = vadd.f32 %v2616, %v2814
          %v2923 = vadd.f32 %v2617, %v2817
          %v2924 = vadd.f32 %v2618, %v2822
          %v2925 = vadd.f32 %v2619, %v2825
          %v2926 = vadd.f32 %v2620, %v2830
          %v2927 = vadd.f32 %v2621, %v2833
          %v2928 = vadd.f32 %v2622, %v2838
          %v2929 = vadd.f32 %v2623, %v2841
          %v2930 = vadd.f32 %v2624, %v2846
          %v2931 = vadd.f32 %v2625, %v2849
          %v2932 = vadd.f32 %v2626, %v2854
          %v2933 = vadd.f32 %v2627, %v2857
          %v2934 = vadd.f32 %v2628, %v2862
          %v2935 = vadd.f32 %v2629, %v2865
          %v2936 = vadd.f32 %v2630, %v2870
          %v2937 = vadd.f32 %v2631, %v2873
          %v2938 = vadd.f32 %v2632, %v2878
          %v2939 = vadd.f32 %v2633, %v2881
          %v2940 = vadd.f32 %v2634, %v2886
          %v2941 = vadd.f32 %v2635, %v2889
          %v2942 = vadd.f32 %v2636, %v2894
          %v2943 = vadd.f32 %v2637, %v2897
          %v2944 = vadd.f32 %v2638, %v2902
          %v2945 = vadd.f32 %v2639, %v2905
          %v2946 = vadd.f32 %v2640, %v2910
          %v2947 = vadd.f32 %v2641, %v2913
          %v2948 = vld [vmem:[%s2642 + $0x1] sm:$0xff]
          %v2949 = vld [vmem:[%s2642 + $0x9] sm:$0xff]
          %v2950 = vld [vmem:[%s2642 + $0x19] sm:$0xff]
          %v2951 = vld [vmem:[%s2642 + $0x21] sm:$0xff]
          %v2952 = vld [vmem:[%s2642 + $0x31] sm:$0xff]
          %v2953 = vld [vmem:[%s2642 + $0x39] sm:$0xff]
          %v2954 = vld [vmem:[%s2642 + $0x49] sm:$0xff]
          %v2955 = vld [vmem:[%s2642 + $0x51] sm:$0xff]
          %v2956 = vld [vmem:[%s2642 + $0x61] sm:$0xff]
          %v2957 = vld [vmem:[%s2642 + $0x69] sm:$0xff]
          %v2958 = vld [vmem:[%s2642 + $0x79] sm:$0xff]
          %v2959 = vld [vmem:[%s2642 + $0x81] sm:$0xff]
          %v2960 = vld [vmem:[%s2642 + $0x91] sm:$0xff]
          %v2961 = vld [vmem:[%s2642 + $0x99] sm:$0xff]
          %v2962 = vld [vmem:[%s2642 + $0xa9] sm:$0xff]
          %v2963 = vld [vmem:[%s2642 + $0xb1] sm:$0xff]
          %v2964 = vld [vmem:[%s2642 + $0xc1] sm:$0xff]
          %v2965 = vld [vmem:[%s2642 + $0xc9] sm:$0xff]
          %v2966 = vld [vmem:[%s2642 + $0xd9] sm:$0xff]
          %v2967 = vld [vmem:[%s2642 + $0xe1] sm:$0xff]
          %v2968 = vld [vmem:[%s2642 + $0xf1] sm:$0xff]
          %v2969 = vld [vmem:[%s2642 + $0xf9] sm:$0xff]
          %v2970 = vld [vmem:[%s2642 + $0x109] sm:$0xff]
          %v2971 = vld [vmem:[%s2642 + $0x111] sm:$0xff]
          %v2972 = vld [vmem:[%s2642 + $0x121] sm:$0xff]
          %v2973 = vld [vmem:[%s2642 + $0x129] sm:$0xff]
          %v2974 = vld [vmem:[%s2642 + $0x139] sm:$0xff]
          %v2975 = vld [vmem:[%s2642 + $0x141] sm:$0xff]
          %v2976 = vld [vmem:[%s2642 + $0x151] sm:$0xff]
          %v2977 = vld [vmem:[%s2642 + $0x159] sm:$0xff]
          %v2978 = vld [vmem:[%s2642 + $0x169] sm:$0xff]
          %v2979 = vld [vmem:[%s2642 + $0x171] sm:$0xff]
          %v2980 = vpack.c.bf16 %v2949, %v2948
          %v2981 = vpack.c.bf16 %v2951, %v2950
          %v2982 = vpack.c.bf16 %v2953, %v2952
          %v2983 = vpack.c.bf16 %v2955, %v2954
          %v2984 = vpack.c.bf16 %v2957, %v2956
          %v2985 = vpack.c.bf16 %v2959, %v2958
          %v2986 = vpack.c.bf16 %v2961, %v2960
          %v2987 = vpack.c.bf16 %v2963, %v2962
          %v2988 = vpack.c.bf16 %v2965, %v2964
          %v2989 = vpack.c.bf16 %v2967, %v2966
          %v2990 = vpack.c.bf16 %v2969, %v2968
          %v2991 = vpack.c.bf16 %v2971, %v2970
          %v2992 = vpack.c.bf16 %v2973, %v2972
          %v2993 = vpack.c.bf16 %v2975, %v2974
          %v2994 = vpack.c.bf16 %v2977, %v2976
          %v2995 = vpack.c.bf16 %v2979, %v2978
          %v2996 = vld [vmem:[#allocation8 + $0x1c0] sm:$0xf]
          %v2997 = vld [vmem:[#allocation8 + $0x1c4] sm:$0xf]
          %v2998 = vld [vmem:[#allocation8 + $0x1c8] sm:$0xf]
          %v2999 = vld [vmem:[#allocation8 + $0x1cc] sm:$0xf]
          %v3000 = vld [vmem:[#allocation8 + $0x1d0] sm:$0xf]
          %v3001 = vld [vmem:[#allocation8 + $0x1d4] sm:$0xf]
          %v3002 = vld [vmem:[#allocation8 + $0x1d8] sm:$0xf]
          %v3003 = vld [vmem:[#allocation8 + $0x1dc] sm:$0xf]
          %v3004 = vld [vmem:[#allocation8 + $0x1e0] sm:$0xf]
          %v3005 = vld [vmem:[#allocation8 + $0x1e4] sm:$0xf]
          %v3006 = vld [vmem:[#allocation8 + $0x1e8] sm:$0xf]
          %v3007 = vld [vmem:[#allocation8 + $0x1ec] sm:$0xf]
          %v3008 = vld [vmem:[#allocation8 + $0x1f0] sm:$0xf]
          %v3009 = vld [vmem:[#allocation8 + $0x1f4] sm:$0xf]
          %v3010 = vld [vmem:[#allocation8 + $0x1f8] sm:$0xf]
          %v3011 = vld [vmem:[#allocation8 + $0x1fc] sm:$0xf]
          %v3028 = vunpack.c.l.b16 %v2996
          %v3029 = vunpack.c.l.b16 %v2997
          %v3030 = vunpack.c.l.b16 %v2998
          %v3031 = vunpack.c.l.b16 %v2999
          %v3032 = vunpack.c.l.b16 %v3000
          %v3033 = vunpack.c.l.b16 %v3001
          %v3034 = vunpack.c.l.b16 %v3002
          %v3035 = vunpack.c.l.b16 %v3003
          %v3036 = vunpack.c.l.b16 %v3004
          %v3037 = vunpack.c.l.b16 %v3005
          %v3038 = vunpack.c.l.b16 %v3006
          %v3039 = vunpack.c.l.b16 %v3007
          %v3040 = vunpack.c.l.b16 %v3008
          %v3041 = vunpack.c.l.b16 %v3009
          %v3042 = vunpack.c.l.b16 %v3010
          %v3043 = vunpack.c.l.b16 %v3011
          %v3044 = vpack.c.b16 %v3029, %v3028
          %v3045 = vpack.c.b16 %v3031, %v3030
          %v3046 = vpack.c.b16 %v3033, %v3032
          %v3047 = vpack.c.b16 %v3035, %v3034
          %v3048 = vpack.c.b16 %v3037, %v3036
          %v3049 = vpack.c.b16 %v3039, %v3038
          %v3050 = vpack.c.b16 %v3041, %v3040
          %v3051 = vpack.c.b16 %v3043, %v3042
          %3060 = vmatprep.subr.bf16.mxu0 0
          %3061 = vmatpush1.bf16.msra.mxu0 %v3044
          %3062 = vmatprep.subr.bf16.mxu0 0
          %3063 = vmatpush1.bf16.msra.mxu0 %v3045
          %3064 = vmatprep.subr.bf16.mxu0 0
          %3065 = vmatpush1.bf16.msra.mxu0 %v3046
          %3066 = vmatprep.subr.bf16.mxu0 0
          %3067 = vmatpush1.bf16.msra.mxu0 %v3047
          %3068 = vmatprep.subr.bf16.mxu0 0
          %3069 = vmatpush1.bf16.msra.mxu0 %v3048
          %3070 = vmatprep.subr.bf16.mxu0 0
          %3071 = vmatpush1.bf16.msra.mxu0 %v3049
          %3072 = vmatprep.subr.bf16.mxu0 0
          %3073 = vmatpush1.bf16.msra.mxu0 %v3050
          %3074 = vmatprep.subr.bf16.mxu0 0
          %3075 = vmatpush1.bf16.msra.mxu0 %v3051
          %3076 = vmatprep.subr.bf16.mxu0 0
          %3077 = vmatpush1.bf16.msra.mxu0 0
          %3078 = vmatprep.subr.bf16.mxu0 0
          %3079 = vmatpush1.bf16.msra.mxu0 0
          %3080 = vmatprep.subr.bf16.mxu0 0
          %3081 = vmatpush1.bf16.msra.mxu0 0
          %3082 = vmatprep.subr.bf16.mxu0 0
          %3083 = vmatpush1.bf16.msra.mxu0 0
          %3084 = vmatprep.subr.bf16.mxu0 0
          %3085 = vmatpush1.bf16.msra.mxu0 0
          %3086 = vmatprep.subr.bf16.mxu0 0
          %3087 = vmatpush1.bf16.msra.mxu0 0
          %3088 = vmatprep.subr.bf16.mxu0 0
          %3089 = vmatpush1.bf16.msra.mxu0 0
          %3090 = vmatprep.subr.bf16.mxu0 0
          %3091 = vmatpush1.bf16.msra.mxu0 0
          %3092 = vmatprep.mubr.bf16.mxu0 0
          %3093 = vmatmul.mubr.bf16.gmra.mrb[0].mxu0 %v2980
          %v3094 = vpop.f32.mrb[0].mxu0
          %v3095 = vadd.f32 0.0, %v3094
          %v3096 = vpop.f32.mrb[0].mxu0
          %v3097 = vpop.f32.mrb[0].mxu0
          %v3098 = vadd.f32 0.0, %v3097
          %v3099 = vpop.f32.mrb[0].mxu0
          %3100 = vmatprep.mubr.bf16.mxu0 0
          %3101 = vmatmul.mubr.bf16.gmra.mrb[0].mxu0 %v2981
          %v3102 = vpop.f32.mrb[0].mxu0
          %v3103 = vadd.f32 0.0, %v3102
          %v3104 = vpop.f32.mrb[0].mxu0
          %v3105 = vpop.f32.mrb[0].mxu0
          %v3106 = vadd.f32 0.0, %v3105
          %v3107 = vpop.f32.mrb[0].mxu0
          %3108 = vmatprep.mubr.bf16.mxu0 0
          %3109 = vmatmul.mubr.bf16.gmra.mrb[0].mxu0 %v2982
          %v3110 = vpop.f32.mrb[0].mxu0
          %v3111 = vadd.f32 0.0, %v3110
          %v3112 = vpop.f32.mrb[0].mxu0
          %v3113 = vpop.f32.mrb[0].mxu0
          %v3114 = vadd.f32 0.0, %v3113
          %v3115 = vpop.f32.mrb[0].mxu0
          %3116 = vmatprep.mubr.bf16.mxu0 0
          %3117 = vmatmul.mubr.bf16.gmra.mrb[0].mxu0 %v2983
          %v3118 = vpop.f32.mrb[0].mxu0
          %v3119 = vadd.f32 0.0, %v3118
          %v3120 = vpop.f32.mrb[0].mxu0
          %v3121 = vpop.f32.mrb[0].mxu0
          %v3122 = vadd.f32 0.0, %v3121
          %v3123 = vpop.f32.mrb[0].mxu0
          %3124 = vmatprep.mubr.bf16.mxu0 0
          %3125 = vmatmul.mubr.bf16.gmra.mrb[0].mxu0 %v2984
          %v3126 = vpop.f32.mrb[0].mxu0
          %v3127 = vadd.f32 0.0, %v3126
          %v3128 = vpop.f32.mrb[0].mxu0
          %v3129 = vpop.f32.mrb[0].mxu0
          %v3130 = vadd.f32 0.0, %v3129
          %v3131 = vpop.f32.mrb[0].mxu0
          %3132 = vmatprep.mubr.bf16.mxu0 0
          %3133 = vmatmul.mubr.bf16.gmra.mrb[0].mxu0 %v2985
          %v3134 = vpop.f32.mrb[0].mxu0
          %v3135 = vadd.f32 0.0, %v3134
          %v3136 = vpop.f32.mrb[0].mxu0
          %v3137 = vpop.f32.mrb[0].mxu0
          %v3138 = vadd.f32 0.0, %v3137
          %v3139 = vpop.f32.mrb[0].mxu0
          %3140 = vmatprep.mubr.bf16.mxu0 0
          %3141 = vmatmul.mubr.bf16.gmra.mrb[0].mxu0 %v2986
          %v3142 = vpop.f32.mrb[0].mxu0
          %v3143 = vadd.f32 0.0, %v3142
          %v3144 = vpop.f32.mrb[0].mxu0
          %v3145 = vpop.f32.mrb[0].mxu0
          %v3146 = vadd.f32 0.0, %v3145
          %v3147 = vpop.f32.mrb[0].mxu0
          %3148 = vmatprep.mubr.bf16.mxu0 0
          %3149 = vmatmul.mubr.bf16.gmra.mrb[0].mxu0 %v2987
          %v3150 = vpop.f32.mrb[0].mxu0
          %v3151 = vadd.f32 0.0, %v3150
          %v3152 = vpop.f32.mrb[0].mxu0
          %v3153 = vpop.f32.mrb[0].mxu0
          %v3154 = vadd.f32 0.0, %v3153
          %v3155 = vpop.f32.mrb[0].mxu0
          %3156 = vmatprep.mubr.bf16.mxu0 0
          %3157 = vmatmul.mubr.bf16.gmra.mrb[0].mxu0 %v2988
          %v3158 = vpop.f32.mrb[0].mxu0
          %v3159 = vadd.f32 0.0, %v3158
          %v3160 = vpop.f32.mrb[0].mxu0
          %v3161 = vpop.f32.mrb[0].mxu0
          %v3162 = vadd.f32 0.0, %v3161
          %v3163 = vpop.f32.mrb[0].mxu0
          %3164 = vmatprep.mubr.bf16.mxu0 0
          %3165 = vmatmul.mubr.bf16.gmra.mrb[0].mxu0 %v2989
          %v3166 = vpop.f32.mrb[0].mxu0
          %v3167 = vadd.f32 0.0, %v3166
          %v3168 = vpop.f32.mrb[0].mxu0
          %v3169 = vpop.f32.mrb[0].mxu0
          %v3170 = vadd.f32 0.0, %v3169
          %v3171 = vpop.f32.mrb[0].mxu0
          %3172 = vmatprep.mubr.bf16.mxu0 0
          %3173 = vmatmul.mubr.bf16.gmra.mrb[0].mxu0 %v2990
          %v3174 = vpop.f32.mrb[0].mxu0
          %v3175 = vadd.f32 0.0, %v3174
          %v3176 = vpop.f32.mrb[0].mxu0
          %v3177 = vpop.f32.mrb[0].mxu0
          %v3178 = vadd.f32 0.0, %v3177
          %v3179 = vpop.f32.mrb[0].mxu0
          %3180 = vmatprep.mubr.bf16.mxu0 0
          %3181 = vmatmul.mubr.bf16.gmra.mrb[0].mxu0 %v2991
          %v3182 = vpop.f32.mrb[0].mxu0
          %v3183 = vadd.f32 0.0, %v3182
          %v3184 = vpop.f32.mrb[0].mxu0
          %v3185 = vpop.f32.mrb[0].mxu0
          %v3186 = vadd.f32 0.0, %v3185
          %v3187 = vpop.f32.mrb[0].mxu0
          %3188 = vmatprep.mubr.bf16.mxu0 0
          %3189 = vmatmul.mubr.bf16.gmra.mrb[0].mxu0 %v2992
          %v3190 = vpop.f32.mrb[0].mxu0
          %v3191 = vadd.f32 0.0, %v3190
          %v3192 = vpop.f32.mrb[0].mxu0
          %v3193 = vpop.f32.mrb[0].mxu0
          %v3194 = vadd.f32 0.0, %v3193
          %v3195 = vpop.f32.mrb[0].mxu0
          %3196 = vmatprep.mubr.bf16.mxu0 0
          %3197 = vmatmul.mubr.bf16.gmra.mrb[0].mxu0 %v2993
          %v3198 = vpop.f32.mrb[0].mxu0
          %v3199 = vadd.f32 0.0, %v3198
          %v3200 = vpop.f32.mrb[0].mxu0
          %v3201 = vpop.f32.mrb[0].mxu0
          %v3202 = vadd.f32 0.0, %v3201
          %v3203 = vpop.f32.mrb[0].mxu0
          %3204 = vmatprep.mubr.bf16.mxu0 0
          %3205 = vmatmul.mubr.bf16.gmra.mrb[0].mxu0 %v2994
          %v3206 = vpop.f32.mrb[0].mxu0
          %v3207 = vadd.f32 0.0, %v3206
          %v3208 = vpop.f32.mrb[0].mxu0
          %v3209 = vpop.f32.mrb[0].mxu0
          %v3210 = vadd.f32 0.0, %v3209
          %v3211 = vpop.f32.mrb[0].mxu0
          %3212 = vmatprep.mubr.bf16.mxu0 0
          %3213 = vmatmul.mubr.bf16.gmra.mrb[0].mxu0 %v2995
          %v3214 = vpop.f32.mrb[0].mxu0
          %v3215 = vadd.f32 0.0, %v3214
          %v3216 = vpop.f32.mrb[0].mxu0
          %v3217 = vpop.f32.mrb[0].mxu0
          %v3218 = vadd.f32 0.0, %v3217
          %v3219 = vpop.f32.mrb[0].mxu0
          %3220 = vdwg.mxu0
          %v3221 = vadd.f32 %v2916, %v3095
          %v3222 = vadd.f32 %v2917, %v3098
          %v3223 = vadd.f32 %v2918, %v3103
          %v3224 = vadd.f32 %v2919, %v3106
          %v3225 = vadd.f32 %v2920, %v3111
          %v3226 = vadd.f32 %v2921, %v3114
          %v3227 = vadd.f32 %v2922, %v3119
          %v3228 = vadd.f32 %v2923, %v3122
          %v3229 = vadd.f32 %v2924, %v3127
          %v3230 = vadd.f32 %v2925, %v3130
          %v3231 = vadd.f32 %v2926, %v3135
          %v3232 = vadd.f32 %v2927, %v3138
          %v3233 = vadd.f32 %v2928, %v3143
          %v3234 = vadd.f32 %v2929, %v3146
          %v3235 = vadd.f32 %v2930, %v3151
          %v3236 = vadd.f32 %v2931, %v3154
          %v3237 = vadd.f32 %v2932, %v3159
          %v3238 = vadd.f32 %v2933, %v3162
          %v3239 = vadd.f32 %v2934, %v3167
          %v3240 = vadd.f32 %v2935, %v3170
          %v3241 = vadd.f32 %v2936, %v3175
          %v3242 = vadd.f32 %v2937, %v3178
          %v3243 = vadd.f32 %v2938, %v3183
          %v3244 = vadd.f32 %v2939, %v3186
          %v3245 = vadd.f32 %v2940, %v3191
          %v3246 = vadd.f32 %v2941, %v3194
          %v3247 = vadd.f32 %v2942, %v3199
          %v3248 = vadd.f32 %v2943, %v3202
          %v3249 = vadd.f32 %v2944, %v3207
          %v3250 = vadd.f32 %v2945, %v3210
          %v3251 = vadd.f32 %v2946, %v3215
          %v3252 = vadd.f32 %v2947, %v3218
          %v3253 = vld [vmem:[%s2642 + $0x2] sm:$0xff]
          %v3254 = vld [vmem:[%s2642 + $0xa] sm:$0xff]
          %v3255 = vld [vmem:[%s2642 + $0x1a] sm:$0xff]
          %v3256 = vld [vmem:[%s2642 + $0x22] sm:$0xff]
          %v3257 = vld [vmem:[%s2642 + $0x32] sm:$0xff]
          %v3258 = vld [vmem:[%s2642 + $0x3a] sm:$0xff]
          %v3259 = vld [vmem:[%s2642 + $0x4a] sm:$0xff]
          %v3260 = vld [vmem:[%s2642 + $0x52] sm:$0xff]
          %v3261 = vld [vmem:[%s2642 + $0x62] sm:$0xff]
          %v3262 = vld [vmem:[%s2642 + $0x6a] sm:$0xff]
          %v3263 = vld [vmem:[%s2642 + $0x7a] sm:$0xff]
          %v3264 = vld [vmem:[%s2642 + $0x82] sm:$0xff]
          %v3265 = vld [vmem:[%s2642 + $0x92] sm:$0xff]
          %v3266 = vld [vmem:[%s2642 + $0x9a] sm:$0xff]
          %v3267 = vld [vmem:[%s2642 + $0xaa] sm:$0xff]
          %v3268 = vld [vmem:[%s2642 + $0xb2] sm:$0xff]
          %v3269 = vld [vmem:[%s2642 + $0xc2] sm:$0xff]
          %v3270 = vld [vmem:[%s2642 + $0xca] sm:$0xff]
          %v3271 = vld [vmem:[%s2642 + $0xda] sm:$0xff]
          %v3272 = vld [vmem:[%s2642 + $0xe2] sm:$0xff]
          %v3273 = vld [vmem:[%s2642 + $0xf2] sm:$0xff]
          %v3274 = vld [vmem:[%s2642 + $0xfa] sm:$0xff]
          %v3275 = vld [vmem:[%s2642 + $0x10a] sm:$0xff]
          %v3276 = vld [vmem:[%s2642 + $0x112] sm:$0xff]
          %v3277 = vld [vmem:[%s2642 + $0x122] sm:$0xff]
          %v3278 = vld [vmem:[%s2642 + $0x12a] sm:$0xff]
          %v3279 = vld [vmem:[%s2642 + $0x13a] sm:$0xff]
          %v3280 = vld [vmem:[%s2642 + $0x142] sm:$0xff]
          %v3281 = vld [vmem:[%s2642 + $0x152] sm:$0xff]
          %v3282 = vld [vmem:[%s2642 + $0x15a] sm:$0xff]
          %v3283 = vld [vmem:[%s2642 + $0x16a] sm:$0xff]
          %v3284 = vld [vmem:[%s2642 + $0x172] sm:$0xff]
          %v3285 = vpack.c.bf16 %v3254, %v3253
          %v3286 = vpack.c.bf16 %v3256, %v3255
          %v3287 = vpack.c.bf16 %v3258, %v3257
          %v3288 = vpack.c.bf16 %v3260, %v3259
          %v3289 = vpack.c.bf16 %v3262, %v3261
          %v3290 = vpack.c.bf16 %v3264, %v3263
          %v3291 = vpack.c.bf16 %v3266, %v3265
          %v3292 = vpack.c.bf16 %v3268, %v3267
          %v3293 = vpack.c.bf16 %v3270, %v3269
          %v3294 = vpack.c.bf16 %v3272, %v3271
          %v3295 = vpack.c.bf16 %v3274, %v3273
          %v3296 = vpack.c.bf16 %v3276, %v3275
          %v3297 = vpack.c.bf16 %v3278, %v3277
          %v3298 = vpack.c.bf16 %v3280, %v3279
          %v3299 = vpack.c.bf16 %v3282, %v3281
          %v3300 = vpack.c.bf16 %v3284, %v3283
          %v3301 = vld [vmem:[#allocation8 + $0x200] sm:$0xf]
          %v3302 = vld [vmem:[#allocation8 + $0x204] sm:$0xf]
          %v3303 = vld [vmem:[#allocation8 + $0x208] sm:$0xf]
          %v3304 = vld [vmem:[#allocation8 + $0x20c] sm:$0xf]
          %v3305 = vld [vmem:[#allocation8 + $0x210] sm:$0xf]
          %v3306 = vld [vmem:[#allocation8 + $0x214] sm:$0xf]
          %v3307 = vld [vmem:[#allocation8 + $0x218] sm:$0xf]
          %v3308 = vld [vmem:[#allocation8 + $0x21c] sm:$0xf]
          %v3309 = vld [vmem:[#allocation8 + $0x220] sm:$0xf]
          %v3310 = vld [vmem:[#allocation8 + $0x224] sm:$0xf]
          %v3311 = vld [vmem:[#allocation8 + $0x228] sm:$0xf]
          %v3312 = vld [vmem:[#allocation8 + $0x22c] sm:$0xf]
          %v3313 = vld [vmem:[#allocation8 + $0x230] sm:$0xf]
          %v3314 = vld [vmem:[#allocation8 + $0x234] sm:$0xf]
          %v3315 = vld [vmem:[#allocation8 + $0x238] sm:$0xf]
          %v3316 = vld [vmem:[#allocation8 + $0x23c] sm:$0xf]
          %v3333 = vunpack.c.l.b16 %v3301
          %v3334 = vunpack.c.l.b16 %v3302
          %v3335 = vunpack.c.l.b16 %v3303
          %v3336 = vunpack.c.l.b16 %v3304
          %v3337 = vunpack.c.l.b16 %v3305
          %v3338 = vunpack.c.l.b16 %v3306
          %v3339 = vunpack.c.l.b16 %v3307
          %v3340 = vunpack.c.l.b16 %v3308
          %v3341 = vunpack.c.l.b16 %v3309
          %v3342 = vunpack.c.l.b16 %v3310
          %v3343 = vunpack.c.l.b16 %v3311
          %v3344 = vunpack.c.l.b16 %v3312
          %v3345 = vunpack.c.l.b16 %v3313
          %v3346 = vunpack.c.l.b16 %v3314
          %v3347 = vunpack.c.l.b16 %v3315
          %v3348 = vunpack.c.l.b16 %v3316
          %v3349 = vpack.c.b16 %v3334, %v3333
          %v3350 = vpack.c.b16 %v3336, %v3335
          %v3351 = vpack.c.b16 %v3338, %v3337
          %v3352 = vpack.c.b16 %v3340, %v3339
          %v3353 = vpack.c.b16 %v3342, %v3341
          %v3354 = vpack.c.b16 %v3344, %v3343
          %v3355 = vpack.c.b16 %v3346, %v3345
          %v3356 = vpack.c.b16 %v3348, %v3347
          %3365 = vmatprep.subr.bf16.mxu0 0
          %3366 = vmatpush1.bf16.msra.mxu0 %v3349
          %3367 = vmatprep.subr.bf16.mxu0 0
          %3368 = vmatpush1.bf16.msra.mxu0 %v3350
          %3369 = vmatprep.subr.bf16.mxu0 0
          %3370 = vmatpush1.bf16.msra.mxu0 %v3351
          %3371 = vmatprep.subr.bf16.mxu0 0
          %3372 = vmatpush1.bf16.msra.mxu0 %v3352
          %3373 = vmatprep.subr.bf16.mxu0 0
          %3374 = vmatpush1.bf16.msra.mxu0 %v3353
          %3375 = vmatprep.subr.bf16.mxu0 0
          %3376 = vmatpush1.bf16.msra.mxu0 %v3354
          %3377 = vmatprep.subr.bf16.mxu0 0
          %3378 = vmatpush1.bf16.msra.mxu0 %v3355
          %3379 = vmatprep.subr.bf16.mxu0 0
          %3380 = vmatpush1.bf16.msra.mxu0 %v3356
          %3381 = vmatprep.subr.bf16.mxu0 0
          %3382 = vmatpush1.bf16.msra.mxu0 0
          %3383 = vmatprep.subr.bf16.mxu0 0
          %3384 = vmatpush1.bf16.msra.mxu0 0
          %3385 = vmatprep.subr.bf16.mxu0 0
          %3386 = vmatpush1.bf16.msra.mxu0 0
          %3387 = vmatprep.subr.bf16.mxu0 0
          %3388 = vmatpush1.bf16.msra.mxu0 0
          %3389 = vmatprep.subr.bf16.mxu0 0
          %3390 = vmatpush1.bf16.msra.mxu0 0
          %3391 = vmatprep.subr.bf16.mxu0 0
          %3392 = vmatpush1.bf16.msra.mxu0 0
          %3393 = vmatprep.subr.bf16.mxu0 0
          %3394 = vmatpush1.bf16.msra.mxu0 0
          %3395 = vmatprep.subr.bf16.mxu0 0
          %3396 = vmatpush1.bf16.msra.mxu0 0
          %3397 = vmatprep.mubr.bf16.mxu0 0
          %3398 = vmatmul.mubr.bf16.gmra.mrb[0].mxu0 %v3285
          %v3399 = vpop.f32.mrb[0].mxu0
          %v3400 = vadd.f32 0.0, %v3399
          %v3401 = vpop.f32.mrb[0].mxu0
          %v3402 = vpop.f32.mrb[0].mxu0
          %v3403 = vadd.f32 0.0, %v3402
          %v3404 = vpop.f32.mrb[0].mxu0
          %3405 = vmatprep.mubr.bf16.mxu0 0
          %3406 = vmatmul.mubr.bf16.gmra.mrb[0].mxu0 %v3286
          %v3407 = vpop.f32.mrb[0].mxu0
          %v3408 = vadd.f32 0.0, %v3407
          %v3409 = vpop.f32.mrb[0].mxu0
          %v3410 = vpop.f32.mrb[0].mxu0
          %v3411 = vadd.f32 0.0, %v3410
          %v3412 = vpop.f32.mrb[0].mxu0
          %3413 = vmatprep.mubr.bf16.mxu0 0
          %3414 = vmatmul.mubr.bf16.gmra.mrb[0].mxu0 %v3287
          %v3415 = vpop.f32.mrb[0].mxu0
          %v3416 = vadd.f32 0.0, %v3415
          %v3417 = vpop.f32.mrb[0].mxu0
          %v3418 = vpop.f32.mrb[0].mxu0
          %v3419 = vadd.f32 0.0, %v3418
          %v3420 = vpop.f32.mrb[0].mxu0
          %3421 = vmatprep.mubr.bf16.mxu0 0
          %3422 = vmatmul.mubr.bf16.gmra.mrb[0].mxu0 %v3288
          %v3423 = vpop.f32.mrb[0].mxu0
          %v3424 = vadd.f32 0.0, %v3423
          %v3425 = vpop.f32.mrb[0].mxu0
          %v3426 = vpop.f32.mrb[0].mxu0
          %v3427 = vadd.f32 0.0, %v3426
          %v3428 = vpop.f32.mrb[0].mxu0
          %3429 = vmatprep.mubr.bf16.mxu0 0
          %3430 = vmatmul.mubr.bf16.gmra.mrb[0].mxu0 %v3289
          %v3431 = vpop.f32.mrb[0].mxu0
          %v3432 = vadd.f32 0.0, %v3431
          %v3433 = vpop.f32.mrb[0].mxu0
          %v3434 = vpop.f32.mrb[0].mxu0
          %v3435 = vadd.f32 0.0, %v3434
          %v3436 = vpop.f32.mrb[0].mxu0
          %3437 = vmatprep.mubr.bf16.mxu0 0
          %3438 = vmatmul.mubr.bf16.gmra.mrb[0].mxu0 %v3290
          %v3439 = vpop.f32.mrb[0].mxu0
          %v3440 = vadd.f32 0.0, %v3439
          %v3441 = vpop.f32.mrb[0].mxu0
          %v3442 = vpop.f32.mrb[0].mxu0
          %v3443 = vadd.f32 0.0, %v3442
          %v3444 = vpop.f32.mrb[0].mxu0
          %3445 = vmatprep.mubr.bf16.mxu0 0
          %3446 = vmatmul.mubr.bf16.gmra.mrb[0].mxu0 %v3291
          %v3447 = vpop.f32.mrb[0].mxu0
          %v3448 = vadd.f32 0.0, %v3447
          %v3449 = vpop.f32.mrb[0].mxu0
          %v3450 = vpop.f32.mrb[0].mxu0
          %v3451 = vadd.f32 0.0, %v3450
          %v3452 = vpop.f32.mrb[0].mxu0
          %3453 = vmatprep.mubr.bf16.mxu0 0
          %3454 = vmatmul.mubr.bf16.gmra.mrb[0].mxu0 %v3292
          %v3455 = vpop.f32.mrb[0].mxu0
          %v3456 = vadd.f32 0.0, %v3455
          %v3457 = vpop.f32.mrb[0].mxu0
          %v3458 = vpop.f32.mrb[0].mxu0
          %v3459 = vadd.f32 0.0, %v3458
          %v3460 = vpop.f32.mrb[0].mxu0
          %3461 = vmatprep.mubr.bf16.mxu0 0
          %3462 = vmatmul.mubr.bf16.gmra.mrb[0].mxu0 %v3293
          %v3463 = vpop.f32.mrb[0].mxu0
          %v3464 = vadd.f32 0.0, %v3463
          %v3465 = vpop.f32.mrb[0].mxu0
          %v3466 = vpop.f32.mrb[0].mxu0
          %v3467 = vadd.f32 0.0, %v3466
          %v3468 = vpop.f32.mrb[0].mxu0
          %3469 = vmatprep.mubr.bf16.mxu0 0
          %3470 = vmatmul.mubr.bf16.gmra.mrb[0].mxu0 %v3294
          %v3471 = vpop.f32.mrb[0].mxu0
          %v3472 = vadd.f32 0.0, %v3471
          %v3473 = vpop.f32.mrb[0].mxu0
          %v3474 = vpop.f32.mrb[0].mxu0
          %v3475 = vadd.f32 0.0, %v3474
          %v3476 = vpop.f32.mrb[0].mxu0
          %3477 = vmatprep.mubr.bf16.mxu0 0
          %3478 = vmatmul.mubr.bf16.gmra.mrb[0].mxu0 %v3295
          %v3479 = vpop.f32.mrb[0].mxu0
          %v3480 = vadd.f32 0.0, %v3479
          %v3481 = vpop.f32.mrb[0].mxu0
          %v3482 = vpop.f32.mrb[0].mxu0
          %v3483 = vadd.f32 0.0, %v3482
          %v3484 = vpop.f32.mrb[0].mxu0
          %3485 = vmatprep.mubr.bf16.mxu0 0
          %3486 = vmatmul.mubr.bf16.gmra.mrb[0].mxu0 %v3296
          %v3487 = vpop.f32.mrb[0].mxu0
          %v3488 = vadd.f32 0.0, %v3487
          %v3489 = vpop.f32.mrb[0].mxu0
          %v3490 = vpop.f32.mrb[0].mxu0
          %v3491 = vadd.f32 0.0, %v3490
          %v3492 = vpop.f32.mrb[0].mxu0
          %3493 = vmatprep.mubr.bf16.mxu0 0
          %3494 = vmatmul.mubr.bf16.gmra.mrb[0].mxu0 %v3297
          %v3495 = vpop.f32.mrb[0].mxu0
          %v3496 = vadd.f32 0.0, %v3495
          %v3497 = vpop.f32.mrb[0].mxu0
          %v3498 = vpop.f32.mrb[0].mxu0
          %v3499 = vadd.f32 0.0, %v3498
          %v3500 = vpop.f32.mrb[0].mxu0
          %3501 = vmatprep.mubr.bf16.mxu0 0
          %3502 = vmatmul.mubr.bf16.gmra.mrb[0].mxu0 %v3298
          %v3503 = vpop.f32.mrb[0].mxu0
          %v3504 = vadd.f32 0.0, %v3503
          %v3505 = vpop.f32.mrb[0].mxu0
          %v3506 = vpop.f32.mrb[0].mxu0
          %v3507 = vadd.f32 0.0, %v3506
          %v3508 = vpop.f32.mrb[0].mxu0
          %3509 = vmatprep.mubr.bf16.mxu0 0
          %3510 = vmatmul.mubr.bf16.gmra.mrb[0].mxu0 %v3299
          %v3511 = vpop.f32.mrb[0].mxu0
          %v3512 = vadd.f32 0.0, %v3511
          %v3513 = vpop.f32.mrb[0].mxu0
          %v3514 = vpop.f32.mrb[0].mxu0
          %v3515 = vadd.f32 0.0, %v3514
          %v3516 = vpop.f32.mrb[0].mxu0
          %3517 = vmatprep.mubr.bf16.mxu0 0
          %3518 = vmatmul.mubr.bf16.gmra.mrb[0].mxu0 %v3300
          %v3519 = vpop.f32.mrb[0].mxu0
          %v3520 = vadd.f32 0.0, %v3519
          %v3521 = vpop.f32.mrb[0].mxu0
          %v3522 = vpop.f32.mrb[0].mxu0
          %v3523 = vadd.f32 0.0, %v3522
          %v3524 = vpop.f32.mrb[0].mxu0
          %3525 = vdwg.mxu0
          %v3526 = vadd.f32 %v3221, %v3400
          %v3527 = vadd.f32 %v3222, %v3403
          %v3528 = vadd.f32 %v3223, %v3408
          %v3529 = vadd.f32 %v3224, %v3411
          %v3530 = vadd.f32 %v3225, %v3416
          %v3531 = vadd.f32 %v3226, %v3419
          %v3532 = vadd.f32 %v3227, %v3424
          %v3533 = vadd.f32 %v3228, %v3427
          %v3534 = vadd.f32 %v3229, %v3432
          %v3535 = vadd.f32 %v3230, %v3435
          %v3536 = vadd.f32 %v3231, %v3440
          %v3537 = vadd.f32 %v3232, %v3443
          %v3538 = vadd.f32 %v3233, %v3448
          %v3539 = vadd.f32 %v3234, %v3451
          %v3540 = vadd.f32 %v3235, %v3456
          %v3541 = vadd.f32 %v3236, %v3459
          %v3542 = vadd.f32 %v3237, %v3464
          %v3543 = vadd.f32 %v3238, %v3467
          %v3544 = vadd.f32 %v3239, %v3472
          %v3545 = vadd.f32 %v3240, %v3475
          %v3546 = vadd.f32 %v3241, %v3480
          %v3547 = vadd.f32 %v3242, %v3483
          %v3548 = vadd.f32 %v3243, %v3488
          %v3549 = vadd.f32 %v3244, %v3491
          %v3550 = vadd.f32 %v3245, %v3496
          %v3551 = vadd.f32 %v3246, %v3499
          %v3552 = vadd.f32 %v3247, %v3504
          %v3553 = vadd.f32 %v3248, %v3507
          %v3554 = vadd.f32 %v3249, %v3512
          %v3555 = vadd.f32 %v3250, %v3515
          %v3556 = vadd.f32 %v3251, %v3520
          %v3557 = vadd.f32 %v3252, %v3523
          %v3558 = vld [vmem:[#allocation10] sm:$0x1]
          %v3560 = vlaneseq
          %v3561 = vshrl.u32 %v3560, 7
          %v3562 = vsub.s32 0, %v3561
          %v3563 = vrot.slane %v3558, %v3562
          %v3565 = vadd.f32 %v3526, %v3563
          %v3566 = vadd.f32 %v3527, %v3563
          %v3567 = vadd.f32 %v3528, %v3563
          %v3568 = vadd.f32 %v3529, %v3563
          %v3569 = vadd.f32 %v3530, %v3563
          %v3570 = vadd.f32 %v3531, %v3563
          %v3571 = vadd.f32 %v3532, %v3563
          %v3572 = vadd.f32 %v3533, %v3563
          %v3573 = vadd.f32 %v3534, %v3563
          %v3574 = vadd.f32 %v3535, %v3563
          %v3575 = vadd.f32 %v3536, %v3563
          %v3576 = vadd.f32 %v3537, %v3563
          %v3577 = vadd.f32 %v3538, %v3563
          %v3578 = vadd.f32 %v3539, %v3563
          %v3579 = vadd.f32 %v3540, %v3563
          %v3580 = vadd.f32 %v3541, %v3563
          %v3581 = vadd.f32 %v3542, %v3563
          %v3582 = vadd.f32 %v3543, %v3563
          %v3583 = vadd.f32 %v3544, %v3563
          %v3584 = vadd.f32 %v3545, %v3563
          %v3585 = vadd.f32 %v3546, %v3563
          %v3586 = vadd.f32 %v3547, %v3563
          %v3587 = vadd.f32 %v3548, %v3563
          %v3588 = vadd.f32 %v3549, %v3563
          %v3589 = vadd.f32 %v3550, %v3563
          %v3590 = vadd.f32 %v3551, %v3563
          %v3591 = vadd.f32 %v3552, %v3563
          %v3592 = vadd.f32 %v3553, %v3563
          %v3593 = vadd.f32 %v3554, %v3563
          %v3594 = vadd.f32 %v3555, %v3563
          %v3595 = vadd.f32 %v3556, %v3563
          %v3596 = vadd.f32 %v3557, %v3563
          %v3597 = vmax.f32 %v3565, 0.0
          %v3598 = vmax.f32 %v3566, 0.0
          %v3599 = vmax.f32 %v3567, 0.0
          %v3600 = vmax.f32 %v3568, 0.0
          %v3601 = vmax.f32 %v3569, 0.0
          %v3602 = vmax.f32 %v3570, 0.0
          %v3603 = vmax.f32 %v3571, 0.0
          %v3604 = vmax.f32 %v3572, 0.0
          %v3605 = vmax.f32 %v3573, 0.0
          %v3606 = vmax.f32 %v3574, 0.0
          %v3607 = vmax.f32 %v3575, 0.0
          %v3608 = vmax.f32 %v3576, 0.0
          %v3609 = vmax.f32 %v3577, 0.0
          %v3610 = vmax.f32 %v3578, 0.0
          %v3611 = vmax.f32 %v3579, 0.0
          %v3612 = vmax.f32 %v3580, 0.0
          %v3613 = vmax.f32 %v3581, 0.0
          %v3614 = vmax.f32 %v3582, 0.0
          %v3615 = vmax.f32 %v3583, 0.0
          %v3616 = vmax.f32 %v3584, 0.0
          %v3617 = vmax.f32 %v3585, 0.0
          %v3618 = vmax.f32 %v3586, 0.0
          %v3619 = vmax.f32 %v3587, 0.0
          %v3620 = vmax.f32 %v3588, 0.0
          %v3621 = vmax.f32 %v3589, 0.0
          %v3622 = vmax.f32 %v3590, 0.0
          %v3623 = vmax.f32 %v3591, 0.0
          %v3624 = vmax.f32 %v3592, 0.0
          %v3625 = vmax.f32 %v3593, 0.0
          %v3626 = vmax.f32 %v3594, 0.0
          %v3627 = vmax.f32 %v3595, 0.0
          %v3628 = vmax.f32 %v3596, 0.0
          %3629 = vst [vmem:[#allocation3] sm:$0xff] 0.0
          %3630 = vst [vmem:[#allocation3 + $0x8] sm:$0xff] 0.0
          %3631 = vst [vmem:[#allocation3 + $0x10] sm:$0xff] 0.0
          %s3632 = scalar_lea.vmem [#allocation3], 408
          %3633 = vst [vmem:[%s3632] sm:$0xff] 0.0
          %3634 = vst [vmem:[%s3632 + $0x8] sm:$0xff] 0.0
          %3635 = vst [vmem:[%s3632 + $0x10] sm:$0xff] 0.0
          %s3636 = scalar_lea.vmem [#allocation3], 24
          %3637 = vst [vmem:[%s3636] sm:$0xff] 0.0
          %3638 = vst [vmem:[%s3636 + $0x18] sm:$0xff] 0.0
          %3639 = vst [vmem:[%s3636 + $0x30] sm:$0xff] 0.0
          %3640 = vst [vmem:[%s3636 + $0x48] sm:$0xff] 0.0
          %3641 = vst [vmem:[%s3636 + $0x60] sm:$0xff] 0.0
          %3642 = vst [vmem:[%s3636 + $0x78] sm:$0xff] 0.0
          %3643 = vst [vmem:[%s3636 + $0x90] sm:$0xff] 0.0
          %3644 = vst [vmem:[%s3636 + $0xa8] sm:$0xff] 0.0
          %3645 = vst [vmem:[%s3636 + $0xc0] sm:$0xff] 0.0
          %3646 = vst [vmem:[%s3636 + $0xd8] sm:$0xff] 0.0
          %3647 = vst [vmem:[%s3636 + $0xf0] sm:$0xff] 0.0
          %3648 = vst [vmem:[%s3636 + $0x108] sm:$0xff] 0.0
          %3649 = vst [vmem:[%s3636 + $0x120] sm:$0xff] 0.0
          %3650 = vst [vmem:[%s3636 + $0x138] sm:$0xff] 0.0
          %3651 = vst [vmem:[%s3636 + $0x150] sm:$0xff] 0.0
          %3652 = vst [vmem:[%s3636 + $0x168] sm:$0xff] 0.0
          %3653 = vst [vmem:[%s3636 + $0x10] sm:$0xff] 0.0
          %3654 = vst [vmem:[%s3636 + $0x28] sm:$0xff] 0.0
          %3655 = vst [vmem:[%s3636 + $0x40] sm:$0xff] 0.0
          %3656 = vst [vmem:[%s3636 + $0x58] sm:$0xff] 0.0
          %3657 = vst [vmem:[%s3636 + $0x70] sm:$0xff] 0.0
          %3658 = vst [vmem:[%s3636 + $0x88] sm:$0xff] 0.0
          %3659 = vst [vmem:[%s3636 + $0xa0] sm:$0xff] 0.0
          %3660 = vst [vmem:[%s3636 + $0xb8] sm:$0xff] 0.0
          %3661 = vst [vmem:[%s3636 + $0xd0] sm:$0xff] 0.0
          %3662 = vst [vmem:[%s3636 + $0xe8] sm:$0xff] 0.0
          %3663 = vst [vmem:[%s3636 + $0x100] sm:$0xff] 0.0
          %3664 = vst [vmem:[%s3636 + $0x118] sm:$0xff] 0.0
          %3665 = vst [vmem:[%s3636 + $0x130] sm:$0xff] 0.0
          %3666 = vst [vmem:[%s3636 + $0x148] sm:$0xff] 0.0
          %3667 = vst [vmem:[%s3636 + $0x160] sm:$0xff] 0.0
          %3668 = vst [vmem:[%s3636 + $0x178] sm:$0xff] 0.0
          %3669 = vst [vmem:[%s3636 + $0x1] sm:$0xff] %v3597
          %3670 = vst [vmem:[%s3636 + $0x9] sm:$0xff] %v3598
          %3671 = vst [vmem:[%s3636 + $0x19] sm:$0xff] %v3599
          %3672 = vst [vmem:[%s3636 + $0x21] sm:$0xff] %v3600
          %3673 = vst [vmem:[%s3636 + $0x31] sm:$0xff] %v3601
          %3674 = vst [vmem:[%s3636 + $0x39] sm:$0xff] %v3602
          %3675 = vst [vmem:[%s3636 + $0x49] sm:$0xff] %v3603
          %3676 = vst [vmem:[%s3636 + $0x51] sm:$0xff] %v3604
          %3677 = vst [vmem:[%s3636 + $0x61] sm:$0xff] %v3605
          %3678 = vst [vmem:[%s3636 + $0x69] sm:$0xff] %v3606
          %3679 = vst [vmem:[%s3636 + $0x79] sm:$0xff] %v3607
          %3680 = vst [vmem:[%s3636 + $0x81] sm:$0xff] %v3608
          %3681 = vst [vmem:[%s3636 + $0x91] sm:$0xff] %v3609
          %3682 = vst [vmem:[%s3636 + $0x99] sm:$0xff] %v3610
          %3683 = vst [vmem:[%s3636 + $0xa9] sm:$0xff] %v3611
          %3684 = vst [vmem:[%s3636 + $0xb1] sm:$0xff] %v3612
          %3685 = vst [vmem:[%s3636 + $0xc1] sm:$0xff] %v3613
          %3686 = vst [vmem:[%s3636 + $0xc9] sm:$0xff] %v3614
          %3687 = vst [vmem:[%s3636 + $0xd9] sm:$0xff] %v3615
          %3688 = vst [vmem:[%s3636 + $0xe1] sm:$0xff] %v3616
          %3689 = vst [vmem:[%s3636 + $0xf1] sm:$0xff] %v3617
          %3690 = vst [vmem:[%s3636 + $0xf9] sm:$0xff] %v3618
          %3691 = vst [vmem:[%s3636 + $0x109] sm:$0xff] %v3619
          %3692 = vst [vmem:[%s3636 + $0x111] sm:$0xff] %v3620
          %3693 = vst [vmem:[%s3636 + $0x121] sm:$0xff] %v3621
          %3694 = vst [vmem:[%s3636 + $0x129] sm:$0xff] %v3622
          %3695 = vst [vmem:[%s3636 + $0x139] sm:$0xff] %v3623
          %3696 = vst [vmem:[%s3636 + $0x141] sm:$0xff] %v3624
          %3697 = vst [vmem:[%s3636 + $0x151] sm:$0xff] %v3625
          %3698 = vst [vmem:[%s3636 + $0x159] sm:$0xff] %v3626
          %3699 = vst [vmem:[%s3636 + $0x169] sm:$0xff] %v3627
          %3700 = vst [vmem:[%s3636 + $0x171] sm:$0xff] %v3628
        $region80: #{tpu_custom_call.1} parent=47 // pred_fallthru
          _
        %v3701 = vld [vmem:[#allocation3] sm:$0xff]
        %v3702 = vld [vmem:[#allocation3 + $0x8] sm:$0xff]
        %v3703 = vld [vmem:[#allocation3 + $0x18] sm:$0xff]
        %v3704 = vld [vmem:[#allocation3 + $0x20] sm:$0xff]
        %v3705 = vld [vmem:[#allocation3 + $0x30] sm:$0xff]
        %v3706 = vld [vmem:[#allocation3 + $0x38] sm:$0xff]
        %v3707 = vld [vmem:[#allocation3 + $0x48] sm:$0xff]
        %v3708 = vld [vmem:[#allocation3 + $0x50] sm:$0xff]
        %v3709 = vld [vmem:[#allocation3 + $0x60] sm:$0xff]
        %v3710 = vld [vmem:[#allocation3 + $0x68] sm:$0xff]
        %v3711 = vld [vmem:[#allocation3 + $0x78] sm:$0xff]
        %v3712 = vld [vmem:[#allocation3 + $0x80] sm:$0xff]
        %v3713 = vld [vmem:[#allocation3 + $0x90] sm:$0xff]
        %v3714 = vld [vmem:[#allocation3 + $0x98] sm:$0xff]
        %v3715 = vld [vmem:[#allocation3 + $0xa8] sm:$0xff]
        %v3716 = vld [vmem:[#allocation3 + $0xb0] sm:$0xff]
        %v3717 = vld [vmem:[#allocation3 + $0xc0] sm:$0xff]
        %v3718 = vld [vmem:[#allocation3 + $0xc8] sm:$0xff]
        %v3719 = vld [vmem:[#allocation3 + $0xd8] sm:$0xff]
        %v3720 = vld [vmem:[#allocation3 + $0xe0] sm:$0xff]
        %v3721 = vld [vmem:[#allocation3 + $0xf0] sm:$0xff]
        %v3722 = vld [vmem:[#allocation3 + $0xf8] sm:$0xff]
        %v3723 = vld [vmem:[#allocation3 + $0x108] sm:$0xff]
        %v3724 = vld [vmem:[#allocation3 + $0x110] sm:$0xff]
        %v3725 = vld [vmem:[#allocation3 + $0x120] sm:$0xff]
        %v3726 = vld [vmem:[#allocation3 + $0x128] sm:$0xff]
        %v3727 = vld [vmem:[#allocation3 + $0x138] sm:$0xff]
        %v3728 = vld [vmem:[#allocation3 + $0x140] sm:$0xff]
        %v3729 = vld [vmem:[#allocation3 + $0x150] sm:$0xff]
        %v3730 = vld [vmem:[#allocation3 + $0x158] sm:$0xff]
        %v3731 = vld [vmem:[#allocation3 + $0x168] sm:$0xff]
        %v3732 = vld [vmem:[#allocation3 + $0x170] sm:$0xff]
        %v3733 = vpack.c.bf16 %v3702, %v3701
        %v3734 = vpack.c.bf16 %v3704, %v3703
        %v3735 = vpack.c.bf16 %v3706, %v3705
        %v3736 = vpack.c.bf16 %v3708, %v3707
        %v3737 = vpack.c.bf16 %v3710, %v3709
        %v3738 = vpack.c.bf16 %v3712, %v3711
        %v3739 = vpack.c.bf16 %v3714, %v3713
        %v3740 = vpack.c.bf16 %v3716, %v3715
        %v3741 = vpack.c.bf16 %v3718, %v3717
        %v3742 = vpack.c.bf16 %v3720, %v3719
        %v3743 = vpack.c.bf16 %v3722, %v3721
        %v3744 = vpack.c.bf16 %v3724, %v3723
        %v3745 = vpack.c.bf16 %v3726, %v3725
        %v3746 = vpack.c.bf16 %v3728, %v3727
        %v3747 = vpack.c.bf16 %v3730, %v3729
        %v3748 = vpack.c.bf16 %v3732, %v3731
        %v3749 = vld [vmem:[#allocation11] sm:$0xf]
        %v3750 = vld [vmem:[#allocation11 + $0x4] sm:$0xf]
        %v3751 = vld [vmem:[#allocation11 + $0x8] sm:$0xf]
        %v3752 = vld [vmem:[#allocation11 + $0xc] sm:$0xf]
        %v3753 = vld [vmem:[#allocation11 + $0x10] sm:$0xf]
        %v3754 = vld [vmem:[#allocation11 + $0x14] sm:$0xf]
        %v3755 = vld [vmem:[#allocation11 + $0x18] sm:$0xf]
        %v3756 = vld [vmem:[#allocation11 + $0x1c] sm:$0xf]
        %v3757 = vld [vmem:[#allocation11 + $0x20] sm:$0xf]
        %v3758 = vld [vmem:[#allocation11 + $0x24] sm:$0xf]
        %v3759 = vld [vmem:[#allocation11 + $0x28] sm:$0xf]
        %v3760 = vld [vmem:[#allocation11 + $0x2c] sm:$0xf]
        %v3761 = vld [vmem:[#allocation11 + $0x30] sm:$0xf]
        %v3762 = vld [vmem:[#allocation11 + $0x34] sm:$0xf]
        %v3763 = vld [vmem:[#allocation11 + $0x38] sm:$0xf]
        %v3764 = vld [vmem:[#allocation11 + $0x3c] sm:$0xf]
        %v3765 = vld [vmem:[#allocation3 + $0x1] sm:$0xff]
        %v3766 = vld [vmem:[#allocation3 + $0x9] sm:$0xff]
        %v3767 = vld [vmem:[#allocation3 + $0x19] sm:$0xff]
        %v3768 = vld [vmem:[#allocation3 + $0x21] sm:$0xff]
        %v3769 = vld [vmem:[#allocation3 + $0x31] sm:$0xff]
        %v3770 = vld [vmem:[#allocation3 + $0x39] sm:$0xff]
        %v3771 = vld [vmem:[#allocation3 + $0x49] sm:$0xff]
        %v3772 = vld [vmem:[#allocation3 + $0x51] sm:$0xff]
        %v3773 = vld [vmem:[#allocation3 + $0x61] sm:$0xff]
        %v3774 = vld [vmem:[#allocation3 + $0x69] sm:$0xff]
        %v3775 = vld [vmem:[#allocation3 + $0x79] sm:$0xff]
        %v3776 = vld [vmem:[#allocation3 + $0x81] sm:$0xff]
        %v3777 = vld [vmem:[#allocation3 + $0x91] sm:$0xff]
        %v3778 = vld [vmem:[#allocation3 + $0x99] sm:$0xff]
        %v3779 = vld [vmem:[#allocation3 + $0xa9] sm:$0xff]
        %v3780 = vld [vmem:[#allocation3 + $0xb1] sm:$0xff]
        %v3781 = vld [vmem:[#allocation3 + $0xc1] sm:$0xff]
        %v3782 = vld [vmem:[#allocation3 + $0xc9] sm:$0xff]
        %v3783 = vld [vmem:[#allocation3 + $0xd9] sm:$0xff]
        %v3784 = vld [vmem:[#allocation3 + $0xe1] sm:$0xff]
        %v3785 = vld [vmem:[#allocation3 + $0xf1] sm:$0xff]
        %v3786 = vld [vmem:[#allocation3 + $0xf9] sm:$0xff]
        %v3787 = vld [vmem:[#allocation3 + $0x109] sm:$0xff]
        %v3788 = vld [vmem:[#allocation3 + $0x111] sm:$0xff]
        %v3789 = vld [vmem:[#allocation3 + $0x121] sm:$0xff]
        %v3790 = vld [vmem:[#allocation3 + $0x129] sm:$0xff]
        %v3791 = vld [vmem:[#allocation3 + $0x139] sm:$0xff]
        %v3792 = vld [vmem:[#allocation3 + $0x141] sm:$0xff]
        %v3793 = vld [vmem:[#allocation3 + $0x151] sm:$0xff]
        %v3794 = vld [vmem:[#allocation3 + $0x159] sm:$0xff]
        %v3795 = vld [vmem:[#allocation3 + $0x169] sm:$0xff]
        %v3796 = vld [vmem:[#allocation3 + $0x171] sm:$0xff]
        %v3797 = vpack.c.bf16 %v3766, %v3765
        %v3798 = vpack.c.bf16 %v3768, %v3767
        %v3799 = vpack.c.bf16 %v3770, %v3769
        %v3800 = vpack.c.bf16 %v3772, %v3771
        %v3801 = vpack.c.bf16 %v3774, %v3773
        %v3802 = vpack.c.bf16 %v3776, %v3775
        %v3803 = vpack.c.bf16 %v3778, %v3777
        %v3804 = vpack.c.bf16 %v3780, %v3779
        %v3805 = vpack.c.bf16 %v3782, %v3781
        %v3806 = vpack.c.bf16 %v3784, %v3783
        %v3807 = vpack.c.bf16 %v3786, %v3785
        %v3808 = vpack.c.bf16 %v3788, %v3787
        %v3809 = vpack.c.bf16 %v3790, %v3789
        %v3810 = vpack.c.bf16 %v3792, %v3791
        %v3811 = vpack.c.bf16 %v3794, %v3793
        %v3812 = vpack.c.bf16 %v3796, %v3795
        %v3813 = vld [vmem:[#allocation11 + $0x40] sm:$0xf]
        %v3814 = vld [vmem:[#allocation11 + $0x44] sm:$0xf]
        %v3815 = vld [vmem:[#allocation11 + $0x48] sm:$0xf]
        %v3816 = vld [vmem:[#allocation11 + $0x4c] sm:$0xf]
        %v3817 = vld [vmem:[#allocation11 + $0x50] sm:$0xf]
        %v3818 = vld [vmem:[#allocation11 + $0x54] sm:$0xf]
        %v3819 = vld [vmem:[#allocation11 + $0x58] sm:$0xf]
        %v3820 = vld [vmem:[#allocation11 + $0x5c] sm:$0xf]
        %v3821 = vld [vmem:[#allocation11 + $0x60] sm:$0xf]
        %v3822 = vld [vmem:[#allocation11 + $0x64] sm:$0xf]
        %v3823 = vld [vmem:[#allocation11 + $0x68] sm:$0xf]
        %v3824 = vld [vmem:[#allocation11 + $0x6c] sm:$0xf]
        %v3825 = vld [vmem:[#allocation11 + $0x70] sm:$0xf]
        %v3826 = vld [vmem:[#allocation11 + $0x74] sm:$0xf]
        %v3827 = vld [vmem:[#allocation11 + $0x78] sm:$0xf]
        %v3828 = vld [vmem:[#allocation11 + $0x7c] sm:$0xf]
        %v3845 = vunpack.c.l.b16 %v3813
        %v3846 = vunpack.c.l.b16 %v3814
        %v3847 = vunpack.c.l.b16 %v3815
        %v3848 = vunpack.c.l.b16 %v3816
        %v3849 = vunpack.c.l.b16 %v3817
        %v3850 = vunpack.c.l.b16 %v3818
        %v3851 = vunpack.c.l.b16 %v3819
        %v3852 = vunpack.c.l.b16 %v3820
        %v3853 = vunpack.c.l.b16 %v3821
        %v3854 = vunpack.c.l.b16 %v3822
        %v3855 = vunpack.c.l.b16 %v3823
        %v3856 = vunpack.c.l.b16 %v3824
        %v3857 = vunpack.c.l.b16 %v3825
        %v3858 = vunpack.c.l.b16 %v3826
        %v3859 = vunpack.c.l.b16 %v3827
        %v3860 = vunpack.c.l.b16 %v3828
        %v3861 = vpack.c.b16 %v3846, %v3845
        %v3862 = vpack.c.b16 %v3848, %v3847
        %v3863 = vpack.c.b16 %v3850, %v3849
        %v3864 = vpack.c.b16 %v3852, %v3851
        %v3865 = vpack.c.b16 %v3854, %v3853
        %v3866 = vpack.c.b16 %v3856, %v3855
        %v3867 = vpack.c.b16 %v3858, %v3857
        %v3868 = vpack.c.b16 %v3860, %v3859
        %3877 = vmatprep.subr.bf16.mxu0 0
        %3878 = vmatpush1.bf16.msra.mxu0 %v3861
        %3879 = vmatprep.subr.bf16.mxu0 0
        %3880 = vmatpush1.bf16.msra.mxu0 %v3862
        %3881 = vmatprep.subr.bf16.mxu0 0
        %3882 = vmatpush1.bf16.msra.mxu0 %v3863
        %3883 = vmatprep.subr.bf16.mxu0 0
        %3884 = vmatpush1.bf16.msra.mxu0 %v3864
        %3885 = vmatprep.subr.bf16.mxu0 0
        %3886 = vmatpush1.bf16.msra.mxu0 %v3865
        %3887 = vmatprep.subr.bf16.mxu0 0
        %3888 = vmatpush1.bf16.msra.mxu0 %v3866
        %3889 = vmatprep.subr.bf16.mxu0 0
        %3890 = vmatpush1.bf16.msra.mxu0 %v3867
        %3891 = vmatprep.subr.bf16.mxu0 0
        %3892 = vmatpush1.bf16.msra.mxu0 %v3868
        %3893 = vmatprep.subr.bf16.mxu0 0
        %3894 = vmatpush1.bf16.msra.mxu0 0
        %3895 = vmatprep.subr.bf16.mxu0 0
        %3896 = vmatpush1.bf16.msra.mxu0 0
        %3897 = vmatprep.subr.bf16.mxu0 0
        %3898 = vmatpush1.bf16.msra.mxu0 0
        %3899 = vmatprep.subr.bf16.mxu0 0
        %3900 = vmatpush1.bf16.msra.mxu0 0
        %3901 = vmatprep.subr.bf16.mxu0 0
        %3902 = vmatpush1.bf16.msra.mxu0 0
        %3903 = vmatprep.subr.bf16.mxu0 0
        %3904 = vmatpush1.bf16.msra.mxu0 0
        %3905 = vmatprep.subr.bf16.mxu0 0
        %3906 = vmatpush1.bf16.msra.mxu0 0
        %3907 = vmatprep.subr.bf16.mxu0 0
        %3908 = vmatpush1.bf16.msra.mxu0 0
        %3909 = vmatprep.mubr.bf16.mxu0 0
        %3910 = vmatmul.mubr.bf16.gmra.mrb[0].mxu0 %v3797
        %v3911 = vpop.f32.mrb[0].mxu0
        %v3912 = vadd.f32 0.0, %v3911
        %v3913 = vpop.f32.mrb[0].mxu0
        %v3914 = vpop.f32.mrb[0].mxu0
        %v3915 = vadd.f32 0.0, %v3914
        %v3916 = vpop.f32.mrb[0].mxu0
        %3917 = vmatprep.mubr.bf16.mxu0 0
        %3918 = vmatmul.mubr.bf16.gmra.mrb[0].mxu0 %v3798
        %v3919 = vpop.f32.mrb[0].mxu0
        %v3920 = vadd.f32 0.0, %v3919
        %v3921 = vpop.f32.mrb[0].mxu0
        %v3922 = vpop.f32.mrb[0].mxu0
        %v3923 = vadd.f32 0.0, %v3922
        %v3924 = vpop.f32.mrb[0].mxu0
        %3925 = vmatprep.mubr.bf16.mxu0 0
        %3926 = vmatmul.mubr.bf16.gmra.mrb[0].mxu0 %v3799
        %v3927 = vpop.f32.mrb[0].mxu0
        %v3928 = vadd.f32 0.0, %v3927
        %v3929 = vpop.f32.mrb[0].mxu0
        %v3930 = vpop.f32.mrb[0].mxu0
        %v3931 = vadd.f32 0.0, %v3930
        %v3932 = vpop.f32.mrb[0].mxu0
        %3933 = vmatprep.mubr.bf16.mxu0 0
        %3934 = vmatmul.mubr.bf16.gmra.mrb[0].mxu0 %v3800
        %v3935 = vpop.f32.mrb[0].mxu0
        %v3936 = vadd.f32 0.0, %v3935
        %v3937 = vpop.f32.mrb[0].mxu0
        %v3938 = vpop.f32.mrb[0].mxu0
        %v3939 = vadd.f32 0.0, %v3938
        %v3940 = vpop.f32.mrb[0].mxu0
        %3941 = vmatprep.mubr.bf16.mxu0 0
        %3942 = vmatmul.mubr.bf16.gmra.mrb[0].mxu0 %v3801
        %v3943 = vpop.f32.mrb[0].mxu0
        %v3944 = vadd.f32 0.0, %v3943
        %v3945 = vpop.f32.mrb[0].mxu0
        %v3946 = vpop.f32.mrb[0].mxu0
        %v3947 = vadd.f32 0.0, %v3946
        %v3948 = vpop.f32.mrb[0].mxu0
        %3949 = vmatprep.mubr.bf16.mxu0 0
        %3950 = vmatmul.mubr.bf16.gmra.mrb[0].mxu0 %v3802
        %v3951 = vpop.f32.mrb[0].mxu0
        %v3952 = vadd.f32 0.0, %v3951
        %v3953 = vpop.f32.mrb[0].mxu0
        %v3954 = vpop.f32.mrb[0].mxu0
        %v3955 = vadd.f32 0.0, %v3954
        %v3956 = vpop.f32.mrb[0].mxu0
        %3957 = vmatprep.mubr.bf16.mxu0 0
        %3958 = vmatmul.mubr.bf16.gmra.mrb[0].mxu0 %v3803
        %v3959 = vpop.f32.mrb[0].mxu0
        %v3960 = vadd.f32 0.0, %v3959
        %v3961 = vpop.f32.mrb[0].mxu0
        %v3962 = vpop.f32.mrb[0].mxu0
        %v3963 = vadd.f32 0.0, %v3962
        %v3964 = vpop.f32.mrb[0].mxu0
        %3965 = vmatprep.mubr.bf16.mxu0 0
        %3966 = vmatmul.mubr.bf16.gmra.mrb[0].mxu0 %v3804
        %v3967 = vpop.f32.mrb[0].mxu0
        %v3968 = vadd.f32 0.0, %v3967
        %v3969 = vpop.f32.mrb[0].mxu0
        %v3970 = vpop.f32.mrb[0].mxu0
        %v3971 = vadd.f32 0.0, %v3970
        %v3972 = vpop.f32.mrb[0].mxu0
        %3973 = vmatprep.mubr.bf16.mxu0 0
        %3974 = vmatmul.mubr.bf16.gmra.mrb[0].mxu0 %v3805
        %v3975 = vpop.f32.mrb[0].mxu0
        %v3976 = vadd.f32 0.0, %v3975
        %v3977 = vpop.f32.mrb[0].mxu0
        %v3978 = vpop.f32.mrb[0].mxu0
        %v3979 = vadd.f32 0.0, %v3978
        %v3980 = vpop.f32.mrb[0].mxu0
        %3981 = vmatprep.mubr.bf16.mxu0 0
        %3982 = vmatmul.mubr.bf16.gmra.mrb[0].mxu0 %v3806
        %v3983 = vpop.f32.mrb[0].mxu0
        %v3984 = vadd.f32 0.0, %v3983
        %v3985 = vpop.f32.mrb[0].mxu0
        %v3986 = vpop.f32.mrb[0].mxu0
        %v3987 = vadd.f32 0.0, %v3986
        %v3988 = vpop.f32.mrb[0].mxu0
        %3989 = vmatprep.mubr.bf16.mxu0 0
        %3990 = vmatmul.mubr.bf16.gmra.mrb[0].mxu0 %v3807
        %v3991 = vpop.f32.mrb[0].mxu0
        %v3992 = vadd.f32 0.0, %v3991
        %v3993 = vpop.f32.mrb[0].mxu0
        %v3994 = vpop.f32.mrb[0].mxu0
        %v3995 = vadd.f32 0.0, %v3994
        %v3996 = vpop.f32.mrb[0].mxu0
        %3997 = vmatprep.mubr.bf16.mxu0 0
        %3998 = vmatmul.mubr.bf16.gmra.mrb[0].mxu0 %v3808
        %v3999 = vpop.f32.mrb[0].mxu0
        %v4000 = vadd.f32 0.0, %v3999
        %v4001 = vpop.f32.mrb[0].mxu0
        %v4002 = vpop.f32.mrb[0].mxu0
        %v4003 = vadd.f32 0.0, %v4002
        %v4004 = vpop.f32.mrb[0].mxu0
        %4005 = vmatprep.mubr.bf16.mxu0 0
        %4006 = vmatmul.mubr.bf16.gmra.mrb[0].mxu0 %v3809
        %v4007 = vpop.f32.mrb[0].mxu0
        %v4008 = vadd.f32 0.0, %v4007
        %v4009 = vpop.f32.mrb[0].mxu0
        %v4010 = vpop.f32.mrb[0].mxu0
        %v4011 = vadd.f32 0.0, %v4010
        %v4012 = vpop.f32.mrb[0].mxu0
        %4013 = vmatprep.mubr.bf16.mxu0 0
        %4014 = vmatmul.mubr.bf16.gmra.mrb[0].mxu0 %v3810
        %v4015 = vpop.f32.mrb[0].mxu0
        %v4016 = vadd.f32 0.0, %v4015
        %v4017 = vpop.f32.mrb[0].mxu0
        %v4018 = vpop.f32.mrb[0].mxu0
        %v4019 = vadd.f32 0.0, %v4018
        %v4020 = vpop.f32.mrb[0].mxu0
        %4021 = vmatprep.mubr.bf16.mxu0 0
        %4022 = vmatmul.mubr.bf16.gmra.mrb[0].mxu0 %v3811
        %v4023 = vpop.f32.mrb[0].mxu0
        %v4024 = vadd.f32 0.0, %v4023
        %v4025 = vpop.f32.mrb[0].mxu0
        %v4026 = vpop.f32.mrb[0].mxu0
        %v4027 = vadd.f32 0.0, %v4026
        %v4028 = vpop.f32.mrb[0].mxu0
        %4029 = vmatprep.mubr.bf16.mxu0 0
        %4030 = vmatmul.mubr.bf16.gmra.mrb[0].mxu0 %v3812
        %v4031 = vpop.f32.mrb[0].mxu0
        %v4032 = vadd.f32 0.0, %v4031
        %v4033 = vpop.f32.mrb[0].mxu0
        %v4034 = vpop.f32.mrb[0].mxu0
        %v4035 = vadd.f32 0.0, %v4034
        %v4036 = vpop.f32.mrb[0].mxu0
        %4037 = vdwg.mxu0
        %v4054 = vunpack.c.l.b16 %v3749
        %v4055 = vunpack.c.l.b16 %v3750
        %v4056 = vunpack.c.l.b16 %v3751
        %v4057 = vunpack.c.l.b16 %v3752
        %v4058 = vunpack.c.l.b16 %v3753
        %v4059 = vunpack.c.l.b16 %v3754
        %v4060 = vunpack.c.l.b16 %v3755
        %v4061 = vunpack.c.l.b16 %v3756
        %v4062 = vunpack.c.l.b16 %v3757
        %v4063 = vunpack.c.l.b16 %v3758
        %v4064 = vunpack.c.l.b16 %v3759
        %v4065 = vunpack.c.l.b16 %v3760
        %v4066 = vunpack.c.l.b16 %v3761
        %v4067 = vunpack.c.l.b16 %v3762
        %v4068 = vunpack.c.l.b16 %v3763
        %v4069 = vunpack.c.l.b16 %v3764
        %v4070 = vpack.c.b16 %v4055, %v4054
        %v4071 = vpack.c.b16 %v4057, %v4056
        %v4072 = vpack.c.b16 %v4059, %v4058
        %v4073 = vpack.c.b16 %v4061, %v4060
        %v4074 = vpack.c.b16 %v4063, %v4062
        %v4075 = vpack.c.b16 %v4065, %v4064
        %v4076 = vpack.c.b16 %v4067, %v4066
        %v4077 = vpack.c.b16 %v4069, %v4068
        %4086 = vmatprep.subr.bf16.mxu0 0
        %4087 = vmatpush1.bf16.msra.mxu0 %v4070
        %4088 = vmatprep.subr.bf16.mxu0 0
        %4089 = vmatpush1.bf16.msra.mxu0 %v4071
        %4090 = vmatprep.subr.bf16.mxu0 0
        %4091 = vmatpush1.bf16.msra.mxu0 %v4072
        %4092 = vmatprep.subr.bf16.mxu0 0
        %4093 = vmatpush1.bf16.msra.mxu0 %v4073
        %4094 = vmatprep.subr.bf16.mxu0 0
        %4095 = vmatpush1.bf16.msra.mxu0 %v4074
        %4096 = vmatprep.subr.bf16.mxu0 0
        %4097 = vmatpush1.bf16.msra.mxu0 %v4075
        %4098 = vmatprep.subr.bf16.mxu0 0
        %4099 = vmatpush1.bf16.msra.mxu0 %v4076
        %4100 = vmatprep.subr.bf16.mxu0 0
        %4101 = vmatpush1.bf16.msra.mxu0 %v4077
        %4102 = vmatprep.subr.bf16.mxu0 0
        %4103 = vmatpush1.bf16.msra.mxu0 0
        %4104 = vmatprep.subr.bf16.mxu0 0
        %4105 = vmatpush1.bf16.msra.mxu0 0
        %4106 = vmatprep.subr.bf16.mxu0 0
        %4107 = vmatpush1.bf16.msra.mxu0 0
        %4108 = vmatprep.subr.bf16.mxu0 0
        %4109 = vmatpush1.bf16.msra.mxu0 0
        %4110 = vmatprep.subr.bf16.mxu0 0
        %4111 = vmatpush1.bf16.msra.mxu0 0
        %4112 = vmatprep.subr.bf16.mxu0 0
        %4113 = vmatpush1.bf16.msra.mxu0 0
        %4114 = vmatprep.subr.bf16.mxu0 0
        %4115 = vmatpush1.bf16.msra.mxu0 0
        %4116 = vmatprep.subr.bf16.mxu0 0
        %4117 = vmatpush1.bf16.msra.mxu0 0
        %4118 = vmatprep.mubr.bf16.mxu0 0
        %4119 = vmatmul.mubr.bf16.gmra.mrb[0].mxu0 %v3733
        %v4120 = vpop.f32.mrb[0].mxu0
        %v4121 = vadd.f32 %v3912, %v4120
        %v4122 = vpop.f32.mrb[0].mxu0
        %v4123 = vpop.f32.mrb[0].mxu0
        %v4124 = vadd.f32 %v3915, %v4123
        %v4125 = vpop.f32.mrb[0].mxu0
        %4126 = vmatprep.mubr.bf16.mxu0 0
        %4127 = vmatmul.mubr.bf16.gmra.mrb[0].mxu0 %v3734
        %v4128 = vpop.f32.mrb[0].mxu0
        %v4129 = vadd.f32 %v3920, %v4128
        %v4130 = vpop.f32.mrb[0].mxu0
        %v4131 = vpop.f32.mrb[0].mxu0
        %v4132 = vadd.f32 %v3923, %v4131
        %v4133 = vpop.f32.mrb[0].mxu0
        %4134 = vmatprep.mubr.bf16.mxu0 0
        %4135 = vmatmul.mubr.bf16.gmra.mrb[0].mxu0 %v3735
        %v4136 = vpop.f32.mrb[0].mxu0
        %v4137 = vadd.f32 %v3928, %v4136
        %v4138 = vpop.f32.mrb[0].mxu0
        %v4139 = vpop.f32.mrb[0].mxu0
        %v4140 = vadd.f32 %v3931, %v4139
        %v4141 = vpop.f32.mrb[0].mxu0
        %4142 = vmatprep.mubr.bf16.mxu0 0
        %4143 = vmatmul.mubr.bf16.gmra.mrb[0].mxu0 %v3736
        %v4144 = vpop.f32.mrb[0].mxu0
        %v4145 = vadd.f32 %v3936, %v4144
        %v4146 = vpop.f32.mrb[0].mxu0
        %v4147 = vpop.f32.mrb[0].mxu0
        %v4148 = vadd.f32 %v3939, %v4147
        %v4149 = vpop.f32.mrb[0].mxu0
        %4150 = vmatprep.mubr.bf16.mxu0 0
        %4151 = vmatmul.mubr.bf16.gmra.mrb[0].mxu0 %v3737
        %v4152 = vpop.f32.mrb[0].mxu0
        %v4153 = vadd.f32 %v3944, %v4152
        %v4154 = vpop.f32.mrb[0].mxu0
        %v4155 = vpop.f32.mrb[0].mxu0
        %v4156 = vadd.f32 %v3947, %v4155
        %v4157 = vpop.f32.mrb[0].mxu0
        %4158 = vmatprep.mubr.bf16.mxu0 0
        %4159 = vmatmul.mubr.bf16.gmra.mrb[0].mxu0 %v3738
        %v4160 = vpop.f32.mrb[0].mxu0
        %v4161 = vadd.f32 %v3952, %v4160
        %v4162 = vpop.f32.mrb[0].mxu0
        %v4163 = vpop.f32.mrb[0].mxu0
        %v4164 = vadd.f32 %v3955, %v4163
        %v4165 = vpop.f32.mrb[0].mxu0
        %4166 = vmatprep.mubr.bf16.mxu0 0
        %4167 = vmatmul.mubr.bf16.gmra.mrb[0].mxu0 %v3739
        %v4168 = vpop.f32.mrb[0].mxu0
        %v4169 = vadd.f32 %v3960, %v4168
        %v4170 = vpop.f32.mrb[0].mxu0
        %v4171 = vpop.f32.mrb[0].mxu0
        %v4172 = vadd.f32 %v3963, %v4171
        %v4173 = vpop.f32.mrb[0].mxu0
        %4174 = vmatprep.mubr.bf16.mxu0 0
        %4175 = vmatmul.mubr.bf16.gmra.mrb[0].mxu0 %v3740
        %v4176 = vpop.f32.mrb[0].mxu0
        %v4177 = vadd.f32 %v3968, %v4176
        %v4178 = vpop.f32.mrb[0].mxu0
        %v4179 = vpop.f32.mrb[0].mxu0
        %v4180 = vadd.f32 %v3971, %v4179
        %v4181 = vpop.f32.mrb[0].mxu0
        %4182 = vmatprep.mubr.bf16.mxu0 0
        %4183 = vmatmul.mubr.bf16.gmra.mrb[0].mxu0 %v3741
        %v4184 = vpop.f32.mrb[0].mxu0
        %v4185 = vadd.f32 %v3976, %v4184
        %v4186 = vpop.f32.mrb[0].mxu0
        %v4187 = vpop.f32.mrb[0].mxu0
        %v4188 = vadd.f32 %v3979, %v4187
        %v4189 = vpop.f32.mrb[0].mxu0
        %4190 = vmatprep.mubr.bf16.mxu0 0
        %4191 = vmatmul.mubr.bf16.gmra.mrb[0].mxu0 %v3742
        %v4192 = vpop.f32.mrb[0].mxu0
        %v4193 = vadd.f32 %v3984, %v4192
        %v4194 = vpop.f32.mrb[0].mxu0
        %v4195 = vpop.f32.mrb[0].mxu0
        %v4196 = vadd.f32 %v3987, %v4195
        %v4197 = vpop.f32.mrb[0].mxu0
        %4198 = vmatprep.mubr.bf16.mxu0 0
        %4199 = vmatmul.mubr.bf16.gmra.mrb[0].mxu0 %v3743
        %v4200 = vpop.f32.mrb[0].mxu0
        %v4201 = vadd.f32 %v3992, %v4200
        %v4202 = vpop.f32.mrb[0].mxu0
        %v4203 = vpop.f32.mrb[0].mxu0
        %v4204 = vadd.f32 %v3995, %v4203
        %v4205 = vpop.f32.mrb[0].mxu0
        %4206 = vmatprep.mubr.bf16.mxu0 0
        %4207 = vmatmul.mubr.bf16.gmra.mrb[0].mxu0 %v3744
        %v4208 = vpop.f32.mrb[0].mxu0
        %v4209 = vadd.f32 %v4000, %v4208
        %v4210 = vpop.f32.mrb[0].mxu0
        %v4211 = vpop.f32.mrb[0].mxu0
        %v4212 = vadd.f32 %v4003, %v4211
        %v4213 = vpop.f32.mrb[0].mxu0
        %4214 = vmatprep.mubr.bf16.mxu0 0
        %4215 = vmatmul.mubr.bf16.gmra.mrb[0].mxu0 %v3745
        %v4216 = vpop.f32.mrb[0].mxu0
        %v4217 = vadd.f32 %v4008, %v4216
        %v4218 = vpop.f32.mrb[0].mxu0
        %v4219 = vpop.f32.mrb[0].mxu0
        %v4220 = vadd.f32 %v4011, %v4219
        %v4221 = vpop.f32.mrb[0].mxu0
        %4222 = vmatprep.mubr.bf16.mxu0 0
        %4223 = vmatmul.mubr.bf16.gmra.mrb[0].mxu0 %v3746
        %v4224 = vpop.f32.mrb[0].mxu0
        %v4225 = vadd.f32 %v4016, %v4224
        %v4226 = vpop.f32.mrb[0].mxu0
        %v4227 = vpop.f32.mrb[0].mxu0
        %v4228 = vadd.f32 %v4019, %v4227
        %v4229 = vpop.f32.mrb[0].mxu0
        %4230 = vmatprep.mubr.bf16.mxu0 0
        %4231 = vmatmul.mubr.bf16.gmra.mrb[0].mxu0 %v3747
        %v4232 = vpop.f32.mrb[0].mxu0
        %v4233 = vadd.f32 %v4024, %v4232
        %v4234 = vpop.f32.mrb[0].mxu0
        %v4235 = vpop.f32.mrb[0].mxu0
        %v4236 = vadd.f32 %v4027, %v4235
        %v4237 = vpop.f32.mrb[0].mxu0
        %4238 = vmatprep.mubr.bf16.mxu0 0
        %4239 = vmatmul.mubr.bf16.gmra.mrb[0].mxu0 %v3748
        %v4240 = vpop.f32.mrb[0].mxu0
        %v4241 = vadd.f32 %v4032, %v4240
        %v4242 = vpop.f32.mrb[0].mxu0
        %v4243 = vpop.f32.mrb[0].mxu0
        %v4244 = vadd.f32 %v4035, %v4243
        %v4245 = vpop.f32.mrb[0].mxu0
        %4246 = vdwg.mxu0
        %v4247 = vld [vmem:[#allocation3 + $0x2] sm:$0xff]
        %v4248 = vld [vmem:[#allocation3 + $0xa] sm:$0xff]
        %v4249 = vld [vmem:[#allocation3 + $0x1a] sm:$0xff]
        %v4250 = vld [vmem:[#allocation3 + $0x22] sm:$0xff]
        %v4251 = vld [vmem:[#allocation3 + $0x32] sm:$0xff]
        %v4252 = vld [vmem:[#allocation3 + $0x3a] sm:$0xff]
        %v4253 = vld [vmem:[#allocation3 + $0x4a] sm:$0xff]
        %v4254 = vld [vmem:[#allocation3 + $0x52] sm:$0xff]
        %v4255 = vld [vmem:[#allocation3 + $0x62] sm:$0xff]
        %v4256 = vld [vmem:[#allocation3 + $0x6a] sm:$0xff]
        %v4257 = vld [vmem:[#allocation3 + $0x7a] sm:$0xff]
        %v4258 = vld [vmem:[#allocation3 + $0x82] sm:$0xff]
        %v4259 = vld [vmem:[#allocation3 + $0x92] sm:$0xff]
        %v4260 = vld [vmem:[#allocation3 + $0x9a] sm:$0xff]
        %v4261 = vld [vmem:[#allocation3 + $0xaa] sm:$0xff]
        %v4262 = vld [vmem:[#allocation3 + $0xb2] sm:$0xff]
        %v4263 = vld [vmem:[#allocation3 + $0xc2] sm:$0xff]
        %v4264 = vld [vmem:[#allocation3 + $0xca] sm:$0xff]
        %v4265 = vld [vmem:[#allocation3 + $0xda] sm:$0xff]
        %v4266 = vld [vmem:[#allocation3 + $0xe2] sm:$0xff]
        %v4267 = vld [vmem:[#allocation3 + $0xf2] sm:$0xff]
        %v4268 = vld [vmem:[#allocation3 + $0xfa] sm:$0xff]
        %v4269 = vld [vmem:[#allocation3 + $0x10a] sm:$0xff]
        %v4270 = vld [vmem:[#allocation3 + $0x112] sm:$0xff]
        %v4271 = vld [vmem:[#allocation3 + $0x122] sm:$0xff]
        %v4272 = vld [vmem:[#allocation3 + $0x12a] sm:$0xff]
        %v4273 = vld [vmem:[#allocation3 + $0x13a] sm:$0xff]
        %v4274 = vld [vmem:[#allocation3 + $0x142] sm:$0xff]
        %v4275 = vld [vmem:[#allocation3 + $0x152] sm:$0xff]
        %v4276 = vld [vmem:[#allocation3 + $0x15a] sm:$0xff]
        %v4277 = vld [vmem:[#allocation3 + $0x16a] sm:$0xff]
        %v4278 = vld [vmem:[#allocation3 + $0x172] sm:$0xff]
        %v4279 = vpack.c.bf16 %v4248, %v4247
        %v4280 = vpack.c.bf16 %v4250, %v4249
        %v4281 = vpack.c.bf16 %v4252, %v4251
        %v4282 = vpack.c.bf16 %v4254, %v4253
        %v4283 = vpack.c.bf16 %v4256, %v4255
        %v4284 = vpack.c.bf16 %v4258, %v4257
        %v4285 = vpack.c.bf16 %v4260, %v4259
        %v4286 = vpack.c.bf16 %v4262, %v4261
        %v4287 = vpack.c.bf16 %v4264, %v4263
        %v4288 = vpack.c.bf16 %v4266, %v4265
        %v4289 = vpack.c.bf16 %v4268, %v4267
        %v4290 = vpack.c.bf16 %v4270, %v4269
        %v4291 = vpack.c.bf16 %v4272, %v4271
        %v4292 = vpack.c.bf16 %v4274, %v4273
        %v4293 = vpack.c.bf16 %v4276, %v4275
        %v4294 = vpack.c.bf16 %v4278, %v4277
        %v4295 = vld [vmem:[#allocation11 + $0x80] sm:$0xf]
        %v4296 = vld [vmem:[#allocation11 + $0x84] sm:$0xf]
        %v4297 = vld [vmem:[#allocation11 + $0x88] sm:$0xf]
        %v4298 = vld [vmem:[#allocation11 + $0x8c] sm:$0xf]
        %v4299 = vld [vmem:[#allocation11 + $0x90] sm:$0xf]
        %v4300 = vld [vmem:[#allocation11 + $0x94] sm:$0xf]
        %v4301 = vld [vmem:[#allocation11 + $0x98] sm:$0xf]
        %v4302 = vld [vmem:[#allocation11 + $0x9c] sm:$0xf]
        %v4303 = vld [vmem:[#allocation11 + $0xa0] sm:$0xf]
        %v4304 = vld [vmem:[#allocation11 + $0xa4] sm:$0xf]
        %v4305 = vld [vmem:[#allocation11 + $0xa8] sm:$0xf]
        %v4306 = vld [vmem:[#allocation11 + $0xac] sm:$0xf]
        %v4307 = vld [vmem:[#allocation11 + $0xb0] sm:$0xf]
        %v4308 = vld [vmem:[#allocation11 + $0xb4] sm:$0xf]
        %v4309 = vld [vmem:[#allocation11 + $0xb8] sm:$0xf]
        %v4310 = vld [vmem:[#allocation11 + $0xbc] sm:$0xf]
        %v4327 = vunpack.c.l.b16 %v4295
        %v4328 = vunpack.c.l.b16 %v4296
        %v4329 = vunpack.c.l.b16 %v4297
        %v4330 = vunpack.c.l.b16 %v4298
        %v4331 = vunpack.c.l.b16 %v4299
        %v4332 = vunpack.c.l.b16 %v4300
        %v4333 = vunpack.c.l.b16 %v4301
        %v4334 = vunpack.c.l.b16 %v4302
        %v4335 = vunpack.c.l.b16 %v4303
        %v4336 = vunpack.c.l.b16 %v4304
        %v4337 = vunpack.c.l.b16 %v4305
        %v4338 = vunpack.c.l.b16 %v4306
        %v4339 = vunpack.c.l.b16 %v4307
        %v4340 = vunpack.c.l.b16 %v4308
        %v4341 = vunpack.c.l.b16 %v4309
        %v4342 = vunpack.c.l.b16 %v4310
        %v4343 = vpack.c.b16 %v4328, %v4327
        %v4344 = vpack.c.b16 %v4330, %v4329
        %v4345 = vpack.c.b16 %v4332, %v4331
        %v4346 = vpack.c.b16 %v4334, %v4333
        %v4347 = vpack.c.b16 %v4336, %v4335
        %v4348 = vpack.c.b16 %v4338, %v4337
        %v4349 = vpack.c.b16 %v4340, %v4339
        %v4350 = vpack.c.b16 %v4342, %v4341
        %4359 = vmatprep.subr.bf16.mxu0 0
        %4360 = vmatpush1.bf16.msra.mxu0 %v4343
        %4361 = vmatprep.subr.bf16.mxu0 0
        %4362 = vmatpush1.bf16.msra.mxu0 %v4344
        %4363 = vmatprep.subr.bf16.mxu0 0
        %4364 = vmatpush1.bf16.msra.mxu0 %v4345
        %4365 = vmatprep.subr.bf16.mxu0 0
        %4366 = vmatpush1.bf16.msra.mxu0 %v4346
        %4367 = vmatprep.subr.bf16.mxu0 0
        %4368 = vmatpush1.bf16.msra.mxu0 %v4347
        %4369 = vmatprep.subr.bf16.mxu0 0
        %4370 = vmatpush1.bf16.msra.mxu0 %v4348
        %4371 = vmatprep.subr.bf16.mxu0 0
        %4372 = vmatpush1.bf16.msra.mxu0 %v4349
        %4373 = vmatprep.subr.bf16.mxu0 0
        %4374 = vmatpush1.bf16.msra.mxu0 %v4350
        %4375 = vmatprep.subr.bf16.mxu0 0
        %4376 = vmatpush1.bf16.msra.mxu0 0
        %4377 = vmatprep.subr.bf16.mxu0 0
        %4378 = vmatpush1.bf16.msra.mxu0 0
        %4379 = vmatprep.subr.bf16.mxu0 0
        %4380 = vmatpush1.bf16.msra.mxu0 0
        %4381 = vmatprep.subr.bf16.mxu0 0
        %4382 = vmatpush1.bf16.msra.mxu0 0
        %4383 = vmatprep.subr.bf16.mxu0 0
        %4384 = vmatpush1.bf16.msra.mxu0 0
        %4385 = vmatprep.subr.bf16.mxu0 0
        %4386 = vmatpush1.bf16.msra.mxu0 0
        %4387 = vmatprep.subr.bf16.mxu0 0
        %4388 = vmatpush1.bf16.msra.mxu0 0
        %4389 = vmatprep.subr.bf16.mxu0 0
        %4390 = vmatpush1.bf16.msra.mxu0 0
        %4391 = vmatprep.mubr.bf16.mxu0 0
        %4392 = vmatmul.mubr.bf16.gmra.mrb[0].mxu0 %v4279
        %v4393 = vpop.f32.mrb[0].mxu0
        %v4394 = vadd.f32 0.0, %v4393
        %v4395 = vpop.f32.mrb[0].mxu0
        %v4396 = vpop.f32.mrb[0].mxu0
        %v4397 = vadd.f32 0.0, %v4396
        %v4398 = vpop.f32.mrb[0].mxu0
        %4399 = vmatprep.mubr.bf16.mxu0 0
        %4400 = vmatmul.mubr.bf16.gmra.mrb[0].mxu0 %v4280
        %v4401 = vpop.f32.mrb[0].mxu0
        %v4402 = vadd.f32 0.0, %v4401
        %v4403 = vpop.f32.mrb[0].mxu0
        %v4404 = vpop.f32.mrb[0].mxu0
        %v4405 = vadd.f32 0.0, %v4404
        %v4406 = vpop.f32.mrb[0].mxu0
        %4407 = vmatprep.mubr.bf16.mxu0 0
        %4408 = vmatmul.mubr.bf16.gmra.mrb[0].mxu0 %v4281
        %v4409 = vpop.f32.mrb[0].mxu0
        %v4410 = vadd.f32 0.0, %v4409
        %v4411 = vpop.f32.mrb[0].mxu0
        %v4412 = vpop.f32.mrb[0].mxu0
        %v4413 = vadd.f32 0.0, %v4412
        %v4414 = vpop.f32.mrb[0].mxu0
        %4415 = vmatprep.mubr.bf16.mxu0 0
        %4416 = vmatmul.mubr.bf16.gmra.mrb[0].mxu0 %v4282
        %v4417 = vpop.f32.mrb[0].mxu0
        %v4418 = vadd.f32 0.0, %v4417
        %v4419 = vpop.f32.mrb[0].mxu0
        %v4420 = vpop.f32.mrb[0].mxu0
        %v4421 = vadd.f32 0.0, %v4420
        %v4422 = vpop.f32.mrb[0].mxu0
        %4423 = vmatprep.mubr.bf16.mxu0 0
        %4424 = vmatmul.mubr.bf16.gmra.mrb[0].mxu0 %v4283
        %v4425 = vpop.f32.mrb[0].mxu0
        %v4426 = vadd.f32 0.0, %v4425
        %v4427 = vpop.f32.mrb[0].mxu0
        %v4428 = vpop.f32.mrb[0].mxu0
        %v4429 = vadd.f32 0.0, %v4428
        %v4430 = vpop.f32.mrb[0].mxu0
        %4431 = vmatprep.mubr.bf16.mxu0 0
        %4432 = vmatmul.mubr.bf16.gmra.mrb[0].mxu0 %v4284
        %v4433 = vpop.f32.mrb[0].mxu0
        %v4434 = vadd.f32 0.0, %v4433
        %v4435 = vpop.f32.mrb[0].mxu0
        %v4436 = vpop.f32.mrb[0].mxu0
        %v4437 = vadd.f32 0.0, %v4436
        %v4438 = vpop.f32.mrb[0].mxu0
        %4439 = vmatprep.mubr.bf16.mxu0 0
        %4440 = vmatmul.mubr.bf16.gmra.mrb[0].mxu0 %v4285
        %v4441 = vpop.f32.mrb[0].mxu0
        %v4442 = vadd.f32 0.0, %v4441
        %v4443 = vpop.f32.mrb[0].mxu0
        %v4444 = vpop.f32.mrb[0].mxu0
        %v4445 = vadd.f32 0.0, %v4444
        %v4446 = vpop.f32.mrb[0].mxu0
        %4447 = vmatprep.mubr.bf16.mxu0 0
        %4448 = vmatmul.mubr.bf16.gmra.mrb[0].mxu0 %v4286
        %v4449 = vpop.f32.mrb[0].mxu0
        %v4450 = vadd.f32 0.0, %v4449
        %v4451 = vpop.f32.mrb[0].mxu0
        %v4452 = vpop.f32.mrb[0].mxu0
        %v4453 = vadd.f32 0.0, %v4452
        %v4454 = vpop.f32.mrb[0].mxu0
        %4455 = vmatprep.mubr.bf16.mxu0 0
        %4456 = vmatmul.mubr.bf16.gmra.mrb[0].mxu0 %v4287
        %v4457 = vpop.f32.mrb[0].mxu0
        %v4458 = vadd.f32 0.0, %v4457
        %v4459 = vpop.f32.mrb[0].mxu0
        %v4460 = vpop.f32.mrb[0].mxu0
        %v4461 = vadd.f32 0.0, %v4460
        %v4462 = vpop.f32.mrb[0].mxu0
        %4463 = vmatprep.mubr.bf16.mxu0 0
        %4464 = vmatmul.mubr.bf16.gmra.mrb[0].mxu0 %v4288
        %v4465 = vpop.f32.mrb[0].mxu0
        %v4466 = vadd.f32 0.0, %v4465
        %v4467 = vpop.f32.mrb[0].mxu0
        %v4468 = vpop.f32.mrb[0].mxu0
        %v4469 = vadd.f32 0.0, %v4468
        %v4470 = vpop.f32.mrb[0].mxu0
        %4471 = vmatprep.mubr.bf16.mxu0 0
        %4472 = vmatmul.mubr.bf16.gmra.mrb[0].mxu0 %v4289
        %v4473 = vpop.f32.mrb[0].mxu0
        %v4474 = vadd.f32 0.0, %v4473
        %v4475 = vpop.f32.mrb[0].mxu0
        %v4476 = vpop.f32.mrb[0].mxu0
        %v4477 = vadd.f32 0.0, %v4476
        %v4478 = vpop.f32.mrb[0].mxu0
        %4479 = vmatprep.mubr.bf16.mxu0 0
        %4480 = vmatmul.mubr.bf16.gmra.mrb[0].mxu0 %v4290
        %v4481 = vpop.f32.mrb[0].mxu0
        %v4482 = vadd.f32 0.0, %v4481
        %v4483 = vpop.f32.mrb[0].mxu0
        %v4484 = vpop.f32.mrb[0].mxu0
        %v4485 = vadd.f32 0.0, %v4484
        %v4486 = vpop.f32.mrb[0].mxu0
        %4487 = vmatprep.mubr.bf16.mxu0 0
        %4488 = vmatmul.mubr.bf16.gmra.mrb[0].mxu0 %v4291
        %v4489 = vpop.f32.mrb[0].mxu0
        %v4490 = vadd.f32 0.0, %v4489
        %v4491 = vpop.f32.mrb[0].mxu0
        %v4492 = vpop.f32.mrb[0].mxu0
        %v4493 = vadd.f32 0.0, %v4492
        %v4494 = vpop.f32.mrb[0].mxu0
        %4495 = vmatprep.mubr.bf16.mxu0 0
        %4496 = vmatmul.mubr.bf16.gmra.mrb[0].mxu0 %v4292
        %v4497 = vpop.f32.mrb[0].mxu0
        %v4498 = vadd.f32 0.0, %v4497
        %v4499 = vpop.f32.mrb[0].mxu0
        %v4500 = vpop.f32.mrb[0].mxu0
        %v4501 = vadd.f32 0.0, %v4500
        %v4502 = vpop.f32.mrb[0].mxu0
        %4503 = vmatprep.mubr.bf16.mxu0 0
        %4504 = vmatmul.mubr.bf16.gmra.mrb[0].mxu0 %v4293
        %v4505 = vpop.f32.mrb[0].mxu0
        %v4506 = vadd.f32 0.0, %v4505
        %v4507 = vpop.f32.mrb[0].mxu0
        %v4508 = vpop.f32.mrb[0].mxu0
        %v4509 = vadd.f32 0.0, %v4508
        %v4510 = vpop.f32.mrb[0].mxu0
        %4511 = vmatprep.mubr.bf16.mxu0 0
        %4512 = vmatmul.mubr.bf16.gmra.mrb[0].mxu0 %v4294
        %v4513 = vpop.f32.mrb[0].mxu0
        %v4514 = vadd.f32 0.0, %v4513
        %v4515 = vpop.f32.mrb[0].mxu0
        %v4516 = vpop.f32.mrb[0].mxu0
        %v4517 = vadd.f32 0.0, %v4516
        %v4518 = vpop.f32.mrb[0].mxu0
        %4519 = vdwg.mxu0
        %v4520 = vadd.f32 %v4121, %v4394
        %v4521 = vadd.f32 %v4124, %v4397
        %v4522 = vadd.f32 %v4129, %v4402
        %v4523 = vadd.f32 %v4132, %v4405
        %v4524 = vadd.f32 %v4137, %v4410
        %v4525 = vadd.f32 %v4140, %v4413
        %v4526 = vadd.f32 %v4145, %v4418
        %v4527 = vadd.f32 %v4148, %v4421
        %v4528 = vadd.f32 %v4153, %v4426
        %v4529 = vadd.f32 %v4156, %v4429
        %v4530 = vadd.f32 %v4161, %v4434
        %v4531 = vadd.f32 %v4164, %v4437
        %v4532 = vadd.f32 %v4169, %v4442
        %v4533 = vadd.f32 %v4172, %v4445
        %v4534 = vadd.f32 %v4177, %v4450
        %v4535 = vadd.f32 %v4180, %v4453
        %v4536 = vadd.f32 %v4185, %v4458
        %v4537 = vadd.f32 %v4188, %v4461
        %v4538 = vadd.f32 %v4193, %v4466
        %v4539 = vadd.f32 %v4196, %v4469
        %v4540 = vadd.f32 %v4201, %v4474
        %v4541 = vadd.f32 %v4204, %v4477
        %v4542 = vadd.f32 %v4209, %v4482
        %v4543 = vadd.f32 %v4212, %v4485
        %v4544 = vadd.f32 %v4217, %v4490
        %v4545 = vadd.f32 %v4220, %v4493
        %v4546 = vadd.f32 %v4225, %v4498
        %v4547 = vadd.f32 %v4228, %v4501
        %v4548 = vadd.f32 %v4233, %v4506
        %v4549 = vadd.f32 %v4236, %v4509
        %v4550 = vadd.f32 %v4241, %v4514
        %v4551 = vadd.f32 %v4244, %v4517
        %s4552 = scalar_lea.vmem [#allocation3], 24
        %v4553 = vld [vmem:[%s4552] sm:$0xff]
        %v4554 = vld [vmem:[%s4552 + $0x8] sm:$0xff]
        %v4555 = vld [vmem:[%s4552 + $0x18] sm:$0xff]
        %v4556 = vld [vmem:[%s4552 + $0x20] sm:$0xff]
        %v4557 = vld [vmem:[%s4552 + $0x30] sm:$0xff]
        %v4558 = vld [vmem:[%s4552 + $0x38] sm:$0xff]
        %v4559 = vld [vmem:[%s4552 + $0x48] sm:$0xff]
        %v4560 = vld [vmem:[%s4552 + $0x50] sm:$0xff]
        %v4561 = vld [vmem:[%s4552 + $0x60] sm:$0xff]
        %v4562 = vld [vmem:[%s4552 + $0x68] sm:$0xff]
        %v4563 = vld [vmem:[%s4552 + $0x78] sm:$0xff]
        %v4564 = vld [vmem:[%s4552 + $0x80] sm:$0xff]
        %v4565 = vld [vmem:[%s4552 + $0x90] sm:$0xff]
        %v4566 = vld [vmem:[%s4552 + $0x98] sm:$0xff]
        %v4567 = vld [vmem:[%s4552 + $0xa8] sm:$0xff]
        %v4568 = vld [vmem:[%s4552 + $0xb0] sm:$0xff]
        %v4569 = vld [vmem:[%s4552 + $0xc0] sm:$0xff]
        %v4570 = vld [vmem:[%s4552 + $0xc8] sm:$0xff]
        %v4571 = vld [vmem:[%s4552 + $0xd8] sm:$0xff]
        %v4572 = vld [vmem:[%s4552 + $0xe0] sm:$0xff]
        %v4573 = vld [vmem:[%s4552 + $0xf0] sm:$0xff]
        %v4574 = vld [vmem:[%s4552 + $0xf8] sm:$0xff]
        %v4575 = vld [vmem:[%s4552 + $0x108] sm:$0xff]
        %v4576 = vld [vmem:[%s4552 + $0x110] sm:$0xff]
        %v4577 = vld [vmem:[%s4552 + $0x120] sm:$0xff]
        %v4578 = vld [vmem:[%s4552 + $0x128] sm:$0xff]
        %v4579 = vld [vmem:[%s4552 + $0x138] sm:$0xff]
        %v4580 = vld [vmem:[%s4552 + $0x140] sm:$0xff]
        %v4581 = vld [vmem:[%s4552 + $0x150] sm:$0xff]
        %v4582 = vld [vmem:[%s4552 + $0x158] sm:$0xff]
        %v4583 = vld [vmem:[%s4552 + $0x168] sm:$0xff]
        %v4584 = vld [vmem:[%s4552 + $0x170] sm:$0xff]
        %v4585 = vpack.c.bf16 %v4554, %v4553
        %v4586 = vpack.c.bf16 %v4556, %v4555
        %v4587 = vpack.c.bf16 %v4558, %v4557
        %v4588 = vpack.c.bf16 %v4560, %v4559
        %v4589 = vpack.c.bf16 %v4562, %v4561
        %v4590 = vpack.c.bf16 %v4564, %v4563
        %v4591 = vpack.c.bf16 %v4566, %v4565
        %v4592 = vpack.c.bf16 %v4568, %v4567
        %v4593 = vpack.c.bf16 %v4570, %v4569
        %v4594 = vpack.c.bf16 %v4572, %v4571
        %v4595 = vpack.c.bf16 %v4574, %v4573
        %v4596 = vpack.c.bf16 %v4576, %v4575
        %v4597 = vpack.c.bf16 %v4578, %v4577
        %v4598 = vpack.c.bf16 %v4580, %v4579
        %v4599 = vpack.c.bf16 %v4582, %v4581
        %v4600 = vpack.c.bf16 %v4584, %v4583
        %v4601 = vld [vmem:[#allocation11 + $0xc0] sm:$0xf]
        %v4602 = vld [vmem:[#allocation11 + $0xc4] sm:$0xf]
        %v4603 = vld [vmem:[#allocation11 + $0xc8] sm:$0xf]
        %v4604 = vld [vmem:[#allocation11 + $0xcc] sm:$0xf]
        %v4605 = vld [vmem:[#allocation11 + $0xd0] sm:$0xf]
        %v4606 = vld [vmem:[#allocation11 + $0xd4] sm:$0xf]
        %v4607 = vld [vmem:[#allocation11 + $0xd8] sm:$0xf]
        %v4608 = vld [vmem:[#allocation11 + $0xdc] sm:$0xf]
        %v4609 = vld [vmem:[#allocation11 + $0xe0] sm:$0xf]
        %v4610 = vld [vmem:[#allocation11 + $0xe4] sm:$0xf]
        %v4611 = vld [vmem:[#allocation11 + $0xe8] sm:$0xf]
        %v4612 = vld [vmem:[#allocation11 + $0xec] sm:$0xf]
        %v4613 = vld [vmem:[#allocation11 + $0xf0] sm:$0xf]
        %v4614 = vld [vmem:[#allocation11 + $0xf4] sm:$0xf]
        %v4615 = vld [vmem:[#allocation11 + $0xf8] sm:$0xf]
        %v4616 = vld [vmem:[#allocation11 + $0xfc] sm:$0xf]
        %v4633 = vunpack.c.l.b16 %v4601
        %v4634 = vunpack.c.l.b16 %v4602
        %v4635 = vunpack.c.l.b16 %v4603
        %v4636 = vunpack.c.l.b16 %v4604
        %v4637 = vunpack.c.l.b16 %v4605
        %v4638 = vunpack.c.l.b16 %v4606
        %v4639 = vunpack.c.l.b16 %v4607
        %v4640 = vunpack.c.l.b16 %v4608
        %v4641 = vunpack.c.l.b16 %v4609
        %v4642 = vunpack.c.l.b16 %v4610
        %v4643 = vunpack.c.l.b16 %v4611
        %v4644 = vunpack.c.l.b16 %v4612
        %v4645 = vunpack.c.l.b16 %v4613
        %v4646 = vunpack.c.l.b16 %v4614
        %v4647 = vunpack.c.l.b16 %v4615
        %v4648 = vunpack.c.l.b16 %v4616
        %v4649 = vpack.c.b16 %v4634, %v4633
        %v4650 = vpack.c.b16 %v4636, %v4635
        %v4651 = vpack.c.b16 %v4638, %v4637
        %v4652 = vpack.c.b16 %v4640, %v4639
        %v4653 = vpack.c.b16 %v4642, %v4641
        %v4654 = vpack.c.b16 %v4644, %v4643
        %v4655 = vpack.c.b16 %v4646, %v4645
        %v4656 = vpack.c.b16 %v4648, %v4647
        %4665 = vmatprep.subr.bf16.mxu0 0
        %4666 = vmatpush1.bf16.msra.mxu0 %v4649
        %4667 = vmatprep.subr.bf16.mxu0 0
        %4668 = vmatpush1.bf16.msra.mxu0 %v4650
        %4669 = vmatprep.subr.bf16.mxu0 0
        %4670 = vmatpush1.bf16.msra.mxu0 %v4651
        %4671 = vmatprep.subr.bf16.mxu0 0
        %4672 = vmatpush1.bf16.msra.mxu0 %v4652
        %4673 = vmatprep.subr.bf16.mxu0 0
        %4674 = vmatpush1.bf16.msra.mxu0 %v4653
        %4675 = vmatprep.subr.bf16.mxu0 0
        %4676 = vmatpush1.bf16.msra.mxu0 %v4654
        %4677 = vmatprep.subr.bf16.mxu0 0
        %4678 = vmatpush1.bf16.msra.mxu0 %v4655
        %4679 = vmatprep.subr.bf16.mxu0 0
        %4680 = vmatpush1.bf16.msra.mxu0 %v4656
        %4681 = vmatprep.subr.bf16.mxu0 0
        %4682 = vmatpush1.bf16.msra.mxu0 0
        %4683 = vmatprep.subr.bf16.mxu0 0
        %4684 = vmatpush1.bf16.msra.mxu0 0
        %4685 = vmatprep.subr.bf16.mxu0 0
        %4686 = vmatpush1.bf16.msra.mxu0 0
        %4687 = vmatprep.subr.bf16.mxu0 0
        %4688 = vmatpush1.bf16.msra.mxu0 0
        %4689 = vmatprep.subr.bf16.mxu0 0
        %4690 = vmatpush1.bf16.msra.mxu0 0
        %4691 = vmatprep.subr.bf16.mxu0 0
        %4692 = vmatpush1.bf16.msra.mxu0 0
        %4693 = vmatprep.subr.bf16.mxu0 0
        %4694 = vmatpush1.bf16.msra.mxu0 0
        %4695 = vmatprep.subr.bf16.mxu0 0
        %4696 = vmatpush1.bf16.msra.mxu0 0
        %4697 = vmatprep.mubr.bf16.mxu0 0
        %4698 = vmatmul.mubr.bf16.gmra.mrb[0].mxu0 %v4585
        %v4699 = vpop.f32.mrb[0].mxu0
        %v4700 = vadd.f32 0.0, %v4699
        %v4701 = vpop.f32.mrb[0].mxu0
        %v4702 = vpop.f32.mrb[0].mxu0
        %v4703 = vadd.f32 0.0, %v4702
        %v4704 = vpop.f32.mrb[0].mxu0
        %4705 = vmatprep.mubr.bf16.mxu0 0
        %4706 = vmatmul.mubr.bf16.gmra.mrb[0].mxu0 %v4586
        %v4707 = vpop.f32.mrb[0].mxu0
        %v4708 = vadd.f32 0.0, %v4707
        %v4709 = vpop.f32.mrb[0].mxu0
        %v4710 = vpop.f32.mrb[0].mxu0
        %v4711 = vadd.f32 0.0, %v4710
        %v4712 = vpop.f32.mrb[0].mxu0
        %4713 = vmatprep.mubr.bf16.mxu0 0
        %4714 = vmatmul.mubr.bf16.gmra.mrb[0].mxu0 %v4587
        %v4715 = vpop.f32.mrb[0].mxu0
        %v4716 = vadd.f32 0.0, %v4715
        %v4717 = vpop.f32.mrb[0].mxu0
        %v4718 = vpop.f32.mrb[0].mxu0
        %v4719 = vadd.f32 0.0, %v4718
        %v4720 = vpop.f32.mrb[0].mxu0
        %4721 = vmatprep.mubr.bf16.mxu0 0
        %4722 = vmatmul.mubr.bf16.gmra.mrb[0].mxu0 %v4588
        %v4723 = vpop.f32.mrb[0].mxu0
        %v4724 = vadd.f32 0.0, %v4723
        %v4725 = vpop.f32.mrb[0].mxu0
        %v4726 = vpop.f32.mrb[0].mxu0
        %v4727 = vadd.f32 0.0, %v4726
        %v4728 = vpop.f32.mrb[0].mxu0
        %4729 = vmatprep.mubr.bf16.mxu0 0
        %4730 = vmatmul.mubr.bf16.gmra.mrb[0].mxu0 %v4589
        %v4731 = vpop.f32.mrb[0].mxu0
        %v4732 = vadd.f32 0.0, %v4731
        %v4733 = vpop.f32.mrb[0].mxu0
        %v4734 = vpop.f32.mrb[0].mxu0
        %v4735 = vadd.f32 0.0, %v4734
        %v4736 = vpop.f32.mrb[0].mxu0
        %4737 = vmatprep.mubr.bf16.mxu0 0
        %4738 = vmatmul.mubr.bf16.gmra.mrb[0].mxu0 %v4590
        %v4739 = vpop.f32.mrb[0].mxu0
        %v4740 = vadd.f32 0.0, %v4739
        %v4741 = vpop.f32.mrb[0].mxu0
        %v4742 = vpop.f32.mrb[0].mxu0
        %v4743 = vadd.f32 0.0, %v4742
        %v4744 = vpop.f32.mrb[0].mxu0
        %4745 = vmatprep.mubr.bf16.mxu0 0
        %4746 = vmatmul.mubr.bf16.gmra.mrb[0].mxu0 %v4591
        %v4747 = vpop.f32.mrb[0].mxu0
        %v4748 = vadd.f32 0.0, %v4747
        %v4749 = vpop.f32.mrb[0].mxu0
        %v4750 = vpop.f32.mrb[0].mxu0
        %v4751 = vadd.f32 0.0, %v4750
        %v4752 = vpop.f32.mrb[0].mxu0
        %4753 = vmatprep.mubr.bf16.mxu0 0
        %4754 = vmatmul.mubr.bf16.gmra.mrb[0].mxu0 %v4592
        %v4755 = vpop.f32.mrb[0].mxu0
        %v4756 = vadd.f32 0.0, %v4755
        %v4757 = vpop.f32.mrb[0].mxu0
        %v4758 = vpop.f32.mrb[0].mxu0
        %v4759 = vadd.f32 0.0, %v4758
        %v4760 = vpop.f32.mrb[0].mxu0
        %4761 = vmatprep.mubr.bf16.mxu0 0
        %4762 = vmatmul.mubr.bf16.gmra.mrb[0].mxu0 %v4593
        %v4763 = vpop.f32.mrb[0].mxu0
        %v4764 = vadd.f32 0.0, %v4763
        %v4765 = vpop.f32.mrb[0].mxu0
        %v4766 = vpop.f32.mrb[0].mxu0
        %v4767 = vadd.f32 0.0, %v4766
        %v4768 = vpop.f32.mrb[0].mxu0
        %4769 = vmatprep.mubr.bf16.mxu0 0
        %4770 = vmatmul.mubr.bf16.gmra.mrb[0].mxu0 %v4594
        %v4771 = vpop.f32.mrb[0].mxu0
        %v4772 = vadd.f32 0.0, %v4771
        %v4773 = vpop.f32.mrb[0].mxu0
        %v4774 = vpop.f32.mrb[0].mxu0
        %v4775 = vadd.f32 0.0, %v4774
        %v4776 = vpop.f32.mrb[0].mxu0
        %4777 = vmatprep.mubr.bf16.mxu0 0
        %4778 = vmatmul.mubr.bf16.gmra.mrb[0].mxu0 %v4595
        %v4779 = vpop.f32.mrb[0].mxu0
        %v4780 = vadd.f32 0.0, %v4779
        %v4781 = vpop.f32.mrb[0].mxu0
        %v4782 = vpop.f32.mrb[0].mxu0
        %v4783 = vadd.f32 0.0, %v4782
        %v4784 = vpop.f32.mrb[0].mxu0
        %4785 = vmatprep.mubr.bf16.mxu0 0
        %4786 = vmatmul.mubr.bf16.gmra.mrb[0].mxu0 %v4596
        %v4787 = vpop.f32.mrb[0].mxu0
        %v4788 = vadd.f32 0.0, %v4787
        %v4789 = vpop.f32.mrb[0].mxu0
        %v4790 = vpop.f32.mrb[0].mxu0
        %v4791 = vadd.f32 0.0, %v4790
        %v4792 = vpop.f32.mrb[0].mxu0
        %4793 = vmatprep.mubr.bf16.mxu0 0
        %4794 = vmatmul.mubr.bf16.gmra.mrb[0].mxu0 %v4597
        %v4795 = vpop.f32.mrb[0].mxu0
        %v4796 = vadd.f32 0.0, %v4795
        %v4797 = vpop.f32.mrb[0].mxu0
        %v4798 = vpop.f32.mrb[0].mxu0
        %v4799 = vadd.f32 0.0, %v4798
        %v4800 = vpop.f32.mrb[0].mxu0
        %4801 = vmatprep.mubr.bf16.mxu0 0
        %4802 = vmatmul.mubr.bf16.gmra.mrb[0].mxu0 %v4598
        %v4803 = vpop.f32.mrb[0].mxu0
        %v4804 = vadd.f32 0.0, %v4803
        %v4805 = vpop.f32.mrb[0].mxu0
        %v4806 = vpop.f32.mrb[0].mxu0
        %v4807 = vadd.f32 0.0, %v4806
        %v4808 = vpop.f32.mrb[0].mxu0
        %4809 = vmatprep.mubr.bf16.mxu0 0
        %4810 = vmatmul.mubr.bf16.gmra.mrb[0].mxu0 %v4599
        %v4811 = vpop.f32.mrb[0].mxu0
        %v4812 = vadd.f32 0.0, %v4811
        %v4813 = vpop.f32.mrb[0].mxu0
        %v4814 = vpop.f32.mrb[0].mxu0
        %v4815 = vadd.f32 0.0, %v4814
        %v4816 = vpop.f32.mrb[0].mxu0
        %4817 = vmatprep.mubr.bf16.mxu0 0
        %4818 = vmatmul.mubr.bf16.gmra.mrb[0].mxu0 %v4600
        %v4819 = vpop.f32.mrb[0].mxu0
        %v4820 = vadd.f32 0.0, %v4819
        %v4821 = vpop.f32.mrb[0].mxu0
        %v4822 = vpop.f32.mrb[0].mxu0
        %v4823 = vadd.f32 0.0, %v4822
        %v4824 = vpop.f32.mrb[0].mxu0
        %4825 = vdwg.mxu0
        %v4826 = vadd.f32 %v4520, %v4700
        %v4827 = vadd.f32 %v4521, %v4703
        %v4828 = vadd.f32 %v4522, %v4708
        %v4829 = vadd.f32 %v4523, %v4711
        %v4830 = vadd.f32 %v4524, %v4716
        %v4831 = vadd.f32 %v4525, %v4719
        %v4832 = vadd.f32 %v4526, %v4724
        %v4833 = vadd.f32 %v4527, %v4727
        %v4834 = vadd.f32 %v4528, %v4732
        %v4835 = vadd.f32 %v4529, %v4735
        %v4836 = vadd.f32 %v4530, %v4740
        %v4837 = vadd.f32 %v4531, %v4743
        %v4838 = vadd.f32 %v4532, %v4748
        %v4839 = vadd.f32 %v4533, %v4751
        %v4840 = vadd.f32 %v4534, %v4756
        %v4841 = vadd.f32 %v4535, %v4759
        %v4842 = vadd.f32 %v4536, %v4764
        %v4843 = vadd.f32 %v4537, %v4767
        %v4844 = vadd.f32 %v4538, %v4772
        %v4845 = vadd.f32 %v4539, %v4775
        %v4846 = vadd.f32 %v4540, %v4780
        %v4847 = vadd.f32 %v4541, %v4783
        %v4848 = vadd.f32 %v4542, %v4788
        %v4849 = vadd.f32 %v4543, %v4791
        %v4850 = vadd.f32 %v4544, %v4796
        %v4851 = vadd.f32 %v4545, %v4799
        %v4852 = vadd.f32 %v4546, %v4804
        %v4853 = vadd.f32 %v4547, %v4807
        %v4854 = vadd.f32 %v4548, %v4812
        %v4855 = vadd.f32 %v4549, %v4815
        %v4856 = vadd.f32 %v4550, %v4820
        %v4857 = vadd.f32 %v4551, %v4823
        %v4858 = vld [vmem:[%s4552 + $0x1] sm:$0xff]
        %v4859 = vld [vmem:[%s4552 + $0x9] sm:$0xff]
        %v4860 = vld [vmem:[%s4552 + $0x19] sm:$0xff]
        %v4861 = vld [vmem:[%s4552 + $0x21] sm:$0xff]
        %v4862 = vld [vmem:[%s4552 + $0x31] sm:$0xff]
        %v4863 = vld [vmem:[%s4552 + $0x39] sm:$0xff]
        %v4864 = vld [vmem:[%s4552 + $0x49] sm:$0xff]
        %v4865 = vld [vmem:[%s4552 + $0x51] sm:$0xff]
        %v4866 = vld [vmem:[%s4552 + $0x61] sm:$0xff]
        %v4867 = vld [vmem:[%s4552 + $0x69] sm:$0xff]
        %v4868 = vld [vmem:[%s4552 + $0x79] sm:$0xff]
        %v4869 = vld [vmem:[%s4552 + $0x81] sm:$0xff]
        %v4870 = vld [vmem:[%s4552 + $0x91] sm:$0xff]
        %v4871 = vld [vmem:[%s4552 + $0x99] sm:$0xff]
        %v4872 = vld [vmem:[%s4552 + $0xa9] sm:$0xff]
        %v4873 = vld [vmem:[%s4552 + $0xb1] sm:$0xff]
        %v4874 = vld [vmem:[%s4552 + $0xc1] sm:$0xff]
        %v4875 = vld [vmem:[%s4552 + $0xc9] sm:$0xff]
        %v4876 = vld [vmem:[%s4552 + $0xd9] sm:$0xff]
        %v4877 = vld [vmem:[%s4552 + $0xe1] sm:$0xff]
        %v4878 = vld [vmem:[%s4552 + $0xf1] sm:$0xff]
        %v4879 = vld [vmem:[%s4552 + $0xf9] sm:$0xff]
        %v4880 = vld [vmem:[%s4552 + $0x109] sm:$0xff]
        %v4881 = vld [vmem:[%s4552 + $0x111] sm:$0xff]
        %v4882 = vld [vmem:[%s4552 + $0x121] sm:$0xff]
        %v4883 = vld [vmem:[%s4552 + $0x129] sm:$0xff]
        %v4884 = vld [vmem:[%s4552 + $0x139] sm:$0xff]
        %v4885 = vld [vmem:[%s4552 + $0x141] sm:$0xff]
        %v4886 = vld [vmem:[%s4552 + $0x151] sm:$0xff]
        %v4887 = vld [vmem:[%s4552 + $0x159] sm:$0xff]
        %v4888 = vld [vmem:[%s4552 + $0x169] sm:$0xff]
        %v4889 = vld [vmem:[%s4552 + $0x171] sm:$0xff]
        %v4890 = vpack.c.bf16 %v4859, %v4858
        %v4891 = vpack.c.bf16 %v4861, %v4860
        %v4892 = vpack.c.bf16 %v4863, %v4862
        %v4893 = vpack.c.bf16 %v4865, %v4864
        %v4894 = vpack.c.bf16 %v4867, %v4866
        %v4895 = vpack.c.bf16 %v4869, %v4868
        %v4896 = vpack.c.bf16 %v4871, %v4870
        %v4897 = vpack.c.bf16 %v4873, %v4872
        %v4898 = vpack.c.bf16 %v4875, %v4874
        %v4899 = vpack.c.bf16 %v4877, %v4876
        %v4900 = vpack.c.bf16 %v4879, %v4878
        %v4901 = vpack.c.bf16 %v4881, %v4880
        %v4902 = vpack.c.bf16 %v4883, %v4882
        %v4903 = vpack.c.bf16 %v4885, %v4884
        %v4904 = vpack.c.bf16 %v4887, %v4886
        %v4905 = vpack.c.bf16 %v4889, %v4888
        %v4906 = vld [vmem:[#allocation11 + $0x100] sm:$0xf]
        %v4907 = vld [vmem:[#allocation11 + $0x104] sm:$0xf]
        %v4908 = vld [vmem:[#allocation11 + $0x108] sm:$0xf]
        %v4909 = vld [vmem:[#allocation11 + $0x10c] sm:$0xf]
        %v4910 = vld [vmem:[#allocation11 + $0x110] sm:$0xf]
        %v4911 = vld [vmem:[#allocation11 + $0x114] sm:$0xf]
        %v4912 = vld [vmem:[#allocation11 + $0x118] sm:$0xf]
        %v4913 = vld [vmem:[#allocation11 + $0x11c] sm:$0xf]
        %v4914 = vld [vmem:[#allocation11 + $0x120] sm:$0xf]
        %v4915 = vld [vmem:[#allocation11 + $0x124] sm:$0xf]
        %v4916 = vld [vmem:[#allocation11 + $0x128] sm:$0xf]
        %v4917 = vld [vmem:[#allocation11 + $0x12c] sm:$0xf]
        %v4918 = vld [vmem:[#allocation11 + $0x130] sm:$0xf]
        %v4919 = vld [vmem:[#allocation11 + $0x134] sm:$0xf]
        %v4920 = vld [vmem:[#allocation11 + $0x138] sm:$0xf]
        %v4921 = vld [vmem:[#allocation11 + $0x13c] sm:$0xf]
        %v4938 = vunpack.c.l.b16 %v4906
        %v4939 = vunpack.c.l.b16 %v4907
        %v4940 = vunpack.c.l.b16 %v4908
        %v4941 = vunpack.c.l.b16 %v4909
        %v4942 = vunpack.c.l.b16 %v4910
        %v4943 = vunpack.c.l.b16 %v4911
        %v4944 = vunpack.c.l.b16 %v4912
        %v4945 = vunpack.c.l.b16 %v4913
        %v4946 = vunpack.c.l.b16 %v4914
        %v4947 = vunpack.c.l.b16 %v4915
        %v4948 = vunpack.c.l.b16 %v4916
        %v4949 = vunpack.c.l.b16 %v4917
        %v4950 = vunpack.c.l.b16 %v4918
        %v4951 = vunpack.c.l.b16 %v4919
        %v4952 = vunpack.c.l.b16 %v4920
        %v4953 = vunpack.c.l.b16 %v4921
        %v4954 = vpack.c.b16 %v4939, %v4938
        %v4955 = vpack.c.b16 %v4941, %v4940
        %v4956 = vpack.c.b16 %v4943, %v4942
        %v4957 = vpack.c.b16 %v4945, %v4944
        %v4958 = vpack.c.b16 %v4947, %v4946
        %v4959 = vpack.c.b16 %v4949, %v4948
        %v4960 = vpack.c.b16 %v4951, %v4950
        %v4961 = vpack.c.b16 %v4953, %v4952
        %4970 = vmatprep.subr.bf16.mxu0 0
        %4971 = vmatpush1.bf16.msra.mxu0 %v4954
        %4972 = vmatprep.subr.bf16.mxu0 0
        %4973 = vmatpush1.bf16.msra.mxu0 %v4955
        %4974 = vmatprep.subr.bf16.mxu0 0
        %4975 = vmatpush1.bf16.msra.mxu0 %v4956
        %4976 = vmatprep.subr.bf16.mxu0 0
        %4977 = vmatpush1.bf16.msra.mxu0 %v4957
        %4978 = vmatprep.subr.bf16.mxu0 0
        %4979 = vmatpush1.bf16.msra.mxu0 %v4958
        %4980 = vmatprep.subr.bf16.mxu0 0
        %4981 = vmatpush1.bf16.msra.mxu0 %v4959
        %4982 = vmatprep.subr.bf16.mxu0 0
        %4983 = vmatpush1.bf16.msra.mxu0 %v4960
        %4984 = vmatprep.subr.bf16.mxu0 0
        %4985 = vmatpush1.bf16.msra.mxu0 %v4961
        %4986 = vmatprep.subr.bf16.mxu0 0
        %4987 = vmatpush1.bf16.msra.mxu0 0
        %4988 = vmatprep.subr.bf16.mxu0 0
        %4989 = vmatpush1.bf16.msra.mxu0 0
        %4990 = vmatprep.subr.bf16.mxu0 0
        %4991 = vmatpush1.bf16.msra.mxu0 0
        %4992 = vmatprep.subr.bf16.mxu0 0
        %4993 = vmatpush1.bf16.msra.mxu0 0
        %4994 = vmatprep.subr.bf16.mxu0 0
        %4995 = vmatpush1.bf16.msra.mxu0 0
        %4996 = vmatprep.subr.bf16.mxu0 0
        %4997 = vmatpush1.bf16.msra.mxu0 0
        %4998 = vmatprep.subr.bf16.mxu0 0
        %4999 = vmatpush1.bf16.msra.mxu0 0
        %5000 = vmatprep.subr.bf16.mxu0 0
        %5001 = vmatpush1.bf16.msra.mxu0 0
        %5002 = vmatprep.mubr.bf16.mxu0 0
        %5003 = vmatmul.mubr.bf16.gmra.mrb[0].mxu0 %v4890
        %v5004 = vpop.f32.mrb[0].mxu0
        %v5005 = vadd.f32 0.0, %v5004
        %v5006 = vpop.f32.mrb[0].mxu0
        %v5007 = vpop.f32.mrb[0].mxu0
        %v5008 = vadd.f32 0.0, %v5007
        %v5009 = vpop.f32.mrb[0].mxu0
        %5010 = vmatprep.mubr.bf16.mxu0 0
        %5011 = vmatmul.mubr.bf16.gmra.mrb[0].mxu0 %v4891
        %v5012 = vpop.f32.mrb[0].mxu0
        %v5013 = vadd.f32 0.0, %v5012
        %v5014 = vpop.f32.mrb[0].mxu0
        %v5015 = vpop.f32.mrb[0].mxu0
        %v5016 = vadd.f32 0.0, %v5015
        %v5017 = vpop.f32.mrb[0].mxu0
        %5018 = vmatprep.mubr.bf16.mxu0 0
        %5019 = vmatmul.mubr.bf16.gmra.mrb[0].mxu0 %v4892
        %v5020 = vpop.f32.mrb[0].mxu0
        %v5021 = vadd.f32 0.0, %v5020
        %v5022 = vpop.f32.mrb[0].mxu0
        %v5023 = vpop.f32.mrb[0].mxu0
        %v5024 = vadd.f32 0.0, %v5023
        %v5025 = vpop.f32.mrb[0].mxu0
        %5026 = vmatprep.mubr.bf16.mxu0 0
        %5027 = vmatmul.mubr.bf16.gmra.mrb[0].mxu0 %v4893
        %v5028 = vpop.f32.mrb[0].mxu0
        %v5029 = vadd.f32 0.0, %v5028
        %v5030 = vpop.f32.mrb[0].mxu0
        %v5031 = vpop.f32.mrb[0].mxu0
        %v5032 = vadd.f32 0.0, %v5031
        %v5033 = vpop.f32.mrb[0].mxu0
        %5034 = vmatprep.mubr.bf16.mxu0 0
        %5035 = vmatmul.mubr.bf16.gmra.mrb[0].mxu0 %v4894
        %v5036 = vpop.f32.mrb[0].mxu0
        %v5037 = vadd.f32 0.0, %v5036
        %v5038 = vpop.f32.mrb[0].mxu0
        %v5039 = vpop.f32.mrb[0].mxu0
        %v5040 = vadd.f32 0.0, %v5039
        %v5041 = vpop.f32.mrb[0].mxu0
        %5042 = vmatprep.mubr.bf16.mxu0 0
        %5043 = vmatmul.mubr.bf16.gmra.mrb[0].mxu0 %v4895
        %v5044 = vpop.f32.mrb[0].mxu0
        %v5045 = vadd.f32 0.0, %v5044
        %v5046 = vpop.f32.mrb[0].mxu0
        %v5047 = vpop.f32.mrb[0].mxu0
        %v5048 = vadd.f32 0.0, %v5047
        %v5049 = vpop.f32.mrb[0].mxu0
        %5050 = vmatprep.mubr.bf16.mxu0 0
        %5051 = vmatmul.mubr.bf16.gmra.mrb[0].mxu0 %v4896
        %v5052 = vpop.f32.mrb[0].mxu0
        %v5053 = vadd.f32 0.0, %v5052
        %v5054 = vpop.f32.mrb[0].mxu0
        %v5055 = vpop.f32.mrb[0].mxu0
        %v5056 = vadd.f32 0.0, %v5055
        %v5057 = vpop.f32.mrb[0].mxu0
        %5058 = vmatprep.mubr.bf16.mxu0 0
        %5059 = vmatmul.mubr.bf16.gmra.mrb[0].mxu0 %v4897
        %v5060 = vpop.f32.mrb[0].mxu0
        %v5061 = vadd.f32 0.0, %v5060
        %v5062 = vpop.f32.mrb[0].mxu0
        %v5063 = vpop.f32.mrb[0].mxu0
        %v5064 = vadd.f32 0.0, %v5063
        %v5065 = vpop.f32.mrb[0].mxu0
        %5066 = vmatprep.mubr.bf16.mxu0 0
        %5067 = vmatmul.mubr.bf16.gmra.mrb[0].mxu0 %v4898
        %v5068 = vpop.f32.mrb[0].mxu0
        %v5069 = vadd.f32 0.0, %v5068
        %v5070 = vpop.f32.mrb[0].mxu0
        %v5071 = vpop.f32.mrb[0].mxu0
        %v5072 = vadd.f32 0.0, %v5071
        %v5073 = vpop.f32.mrb[0].mxu0
        %5074 = vmatprep.mubr.bf16.mxu0 0
        %5075 = vmatmul.mubr.bf16.gmra.mrb[0].mxu0 %v4899
        %v5076 = vpop.f32.mrb[0].mxu0
        %v5077 = vadd.f32 0.0, %v5076
        %v5078 = vpop.f32.mrb[0].mxu0
        %v5079 = vpop.f32.mrb[0].mxu0
        %v5080 = vadd.f32 0.0, %v5079
        %v5081 = vpop.f32.mrb[0].mxu0
        %5082 = vmatprep.mubr.bf16.mxu0 0
        %5083 = vmatmul.mubr.bf16.gmra.mrb[0].mxu0 %v4900
        %v5084 = vpop.f32.mrb[0].mxu0
        %v5085 = vadd.f32 0.0, %v5084
        %v5086 = vpop.f32.mrb[0].mxu0
        %v5087 = vpop.f32.mrb[0].mxu0
        %v5088 = vadd.f32 0.0, %v5087
        %v5089 = vpop.f32.mrb[0].mxu0
        %5090 = vmatprep.mubr.bf16.mxu0 0
        %5091 = vmatmul.mubr.bf16.gmra.mrb[0].mxu0 %v4901
        %v5092 = vpop.f32.mrb[0].mxu0
        %v5093 = vadd.f32 0.0, %v5092
        %v5094 = vpop.f32.mrb[0].mxu0
        %v5095 = vpop.f32.mrb[0].mxu0
        %v5096 = vadd.f32 0.0, %v5095
        %v5097 = vpop.f32.mrb[0].mxu0
        %5098 = vmatprep.mubr.bf16.mxu0 0
        %5099 = vmatmul.mubr.bf16.gmra.mrb[0].mxu0 %v4902
        %v5100 = vpop.f32.mrb[0].mxu0
        %v5101 = vadd.f32 0.0, %v5100
        %v5102 = vpop.f32.mrb[0].mxu0
        %v5103 = vpop.f32.mrb[0].mxu0
        %v5104 = vadd.f32 0.0, %v5103
        %v5105 = vpop.f32.mrb[0].mxu0
        %5106 = vmatprep.mubr.bf16.mxu0 0
        %5107 = vmatmul.mubr.bf16.gmra.mrb[0].mxu0 %v4903
        %v5108 = vpop.f32.mrb[0].mxu0
        %v5109 = vadd.f32 0.0, %v5108
        %v5110 = vpop.f32.mrb[0].mxu0
        %v5111 = vpop.f32.mrb[0].mxu0
        %v5112 = vadd.f32 0.0, %v5111
        %v5113 = vpop.f32.mrb[0].mxu0
        %5114 = vmatprep.mubr.bf16.mxu0 0
        %5115 = vmatmul.mubr.bf16.gmra.mrb[0].mxu0 %v4904
        %v5116 = vpop.f32.mrb[0].mxu0
        %v5117 = vadd.f32 0.0, %v5116
        %v5118 = vpop.f32.mrb[0].mxu0
        %v5119 = vpop.f32.mrb[0].mxu0
        %v5120 = vadd.f32 0.0, %v5119
        %v5121 = vpop.f32.mrb[0].mxu0
        %5122 = vmatprep.mubr.bf16.mxu0 0
        %5123 = vmatmul.mubr.bf16.gmra.mrb[0].mxu0 %v4905
        %v5124 = vpop.f32.mrb[0].mxu0
        %v5125 = vadd.f32 0.0, %v5124
        %v5126 = vpop.f32.mrb[0].mxu0
        %v5127 = vpop.f32.mrb[0].mxu0
        %v5128 = vadd.f32 0.0, %v5127
        %v5129 = vpop.f32.mrb[0].mxu0
        %5130 = vdwg.mxu0
        %v5131 = vadd.f32 %v4826, %v5005
        %v5132 = vadd.f32 %v4827, %v5008
        %v5133 = vadd.f32 %v4828, %v5013
        %v5134 = vadd.f32 %v4829, %v5016
        %v5135 = vadd.f32 %v4830, %v5021
        %v5136 = vadd.f32 %v4831, %v5024
        %v5137 = vadd.f32 %v4832, %v5029
        %v5138 = vadd.f32 %v4833, %v5032
        %v5139 = vadd.f32 %v4834, %v5037
        %v5140 = vadd.f32 %v4835, %v5040
        %v5141 = vadd.f32 %v4836, %v5045
        %v5142 = vadd.f32 %v4837, %v5048
        %v5143 = vadd.f32 %v4838, %v5053
        %v5144 = vadd.f32 %v4839, %v5056
        %v5145 = vadd.f32 %v4840, %v5061
        %v5146 = vadd.f32 %v4841, %v5064
        %v5147 = vadd.f32 %v4842, %v5069
        %v5148 = vadd.f32 %v4843, %v5072
        %v5149 = vadd.f32 %v4844, %v5077
        %v5150 = vadd.f32 %v4845, %v5080
        %v5151 = vadd.f32 %v4846, %v5085
        %v5152 = vadd.f32 %v4847, %v5088
        %v5153 = vadd.f32 %v4848, %v5093
        %v5154 = vadd.f32 %v4849, %v5096
        %v5155 = vadd.f32 %v4850, %v5101
        %v5156 = vadd.f32 %v4851, %v5104
        %v5157 = vadd.f32 %v4852, %v5109
        %v5158 = vadd.f32 %v4853, %v5112
        %v5159 = vadd.f32 %v4854, %v5117
        %v5160 = vadd.f32 %v4855, %v5120
        %v5161 = vadd.f32 %v4856, %v5125
        %v5162 = vadd.f32 %v4857, %v5128
        %v5163 = vld [vmem:[%s4552 + $0x2] sm:$0xff]
        %v5164 = vld [vmem:[%s4552 + $0xa] sm:$0xff]
        %v5165 = vld [vmem:[%s4552 + $0x1a] sm:$0xff]
        %v5166 = vld [vmem:[%s4552 + $0x22] sm:$0xff]
        %v5167 = vld [vmem:[%s4552 + $0x32] sm:$0xff]
        %v5168 = vld [vmem:[%s4552 + $0x3a] sm:$0xff]
        %v5169 = vld [vmem:[%s4552 + $0x4a] sm:$0xff]
        %v5170 = vld [vmem:[%s4552 + $0x52] sm:$0xff]
        %v5171 = vld [vmem:[%s4552 + $0x62] sm:$0xff]
        %v5172 = vld [vmem:[%s4552 + $0x6a] sm:$0xff]
        %v5173 = vld [vmem:[%s4552 + $0x7a] sm:$0xff]
        %v5174 = vld [vmem:[%s4552 + $0x82] sm:$0xff]
        %v5175 = vld [vmem:[%s4552 + $0x92] sm:$0xff]
        %v5176 = vld [vmem:[%s4552 + $0x9a] sm:$0xff]
        %v5177 = vld [vmem:[%s4552 + $0xaa] sm:$0xff]
        %v5178 = vld [vmem:[%s4552 + $0xb2] sm:$0xff]
        %v5179 = vld [vmem:[%s4552 + $0xc2] sm:$0xff]
        %v5180 = vld [vmem:[%s4552 + $0xca] sm:$0xff]
        %v5181 = vld [vmem:[%s4552 + $0xda] sm:$0xff]
        %v5182 = vld [vmem:[%s4552 + $0xe2] sm:$0xff]
        %v5183 = vld [vmem:[%s4552 + $0xf2] sm:$0xff]
        %v5184 = vld [vmem:[%s4552 + $0xfa] sm:$0xff]
        %v5185 = vld [vmem:[%s4552 + $0x10a] sm:$0xff]
        %v5186 = vld [vmem:[%s4552 + $0x112] sm:$0xff]
        %v5187 = vld [vmem:[%s4552 + $0x122] sm:$0xff]
        %v5188 = vld [vmem:[%s4552 + $0x12a] sm:$0xff]
        %v5189 = vld [vmem:[%s4552 + $0x13a] sm:$0xff]
        %v5190 = vld [vmem:[%s4552 + $0x142] sm:$0xff]
        %v5191 = vld [vmem:[%s4552 + $0x152] sm:$0xff]
        %v5192 = vld [vmem:[%s4552 + $0x15a] sm:$0xff]
        %v5193 = vld [vmem:[%s4552 + $0x16a] sm:$0xff]
        %v5194 = vld [vmem:[%s4552 + $0x172] sm:$0xff]
        %v5195 = vpack.c.bf16 %v5164, %v5163
        %v5196 = vpack.c.bf16 %v5166, %v5165
        %v5197 = vpack.c.bf16 %v5168, %v5167
        %v5198 = vpack.c.bf16 %v5170, %v5169
        %v5199 = vpack.c.bf16 %v5172, %v5171
        %v5200 = vpack.c.bf16 %v5174, %v5173
        %v5201 = vpack.c.bf16 %v5176, %v5175
        %v5202 = vpack.c.bf16 %v5178, %v5177
        %v5203 = vpack.c.bf16 %v5180, %v5179
        %v5204 = vpack.c.bf16 %v5182, %v5181
        %v5205 = vpack.c.bf16 %v5184, %v5183
        %v5206 = vpack.c.bf16 %v5186, %v5185
        %v5207 = vpack.c.bf16 %v5188, %v5187
        %v5208 = vpack.c.bf16 %v5190, %v5189
        %v5209 = vpack.c.bf16 %v5192, %v5191
        %v5210 = vpack.c.bf16 %v5194, %v5193
        %v5211 = vld [vmem:[#allocation11 + $0x140] sm:$0xf]
        %v5212 = vld [vmem:[#allocation11 + $0x144] sm:$0xf]
        %v5213 = vld [vmem:[#allocation11 + $0x148] sm:$0xf]
        %v5214 = vld [vmem:[#allocation11 + $0x14c] sm:$0xf]
        %v5215 = vld [vmem:[#allocation11 + $0x150] sm:$0xf]
        %v5216 = vld [vmem:[#allocation11 + $0x154] sm:$0xf]
        %v5217 = vld [vmem:[#allocation11 + $0x158] sm:$0xf]
        %v5218 = vld [vmem:[#allocation11 + $0x15c] sm:$0xf]
        %v5219 = vld [vmem:[#allocation11 + $0x160] sm:$0xf]
        %v5220 = vld [vmem:[#allocation11 + $0x164] sm:$0xf]
        %v5221 = vld [vmem:[#allocation11 + $0x168] sm:$0xf]
        %v5222 = vld [vmem:[#allocation11 + $0x16c] sm:$0xf]
        %v5223 = vld [vmem:[#allocation11 + $0x170] sm:$0xf]
        %v5224 = vld [vmem:[#allocation11 + $0x174] sm:$0xf]
        %v5225 = vld [vmem:[#allocation11 + $0x178] sm:$0xf]
        %v5226 = vld [vmem:[#allocation11 + $0x17c] sm:$0xf]
        %v5243 = vunpack.c.l.b16 %v5211
        %v5244 = vunpack.c.l.b16 %v5212
        %v5245 = vunpack.c.l.b16 %v5213
        %v5246 = vunpack.c.l.b16 %v5214
        %v5247 = vunpack.c.l.b16 %v5215
        %v5248 = vunpack.c.l.b16 %v5216
        %v5249 = vunpack.c.l.b16 %v5217
        %v5250 = vunpack.c.l.b16 %v5218
        %v5251 = vunpack.c.l.b16 %v5219
        %v5252 = vunpack.c.l.b16 %v5220
        %v5253 = vunpack.c.l.b16 %v5221
        %v5254 = vunpack.c.l.b16 %v5222
        %v5255 = vunpack.c.l.b16 %v5223
        %v5256 = vunpack.c.l.b16 %v5224
        %v5257 = vunpack.c.l.b16 %v5225
        %v5258 = vunpack.c.l.b16 %v5226
        %v5259 = vpack.c.b16 %v5244, %v5243
        %v5260 = vpack.c.b16 %v5246, %v5245
        %v5261 = vpack.c.b16 %v5248, %v5247
        %v5262 = vpack.c.b16 %v5250, %v5249
        %v5263 = vpack.c.b16 %v5252, %v5251
        %v5264 = vpack.c.b16 %v5254, %v5253
        %v5265 = vpack.c.b16 %v5256, %v5255
        %v5266 = vpack.c.b16 %v5258, %v5257
        %5275 = vmatprep.subr.bf16.mxu0 0
        %5276 = vmatpush1.bf16.msra.mxu0 %v5259
        %5277 = vmatprep.subr.bf16.mxu0 0
        %5278 = vmatpush1.bf16.msra.mxu0 %v5260
        %5279 = vmatprep.subr.bf16.mxu0 0
        %5280 = vmatpush1.bf16.msra.mxu0 %v5261
        %5281 = vmatprep.subr.bf16.mxu0 0
        %5282 = vmatpush1.bf16.msra.mxu0 %v5262
        %5283 = vmatprep.subr.bf16.mxu0 0
        %5284 = vmatpush1.bf16.msra.mxu0 %v5263
        %5285 = vmatprep.subr.bf16.mxu0 0
        %5286 = vmatpush1.bf16.msra.mxu0 %v5264
        %5287 = vmatprep.subr.bf16.mxu0 0
        %5288 = vmatpush1.bf16.msra.mxu0 %v5265
        %5289 = vmatprep.subr.bf16.mxu0 0
        %5290 = vmatpush1.bf16.msra.mxu0 %v5266
        %5291 = vmatprep.subr.bf16.mxu0 0
        %5292 = vmatpush1.bf16.msra.mxu0 0
        %5293 = vmatprep.subr.bf16.mxu0 0
        %5294 = vmatpush1.bf16.msra.mxu0 0
        %5295 = vmatprep.subr.bf16.mxu0 0
        %5296 = vmatpush1.bf16.msra.mxu0 0
        %5297 = vmatprep.subr.bf16.mxu0 0
        %5298 = vmatpush1.bf16.msra.mxu0 0
        %5299 = vmatprep.subr.bf16.mxu0 0
        %5300 = vmatpush1.bf16.msra.mxu0 0
        %5301 = vmatprep.subr.bf16.mxu0 0
        %5302 = vmatpush1.bf16.msra.mxu0 0
        %5303 = vmatprep.subr.bf16.mxu0 0
        %5304 = vmatpush1.bf16.msra.mxu0 0
        %5305 = vmatprep.subr.bf16.mxu0 0
        %5306 = vmatpush1.bf16.msra.mxu0 0
        %5307 = vmatprep.mubr.bf16.mxu0 0
        %5308 = vmatmul.mubr.bf16.gmra.mrb[0].mxu0 %v5195
        %v5309 = vpop.f32.mrb[0].mxu0
        %v5310 = vadd.f32 0.0, %v5309
        %v5311 = vpop.f32.mrb[0].mxu0
        %v5312 = vpop.f32.mrb[0].mxu0
        %v5313 = vadd.f32 0.0, %v5312
        %v5314 = vpop.f32.mrb[0].mxu0
        %5315 = vmatprep.mubr.bf16.mxu0 0
        %5316 = vmatmul.mubr.bf16.gmra.mrb[0].mxu0 %v5196
        %v5317 = vpop.f32.mrb[0].mxu0
        %v5318 = vadd.f32 0.0, %v5317
        %v5319 = vpop.f32.mrb[0].mxu0
        %v5320 = vpop.f32.mrb[0].mxu0
        %v5321 = vadd.f32 0.0, %v5320
        %v5322 = vpop.f32.mrb[0].mxu0
        %5323 = vmatprep.mubr.bf16.mxu0 0
        %5324 = vmatmul.mubr.bf16.gmra.mrb[0].mxu0 %v5197
        %v5325 = vpop.f32.mrb[0].mxu0
        %v5326 = vadd.f32 0.0, %v5325
        %v5327 = vpop.f32.mrb[0].mxu0
        %v5328 = vpop.f32.mrb[0].mxu0
        %v5329 = vadd.f32 0.0, %v5328
        %v5330 = vpop.f32.mrb[0].mxu0
        %5331 = vmatprep.mubr.bf16.mxu0 0
        %5332 = vmatmul.mubr.bf16.gmra.mrb[0].mxu0 %v5198
        %v5333 = vpop.f32.mrb[0].mxu0
        %v5334 = vadd.f32 0.0, %v5333
        %v5335 = vpop.f32.mrb[0].mxu0
        %v5336 = vpop.f32.mrb[0].mxu0
        %v5337 = vadd.f32 0.0, %v5336
        %v5338 = vpop.f32.mrb[0].mxu0
        %5339 = vmatprep.mubr.bf16.mxu0 0
        %5340 = vmatmul.mubr.bf16.gmra.mrb[0].mxu0 %v5199
        %v5341 = vpop.f32.mrb[0].mxu0
        %v5342 = vadd.f32 0.0, %v5341
        %v5343 = vpop.f32.mrb[0].mxu0
        %v5344 = vpop.f32.mrb[0].mxu0
        %v5345 = vadd.f32 0.0, %v5344
        %v5346 = vpop.f32.mrb[0].mxu0
        %5347 = vmatprep.mubr.bf16.mxu0 0
        %5348 = vmatmul.mubr.bf16.gmra.mrb[0].mxu0 %v5200
        %v5349 = vpop.f32.mrb[0].mxu0
        %v5350 = vadd.f32 0.0, %v5349
        %v5351 = vpop.f32.mrb[0].mxu0
        %v5352 = vpop.f32.mrb[0].mxu0
        %v5353 = vadd.f32 0.0, %v5352
        %v5354 = vpop.f32.mrb[0].mxu0
        %5355 = vmatprep.mubr.bf16.mxu0 0
        %5356 = vmatmul.mubr.bf16.gmra.mrb[0].mxu0 %v5201
        %v5357 = vpop.f32.mrb[0].mxu0
        %v5358 = vadd.f32 0.0, %v5357
        %v5359 = vpop.f32.mrb[0].mxu0
        %v5360 = vpop.f32.mrb[0].mxu0
        %v5361 = vadd.f32 0.0, %v5360
        %v5362 = vpop.f32.mrb[0].mxu0
        %5363 = vmatprep.mubr.bf16.mxu0 0
        %5364 = vmatmul.mubr.bf16.gmra.mrb[0].mxu0 %v5202
        %v5365 = vpop.f32.mrb[0].mxu0
        %v5366 = vadd.f32 0.0, %v5365
        %v5367 = vpop.f32.mrb[0].mxu0
        %v5368 = vpop.f32.mrb[0].mxu0
        %v5369 = vadd.f32 0.0, %v5368
        %v5370 = vpop.f32.mrb[0].mxu0
        %5371 = vmatprep.mubr.bf16.mxu0 0
        %5372 = vmatmul.mubr.bf16.gmra.mrb[0].mxu0 %v5203
        %v5373 = vpop.f32.mrb[0].mxu0
        %v5374 = vadd.f32 0.0, %v5373
        %v5375 = vpop.f32.mrb[0].mxu0
        %v5376 = vpop.f32.mrb[0].mxu0
        %v5377 = vadd.f32 0.0, %v5376
        %v5378 = vpop.f32.mrb[0].mxu0
        %5379 = vmatprep.mubr.bf16.mxu0 0
        %5380 = vmatmul.mubr.bf16.gmra.mrb[0].mxu0 %v5204
        %v5381 = vpop.f32.mrb[0].mxu0
        %v5382 = vadd.f32 0.0, %v5381
        %v5383 = vpop.f32.mrb[0].mxu0
        %v5384 = vpop.f32.mrb[0].mxu0
        %v5385 = vadd.f32 0.0, %v5384
        %v5386 = vpop.f32.mrb[0].mxu0
        %5387 = vmatprep.mubr.bf16.mxu0 0
        %5388 = vmatmul.mubr.bf16.gmra.mrb[0].mxu0 %v5205
        %v5389 = vpop.f32.mrb[0].mxu0
        %v5390 = vadd.f32 0.0, %v5389
        %v5391 = vpop.f32.mrb[0].mxu0
        %v5392 = vpop.f32.mrb[0].mxu0
        %v5393 = vadd.f32 0.0, %v5392
        %v5394 = vpop.f32.mrb[0].mxu0
        %5395 = vmatprep.mubr.bf16.mxu0 0
        %5396 = vmatmul.mubr.bf16.gmra.mrb[0].mxu0 %v5206
        %v5397 = vpop.f32.mrb[0].mxu0
        %v5398 = vadd.f32 0.0, %v5397
        %v5399 = vpop.f32.mrb[0].mxu0
        %v5400 = vpop.f32.mrb[0].mxu0
        %v5401 = vadd.f32 0.0, %v5400
        %v5402 = vpop.f32.mrb[0].mxu0
        %5403 = vmatprep.mubr.bf16.mxu0 0
        %5404 = vmatmul.mubr.bf16.gmra.mrb[0].mxu0 %v5207
        %v5405 = vpop.f32.mrb[0].mxu0
        %v5406 = vadd.f32 0.0, %v5405
        %v5407 = vpop.f32.mrb[0].mxu0
        %v5408 = vpop.f32.mrb[0].mxu0
        %v5409 = vadd.f32 0.0, %v5408
        %v5410 = vpop.f32.mrb[0].mxu0
        %5411 = vmatprep.mubr.bf16.mxu0 0
        %5412 = vmatmul.mubr.bf16.gmra.mrb[0].mxu0 %v5208
        %v5413 = vpop.f32.mrb[0].mxu0
        %v5414 = vadd.f32 0.0, %v5413
        %v5415 = vpop.f32.mrb[0].mxu0
        %v5416 = vpop.f32.mrb[0].mxu0
        %v5417 = vadd.f32 0.0, %v5416
        %v5418 = vpop.f32.mrb[0].mxu0
        %5419 = vmatprep.mubr.bf16.mxu0 0
        %5420 = vmatmul.mubr.bf16.gmra.mrb[0].mxu0 %v5209
        %v5421 = vpop.f32.mrb[0].mxu0
        %v5422 = vadd.f32 0.0, %v5421
        %v5423 = vpop.f32.mrb[0].mxu0
        %v5424 = vpop.f32.mrb[0].mxu0
        %v5425 = vadd.f32 0.0, %v5424
        %v5426 = vpop.f32.mrb[0].mxu0
        %5427 = vmatprep.mubr.bf16.mxu0 0
        %5428 = vmatmul.mubr.bf16.gmra.mrb[0].mxu0 %v5210
        %v5429 = vpop.f32.mrb[0].mxu0
        %v5430 = vadd.f32 0.0, %v5429
        %v5431 = vpop.f32.mrb[0].mxu0
        %v5432 = vpop.f32.mrb[0].mxu0
        %v5433 = vadd.f32 0.0, %v5432
        %v5434 = vpop.f32.mrb[0].mxu0
        %5435 = vdwg.mxu0
        %v5436 = vadd.f32 %v5131, %v5310
        %v5437 = vadd.f32 %v5132, %v5313
        %v5438 = vadd.f32 %v5133, %v5318
        %v5439 = vadd.f32 %v5134, %v5321
        %v5440 = vadd.f32 %v5135, %v5326
        %v5441 = vadd.f32 %v5136, %v5329
        %v5442 = vadd.f32 %v5137, %v5334
        %v5443 = vadd.f32 %v5138, %v5337
        %v5444 = vadd.f32 %v5139, %v5342
        %v5445 = vadd.f32 %v5140, %v5345
        %v5446 = vadd.f32 %v5141, %v5350
        %v5447 = vadd.f32 %v5142, %v5353
        %v5448 = vadd.f32 %v5143, %v5358
        %v5449 = vadd.f32 %v5144, %v5361
        %v5450 = vadd.f32 %v5145, %v5366
        %v5451 = vadd.f32 %v5146, %v5369
        %v5452 = vadd.f32 %v5147, %v5374
        %v5453 = vadd.f32 %v5148, %v5377
        %v5454 = vadd.f32 %v5149, %v5382
        %v5455 = vadd.f32 %v5150, %v5385
        %v5456 = vadd.f32 %v5151, %v5390
        %v5457 = vadd.f32 %v5152, %v5393
        %v5458 = vadd.f32 %v5153, %v5398
        %v5459 = vadd.f32 %v5154, %v5401
        %v5460 = vadd.f32 %v5155, %v5406
        %v5461 = vadd.f32 %v5156, %v5409
        %v5462 = vadd.f32 %v5157, %v5414
        %v5463 = vadd.f32 %v5158, %v5417
        %v5464 = vadd.f32 %v5159, %v5422
        %v5465 = vadd.f32 %v5160, %v5425
        %v5466 = vadd.f32 %v5161, %v5430
        %v5467 = vadd.f32 %v5162, %v5433
        %s5468 = scalar_lea.vmem [#allocation3], 48
        %v5469 = vld [vmem:[%s5468] sm:$0xff]
        %v5470 = vld [vmem:[%s5468 + $0x8] sm:$0xff]
        %v5471 = vld [vmem:[%s5468 + $0x18] sm:$0xff]
        %v5472 = vld [vmem:[%s5468 + $0x20] sm:$0xff]
        %v5473 = vld [vmem:[%s5468 + $0x30] sm:$0xff]
        %v5474 = vld [vmem:[%s5468 + $0x38] sm:$0xff]
        %v5475 = vld [vmem:[%s5468 + $0x48] sm:$0xff]
        %v5476 = vld [vmem:[%s5468 + $0x50] sm:$0xff]
        %v5477 = vld [vmem:[%s5468 + $0x60] sm:$0xff]
        %v5478 = vld [vmem:[%s5468 + $0x68] sm:$0xff]
        %v5479 = vld [vmem:[%s5468 + $0x78] sm:$0xff]
        %v5480 = vld [vmem:[%s5468 + $0x80] sm:$0xff]
        %v5481 = vld [vmem:[%s5468 + $0x90] sm:$0xff]
        %v5482 = vld [vmem:[%s5468 + $0x98] sm:$0xff]
        %v5483 = vld [vmem:[%s5468 + $0xa8] sm:$0xff]
        %v5484 = vld [vmem:[%s5468 + $0xb0] sm:$0xff]
        %v5485 = vld [vmem:[%s5468 + $0xc0] sm:$0xff]
        %v5486 = vld [vmem:[%s5468 + $0xc8] sm:$0xff]
        %v5487 = vld [vmem:[%s5468 + $0xd8] sm:$0xff]
        %v5488 = vld [vmem:[%s5468 + $0xe0] sm:$0xff]
        %v5489 = vld [vmem:[%s5468 + $0xf0] sm:$0xff]
        %v5490 = vld [vmem:[%s5468 + $0xf8] sm:$0xff]
        %v5491 = vld [vmem:[%s5468 + $0x108] sm:$0xff]
        %v5492 = vld [vmem:[%s5468 + $0x110] sm:$0xff]
        %v5493 = vld [vmem:[%s5468 + $0x120] sm:$0xff]
        %v5494 = vld [vmem:[%s5468 + $0x128] sm:$0xff]
        %v5495 = vld [vmem:[%s5468 + $0x138] sm:$0xff]
        %v5496 = vld [vmem:[%s5468 + $0x140] sm:$0xff]
        %v5497 = vld [vmem:[%s5468 + $0x150] sm:$0xff]
        %v5498 = vld [vmem:[%s5468 + $0x158] sm:$0xff]
        %v5499 = vld [vmem:[%s5468 + $0x168] sm:$0xff]
        %v5500 = vld [vmem:[%s5468 + $0x170] sm:$0xff]
        %v5501 = vpack.c.bf16 %v5470, %v5469
        %v5502 = vpack.c.bf16 %v5472, %v5471
        %v5503 = vpack.c.bf16 %v5474, %v5473
        %v5504 = vpack.c.bf16 %v5476, %v5475
        %v5505 = vpack.c.bf16 %v5478, %v5477
        %v5506 = vpack.c.bf16 %v5480, %v5479
        %v5507 = vpack.c.bf16 %v5482, %v5481
        %v5508 = vpack.c.bf16 %v5484, %v5483
        %v5509 = vpack.c.bf16 %v5486, %v5485
        %v5510 = vpack.c.bf16 %v5488, %v5487
        %v5511 = vpack.c.bf16 %v5490, %v5489
        %v5512 = vpack.c.bf16 %v5492, %v5491
        %v5513 = vpack.c.bf16 %v5494, %v5493
        %v5514 = vpack.c.bf16 %v5496, %v5495
        %v5515 = vpack.c.bf16 %v5498, %v5497
        %v5516 = vpack.c.bf16 %v5500, %v5499
        %v5517 = vld [vmem:[#allocation11 + $0x180] sm:$0xf]
        %v5518 = vld [vmem:[#allocation11 + $0x184] sm:$0xf]
        %v5519 = vld [vmem:[#allocation11 + $0x188] sm:$0xf]
        %v5520 = vld [vmem:[#allocation11 + $0x18c] sm:$0xf]
        %v5521 = vld [vmem:[#allocation11 + $0x190] sm:$0xf]
        %v5522 = vld [vmem:[#allocation11 + $0x194] sm:$0xf]
        %v5523 = vld [vmem:[#allocation11 + $0x198] sm:$0xf]
        %v5524 = vld [vmem:[#allocation11 + $0x19c] sm:$0xf]
        %v5525 = vld [vmem:[#allocation11 + $0x1a0] sm:$0xf]
        %v5526 = vld [vmem:[#allocation11 + $0x1a4] sm:$0xf]
        %v5527 = vld [vmem:[#allocation11 + $0x1a8] sm:$0xf]
        %v5528 = vld [vmem:[#allocation11 + $0x1ac] sm:$0xf]
        %v5529 = vld [vmem:[#allocation11 + $0x1b0] sm:$0xf]
        %v5530 = vld [vmem:[#allocation11 + $0x1b4] sm:$0xf]
        %v5531 = vld [vmem:[#allocation11 + $0x1b8] sm:$0xf]
        %v5532 = vld [vmem:[#allocation11 + $0x1bc] sm:$0xf]
        %v5549 = vunpack.c.l.b16 %v5517
        %v5550 = vunpack.c.l.b16 %v5518
        %v5551 = vunpack.c.l.b16 %v5519
        %v5552 = vunpack.c.l.b16 %v5520
        %v5553 = vunpack.c.l.b16 %v5521
        %v5554 = vunpack.c.l.b16 %v5522
        %v5555 = vunpack.c.l.b16 %v5523
        %v5556 = vunpack.c.l.b16 %v5524
        %v5557 = vunpack.c.l.b16 %v5525
        %v5558 = vunpack.c.l.b16 %v5526
        %v5559 = vunpack.c.l.b16 %v5527
        %v5560 = vunpack.c.l.b16 %v5528
        %v5561 = vunpack.c.l.b16 %v5529
        %v5562 = vunpack.c.l.b16 %v5530
        %v5563 = vunpack.c.l.b16 %v5531
        %v5564 = vunpack.c.l.b16 %v5532
        %v5565 = vpack.c.b16 %v5550, %v5549
        %v5566 = vpack.c.b16 %v5552, %v5551
        %v5567 = vpack.c.b16 %v5554, %v5553
        %v5568 = vpack.c.b16 %v5556, %v5555
        %v5569 = vpack.c.b16 %v5558, %v5557
        %v5570 = vpack.c.b16 %v5560, %v5559
        %v5571 = vpack.c.b16 %v5562, %v5561
        %v5572 = vpack.c.b16 %v5564, %v5563
        %5581 = vmatprep.subr.bf16.mxu0 0
        %5582 = vmatpush1.bf16.msra.mxu0 %v5565
        %5583 = vmatprep.subr.bf16.mxu0 0
        %5584 = vmatpush1.bf16.msra.mxu0 %v5566
        %5585 = vmatprep.subr.bf16.mxu0 0
        %5586 = vmatpush1.bf16.msra.mxu0 %v5567
        %5587 = vmatprep.subr.bf16.mxu0 0
        %5588 = vmatpush1.bf16.msra.mxu0 %v5568
        %5589 = vmatprep.subr.bf16.mxu0 0
        %5590 = vmatpush1.bf16.msra.mxu0 %v5569
        %5591 = vmatprep.subr.bf16.mxu0 0
        %5592 = vmatpush1.bf16.msra.mxu0 %v5570
        %5593 = vmatprep.subr.bf16.mxu0 0
        %5594 = vmatpush1.bf16.msra.mxu0 %v5571
        %5595 = vmatprep.subr.bf16.mxu0 0
        %5596 = vmatpush1.bf16.msra.mxu0 %v5572
        %5597 = vmatprep.subr.bf16.mxu0 0
        %5598 = vmatpush1.bf16.msra.mxu0 0
        %5599 = vmatprep.subr.bf16.mxu0 0
        %5600 = vmatpush1.bf16.msra.mxu0 0
        %5601 = vmatprep.subr.bf16.mxu0 0
        %5602 = vmatpush1.bf16.msra.mxu0 0
        %5603 = vmatprep.subr.bf16.mxu0 0
        %5604 = vmatpush1.bf16.msra.mxu0 0
        %5605 = vmatprep.subr.bf16.mxu0 0
        %5606 = vmatpush1.bf16.msra.mxu0 0
        %5607 = vmatprep.subr.bf16.mxu0 0
        %5608 = vmatpush1.bf16.msra.mxu0 0
        %5609 = vmatprep.subr.bf16.mxu0 0
        %5610 = vmatpush1.bf16.msra.mxu0 0
        %5611 = vmatprep.subr.bf16.mxu0 0
        %5612 = vmatpush1.bf16.msra.mxu0 0
        %5613 = vmatprep.mubr.bf16.mxu0 0
        %5614 = vmatmul.mubr.bf16.gmra.mrb[0].mxu0 %v5501
        %v5615 = vpop.f32.mrb[0].mxu0
        %v5616 = vadd.f32 0.0, %v5615
        %v5617 = vpop.f32.mrb[0].mxu0
        %v5618 = vpop.f32.mrb[0].mxu0
        %v5619 = vadd.f32 0.0, %v5618
        %v5620 = vpop.f32.mrb[0].mxu0
        %5621 = vmatprep.mubr.bf16.mxu0 0
        %5622 = vmatmul.mubr.bf16.gmra.mrb[0].mxu0 %v5502
        %v5623 = vpop.f32.mrb[0].mxu0
        %v5624 = vadd.f32 0.0, %v5623
        %v5625 = vpop.f32.mrb[0].mxu0
        %v5626 = vpop.f32.mrb[0].mxu0
        %v5627 = vadd.f32 0.0, %v5626
        %v5628 = vpop.f32.mrb[0].mxu0
        %5629 = vmatprep.mubr.bf16.mxu0 0
        %5630 = vmatmul.mubr.bf16.gmra.mrb[0].mxu0 %v5503
        %v5631 = vpop.f32.mrb[0].mxu0
        %v5632 = vadd.f32 0.0, %v5631
        %v5633 = vpop.f32.mrb[0].mxu0
        %v5634 = vpop.f32.mrb[0].mxu0
        %v5635 = vadd.f32 0.0, %v5634
        %v5636 = vpop.f32.mrb[0].mxu0
        %5637 = vmatprep.mubr.bf16.mxu0 0
        %5638 = vmatmul.mubr.bf16.gmra.mrb[0].mxu0 %v5504
        %v5639 = vpop.f32.mrb[0].mxu0
        %v5640 = vadd.f32 0.0, %v5639
        %v5641 = vpop.f32.mrb[0].mxu0
        %v5642 = vpop.f32.mrb[0].mxu0
        %v5643 = vadd.f32 0.0, %v5642
        %v5644 = vpop.f32.mrb[0].mxu0
        %5645 = vmatprep.mubr.bf16.mxu0 0
        %5646 = vmatmul.mubr.bf16.gmra.mrb[0].mxu0 %v5505
        %v5647 = vpop.f32.mrb[0].mxu0
        %v5648 = vadd.f32 0.0, %v5647
        %v5649 = vpop.f32.mrb[0].mxu0
        %v5650 = vpop.f32.mrb[0].mxu0
        %v5651 = vadd.f32 0.0, %v5650
        %v5652 = vpop.f32.mrb[0].mxu0
        %5653 = vmatprep.mubr.bf16.mxu0 0
        %5654 = vmatmul.mubr.bf16.gmra.mrb[0].mxu0 %v5506
        %v5655 = vpop.f32.mrb[0].mxu0
        %v5656 = vadd.f32 0.0, %v5655
        %v5657 = vpop.f32.mrb[0].mxu0
        %v5658 = vpop.f32.mrb[0].mxu0
        %v5659 = vadd.f32 0.0, %v5658
        %v5660 = vpop.f32.mrb[0].mxu0
        %5661 = vmatprep.mubr.bf16.mxu0 0
        %5662 = vmatmul.mubr.bf16.gmra.mrb[0].mxu0 %v5507
        %v5663 = vpop.f32.mrb[0].mxu0
        %v5664 = vadd.f32 0.0, %v5663
        %v5665 = vpop.f32.mrb[0].mxu0
        %v5666 = vpop.f32.mrb[0].mxu0
        %v5667 = vadd.f32 0.0, %v5666
        %v5668 = vpop.f32.mrb[0].mxu0
        %5669 = vmatprep.mubr.bf16.mxu0 0
        %5670 = vmatmul.mubr.bf16.gmra.mrb[0].mxu0 %v5508
        %v5671 = vpop.f32.mrb[0].mxu0
        %v5672 = vadd.f32 0.0, %v5671
        %v5673 = vpop.f32.mrb[0].mxu0
        %v5674 = vpop.f32.mrb[0].mxu0
        %v5675 = vadd.f32 0.0, %v5674
        %v5676 = vpop.f32.mrb[0].mxu0
        %5677 = vmatprep.mubr.bf16.mxu0 0
        %5678 = vmatmul.mubr.bf16.gmra.mrb[0].mxu0 %v5509
        %v5679 = vpop.f32.mrb[0].mxu0
        %v5680 = vadd.f32 0.0, %v5679
        %v5681 = vpop.f32.mrb[0].mxu0
        %v5682 = vpop.f32.mrb[0].mxu0
        %v5683 = vadd.f32 0.0, %v5682
        %v5684 = vpop.f32.mrb[0].mxu0
        %5685 = vmatprep.mubr.bf16.mxu0 0
        %5686 = vmatmul.mubr.bf16.gmra.mrb[0].mxu0 %v5510
        %v5687 = vpop.f32.mrb[0].mxu0
        %v5688 = vadd.f32 0.0, %v5687
        %v5689 = vpop.f32.mrb[0].mxu0
        %v5690 = vpop.f32.mrb[0].mxu0
        %v5691 = vadd.f32 0.0, %v5690
        %v5692 = vpop.f32.mrb[0].mxu0
        %5693 = vmatprep.mubr.bf16.mxu0 0
        %5694 = vmatmul.mubr.bf16.gmra.mrb[0].mxu0 %v5511
        %v5695 = vpop.f32.mrb[0].mxu0
        %v5696 = vadd.f32 0.0, %v5695
        %v5697 = vpop.f32.mrb[0].mxu0
        %v5698 = vpop.f32.mrb[0].mxu0
        %v5699 = vadd.f32 0.0, %v5698
        %v5700 = vpop.f32.mrb[0].mxu0
        %5701 = vmatprep.mubr.bf16.mxu0 0
        %5702 = vmatmul.mubr.bf16.gmra.mrb[0].mxu0 %v5512
        %v5703 = vpop.f32.mrb[0].mxu0
        %v5704 = vadd.f32 0.0, %v5703
        %v5705 = vpop.f32.mrb[0].mxu0
        %v5706 = vpop.f32.mrb[0].mxu0
        %v5707 = vadd.f32 0.0, %v5706
        %v5708 = vpop.f32.mrb[0].mxu0
        %5709 = vmatprep.mubr.bf16.mxu0 0
        %5710 = vmatmul.mubr.bf16.gmra.mrb[0].mxu0 %v5513
        %v5711 = vpop.f32.mrb[0].mxu0
        %v5712 = vadd.f32 0.0, %v5711
        %v5713 = vpop.f32.mrb[0].mxu0
        %v5714 = vpop.f32.mrb[0].mxu0
        %v5715 = vadd.f32 0.0, %v5714
        %v5716 = vpop.f32.mrb[0].mxu0
        %5717 = vmatprep.mubr.bf16.mxu0 0
        %5718 = vmatmul.mubr.bf16.gmra.mrb[0].mxu0 %v5514
        %v5719 = vpop.f32.mrb[0].mxu0
        %v5720 = vadd.f32 0.0, %v5719
        %v5721 = vpop.f32.mrb[0].mxu0
        %v5722 = vpop.f32.mrb[0].mxu0
        %v5723 = vadd.f32 0.0, %v5722
        %v5724 = vpop.f32.mrb[0].mxu0
        %5725 = vmatprep.mubr.bf16.mxu0 0
        %5726 = vmatmul.mubr.bf16.gmra.mrb[0].mxu0 %v5515
        %v5727 = vpop.f32.mrb[0].mxu0
        %v5728 = vadd.f32 0.0, %v5727
        %v5729 = vpop.f32.mrb[0].mxu0
        %v5730 = vpop.f32.mrb[0].mxu0
        %v5731 = vadd.f32 0.0, %v5730
        %v5732 = vpop.f32.mrb[0].mxu0
        %5733 = vmatprep.mubr.bf16.mxu0 0
        %5734 = vmatmul.mubr.bf16.gmra.mrb[0].mxu0 %v5516
        %v5735 = vpop.f32.mrb[0].mxu0
        %v5736 = vadd.f32 0.0, %v5735
        %v5737 = vpop.f32.mrb[0].mxu0
        %v5738 = vpop.f32.mrb[0].mxu0
        %v5739 = vadd.f32 0.0, %v5738
        %v5740 = vpop.f32.mrb[0].mxu0
        %5741 = vdwg.mxu0
        %v5742 = vadd.f32 %v5436, %v5616
        %v5743 = vadd.f32 %v5437, %v5619
        %v5744 = vadd.f32 %v5438, %v5624
        %v5745 = vadd.f32 %v5439, %v5627
        %v5746 = vadd.f32 %v5440, %v5632
        %v5747 = vadd.f32 %v5441, %v5635
        %v5748 = vadd.f32 %v5442, %v5640
        %v5749 = vadd.f32 %v5443, %v5643
        %v5750 = vadd.f32 %v5444, %v5648
        %v5751 = vadd.f32 %v5445, %v5651
        %v5752 = vadd.f32 %v5446, %v5656
        %v5753 = vadd.f32 %v5447, %v5659
        %v5754 = vadd.f32 %v5448, %v5664
        %v5755 = vadd.f32 %v5449, %v5667
        %v5756 = vadd.f32 %v5450, %v5672
        %v5757 = vadd.f32 %v5451, %v5675
        %v5758 = vadd.f32 %v5452, %v5680
        %v5759 = vadd.f32 %v5453, %v5683
        %v5760 = vadd.f32 %v5454, %v5688
        %v5761 = vadd.f32 %v5455, %v5691
        %v5762 = vadd.f32 %v5456, %v5696
        %v5763 = vadd.f32 %v5457, %v5699
        %v5764 = vadd.f32 %v5458, %v5704
        %v5765 = vadd.f32 %v5459, %v5707
        %v5766 = vadd.f32 %v5460, %v5712
        %v5767 = vadd.f32 %v5461, %v5715
        %v5768 = vadd.f32 %v5462, %v5720
        %v5769 = vadd.f32 %v5463, %v5723
        %v5770 = vadd.f32 %v5464, %v5728
        %v5771 = vadd.f32 %v5465, %v5731
        %v5772 = vadd.f32 %v5466, %v5736
        %v5773 = vadd.f32 %v5467, %v5739
        %v5774 = vld [vmem:[%s5468 + $0x1] sm:$0xff]
        %v5775 = vld [vmem:[%s5468 + $0x9] sm:$0xff]
        %v5776 = vld [vmem:[%s5468 + $0x19] sm:$0xff]
        %v5777 = vld [vmem:[%s5468 + $0x21] sm:$0xff]
        %v5778 = vld [vmem:[%s5468 + $0x31] sm:$0xff]
        %v5779 = vld [vmem:[%s5468 + $0x39] sm:$0xff]
        %v5780 = vld [vmem:[%s5468 + $0x49] sm:$0xff]
        %v5781 = vld [vmem:[%s5468 + $0x51] sm:$0xff]
        %v5782 = vld [vmem:[%s5468 + $0x61] sm:$0xff]
        %v5783 = vld [vmem:[%s5468 + $0x69] sm:$0xff]
        %v5784 = vld [vmem:[%s5468 + $0x79] sm:$0xff]
        %v5785 = vld [vmem:[%s5468 + $0x81] sm:$0xff]
        %v5786 = vld [vmem:[%s5468 + $0x91] sm:$0xff]
        %v5787 = vld [vmem:[%s5468 + $0x99] sm:$0xff]
        %v5788 = vld [vmem:[%s5468 + $0xa9] sm:$0xff]
        %v5789 = vld [vmem:[%s5468 + $0xb1] sm:$0xff]
        %v5790 = vld [vmem:[%s5468 + $0xc1] sm:$0xff]
        %v5791 = vld [vmem:[%s5468 + $0xc9] sm:$0xff]
        %v5792 = vld [vmem:[%s5468 + $0xd9] sm:$0xff]
        %v5793 = vld [vmem:[%s5468 + $0xe1] sm:$0xff]
        %v5794 = vld [vmem:[%s5468 + $0xf1] sm:$0xff]
        %v5795 = vld [vmem:[%s5468 + $0xf9] sm:$0xff]
        %v5796 = vld [vmem:[%s5468 + $0x109] sm:$0xff]
        %v5797 = vld [vmem:[%s5468 + $0x111] sm:$0xff]
        %v5798 = vld [vmem:[%s5468 + $0x121] sm:$0xff]
        %v5799 = vld [vmem:[%s5468 + $0x129] sm:$0xff]
        %v5800 = vld [vmem:[%s5468 + $0x139] sm:$0xff]
        %v5801 = vld [vmem:[%s5468 + $0x141] sm:$0xff]
        %v5802 = vld [vmem:[%s5468 + $0x151] sm:$0xff]
        %v5803 = vld [vmem:[%s5468 + $0x159] sm:$0xff]
        %v5804 = vld [vmem:[%s5468 + $0x169] sm:$0xff]
        %v5805 = vld [vmem:[%s5468 + $0x171] sm:$0xff]
        %v5806 = vpack.c.bf16 %v5775, %v5774
        %v5807 = vpack.c.bf16 %v5777, %v5776
        %v5808 = vpack.c.bf16 %v5779, %v5778
        %v5809 = vpack.c.bf16 %v5781, %v5780
        %v5810 = vpack.c.bf16 %v5783, %v5782
        %v5811 = vpack.c.bf16 %v5785, %v5784
        %v5812 = vpack.c.bf16 %v5787, %v5786
        %v5813 = vpack.c.bf16 %v5789, %v5788
        %v5814 = vpack.c.bf16 %v5791, %v5790
        %v5815 = vpack.c.bf16 %v5793, %v5792
        %v5816 = vpack.c.bf16 %v5795, %v5794
        %v5817 = vpack.c.bf16 %v5797, %v5796
        %v5818 = vpack.c.bf16 %v5799, %v5798
        %v5819 = vpack.c.bf16 %v5801, %v5800
        %v5820 = vpack.c.bf16 %v5803, %v5802
        %v5821 = vpack.c.bf16 %v5805, %v5804
        %v5822 = vld [vmem:[#allocation11 + $0x1c0] sm:$0xf]
        %v5823 = vld [vmem:[#allocation11 + $0x1c4] sm:$0xf]
        %v5824 = vld [vmem:[#allocation11 + $0x1c8] sm:$0xf]
        %v5825 = vld [vmem:[#allocation11 + $0x1cc] sm:$0xf]
        %v5826 = vld [vmem:[#allocation11 + $0x1d0] sm:$0xf]
        %v5827 = vld [vmem:[#allocation11 + $0x1d4] sm:$0xf]
        %v5828 = vld [vmem:[#allocation11 + $0x1d8] sm:$0xf]
        %v5829 = vld [vmem:[#allocation11 + $0x1dc] sm:$0xf]
        %v5830 = vld [vmem:[#allocation11 + $0x1e0] sm:$0xf]
        %v5831 = vld [vmem:[#allocation11 + $0x1e4] sm:$0xf]
        %v5832 = vld [vmem:[#allocation11 + $0x1e8] sm:$0xf]
        %v5833 = vld [vmem:[#allocation11 + $0x1ec] sm:$0xf]
        %v5834 = vld [vmem:[#allocation11 + $0x1f0] sm:$0xf]
        %v5835 = vld [vmem:[#allocation11 + $0x1f4] sm:$0xf]
        %v5836 = vld [vmem:[#allocation11 + $0x1f8] sm:$0xf]
        %v5837 = vld [vmem:[#allocation11 + $0x1fc] sm:$0xf]
        %v5854 = vunpack.c.l.b16 %v5822
        %v5855 = vunpack.c.l.b16 %v5823
        %v5856 = vunpack.c.l.b16 %v5824
        %v5857 = vunpack.c.l.b16 %v5825
        %v5858 = vunpack.c.l.b16 %v5826
        %v5859 = vunpack.c.l.b16 %v5827
        %v5860 = vunpack.c.l.b16 %v5828
        %v5861 = vunpack.c.l.b16 %v5829
        %v5862 = vunpack.c.l.b16 %v5830
        %v5863 = vunpack.c.l.b16 %v5831
        %v5864 = vunpack.c.l.b16 %v5832
        %v5865 = vunpack.c.l.b16 %v5833
        %v5866 = vunpack.c.l.b16 %v5834
        %v5867 = vunpack.c.l.b16 %v5835
        %v5868 = vunpack.c.l.b16 %v5836
        %v5869 = vunpack.c.l.b16 %v5837
        %v5870 = vpack.c.b16 %v5855, %v5854
        %v5871 = vpack.c.b16 %v5857, %v5856
        %v5872 = vpack.c.b16 %v5859, %v5858
        %v5873 = vpack.c.b16 %v5861, %v5860
        %v5874 = vpack.c.b16 %v5863, %v5862
        %v5875 = vpack.c.b16 %v5865, %v5864
        %v5876 = vpack.c.b16 %v5867, %v5866
        %v5877 = vpack.c.b16 %v5869, %v5868
        %5886 = vmatprep.subr.bf16.mxu0 0
        %5887 = vmatpush1.bf16.msra.mxu0 %v5870
        %5888 = vmatprep.subr.bf16.mxu0 0
        %5889 = vmatpush1.bf16.msra.mxu0 %v5871
        %5890 = vmatprep.subr.bf16.mxu0 0
        %5891 = vmatpush1.bf16.msra.mxu0 %v5872
        %5892 = vmatprep.subr.bf16.mxu0 0
        %5893 = vmatpush1.bf16.msra.mxu0 %v5873
        %5894 = vmatprep.subr.bf16.mxu0 0
        %5895 = vmatpush1.bf16.msra.mxu0 %v5874
        %5896 = vmatprep.subr.bf16.mxu0 0
        %5897 = vmatpush1.bf16.msra.mxu0 %v5875
        %5898 = vmatprep.subr.bf16.mxu0 0
        %5899 = vmatpush1.bf16.msra.mxu0 %v5876
        %5900 = vmatprep.subr.bf16.mxu0 0
        %5901 = vmatpush1.bf16.msra.mxu0 %v5877
        %5902 = vmatprep.subr.bf16.mxu0 0
        %5903 = vmatpush1.bf16.msra.mxu0 0
        %5904 = vmatprep.subr.bf16.mxu0 0
        %5905 = vmatpush1.bf16.msra.mxu0 0
        %5906 = vmatprep.subr.bf16.mxu0 0
        %5907 = vmatpush1.bf16.msra.mxu0 0
        %5908 = vmatprep.subr.bf16.mxu0 0
        %5909 = vmatpush1.bf16.msra.mxu0 0
        %5910 = vmatprep.subr.bf16.mxu0 0
        %5911 = vmatpush1.bf16.msra.mxu0 0
        %5912 = vmatprep.subr.bf16.mxu0 0
        %5913 = vmatpush1.bf16.msra.mxu0 0
        %5914 = vmatprep.subr.bf16.mxu0 0
        %5915 = vmatpush1.bf16.msra.mxu0 0
        %5916 = vmatprep.subr.bf16.mxu0 0
        %5917 = vmatpush1.bf16.msra.mxu0 0
        %5918 = vmatprep.mubr.bf16.mxu0 0
        %5919 = vmatmul.mubr.bf16.gmra.mrb[0].mxu0 %v5806
        %v5920 = vpop.f32.mrb[0].mxu0
        %v5921 = vadd.f32 0.0, %v5920
        %v5922 = vpop.f32.mrb[0].mxu0
        %v5923 = vpop.f32.mrb[0].mxu0
        %v5924 = vadd.f32 0.0, %v5923
        %v5925 = vpop.f32.mrb[0].mxu0
        %5926 = vmatprep.mubr.bf16.mxu0 0
        %5927 = vmatmul.mubr.bf16.gmra.mrb[0].mxu0 %v5807
        %v5928 = vpop.f32.mrb[0].mxu0
        %v5929 = vadd.f32 0.0, %v5928
        %v5930 = vpop.f32.mrb[0].mxu0
        %v5931 = vpop.f32.mrb[0].mxu0
        %v5932 = vadd.f32 0.0, %v5931
        %v5933 = vpop.f32.mrb[0].mxu0
        %5934 = vmatprep.mubr.bf16.mxu0 0
        %5935 = vmatmul.mubr.bf16.gmra.mrb[0].mxu0 %v5808
        %v5936 = vpop.f32.mrb[0].mxu0
        %v5937 = vadd.f32 0.0, %v5936
        %v5938 = vpop.f32.mrb[0].mxu0
        %v5939 = vpop.f32.mrb[0].mxu0
        %v5940 = vadd.f32 0.0, %v5939
        %v5941 = vpop.f32.mrb[0].mxu0
        %5942 = vmatprep.mubr.bf16.mxu0 0
        %5943 = vmatmul.mubr.bf16.gmra.mrb[0].mxu0 %v5809
        %v5944 = vpop.f32.mrb[0].mxu0
        %v5945 = vadd.f32 0.0, %v5944
        %v5946 = vpop.f32.mrb[0].mxu0
        %v5947 = vpop.f32.mrb[0].mxu0
        %v5948 = vadd.f32 0.0, %v5947
        %v5949 = vpop.f32.mrb[0].mxu0
        %5950 = vmatprep.mubr.bf16.mxu0 0
        %5951 = vmatmul.mubr.bf16.gmra.mrb[0].mxu0 %v5810
        %v5952 = vpop.f32.mrb[0].mxu0
        %v5953 = vadd.f32 0.0, %v5952
        %v5954 = vpop.f32.mrb[0].mxu0
        %v5955 = vpop.f32.mrb[0].mxu0
        %v5956 = vadd.f32 0.0, %v5955
        %v5957 = vpop.f32.mrb[0].mxu0
        %5958 = vmatprep.mubr.bf16.mxu0 0
        %5959 = vmatmul.mubr.bf16.gmra.mrb[0].mxu0 %v5811
        %v5960 = vpop.f32.mrb[0].mxu0
        %v5961 = vadd.f32 0.0, %v5960
        %v5962 = vpop.f32.mrb[0].mxu0
        %v5963 = vpop.f32.mrb[0].mxu0
        %v5964 = vadd.f32 0.0, %v5963
        %v5965 = vpop.f32.mrb[0].mxu0
        %5966 = vmatprep.mubr.bf16.mxu0 0
        %5967 = vmatmul.mubr.bf16.gmra.mrb[0].mxu0 %v5812
        %v5968 = vpop.f32.mrb[0].mxu0
        %v5969 = vadd.f32 0.0, %v5968
        %v5970 = vpop.f32.mrb[0].mxu0
        %v5971 = vpop.f32.mrb[0].mxu0
        %v5972 = vadd.f32 0.0, %v5971
        %v5973 = vpop.f32.mrb[0].mxu0
        %5974 = vmatprep.mubr.bf16.mxu0 0
        %5975 = vmatmul.mubr.bf16.gmra.mrb[0].mxu0 %v5813
        %v5976 = vpop.f32.mrb[0].mxu0
        %v5977 = vadd.f32 0.0, %v5976
        %v5978 = vpop.f32.mrb[0].mxu0
        %v5979 = vpop.f32.mrb[0].mxu0
        %v5980 = vadd.f32 0.0, %v5979
        %v5981 = vpop.f32.mrb[0].mxu0
        %5982 = vmatprep.mubr.bf16.mxu0 0
        %5983 = vmatmul.mubr.bf16.gmra.mrb[0].mxu0 %v5814
        %v5984 = vpop.f32.mrb[0].mxu0
        %v5985 = vadd.f32 0.0, %v5984
        %v5986 = vpop.f32.mrb[0].mxu0
        %v5987 = vpop.f32.mrb[0].mxu0
        %v5988 = vadd.f32 0.0, %v5987
        %v5989 = vpop.f32.mrb[0].mxu0
        %5990 = vmatprep.mubr.bf16.mxu0 0
        %5991 = vmatmul.mubr.bf16.gmra.mrb[0].mxu0 %v5815
        %v5992 = vpop.f32.mrb[0].mxu0
        %v5993 = vadd.f32 0.0, %v5992
        %v5994 = vpop.f32.mrb[0].mxu0
        %v5995 = vpop.f32.mrb[0].mxu0
        %v5996 = vadd.f32 0.0, %v5995
        %v5997 = vpop.f32.mrb[0].mxu0
        %5998 = vmatprep.mubr.bf16.mxu0 0
        %5999 = vmatmul.mubr.bf16.gmra.mrb[0].mxu0 %v5816
        %v6000 = vpop.f32.mrb[0].mxu0
        %v6001 = vadd.f32 0.0, %v6000
        %v6002 = vpop.f32.mrb[0].mxu0
        %v6003 = vpop.f32.mrb[0].mxu0
        %v6004 = vadd.f32 0.0, %v6003
        %v6005 = vpop.f32.mrb[0].mxu0
        %6006 = vmatprep.mubr.bf16.mxu0 0
        %6007 = vmatmul.mubr.bf16.gmra.mrb[0].mxu0 %v5817
        %v6008 = vpop.f32.mrb[0].mxu0
        %v6009 = vadd.f32 0.0, %v6008
        %v6010 = vpop.f32.mrb[0].mxu0
        %v6011 = vpop.f32.mrb[0].mxu0
        %v6012 = vadd.f32 0.0, %v6011
        %v6013 = vpop.f32.mrb[0].mxu0
        %6014 = vmatprep.mubr.bf16.mxu0 0
        %6015 = vmatmul.mubr.bf16.gmra.mrb[0].mxu0 %v5818
        %v6016 = vpop.f32.mrb[0].mxu0
        %v6017 = vadd.f32 0.0, %v6016
        %v6018 = vpop.f32.mrb[0].mxu0
        %v6019 = vpop.f32.mrb[0].mxu0
        %v6020 = vadd.f32 0.0, %v6019
        %v6021 = vpop.f32.mrb[0].mxu0
        %6022 = vmatprep.mubr.bf16.mxu0 0
        %6023 = vmatmul.mubr.bf16.gmra.mrb[0].mxu0 %v5819
        %v6024 = vpop.f32.mrb[0].mxu0
        %v6025 = vadd.f32 0.0, %v6024
        %v6026 = vpop.f32.mrb[0].mxu0
        %v6027 = vpop.f32.mrb[0].mxu0
        %v6028 = vadd.f32 0.0, %v6027
        %v6029 = vpop.f32.mrb[0].mxu0
        %6030 = vmatprep.mubr.bf16.mxu0 0
        %6031 = vmatmul.mubr.bf16.gmra.mrb[0].mxu0 %v5820
        %v6032 = vpop.f32.mrb[0].mxu0
        %v6033 = vadd.f32 0.0, %v6032
        %v6034 = vpop.f32.mrb[0].mxu0
        %v6035 = vpop.f32.mrb[0].mxu0
        %v6036 = vadd.f32 0.0, %v6035
        %v6037 = vpop.f32.mrb[0].mxu0
        %6038 = vmatprep.mubr.bf16.mxu0 0
        %6039 = vmatmul.mubr.bf16.gmra.mrb[0].mxu0 %v5821
        %v6040 = vpop.f32.mrb[0].mxu0
        %v6041 = vadd.f32 0.0, %v6040
        %v6042 = vpop.f32.mrb[0].mxu0
        %v6043 = vpop.f32.mrb[0].mxu0
        %v6044 = vadd.f32 0.0, %v6043
        %v6045 = vpop.f32.mrb[0].mxu0
        %6046 = vdwg.mxu0
        %v6047 = vadd.f32 %v5742, %v5921
        %v6048 = vadd.f32 %v5743, %v5924
        %v6049 = vadd.f32 %v5744, %v5929
        %v6050 = vadd.f32 %v5745, %v5932
        %v6051 = vadd.f32 %v5746, %v5937
        %v6052 = vadd.f32 %v5747, %v5940
        %v6053 = vadd.f32 %v5748, %v5945
        %v6054 = vadd.f32 %v5749, %v5948
        %v6055 = vadd.f32 %v5750, %v5953
        %v6056 = vadd.f32 %v5751, %v5956
        %v6057 = vadd.f32 %v5752, %v5961
        %v6058 = vadd.f32 %v5753, %v5964
        %v6059 = vadd.f32 %v5754, %v5969
        %v6060 = vadd.f32 %v5755, %v5972
        %v6061 = vadd.f32 %v5756, %v5977
        %v6062 = vadd.f32 %v5757, %v5980
        %v6063 = vadd.f32 %v5758, %v5985
        %v6064 = vadd.f32 %v5759, %v5988
        %v6065 = vadd.f32 %v5760, %v5993
        %v6066 = vadd.f32 %v5761, %v5996
        %v6067 = vadd.f32 %v5762, %v6001
        %v6068 = vadd.f32 %v5763, %v6004
        %v6069 = vadd.f32 %v5764, %v6009
        %v6070 = vadd.f32 %v5765, %v6012
        %v6071 = vadd.f32 %v5766, %v6017
        %v6072 = vadd.f32 %v5767, %v6020
        %v6073 = vadd.f32 %v5768, %v6025
        %v6074 = vadd.f32 %v5769, %v6028
        %v6075 = vadd.f32 %v5770, %v6033
        %v6076 = vadd.f32 %v5771, %v6036
        %v6077 = vadd.f32 %v5772, %v6041
        %v6078 = vadd.f32 %v5773, %v6044
        %v6079 = vld [vmem:[%s5468 + $0x2] sm:$0xff]
        %v6080 = vld [vmem:[%s5468 + $0xa] sm:$0xff]
        %v6081 = vld [vmem:[%s5468 + $0x1a] sm:$0xff]
        %v6082 = vld [vmem:[%s5468 + $0x22] sm:$0xff]
        %v6083 = vld [vmem:[%s5468 + $0x32] sm:$0xff]
        %v6084 = vld [vmem:[%s5468 + $0x3a] sm:$0xff]
        %v6085 = vld [vmem:[%s5468 + $0x4a] sm:$0xff]
        %v6086 = vld [vmem:[%s5468 + $0x52] sm:$0xff]
        %v6087 = vld [vmem:[%s5468 + $0x62] sm:$0xff]
        %v6088 = vld [vmem:[%s5468 + $0x6a] sm:$0xff]
        %v6089 = vld [vmem:[%s5468 + $0x7a] sm:$0xff]
        %v6090 = vld [vmem:[%s5468 + $0x82] sm:$0xff]
        %v6091 = vld [vmem:[%s5468 + $0x92] sm:$0xff]
        %v6092 = vld [vmem:[%s5468 + $0x9a] sm:$0xff]
        %v6093 = vld [vmem:[%s5468 + $0xaa] sm:$0xff]
        %v6094 = vld [vmem:[%s5468 + $0xb2] sm:$0xff]
        %v6095 = vld [vmem:[%s5468 + $0xc2] sm:$0xff]
        %v6096 = vld [vmem:[%s5468 + $0xca] sm:$0xff]
        %v6097 = vld [vmem:[%s5468 + $0xda] sm:$0xff]
        %v6098 = vld [vmem:[%s5468 + $0xe2] sm:$0xff]
        %v6099 = vld [vmem:[%s5468 + $0xf2] sm:$0xff]
        %v6100 = vld [vmem:[%s5468 + $0xfa] sm:$0xff]
        %v6101 = vld [vmem:[%s5468 + $0x10a] sm:$0xff]
        %v6102 = vld [vmem:[%s5468 + $0x112] sm:$0xff]
        %v6103 = vld [vmem:[%s5468 + $0x122] sm:$0xff]
        %v6104 = vld [vmem:[%s5468 + $0x12a] sm:$0xff]
        %v6105 = vld [vmem:[%s5468 + $0x13a] sm:$0xff]
        %v6106 = vld [vmem:[%s5468 + $0x142] sm:$0xff]
        %v6107 = vld [vmem:[%s5468 + $0x152] sm:$0xff]
        %v6108 = vld [vmem:[%s5468 + $0x15a] sm:$0xff]
        %v6109 = vld [vmem:[%s5468 + $0x16a] sm:$0xff]
        %v6110 = vld [vmem:[%s5468 + $0x172] sm:$0xff]
        %v6111 = vpack.c.bf16 %v6080, %v6079
        %v6112 = vpack.c.bf16 %v6082, %v6081
        %v6113 = vpack.c.bf16 %v6084, %v6083
        %v6114 = vpack.c.bf16 %v6086, %v6085
        %v6115 = vpack.c.bf16 %v6088, %v6087
        %v6116 = vpack.c.bf16 %v6090, %v6089
        %v6117 = vpack.c.bf16 %v6092, %v6091
        %v6118 = vpack.c.bf16 %v6094, %v6093
        %v6119 = vpack.c.bf16 %v6096, %v6095
        %v6120 = vpack.c.bf16 %v6098, %v6097
        %v6121 = vpack.c.bf16 %v6100, %v6099
        %v6122 = vpack.c.bf16 %v6102, %v6101
        %v6123 = vpack.c.bf16 %v6104, %v6103
        %v6124 = vpack.c.bf16 %v6106, %v6105
        %v6125 = vpack.c.bf16 %v6108, %v6107
        %v6126 = vpack.c.bf16 %v6110, %v6109
        %v6127 = vld [vmem:[#allocation11 + $0x200] sm:$0xf]
        %v6128 = vld [vmem:[#allocation11 + $0x204] sm:$0xf]
        %v6129 = vld [vmem:[#allocation11 + $0x208] sm:$0xf]
        %v6130 = vld [vmem:[#allocation11 + $0x20c] sm:$0xf]
        %v6131 = vld [vmem:[#allocation11 + $0x210] sm:$0xf]
        %v6132 = vld [vmem:[#allocation11 + $0x214] sm:$0xf]
        %v6133 = vld [vmem:[#allocation11 + $0x218] sm:$0xf]
        %v6134 = vld [vmem:[#allocation11 + $0x21c] sm:$0xf]
        %v6135 = vld [vmem:[#allocation11 + $0x220] sm:$0xf]
        %v6136 = vld [vmem:[#allocation11 + $0x224] sm:$0xf]
        %v6137 = vld [vmem:[#allocation11 + $0x228] sm:$0xf]
        %v6138 = vld [vmem:[#allocation11 + $0x22c] sm:$0xf]
        %v6139 = vld [vmem:[#allocation11 + $0x230] sm:$0xf]
        %v6140 = vld [vmem:[#allocation11 + $0x234] sm:$0xf]
        %v6141 = vld [vmem:[#allocation11 + $0x238] sm:$0xf]
        %v6142 = vld [vmem:[#allocation11 + $0x23c] sm:$0xf]
        %v6159 = vunpack.c.l.b16 %v6127
        %v6160 = vunpack.c.l.b16 %v6128
        %v6161 = vunpack.c.l.b16 %v6129
        %v6162 = vunpack.c.l.b16 %v6130
        %v6163 = vunpack.c.l.b16 %v6131
        %v6164 = vunpack.c.l.b16 %v6132
        %v6165 = vunpack.c.l.b16 %v6133
        %v6166 = vunpack.c.l.b16 %v6134
        %v6167 = vunpack.c.l.b16 %v6135
        %v6168 = vunpack.c.l.b16 %v6136
        %v6169 = vunpack.c.l.b16 %v6137
        %v6170 = vunpack.c.l.b16 %v6138
        %v6171 = vunpack.c.l.b16 %v6139
        %v6172 = vunpack.c.l.b16 %v6140
        %v6173 = vunpack.c.l.b16 %v6141
        %v6174 = vunpack.c.l.b16 %v6142
        %v6175 = vpack.c.b16 %v6160, %v6159
        %v6176 = vpack.c.b16 %v6162, %v6161
        %v6177 = vpack.c.b16 %v6164, %v6163
        %v6178 = vpack.c.b16 %v6166, %v6165
        %v6179 = vpack.c.b16 %v6168, %v6167
        %v6180 = vpack.c.b16 %v6170, %v6169
        %v6181 = vpack.c.b16 %v6172, %v6171
        %v6182 = vpack.c.b16 %v6174, %v6173
        %6191 = vmatprep.subr.bf16.mxu0 0
        %6192 = vmatpush1.bf16.msra.mxu0 %v6175
        %6193 = vmatprep.subr.bf16.mxu0 0
        %6194 = vmatpush1.bf16.msra.mxu0 %v6176
        %6195 = vmatprep.subr.bf16.mxu0 0
        %6196 = vmatpush1.bf16.msra.mxu0 %v6177
        %6197 = vmatprep.subr.bf16.mxu0 0
        %6198 = vmatpush1.bf16.msra.mxu0 %v6178
        %6199 = vmatprep.subr.bf16.mxu0 0
        %6200 = vmatpush1.bf16.msra.mxu0 %v6179
        %6201 = vmatprep.subr.bf16.mxu0 0
        %6202 = vmatpush1.bf16.msra.mxu0 %v6180
        %6203 = vmatprep.subr.bf16.mxu0 0
        %6204 = vmatpush1.bf16.msra.mxu0 %v6181
        %6205 = vmatprep.subr.bf16.mxu0 0
        %6206 = vmatpush1.bf16.msra.mxu0 %v6182
        %6207 = vmatprep.subr.bf16.mxu0 0
        %6208 = vmatpush1.bf16.msra.mxu0 0
        %6209 = vmatprep.subr.bf16.mxu0 0
        %6210 = vmatpush1.bf16.msra.mxu0 0
        %6211 = vmatprep.subr.bf16.mxu0 0
        %6212 = vmatpush1.bf16.msra.mxu0 0
        %6213 = vmatprep.subr.bf16.mxu0 0
        %6214 = vmatpush1.bf16.msra.mxu0 0
        %6215 = vmatprep.subr.bf16.mxu0 0
        %6216 = vmatpush1.bf16.msra.mxu0 0
        %6217 = vmatprep.subr.bf16.mxu0 0
        %6218 = vmatpush1.bf16.msra.mxu0 0
        %6219 = vmatprep.subr.bf16.mxu0 0
        %6220 = vmatpush1.bf16.msra.mxu0 0
        %6221 = vmatprep.subr.bf16.mxu0 0
        %6222 = vmatpush1.bf16.msra.mxu0 0
        %6223 = vmatprep.mubr.bf16.mxu0 0
        %6224 = vmatmul.mubr.bf16.gmra.mrb[0].mxu0 %v6111
        %v6225 = vpop.f32.mrb[0].mxu0
        %v6226 = vadd.f32 0.0, %v6225
        %v6227 = vpop.f32.mrb[0].mxu0
        %v6228 = vpop.f32.mrb[0].mxu0
        %v6229 = vadd.f32 0.0, %v6228
        %v6230 = vpop.f32.mrb[0].mxu0
        %6231 = vmatprep.mubr.bf16.mxu0 0
        %6232 = vmatmul.mubr.bf16.gmra.mrb[0].mxu0 %v6112
        %v6233 = vpop.f32.mrb[0].mxu0
        %v6234 = vadd.f32 0.0, %v6233
        %v6235 = vpop.f32.mrb[0].mxu0
        %v6236 = vpop.f32.mrb[0].mxu0
        %v6237 = vadd.f32 0.0, %v6236
        %v6238 = vpop.f32.mrb[0].mxu0
        %6239 = vmatprep.mubr.bf16.mxu0 0
        %6240 = vmatmul.mubr.bf16.gmra.mrb[0].mxu0 %v6113
        %v6241 = vpop.f32.mrb[0].mxu0
        %v6242 = vadd.f32 0.0, %v6241
        %v6243 = vpop.f32.mrb[0].mxu0
        %v6244 = vpop.f32.mrb[0].mxu0
        %v6245 = vadd.f32 0.0, %v6244
        %v6246 = vpop.f32.mrb[0].mxu0
        %6247 = vmatprep.mubr.bf16.mxu0 0
        %6248 = vmatmul.mubr.bf16.gmra.mrb[0].mxu0 %v6114
        %v6249 = vpop.f32.mrb[0].mxu0
        %v6250 = vadd.f32 0.0, %v6249
        %v6251 = vpop.f32.mrb[0].mxu0
        %v6252 = vpop.f32.mrb[0].mxu0
        %v6253 = vadd.f32 0.0, %v6252
        %v6254 = vpop.f32.mrb[0].mxu0
        %6255 = vmatprep.mubr.bf16.mxu0 0
        %6256 = vmatmul.mubr.bf16.gmra.mrb[0].mxu0 %v6115
        %v6257 = vpop.f32.mrb[0].mxu0
        %v6258 = vadd.f32 0.0, %v6257
        %v6259 = vpop.f32.mrb[0].mxu0
        %v6260 = vpop.f32.mrb[0].mxu0
        %v6261 = vadd.f32 0.0, %v6260
        %v6262 = vpop.f32.mrb[0].mxu0
        %6263 = vmatprep.mubr.bf16.mxu0 0
        %6264 = vmatmul.mubr.bf16.gmra.mrb[0].mxu0 %v6116
        %v6265 = vpop.f32.mrb[0].mxu0
        %v6266 = vadd.f32 0.0, %v6265
        %v6267 = vpop.f32.mrb[0].mxu0
        %v6268 = vpop.f32.mrb[0].mxu0
        %v6269 = vadd.f32 0.0, %v6268
        %v6270 = vpop.f32.mrb[0].mxu0
        %6271 = vmatprep.mubr.bf16.mxu0 0
        %6272 = vmatmul.mubr.bf16.gmra.mrb[0].mxu0 %v6117
        %v6273 = vpop.f32.mrb[0].mxu0
        %v6274 = vadd.f32 0.0, %v6273
        %v6275 = vpop.f32.mrb[0].mxu0
        %v6276 = vpop.f32.mrb[0].mxu0
        %v6277 = vadd.f32 0.0, %v6276
        %v6278 = vpop.f32.mrb[0].mxu0
        %6279 = vmatprep.mubr.bf16.mxu0 0
        %6280 = vmatmul.mubr.bf16.gmra.mrb[0].mxu0 %v6118
        %v6281 = vpop.f32.mrb[0].mxu0
        %v6282 = vadd.f32 0.0, %v6281
        %v6283 = vpop.f32.mrb[0].mxu0
        %v6284 = vpop.f32.mrb[0].mxu0
        %v6285 = vadd.f32 0.0, %v6284
        %v6286 = vpop.f32.mrb[0].mxu0
        %6287 = vmatprep.mubr.bf16.mxu0 0
        %6288 = vmatmul.mubr.bf16.gmra.mrb[0].mxu0 %v6119
        %v6289 = vpop.f32.mrb[0].mxu0
        %v6290 = vadd.f32 0.0, %v6289
        %v6291 = vpop.f32.mrb[0].mxu0
        %v6292 = vpop.f32.mrb[0].mxu0
        %v6293 = vadd.f32 0.0, %v6292
        %v6294 = vpop.f32.mrb[0].mxu0
        %6295 = vmatprep.mubr.bf16.mxu0 0
        %6296 = vmatmul.mubr.bf16.gmra.mrb[0].mxu0 %v6120
        %v6297 = vpop.f32.mrb[0].mxu0
        %v6298 = vadd.f32 0.0, %v6297
        %v6299 = vpop.f32.mrb[0].mxu0
        %v6300 = vpop.f32.mrb[0].mxu0
        %v6301 = vadd.f32 0.0, %v6300
        %v6302 = vpop.f32.mrb[0].mxu0
        %6303 = vmatprep.mubr.bf16.mxu0 0
        %6304 = vmatmul.mubr.bf16.gmra.mrb[0].mxu0 %v6121
        %v6305 = vpop.f32.mrb[0].mxu0
        %v6306 = vadd.f32 0.0, %v6305
        %v6307 = vpop.f32.mrb[0].mxu0
        %v6308 = vpop.f32.mrb[0].mxu0
        %v6309 = vadd.f32 0.0, %v6308
        %v6310 = vpop.f32.mrb[0].mxu0
        %6311 = vmatprep.mubr.bf16.mxu0 0
        %6312 = vmatmul.mubr.bf16.gmra.mrb[0].mxu0 %v6122
        %v6313 = vpop.f32.mrb[0].mxu0
        %v6314 = vadd.f32 0.0, %v6313
        %v6315 = vpop.f32.mrb[0].mxu0
        %v6316 = vpop.f32.mrb[0].mxu0
        %v6317 = vadd.f32 0.0, %v6316
        %v6318 = vpop.f32.mrb[0].mxu0
        %6319 = vmatprep.mubr.bf16.mxu0 0
        %6320 = vmatmul.mubr.bf16.gmra.mrb[0].mxu0 %v6123
        %v6321 = vpop.f32.mrb[0].mxu0
        %v6322 = vadd.f32 0.0, %v6321
        %v6323 = vpop.f32.mrb[0].mxu0
        %v6324 = vpop.f32.mrb[0].mxu0
        %v6325 = vadd.f32 0.0, %v6324
        %v6326 = vpop.f32.mrb[0].mxu0
        %6327 = vmatprep.mubr.bf16.mxu0 0
        %6328 = vmatmul.mubr.bf16.gmra.mrb[0].mxu0 %v6124
        %v6329 = vpop.f32.mrb[0].mxu0
        %v6330 = vadd.f32 0.0, %v6329
        %v6331 = vpop.f32.mrb[0].mxu0
        %v6332 = vpop.f32.mrb[0].mxu0
        %v6333 = vadd.f32 0.0, %v6332
        %v6334 = vpop.f32.mrb[0].mxu0
        %6335 = vmatprep.mubr.bf16.mxu0 0
        %6336 = vmatmul.mubr.bf16.gmra.mrb[0].mxu0 %v6125
        %v6337 = vpop.f32.mrb[0].mxu0
        %v6338 = vadd.f32 0.0, %v6337
        %v6339 = vpop.f32.mrb[0].mxu0
        %v6340 = vpop.f32.mrb[0].mxu0
        %v6341 = vadd.f32 0.0, %v6340
        %v6342 = vpop.f32.mrb[0].mxu0
        %6343 = vmatprep.mubr.bf16.mxu0 0
        %6344 = vmatmul.mubr.bf16.gmra.mrb[0].mxu0 %v6126
        %v6345 = vpop.f32.mrb[0].mxu0
        %v6346 = vadd.f32 0.0, %v6345
        %v6347 = vpop.f32.mrb[0].mxu0
        %v6348 = vpop.f32.mrb[0].mxu0
        %v6349 = vadd.f32 0.0, %v6348
        %v6350 = vpop.f32.mrb[0].mxu0
        %6351 = vdwg.mxu0
        %v6352 = vadd.f32 %v6047, %v6226
        %v6353 = vadd.f32 %v6048, %v6229
        %v6354 = vadd.f32 %v6049, %v6234
        %v6355 = vadd.f32 %v6050, %v6237
        %v6356 = vadd.f32 %v6051, %v6242
        %v6357 = vadd.f32 %v6052, %v6245
        %v6358 = vadd.f32 %v6053, %v6250
        %v6359 = vadd.f32 %v6054, %v6253
        %v6360 = vadd.f32 %v6055, %v6258
        %v6361 = vadd.f32 %v6056, %v6261
        %v6362 = vadd.f32 %v6057, %v6266
        %v6363 = vadd.f32 %v6058, %v6269
        %v6364 = vadd.f32 %v6059, %v6274
        %v6365 = vadd.f32 %v6060, %v6277
        %v6366 = vadd.f32 %v6061, %v6282
        %v6367 = vadd.f32 %v6062, %v6285
        %v6368 = vadd.f32 %v6063, %v6290
        %v6369 = vadd.f32 %v6064, %v6293
        %v6370 = vadd.f32 %v6065, %v6298
        %v6371 = vadd.f32 %v6066, %v6301
        %v6372 = vadd.f32 %v6067, %v6306
        %v6373 = vadd.f32 %v6068, %v6309
        %v6374 = vadd.f32 %v6069, %v6314
        %v6375 = vadd.f32 %v6070, %v6317
        %v6376 = vadd.f32 %v6071, %v6322
        %v6377 = vadd.f32 %v6072, %v6325
        %v6378 = vadd.f32 %v6073, %v6330
        %v6379 = vadd.f32 %v6074, %v6333
        %v6380 = vadd.f32 %v6075, %v6338
        %v6381 = vadd.f32 %v6076, %v6341
        %v6382 = vadd.f32 %v6077, %v6346
        %v6383 = vadd.f32 %v6078, %v6349
        %v6384 = vld [vmem:[#allocation13] sm:$0x1]
        %v6386 = vlaneseq
        %v6387 = vshrl.u32 %v6386, 7
        %v6388 = vsub.s32 0, %v6387
        %v6389 = vrot.slane %v6384, %v6388
        %v6391 = vadd.f32 %v6352, %v6389
        %v6392 = vadd.f32 %v6353, %v6389
        %v6393 = vadd.f32 %v6354, %v6389
        %v6394 = vadd.f32 %v6355, %v6389
        %v6395 = vadd.f32 %v6356, %v6389
        %v6396 = vadd.f32 %v6357, %v6389
        %v6397 = vadd.f32 %v6358, %v6389
        %v6398 = vadd.f32 %v6359, %v6389
        %v6399 = vadd.f32 %v6360, %v6389
        %v6400 = vadd.f32 %v6361, %v6389
        %v6401 = vadd.f32 %v6362, %v6389
        %v6402 = vadd.f32 %v6363, %v6389
        %v6403 = vadd.f32 %v6364, %v6389
        %v6404 = vadd.f32 %v6365, %v6389
        %v6405 = vadd.f32 %v6366, %v6389
        %v6406 = vadd.f32 %v6367, %v6389
        %v6407 = vadd.f32 %v6368, %v6389
        %v6408 = vadd.f32 %v6369, %v6389
        %v6409 = vadd.f32 %v6370, %v6389
        %v6410 = vadd.f32 %v6371, %v6389
        %v6411 = vadd.f32 %v6372, %v6389
        %v6412 = vadd.f32 %v6373, %v6389
        %v6413 = vadd.f32 %v6374, %v6389
        %v6414 = vadd.f32 %v6375, %v6389
        %v6415 = vadd.f32 %v6376, %v6389
        %v6416 = vadd.f32 %v6377, %v6389
        %v6417 = vadd.f32 %v6378, %v6389
        %v6418 = vadd.f32 %v6379, %v6389
        %v6419 = vadd.f32 %v6380, %v6389
        %v6420 = vadd.f32 %v6381, %v6389
        %v6421 = vadd.f32 %v6382, %v6389
        %v6422 = vadd.f32 %v6383, %v6389
        %v6423 = vadd.f32 %v6391, %v6393
        %v6424 = vadd.f32 %v6392, %v6394
        %v6425 = vadd.f32 %v6395, %v6397
        %v6426 = vadd.f32 %v6396, %v6398
        %v6427 = vadd.f32 %v6399, %v6401
        %v6428 = vadd.f32 %v6400, %v6402
        %v6429 = vadd.f32 %v6403, %v6405
        %v6430 = vadd.f32 %v6404, %v6406
        %v6431 = vadd.f32 %v6407, %v6409
        %v6432 = vadd.f32 %v6408, %v6410
        %v6433 = vadd.f32 %v6411, %v6413
        %v6434 = vadd.f32 %v6412, %v6414
        %v6435 = vadd.f32 %v6415, %v6417
        %v6436 = vadd.f32 %v6416, %v6418
        %v6437 = vadd.f32 %v6419, %v6421
        %v6438 = vadd.f32 %v6420, %v6422
        %6439 = vst [vmem:[#allocation4] sm:$0xff] %v6423
        %6440 = vst [vmem:[#allocation4 + $0x8] sm:$0xff] %v6424
        %6441 = vst [vmem:[#allocation4 + $0x10] sm:$0xff] %v6425
        %6442 = vst [vmem:[#allocation4 + $0x18] sm:$0xff] %v6426
        %6443 = vst [vmem:[#allocation4 + $0x20] sm:$0xff] %v6427
        %6444 = vst [vmem:[#allocation4 + $0x28] sm:$0xff] %v6428
        %6445 = vst [vmem:[#allocation4 + $0x30] sm:$0xff] %v6429
        %6446 = vst [vmem:[#allocation4 + $0x38] sm:$0xff] %v6430
        %6447 = vst [vmem:[#allocation4 + $0x40] sm:$0xff] %v6431
        %6448 = vst [vmem:[#allocation4 + $0x48] sm:$0xff] %v6432
        %6449 = vst [vmem:[#allocation4 + $0x50] sm:$0xff] %v6433
        %6450 = vst [vmem:[#allocation4 + $0x58] sm:$0xff] %v6434
        %6451 = vst [vmem:[#allocation4 + $0x60] sm:$0xff] %v6435
        %6452 = vst [vmem:[#allocation4 + $0x68] sm:$0xff] %v6436
        %6453 = vst [vmem:[#allocation4 + $0x70] sm:$0xff] %v6437
        %6454 = vst [vmem:[#allocation4 + $0x78] sm:$0xff] %v6438
        %v6455 = vld [vmem:[#allocation4] ss:$2 sm:$0xff]
        %v6456 = vld [vmem:[%s518] ss:$2 sm:$0xff]
        %v6457 = vld [vmem:[%s520] ss:$2 sm:$0xff]
        %v6458 = vld [vmem:[%s522] ss:$2 sm:$0xff]
        %v6459 = vld [vmem:[%s524] ss:$2 sm:$0xff]
        %v6460 = vld [vmem:[%s526] ss:$2 sm:$0xff]
        %v6461 = vld [vmem:[%s528] ss:$2 sm:$0xff]
        %v6462 = vld [vmem:[%s530] ss:$2 sm:$0xff]
        %v6463 = vld [vmem:[%s532] ss:$2 sm:$0xff]
        %v6464 = vld [vmem:[%s534] ss:$2 sm:$0xff]
        %v6465 = vld [vmem:[%s536] ss:$2 sm:$0xff]
        %v6466 = vld [vmem:[%s538] ss:$2 sm:$0xff]
        %v6467 = vld [vmem:[%s540] ss:$2 sm:$0xff]
        %v6468 = vld [vmem:[%s542] ss:$2 sm:$0xff]
        %v6469 = vld [vmem:[%s544] ss:$2 sm:$0xff]
        %v6470 = vld [vmem:[%s546] ss:$2 sm:$0xff]
        %v6471 = vadd.f32 %v6455, %v6463
        %v6472 = vadd.f32 %v6456, %v6464
        %v6473 = vadd.f32 %v6457, %v6465
        %v6474 = vadd.f32 %v6458, %v6466
        %v6475 = vadd.f32 %v6459, %v6467
        %v6476 = vadd.f32 %v6460, %v6468
        %v6477 = vadd.f32 %v6461, %v6469
        %v6478 = vadd.f32 %v6462, %v6470
        %v6479 = vmul.f32 %v6471, 0.25
        %v6480 = vmul.f32 %v6472, 0.25
        %v6481 = vmul.f32 %v6473, 0.25
        %v6482 = vmul.f32 %v6474, 0.25
        %v6483 = vmul.f32 %v6475, 0.25
        %v6484 = vmul.f32 %v6476, 0.25
        %v6485 = vmul.f32 %v6477, 0.25
        %v6486 = vmul.f32 %v6478, 0.25
        %v6487 = vadd.f32 %v674, %v6479
        %v6488 = vadd.f32 %v677, %v6480
        %v6489 = vadd.f32 %v682, %v6481
        %v6490 = vadd.f32 %v685, %v6482
        %v6491 = vadd.f32 %v690, %v6483
        %v6492 = vadd.f32 %v693, %v6484
        %v6493 = vadd.f32 %v698, %v6485
        %v6494 = vadd.f32 %v701, %v6486
        %v6495 = vpack.c.bf16 %v6487, %v6487
        %v6496 = vpack.c.bf16 %v6488, %v6488
        %v6497 = vpack.c.bf16 %v6489, %v6489
        %v6498 = vpack.c.bf16 %v6490, %v6490
        %v6499 = vpack.c.bf16 %v6491, %v6491
        %v6500 = vpack.c.bf16 %v6492, %v6492
        %v6501 = vpack.c.bf16 %v6493, %v6493
        %v6502 = vpack.c.bf16 %v6494, %v6494
        %6503 = vst [vmem:[%s419] sm:$0xf] %v6495
        %6504 = vst [vmem:[%s419 + $0x4] sm:$0xf] %v6496
        %6505 = vst [vmem:[%s419 + $0x8] sm:$0xf] %v6497
        %6506 = vst [vmem:[%s419 + $0xc] sm:$0xf] %v6498
        %6507 = vst [vmem:[%s419 + $0x10] sm:$0xf] %v6499
        %6508 = vst [vmem:[%s419 + $0x14] sm:$0xf] %v6500
        %6509 = vst [vmem:[%s419 + $0x18] sm:$0xf] %v6501
        %6510 = vst [vmem:[%s419 + $0x1c] sm:$0xf] %v6502
        %s6511 = sand.u32 %s221, 1
        %s6512 = scalar_lea.sflag [#allocation7], %s6511
        %s6513 = sand.u32 %s221, 1
        %s6514 = smul.addr %s6513, 32
        %s6515 = scalar_lea.vmem [#allocation17], %s6514
        // Predicated region
        $region81: #{tpu_custom_call.1} parent=47 // pred_check
          %p6516 = pneg %p231
        $region82: #{tpu_custom_call.1} parent=47 // pred_check_branch
          %6518 = sbr.rel (%p6516) target = $region84
        $region83: #{tpu_custom_call.1} parent=47 // pred_region
          %s6520 = ssub.s32 512, 512
          %6521 = vsyncadd %s6512, %s6520
          %s6522 = smul.addr %s31, 8
          %s6523 = sadd.s32 %s32, %s6522
          %s6524 = smul.addr %s6523, 64
          %s6525 = scalar_lea.hbm %s7, %s6524
          %s6526 = sshll.u32 %s6515, 4
          %s6527 = int_to_ptr.vmem [resolvable:$true] %s6526
          %6532 = dma.vmem_to_hbm [thread:$0]  %s6527, 512, %s6525, %s6512, 64, 64, 4
        $region84: #{tpu_custom_call.1} parent=47 // pred_fallthru
          _
      $region48: #{tpu_custom_call.1} parent=5 // pred_fallthru
        _
      %p6533 = scmp.le.s32.totalorder 2, %s22
      // Predicated region
      $region85: #{tpu_custom_call.1} parent=5 // pred_check
        %p6534 = pneg %p6533
      $region86: #{tpu_custom_call.1} parent=5 // pred_check_branch
        %6536 = sbr.rel (%p6534) target = $region88
      $region87: #{tpu_custom_call.1} parent=5 // pred_region
        %s6537 = ssub.s32 %s22, 2
        // Predicated region
        $region89: #{tpu_custom_call.1} parent=87 // pred_check
          %p6538 = pneg %p237
        $region90: #{tpu_custom_call.1} parent=87 // pred_check_branch
          %6540 = sbr.rel (%p6538) target = $region92
        $region91: #{tpu_custom_call.1} parent=87 // pred_region
          %s6541 = sand.u32 %s222, 1
          %s6542 = scalar_lea.sflag [#allocation7], %s6541
          %s6543 = sand.u32 %s222, 1
          %s6544 = smul.addr %s6543, 32
          %s6545 = scalar_lea.vmem [#allocation17], %s6544
          %6546 = dma.done %s6542, 512
        $region92: #{tpu_custom_call.1} parent=87 // pred_fallthru
          _
      $region88: #{tpu_custom_call.1} parent=5 // pred_fallthru
        _
    $region6: #{tpu_custom_call.1} parent=1 // loop_footer
      %s26 = sadd.s32 1, %s22
    $region7: #{tpu_custom_call.1} parent=1 // loop_footer_branch
      %21 = sbr.rel target = $region3
    $region8: #{tpu_custom_call.1} parent=1 // loop_exit
      _
    %6547 = vsyncpa [#allocation6], 1
    %s6548 = scalar_lea.sflag [#allocation6], 1
    %6549 = vsyncpa %s6548, 1
    %6550 = vsyncpa [#allocation9], 1
    %6551 = vsyncpa [#allocation12], 1
    %6552 = vsyncpa [#allocation15], 1
    %6553 = vsyncpa [#allocation7], 1
    %s6554 = scalar_lea.sflag [#allocation7], 1
    %6555 = vsyncpa %s6554, 1

</llo_original>
